<compile_context>
chip_gen: v7x
topology: tpu7x:2x2x1
jax: 0.10.0
libtpu: 0.0.40
codegen_flags: <defaults>
</compile_context>

<pallas_src>
import functools

import jax
import jax.numpy as jnp
from jax import lax
from jax.experimental import pallas as pl
from jax.experimental.pallas import tpu as pltpu


# ----------------------------- Pallas kernels ------------------------------

def _attention(x2, w_qkv, b_qkv, wo, bo, B, S, E):
    """Single-head self-attention on flattened (B*S, E) activations."""
    qkv = jnp.dot(x2, w_qkv, preferred_element_type=jnp.float32) + b_qkv
    qkv3 = qkv.reshape(B, S, 3 * E)
    scale = 1.0 / (float(E) ** 0.5)
    q = qkv3[..., :E] * scale
    k = qkv3[..., E:2 * E]
    v = qkv3[..., 2 * E:]
    s = jnp.einsum('bqd,bkd->bqk', q, k, preferred_element_type=jnp.float32)
    m = jnp.max(s, axis=-1, keepdims=True)
    ex = jnp.exp(s - m)
    # Exact divide (not pl.reciprocal approx) to match PyTorch softmax.
    p = ex / jnp.sum(ex, axis=-1, keepdims=True)
    ctx = jnp.einsum('bqk,bkd->bqd', p, v, preferred_element_type=jnp.float32)
    return jnp.dot(ctx.reshape(B * S, E), wo,
                   preferred_element_type=jnp.float32) + bo     # (B*S, E)


def _alstm_track_kernel(x_ref, *refs, ncells, hid):
    """Fused stack of AttentionLSTMCells for one track (narrow or wide).

    refs layout: ncells * (w_qkv, b_qkv, wo, bo, w_ihb, b_gate, whh_blk)
    followed by out_ref of shape (B, 2H) = last cell's last-timestep hidden.
    Gate-chunk layout of the packed 8H axis: [i_f i_b | f_f f_b | g_f g_b |
    o_f o_b] (PyTorch gate order i, f, g, o; fwd / bwd halves interleaved).
    """
    out_ref = refs[-1]
    H = hid
    H2, H4, H6, H8 = 2 * H, 4 * H, 6 * H, 8 * H
    x = x_ref[...]                                          # (B, S, E0)
    B, S, _ = x.shape
    lane8 = lax.broadcasted_iota(jnp.int32, (B, H8), 1)
    fwd_mask8 = (lane8 % H2) < H             # fwd half of every 2H gate chunk
    tanh_mask8 = (lane8 >= H4) & (lane8 < H6)           # 'g' chunk -> tanh
    lane2 = lax.broadcasted_iota(jnp.int32, (B, H2), 1)
    fwd_mask2 = lane2 < H

    for c in range(ncells):                       # static unroll over cells
        wqkv_r, bqkv_r, wo_r, bo_r, wih_r, bg_r, whh_r = refs[7 * c:7 * c + 7]
        E = x.shape[-1]
        a = _attention(x.reshape(B * S, E), wqkv_r[...], bqkv_r[...],
                       wo_r[...], bo_r[...], B, S, E)
        # Both LSTM directions' input-gate pre-activations from one
        # lane-dense (E, 8H) matmul (8H = 128 at H = 16).
        gates = (jnp.dot(a, wih_r[...], preferred_element_type=jnp.float32)
                 + bg_r[...]).reshape(B, S, H8)
        whh = whh_r[...]                         # (2H, 8H) block-diag Whh
        h = jnp.zeros((B, H2), jnp.float32)
        cst = jnp.zeros((B, H2), jnp.float32)
        steps = []
        for t in range(S):                       # static unroll over time
            # fwd direction consumes time t, bwd direction time S-1-t.
            gx = jnp.where(fwd_mask8, gates[:, t, :], gates[:, S - 1 - t, :])
            pre = gx + jnp.dot(h, whh, preferred_element_type=jnp.float32)
            # Full-vreg EUP activations blended by a lane-iota mask.
            act = jnp.where(tanh_mask8, jnp.tanh(pre), jax.nn.sigmoid(pre))
            gi = act[:, 0:H2]
            gf = act[:, H2:H4]
            gg = act[:, H4:H6]
            go = act[:, H6:H8]
            cst = gf * cst + gi * gg
            h = go * jnp.tanh(cst)
            steps.append(h)                      # [:, :H]=h_f(t), [:, H:]=h_b(S-1-t)
        if c < ncells - 1:
            # y[:, t, :H] = fwd hidden at t ; y[:, t, H:] = bwd hidden at t.
            y = jnp.stack(
                [jnp.where(fwd_mask2, steps[t], steps[S - 1 - t])
                 for t in range(S)], axis=1)                 # (B, S, 2H)
            x = jnp.concatenate([x, y], axis=-1)
        else:
            # Only the last timestep of the final cell feeds the condenser.
            out_ref[...] = jnp.where(fwd_mask2, steps[S - 1], steps[0])


def _dense_block_kernel(x_ref, *refs, num_layers, in_dim, hid):
    """Fused DenseBlock: in-place growth into the output buffer.

    o_ref[:, :in_dim] = x; each layer appends tanh(prefix @ w + b) in place
    (no growing jnp.concatenate copies).  Dropout = identity (eval).
    """
    o_ref = refs[-1]
    o_ref[:, :in_dim] = x_ref[...]
    cur = in_dim
    for i in range(num_layers):
        w = refs[2 * i][...]
        b = refs[2 * i + 1][...]
        y = jnp.tanh(jnp.dot(o_ref[:, :cur], w,
                             preferred_element_type=jnp.float32) + b)
        o_ref[:, cur:cur + hid] = y
        cur += hid


def _condenser_kernel(x_ref, mhc_ref, *refs, num_layers, in_dim, hid):
    """Fused Condenser: pre-attention DenseBlock (in a VMEM scratch) +
    att linear + mask + row-sum + sigmoid.

    refs = (w_0, b_0, ..., w_{L-1}, b_{L-1}, att_w, att_b, out_w, out_b,
            prob_ref, masked_ref, scratch_buf).
    """
    prob_ref, masked_ref, buf = refs[-3], refs[-2], refs[-1]
    att_w_ref, att_b_ref, out_w_ref, out_b_ref = refs[2 * num_layers:
                                                      2 * num_layers + 4]
    buf[:, :in_dim] = x_ref[...]
    cur = in_dim
    for i in range(num_layers):
        w = refs[2 * i][...]
        b = refs[2 * i + 1][...]
        y = jnp.tanh(jnp.dot(buf[:, :cur], w,
                             preferred_element_type=jnp.float32) + b)
        buf[:, cur:cur + hid] = y
        cur += hid
    att = (jnp.dot(buf[...], att_w_ref[...],
                   preferred_element_type=jnp.float32) + att_b_ref[...])
    masked = (out_w_ref[...] * att) * (mhc_ref[...] != 0).astype(jnp.float32)
    masked_ref[...] = masked
    prob_ref[...] = jax.nn.sigmoid(
        jnp.sum(masked, axis=1, keepdims=True) + out_b_ref[...])


# ------------------------------ wrappers ------------------------------------

def dense_block(x, layer_params, hid):
    M, D = x.shape
    L = len(layer_params)
    args = [x]
    for p in layer_params:
        args.extend([p['w'], p['b']])
    return pl.pallas_call(
        functools.partial(_dense_block_kernel, num_layers=L, in_dim=D,
                          hid=hid),
        out_shape=jax.ShapeDtypeStruct((M, D + L * hid), jnp.float32),
    )(*args)


def alstm_track(x, cells, hid):
    """Run an L-cell AttentionLSTM track fully fused inside one kernel.

    Returns (B, 2H): the last timestep (fwd | bwd) of the last cell.
    """
    B = x.shape[0]
    args = [x]
    for cp in cells:
        args.extend([cp['w_qkv'], cp['b_qkv'], cp['wo'], cp['bo'],
                     cp['w_ihb'], cp['b_gate'], cp['whh_blk']])
    return pl.pallas_call(
        functools.partial(_alstm_track_kernel, ncells=len(cells), hid=hid),
        out_shape=jax.ShapeDtypeStruct((B, 2 * hid), jnp.float32),
    )(*args)


def condenser_core(p, mhc, anchor_out, lstm_out, hid):
    x = jnp.concatenate([anchor_out, lstm_out], axis=-1)
    B, D = x.shape
    M = mhc.shape[1]
    L = len(p['pre'])
    args = [x, mhc]
    for lp in p['pre']:
        args.extend([lp['w'], lp['b']])
    args.extend([p['att_w'], p['att_b'], p['out_w'], p['out_b']])
    prob2d, masked = pl.pallas_call(
        functools.partial(_condenser_kernel, num_layers=L, in_dim=D, hid=hid),
        out_shape=(jax.ShapeDtypeStruct((B, 1), jnp.float32),
                   jax.ShapeDtypeStruct((B, M), jnp.float32)),
        scratch_shapes=[pltpu.VMEM((B, D + L * hid), jnp.float32)],
    )(*args)
    return prob2d[:, 0], masked


# ------------------------------ model glue ----------------------------------

def anchor_block(p, mhc, pep, cfg):
    minpep, enclen, hid = cfg['minpep'], cfg['enclen'], cfg['hidlen']
    half = minpep // 2 * enclen
    rest = (minpep - minpep // 2) * enclen
    x = jnp.concatenate(
        [mhc, pep[:, :half], pep[:, pep.shape[1] - rest:]], axis=1)
    return dense_block(x, p, hid)


def pmhc_build_input(mhc, pep, win, enclen):
    window = win * enclen
    slices = (pep.shape[1] - window) // enclen + 1
    pep_sl = jnp.stack(
        [pep[:, i * enclen:i * enclen + window] for i in range(slices)], axis=1)
    mhc_b = jnp.broadcast_to(mhc[:, None, :],
                             (mhc.shape[0], slices, mhc.shape[1]))
    return jnp.concatenate([pep_sl, mhc_b], axis=-1)


def pmhc_lstm(p, mhc, pep, cfg):
    H, minpep, enclen = cfg['hidlen'], cfg['minpep'], cfg['enclen']
    narrowinp = pmhc_build_input(mhc, pep, 1, enclen)
    wideinp = pmhc_build_input(mhc, pep, minpep, enclen)
    # TODO(synk): on v7x the two independent tracks could run on separate
    # TensorCores via pltpu.create_tensorcore_mesh + pl.core_map; here they
    # are two gridless pallas_calls (single TC each).
    narrow_last = alstm_track(narrowinp, p['narrow'], H)
    wide_last = alstm_track(wideinp, p['wide'], H)
    return jnp.concatenate([narrow_last, wide_last], axis=-1)


@functools.partial(
    jax.jit,
    static_argnames=('mhclen', 'minpep', 'enclen', 'hidlen', 'layers'))
def bigmhc_core(params, mhc, pep, *, mhclen, minpep, enclen, hidlen, layers):
    cfg = dict(mhclen=mhclen, minpep=minpep, enclen=enclen,
               hidlen=hidlen, layers=layers)
    mhc = mhc.astype(jnp.float32)
    pep = pep.astype(jnp.float32)
    anchor_out = anchor_block(params['anchor'], mhc, pep, cfg)
    lstm_out = pmhc_lstm(params['lstm'], mhc, pep, cfg)
    return condenser_core(params['cond'], mhc, anchor_out, lstm_out, hidlen)


def bigmhc_forward(params, mhc, pep, cfg):
    prob, masked = bigmhc_core(params, mhc, pep, **cfg)
    # TODO(synk): torch.masked_select has a data-dependent output shape; the
    # mask + row-reduction run inside the fused condenser kernel, the
    # select/reshape runs eagerly (assumes equal nonzero count per row).
    attention = masked[mhc != 0].reshape(mhc.shape[0], -1)
    return prob, attention


# ---------------------------- parameter setup --------------------------------

class KeyGen:
    def __init__(self, seed):
        self._key = jax.random.PRNGKey(seed)

    def __call__(self):
        self._key, sub = jax.random.split(self._key)
        return sub


def _init(key, shape, scale=0.1):
    return scale * jax.random.normal(key, shape, dtype=jnp.float32)


def make_dense_block_params(kg, inp, out, layers):
    ps = []
    for x in range(layers):
        d = inp + x * out
        ps.append({'w': _init(kg(), (d, out)), 'b': _init(kg(), (1, out))})
    return ps


def _pack_gate_cols(w_f, w_b, H):
    """Pack per-direction (4H, D) PyTorch-layout matrices (gate order i,f,g,o)
    into (D, 8H) with chunk layout [i_f i_b | f_f f_b | g_f g_b | o_f o_b]."""
    cols = []
    for g in range(4):
        cols.append(w_f[g * H:(g + 1) * H, :].T)
        cols.append(w_b[g * H:(g + 1) * H, :].T)
    return jnp.concatenate(cols, axis=1)


def _pack_gate_bias(b_f, b_b, H):
    chunks = []
    for g in range(4):
        chunks.append(b_f[g * H:(g + 1) * H])
        chunks.append(b_b[g * H:(g + 1) * H])
    return jnp.concatenate(chunks)[None, :]


def _pack_hh_blockdiag(w_hh_f, w_hh_b, H):
    """block_diag(Whh_f, Whh_b) packed to (2H, 8H): rows [:H] map h_fwd,
    rows [H:] map h_bwd, columns follow the same gate-chunk layout."""
    z = jnp.zeros((H, H), jnp.float32)
    cols = []
    for g in range(4):
        f_t = w_hh_f[g * H:(g + 1) * H, :].T          # (H, H)
        b_t = w_hh_b[g * H:(g + 1) * H, :].T          # (H, H)
        cols.append(jnp.concatenate([f_t, z], axis=0))   # (2H, H)
        cols.append(jnp.concatenate([z, b_t], axis=0))   # (2H, H)
    return jnp.concatenate(cols, axis=1)                 # (2H, 8H)


def make_alstm_params(kg, inp, H):
    # MultiheadAttention params (num_heads=1): in_proj (3E,E), out_proj (E,E).
    in_w = _init(kg(), (3 * inp, inp))
    in_b = _init(kg(), (3 * inp,))
    out_w = _init(kg(), (inp, inp))
    out_b = _init(kg(), (1, inp))
    # Bidirectional LSTM weights in PyTorch layout (gate order i,f,g,o).
    w_ih_f = _init(kg(), (4 * H, inp))
    w_hh_f = _init(kg(), (4 * H, H))
    b_ih_f = _init(kg(), (4 * H,))
    b_hh_f = _init(kg(), (4 * H,))
    w_ih_b = _init(kg(), (4 * H, inp))
    w_hh_b = _init(kg(), (4 * H, H))
    b_ih_b = _init(kg(), (4 * H,))
    b_hh_b = _init(kg(), (4 * H,))
    return {
        'w_qkv': in_w.T, 'b_qkv': in_b[None, :],
        'wo': out_w.T, 'bo': out_b,
        'w_ihb': _pack_gate_cols(w_ih_f, w_ih_b, H),                # (E, 8H)
        'b_gate': _pack_gate_bias(b_ih_f + b_hh_f, b_ih_b + b_hh_b, H),
        'whh_blk': _pack_hh_blockdiag(w_hh_f, w_hh_b, H),           # (2H, 8H)
    }


def make_params(kg, cfg):
    M, P, E, H, L = (cfg['mhclen'], cfg['minpep'], cfg['enclen'],
                     cfg['hidlen'], cfg['layers'])
    params = {
        'anchor': make_dense_block_params(kg, M + P * E, H, L),
        'lstm': {
            'narrow': [make_alstm_params(kg, 2 * H * x + M + E, H)
                       for x in range(L)],
            'wide': [make_alstm_params(kg, 2 * H * x + M + P * E, H)
                     for x in range(L)],
        },
    }
    inp = M + P * E + H * (4 + L)
    params['cond'] = {
        'pre': make_dense_block_params(kg, inp, H, L),
        'att_w': _init(kg(), (inp + H * L, M)),
        'att_b': _init(kg(), (1, M)),
        'out_w': _init(kg(), (1, M)),
        'out_b': _init(kg(), (1, 1)),
    }
    return params


# ---------------------------------- main -------------------------------------

if __name__ == "__main__":
    # Small BigMHC configuration (same structure as defaults, scaled down).
    # hidlen=16 makes the packed LSTM gate width 8H = 128 (one full lane tile).
    cfg = dict(mhclen=32, minpep=8, enclen=4, hidlen=16, layers=2)
    B, pep_residues = 2, 10               # pep feature length = 10 * 4 = 40

    kg = KeyGen(0)
    params = make_params(kg, cfg)

    # mhc must have the same nonzero count per row for masked_select/reshape.
    n_nonzero = 20
    mhc_vals = jax.random.uniform(kg(), (B, n_nonzero), dtype=jnp.float32) + 0.5
    mhc = jnp.concatenate(
        [mhc_vals, jnp.zeros((B, cfg['mhclen'] - n_nonzero), jnp.float32)],
        axis=1)
    pep = jax.random.uniform(kg(), (B, pep_residues * cfg['enclen']),
                             dtype=jnp.float32)

    prob, attention = bigmhc_forward(params, mhc, pep, cfg)
    jax.block_until_ready((prob, attention))
    assert prob.shape == (B,)
    assert attention.shape == (B, n_nonzero)
    assert bool(jnp.all(jnp.isfinite(prob)))
    print("KERNEL_OK")
</pallas_src>

<mosaic_0001>
module attributes {stable_mosaic.version = 11 : i64} {
  func.func @_dense_block_kernel(%arg0: memref<2x64xf32, #tpu.memory_space<vmem>>, %arg1: memref<64x16xf32, #tpu.memory_space<vmem>>, %arg2: memref<1x16xf32, #tpu.memory_space<vmem>>, %arg3: memref<80x16xf32, #tpu.memory_space<vmem>>, %arg4: memref<1x16xf32, #tpu.memory_space<vmem>>, %arg5: memref<2x96xf32, #tpu.memory_space<vmem>>) attributes {dimension_semantics = [], scalar_prefetch = 0 : i64, scratch_operands = 0 : i64, tpu.core_type = #tpu.core_type<tc>} {
    %c0 = arith.constant 0 : index
    %c0_0 = arith.constant 0 : index
    %0 = vector.load %arg0[%c0, %c0_0] : memref<2x64xf32, #tpu.memory_space<vmem>>, vector<2x64xf32>
    %c0_1 = arith.constant 0 : index
    %c0_2 = arith.constant 0 : index
    %1 = vector.load %arg5[%c0_1, %c0_2] : memref<2x96xf32, #tpu.memory_space<vmem>>, vector<2x64xf32>
    tpu.vector_store %arg5[%c0_1, %c0_2], %0 {strides = array<i32>} : memref<2x96xf32, #tpu.memory_space<vmem>>, vector<2x64xf32>,
    %c0_3 = arith.constant 0 : index
    %c0_4 = arith.constant 0 : index
    %2 = vector.load %arg1[%c0_3, %c0_4] : memref<64x16xf32, #tpu.memory_space<vmem>>, vector<64x16xf32>
    %c0_5 = arith.constant 0 : index
    %c0_6 = arith.constant 0 : index
    %3 = vector.load %arg2[%c0_5, %c0_6] : memref<1x16xf32, #tpu.memory_space<vmem>>, vector<1x16xf32>
    %c0_7 = arith.constant 0 : index
    %c0_8 = arith.constant 0 : index
    %4 = vector.load %arg5[%c0_7, %c0_8] : memref<2x96xf32, #tpu.memory_space<vmem>>, vector<2x64xf32>
    %cst = arith.constant dense<0.000000e+00> : vector<2x16xf32>
    %5 = tpu.matmul %4, %2, %cst {dimension_numbers = #tpu.dot_dimension_numbers<[1], [0], [0], [1], [0, 0, 1, 1], [], []>} : vector<2x64xf32>, vector<64x16xf32>, vector<2x16xf32> -> vector<2x16xf32>
    %6 = vector.broadcast %3 : vector<1x16xf32> to vector<2x16xf32>
    %7 = arith.addf %5, %6 : vector<2x16xf32>
    %8 = math.tanh %7 : vector<2x16xf32>
    %c0_9 = arith.constant 0 : index
    %c64 = arith.constant 64 : index
    %9 = vector.load %arg5[%c0_9, %c64] : memref<2x96xf32, #tpu.memory_space<vmem>>, vector<2x16xf32>
    tpu.vector_store %arg5[%c0_9, %c64], %8 {strides = array<i32>} : memref<2x96xf32, #tpu.memory_space<vmem>>, vector<2x16xf32>,
    %c0_10 = arith.constant 0 : index
    %c0_11 = arith.constant 0 : index
    %10 = vector.load %arg3[%c0_10, %c0_11] : memref<80x16xf32, #tpu.memory_space<vmem>>, vector<80x16xf32>
    %c0_12 = arith.constant 0 : index
    %c0_13 = arith.constant 0 : index
    %11 = vector.load %arg4[%c0_12, %c0_13] : memref<1x16xf32, #tpu.memory_space<vmem>>, vector<1x16xf32>
    %c0_14 = arith.constant 0 : index
    %c0_15 = arith.constant 0 : index
    %12 = vector.load %arg5[%c0_14, %c0_15] : memref<2x96xf32, #tpu.memory_space<vmem>>, vector<2x80xf32>
    %cst_16 = arith.constant dense<0.000000e+00> : vector<2x16xf32>
    %13 = tpu.matmul %12, %10, %cst_16 {dimension_numbers = #tpu.dot_dimension_numbers<[1], [0], [0], [1], [0, 0, 1, 1], [], []>} : vector<2x80xf32>, vector<80x16xf32>, vector<2x16xf32> -> vector<2x16xf32>
    %14 = vector.broadcast %11 : vector<1x16xf32> to vector<2x16xf32>
    %15 = arith.addf %13, %14 : vector<2x16xf32>
    %16 = math.tanh %15 : vector<2x16xf32>
    %c0_17 = arith.constant 0 : index
    %c80 = arith.constant 80 : index
    %17 = vector.load %arg5[%c0_17, %c80] : memref<2x96xf32, #tpu.memory_space<vmem>>, vector<2x16xf32>
    tpu.vector_store %arg5[%c0_17, %c80], %16 {strides = array<i32>} : memref<2x96xf32, #tpu.memory_space<vmem>>, vector<2x16xf32>,
    return
  }
}

module attributes {stable_mosaic.version = 11 : i64} {
  func.func @_alstm_track_kernel(%arg0: memref<2x3x64xf32, #tpu.memory_space<vmem>>, %arg1: memref<64x192xf32, #tpu.memory_space<vmem>>, %arg2: memref<1x192xf32, #tpu.memory_space<vmem>>, %arg3: memref<64x64xf32, #tpu.memory_space<vmem>>, %arg4: memref<1x64xf32, #tpu.memory_space<vmem>>, %arg5: memref<64x128xf32, #tpu.memory_space<vmem>>, %arg6: memref<1x128xf32, #tpu.memory_space<vmem>>, %arg7: memref<32x128xf32, #tpu.memory_space<vmem>>, %arg8: memref<96x288xf32, #tpu.memory_space<vmem>>, %arg9: memref<1x288xf32, #tpu.memory_space<vmem>>, %arg10: memref<96x96xf32, #tpu.memory_space<vmem>>, %arg11: memref<1x96xf32, #tpu.memory_space<vmem>>, %arg12: memref<96x128xf32, #tpu.memory_space<vmem>>, %arg13: memref<1x128xf32, #tpu.memory_space<vmem>>, %arg14: memref<32x128xf32, #tpu.memory_space<vmem>>, %arg15: memref<2x32xf32, #tpu.memory_space<vmem>>) attributes {dimension_semantics = [], scalar_prefetch = 0 : i64, scratch_operands = 0 : i64, tpu.core_type = #tpu.core_type<tc>} {
    %c0 = arith.constant 0 : index
    %c0_0 = arith.constant 0 : index
    %c0_1 = arith.constant 0 : index
    %0 = vector.load %arg0[%c0, %c0_0, %c0_1] : memref<2x3x64xf32, #tpu.memory_space<vmem>>, vector<2x3x64xf32>
    %1 = tpu.iota {dimensions = array<i32: 1>} : vector<2x128xi32>
    %c32_i32 = arith.constant 32 : i32
    %c0_i32 = arith.constant 0 : i32
    %2 = arith.cmpi eq, %c32_i32, %c0_i32 : i32
    %c1_i32 = arith.constant 1 : i32
    %3 = arith.select %2, %c1_i32, %c32_i32 : i32
    %4 = vector.broadcast %3 : i32 to vector<2x128xi32>
    %5 = arith.remsi %1, %4 : vector<2x128xi32>
    %c0_i32_2 = arith.constant 0 : i32
    %6 = vector.broadcast %c0_i32_2 : i32 to vector<2x128xi32>
    %7 = arith.cmpi ne, %5, %6 : vector<2x128xi32>
    %c0_i32_3 = arith.constant 0 : i32
    %8 = vector.broadcast %c0_i32_3 : i32 to vector<2x128xi32>
    %9 = arith.cmpi slt, %5, %8 : vector<2x128xi32>
    %c0_i32_4 = arith.constant 0 : i32
    %10 = arith.cmpi slt, %3, %c0_i32_4 : i32
    %11 = vector.broadcast %10 : i1 to vector<2x128xi1>
    %12 = vector.broadcast %11 : vector<2x128xi1> to vector<2x128xi1>
    %13 = arith.xori %9, %12 : vector<2x128xi1>
    %14 = arith.andi %13, %7 : vector<2x128xi1>
    %15 = vector.broadcast %3 : i32 to vector<2x128xi32>
    %16 = arith.addi %5, %15 : vector<2x128xi32>
    %17 = arith.select %14, %16, %5 : vector<2x128xi1>, vector<2x128xi32>
    %c16_i32 = arith.constant 16 : i32
    %18 = vector.broadcast %c16_i32 : i32 to vector<2x128xi32>
    %19 = arith.cmpi slt, %17, %18 : vector<2x128xi32>
    %c64_i32 = arith.constant 64 : i32
    %20 = vector.broadcast %c64_i32 : i32 to vector<2x128xi32>
    %21 = arith.cmpi sge, %1, %20 : vector<2x128xi32>
    %c96_i32 = arith.constant 96 : i32
    %22 = vector.broadcast %c96_i32 : i32 to vector<2x128xi32>
    %23 = arith.cmpi slt, %1, %22 : vector<2x128xi32>
    %24 = arith.andi %21, %23 : vector<2x128xi1>
    %25 = tpu.iota {dimensions = array<i32: 1>} : vector<2x32xi32>
    %c16_i32_5 = arith.constant 16 : i32
    %26 = vector.broadcast %c16_i32_5 : i32 to vector<2x32xi32>
    %27 = arith.cmpi slt, %25, %26 : vector<2x32xi32>
    %28 = vector.shape_cast %0 : vector<2x3x64xf32> to vector<6x64xf32>
    %c0_6 = arith.constant 0 : index
    %c0_7 = arith.constant 0 : index
    %29 = vector.load %arg1[%c0_6, %c0_7] : memref<64x192xf32, #tpu.memory_space<vmem>>, vector<64x192xf32>
    %c0_8 = arith.constant 0 : index
    %c0_9 = arith.constant 0 : index
    %30 = vector.load %arg2[%c0_8, %c0_9] : memref<1x192xf32, #tpu.memory_space<vmem>>, vector<1x192xf32>
    %c0_10 = arith.constant 0 : index
    %c0_11 = arith.constant 0 : index
    %31 = vector.load %arg3[%c0_10, %c0_11] : memref<64x64xf32, #tpu.memory_space<vmem>>, vector<64x64xf32>
    %c0_12 = arith.constant 0 : index
    %c0_13 = arith.constant 0 : index
    %32 = vector.load %arg4[%c0_12, %c0_13] : memref<1x64xf32, #tpu.memory_space<vmem>>, vector<1x64xf32>
    %cst = arith.constant dense<0.000000e+00> : vector<6x192xf32>
    %33 = tpu.matmul %28, %29, %cst {dimension_numbers = #tpu.dot_dimension_numbers<[1], [0], [0], [1], [0, 0, 1, 1], [], []>} : vector<6x64xf32>, vector<64x192xf32>, vector<6x192xf32> -> vector<6x192xf32>
    %34 = vector.broadcast %30 : vector<1x192xf32> to vector<6x192xf32>
    %35 = arith.addf %33, %34 : vector<6x192xf32>
    %36 = vector.shape_cast %35 : vector<6x192xf32> to vector<2x3x192xf32>
    %37 = vector.extract_strided_slice %36 {offsets = [0, 0, 0], sizes = [2, 3, 64], strides = [1, 1, 1]} : vector<2x3x192xf32> to vector<2x3x64xf32>
    %cst_14 = arith.constant 1.250000e-01 : f32
    %38 = vector.broadcast %cst_14 : f32 to vector<2x3x64xf32>
    %39 = arith.mulf %37, %38 : vector<2x3x64xf32>
    %40 = vector.extract_strided_slice %36 {offsets = [0, 0, 64], sizes = [2, 3, 64], strides = [1, 1, 1]} : vector<2x3x192xf32> to vector<2x3x64xf32>
    %41 = vector.extract_strided_slice %36 {offsets = [0, 0, 128], sizes = [2, 3, 64], strides = [1, 1, 1]} : vector<2x3x192xf32> to vector<2x3x64xf32>
    "tpu.trace_start"() <{level = 10 : i32, message = "bqd,bkd->bqk"}> : () -> ()
    %cst_15 = arith.constant dense<0.000000e+00> : vector<2x3x3xf32>
    %42 = tpu.matmul %39, %40, %cst_15 {dimension_numbers = #tpu.dot_dimension_numbers<[2], [2], [1], [1], [0, 0, 0, 1, 1, 1], [0], [0]>} : vector<2x3x64xf32>, vector<2x3x64xf32>, vector<2x3x3xf32> -> vector<2x3x3xf32>
    "tpu.trace_stop"() : () -> ()
    %cst_16 = arith.constant dense<0xFF800000> : vector<2x3xf32>
    %43 = vector.multi_reduction <maximumf>, %42, %cst_16 [2] : vector<2x3x3xf32> to vector<2x3xf32>
    %44 = vector.shape_cast %43 : vector<2x3xf32> to vector<2x3x1xf32>
    %45 = vector.broadcast %44 : vector<2x3x1xf32> to vector<2x3x3xf32>
    %46 = arith.subf %42, %45 : vector<2x3x3xf32>
    %47 = math.exp %46 : vector<2x3x3xf32>
    %cst_17 = arith.constant dense<0.000000e+00> : vector<2x3xf32>
    %48 = vector.multi_reduction <add>, %47, %cst_17 [2] : vector<2x3x3xf32> to vector<2x3xf32>
    %49 = vector.shape_cast %48 : vector<2x3xf32> to vector<2x3x1xf32>
    %50 = vector.broadcast %49 : vector<2x3x1xf32> to vector<2x3x3xf32>
    %51 = arith.divf %47, %50 : vector<2x3x3xf32>
    "tpu.trace_start"() <{level = 10 : i32, message = "bqk,bkd->bqd"}> : () -> ()
    %cst_18 = arith.constant dense<0.000000e+00> : vector<2x3x64xf32>
    %52 = tpu.matmul %51, %41, %cst_18 {dimension_numbers = #tpu.dot_dimension_numbers<[2], [1], [1], [2], [0, 0, 0, 1, 1, 2], [0], [0]>} : vector<2x3x3xf32>, vector<2x3x64xf32>, vector<2x3x64xf32> -> vector<2x3x64xf32>
    "tpu.trace_stop"() : () -> ()
    %53 = vector.shape_cast %52 : vector<2x3x64xf32> to vector<6x64xf32>
    %cst_19 = arith.constant dense<0.000000e+00> : vector<6x64xf32>
    %54 = tpu.matmul %53, %31, %cst_19 {dimension_numbers = #tpu.dot_dimension_numbers<[1], [0], [0], [1], [0, 0, 1, 1], [], []>} : vector<6x64xf32>, vector<64x64xf32>, vector<6x64xf32> -> vector<6x64xf32>
    %55 = vector.broadcast %32 : vector<1x64xf32> to vector<6x64xf32>
    %56 = arith.addf %54, %55 : vector<6x64xf32>
    %c0_20 = arith.constant 0 : index
    %c0_21 = arith.constant 0 : index
    %57 = vector.load %arg5[%c0_20, %c0_21] : memref<64x128xf32, #tpu.memory_space<vmem>>, vector<64x128xf32>
    %cst_22 = arith.constant dense<0.000000e+00> : vector<6x128xf32>
    %58 = tpu.matmul %56, %57, %cst_22 {dimension_numbers = #tpu.dot_dimension_numbers<[1], [0], [0], [1], [0, 0, 1, 1], [], []>} : vector<6x64xf32>, vector<64x128xf32>, vector<6x128xf32> -> vector<6x128xf32>
    %c0_23 = arith.constant 0 : index
    %c0_24 = arith.constant 0 : index
    %59 = vector.load %arg6[%c0_23, %c0_24] : memref<1x128xf32, #tpu.memory_space<vmem>>, vector<1x128xf32>
    %60 = vector.broadcast %59 : vector<1x128xf32> to vector<6x128xf32>
    %61 = arith.addf %58, %60 : vector<6x128xf32>
    %62 = vector.shape_cast %61 : vector<6x128xf32> to vector<2x3x128xf32>
    %c0_25 = arith.constant 0 : index
    %c0_26 = arith.constant 0 : index
    %63 = vector.load %arg7[%c0_25, %c0_26] : memref<32x128xf32, #tpu.memory_space<vmem>>, vector<32x128xf32>
    %cst_27 = arith.constant 0.000000e+00 : f32
    %64 = vector.broadcast %cst_27 : f32 to vector<2x32xf32>
    %cst_28 = arith.constant 0.000000e+00 : f32
    %65 = vector.broadcast %cst_28 : f32 to vector<2x32xf32>
    %66 = vector.extract_strided_slice %62 {offsets = [0, 0, 0], sizes = [2, 1, 128], strides = [1, 1, 1]} : vector<2x3x128xf32> to vector<2x1x128xf32>
    %67 = vector.shape_cast %66 : vector<2x1x128xf32> to vector<2x128xf32>
    %68 = vector.extract_strided_slice %62 {offsets = [0, 2, 0], sizes = [2, 1, 128], strides = [1, 1, 1]} : vector<2x3x128xf32> to vector<2x1x128xf32>
    %69 = vector.shape_cast %68 : vector<2x1x128xf32> to vector<2x128xf32>
    %70 = arith.select %19, %67, %69 : vector<2x128xi1>, vector<2x128xf32>
    %cst_29 = arith.constant dense<0.000000e+00> : vector<2x128xf32>
    %71 = tpu.matmul %64, %63, %cst_29 {dimension_numbers = #tpu.dot_dimension_numbers<[1], [0], [0], [1], [0, 0, 1, 1], [], []>} : vector<2x32xf32>, vector<32x128xf32>, vector<2x128xf32> -> vector<2x128xf32>
    %72 = arith.addf %70, %71 : vector<2x128xf32>
    %73 = math.tanh %72 : vector<2x128xf32>
    %74 = arith.negf %72 : vector<2x128xf32>
    %75 = math.exp %74 : vector<2x128xf32>
    %cst_30 = arith.constant 1.000000e+00 : f32
    %76 = vector.broadcast %cst_30 : f32 to vector<2x128xf32>
    %77 = arith.addf %76, %75 : vector<2x128xf32>
    %78 = arith.divf %76, %77 : vector<2x128xf32>
    %79 = arith.select %24, %73, %78 : vector<2x128xi1>, vector<2x128xf32>
    %80 = vector.extract_strided_slice %79 {offsets = [0, 0], sizes = [2, 32], strides = [1, 1]} : vector<2x128xf32> to vector<2x32xf32>
    %81 = vector.extract_strided_slice %79 {offsets = [0, 32], sizes = [2, 32], strides = [1, 1]} : vector<2x128xf32> to vector<2x32xf32>
    %82 = vector.extract_strided_slice %79 {offsets = [0, 64], sizes = [2, 32], strides = [1, 1]} : vector<2x128xf32> to vector<2x32xf32>
    %83 = vector.extract_strided_slice %79 {offsets = [0, 96], sizes = [2, 32], strides = [1, 1]} : vector<2x128xf32> to vector<2x32xf32>
    %84 = arith.mulf %81, %65 : vector<2x32xf32>
    %85 = arith.mulf %80, %82 : vector<2x32xf32>
    %86 = arith.addf %84, %85 : vector<2x32xf32>
    %87 = math.tanh %86 : vector<2x32xf32>
    %88 = arith.mulf %83, %87 : vector<2x32xf32>
    %89 = vector.extract_strided_slice %62 {offsets = [0, 1, 0], sizes = [2, 1, 128], strides = [1, 1, 1]} : vector<2x3x128xf32> to vector<2x1x128xf32>
    %90 = vector.shape_cast %89 : vector<2x1x128xf32> to vector<2x128xf32>
    %91 = vector.extract_strided_slice %62 {offsets = [0, 1, 0], sizes = [2, 1, 128], strides = [1, 1, 1]} : vector<2x3x128xf32> to vector<2x1x128xf32>
    %92 = vector.shape_cast %91 : vector<2x1x128xf32> to vector<2x128xf32>
    %93 = arith.select %19, %90, %92 : vector<2x128xi1>, vector<2x128xf32>
    %cst_31 = arith.constant dense<0.000000e+00> : vector<2x128xf32>
    %94 = tpu.matmul %88, %63, %cst_31 {dimension_numbers = #tpu.dot_dimension_numbers<[1], [0], [0], [1], [0, 0, 1, 1], [], []>} : vector<2x32xf32>, vector<32x128xf32>, vector<2x128xf32> -> vector<2x128xf32>
    %95 = arith.addf %93, %94 : vector<2x128xf32>
    %96 = math.tanh %95 : vector<2x128xf32>
    %97 = arith.negf %95 : vector<2x128xf32>
    %98 = math.exp %97 : vector<2x128xf32>
    %cst_32 = arith.constant 1.000000e+00 : f32
    %99 = vector.broadcast %cst_32 : f32 to vector<2x128xf32>
    %100 = arith.addf %99, %98 : vector<2x128xf32>
    %101 = arith.divf %99, %100 : vector<2x128xf32>
    %102 = arith.select %24, %96, %101 : vector<2x128xi1>, vector<2x128xf32>
    %103 = vector.extract_strided_slice %102 {offsets = [0, 0], sizes = [2, 32], strides = [1, 1]} : vector<2x128xf32> to vector<2x32xf32>
    %104 = vector.extract_strided_slice %102 {offsets = [0, 32], sizes = [2, 32], strides = [1, 1]} : vector<2x128xf32> to vector<2x32xf32>
    %105 = vector.extract_strided_slice %102 {offsets = [0, 64], sizes = [2, 32], strides = [1, 1]} : vector<2x128xf32> to vector<2x32xf32>
    %106 = vector.extract_strided_slice %102 {offsets = [0, 96], sizes = [2, 32], strides = [1, 1]} : vector<2x128xf32> to vector<2x32xf32>
    %107 = arith.mulf %104, %86 : vector<2x32xf32>
    %108 = arith.mulf %103, %105 : vector<2x32xf32>
    %109 = arith.addf %107, %108 : vector<2x32xf32>
    %110 = math.tanh %109 : vector<2x32xf32>
    %111 = arith.mulf %106, %110 : vector<2x32xf32>
    %112 = vector.extract_strided_slice %62 {offsets = [0, 2, 0], sizes = [2, 1, 128], strides = [1, 1, 1]} : vector<2x3x128xf32> to vector<2x1x128xf32>
    %113 = vector.shape_cast %112 : vector<2x1x128xf32> to vector<2x128xf32>
    %114 = vector.extract_strided_slice %62 {offsets = [0, 0, 0], sizes = [2, 1, 128], strides = [1, 1, 1]} : vector<2x3x128xf32> to vector<2x1x128xf32>
    %115 = vector.shape_cast %114 : vector<2x1x128xf32> to vector<2x128xf32>
    %116 = arith.select %19, %113, %115 : vector<2x128xi1>, vector<2x128xf32>
    %cst_33 = arith.constant dense<0.000000e+00> : vector<2x128xf32>
    %117 = tpu.matmul %111, %63, %cst_33 {dimension_numbers = #tpu.dot_dimension_numbers<[1], [0], [0], [1], [0, 0, 1, 1], [], []>} : vector<2x32xf32>, vector<32x128xf32>, vector<2x128xf32> -> vector<2x128xf32>
    %118 = arith.addf %116, %117 : vector<2x128xf32>
    %119 = math.tanh %118 : vector<2x128xf32>
    %120 = arith.negf %118 : vector<2x128xf32>
    %121 = math.exp %120 : vector<2x128xf32>
    %cst_34 = arith.constant 1.000000e+00 : f32
    %122 = vector.broadcast %cst_34 : f32 to vector<2x128xf32>
    %123 = arith.addf %122, %121 : vector<2x128xf32>
    %124 = arith.divf %122, %123 : vector<2x128xf32>
    %125 = arith.select %24, %119, %124 : vector<2x128xi1>, vector<2x128xf32>
    %126 = vector.extract_strided_slice %125 {offsets = [0, 0], sizes = [2, 32], strides = [1, 1]} : vector<2x128xf32> to vector<2x32xf32>
    %127 = vector.extract_strided_slice %125 {offsets = [0, 32], sizes = [2, 32], strides = [1, 1]} : vector<2x128xf32> to vector<2x32xf32>
    %128 = vector.extract_strided_slice %125 {offsets = [0, 64], sizes = [2, 32], strides = [1, 1]} : vector<2x128xf32> to vector<2x32xf32>
    %129 = vector.extract_strided_slice %125 {offsets = [0, 96], sizes = [2, 32], strides = [1, 1]} : vector<2x128xf32> to vector<2x32xf32>
    %130 = arith.mulf %127, %109 : vector<2x32xf32>
    %131 = arith.mulf %126, %128 : vector<2x32xf32>
    %132 = arith.addf %130, %131 : vector<2x32xf32>
    %133 = math.tanh %132 : vector<2x32xf32>
    %134 = arith.mulf %129, %133 : vector<2x32xf32>
    %135 = arith.select %27, %88, %134 : vector<2x32xi1>, vector<2x32xf32>
    %136 = arith.select %27, %111, %111 : vector<2x32xi1>, vector<2x32xf32>
    %137 = arith.select %27, %134, %88 : vector<2x32xi1>, vector<2x32xf32>
    %138 = vector.shape_cast %135 : vector<2x32xf32> to vector<2x1x32xf32>
    %139 = vector.shape_cast %136 : vector<2x32xf32> to vector<2x1x32xf32>
    %140 = vector.shape_cast %137 : vector<2x32xf32> to vector<2x1x32xf32>
    %141 = tpu.concatenate %138, %139, %140 in 1 : vector<2x1x32xf32>, vector<2x1x32xf32>, vector<2x1x32xf32> -> vector<2x3x32xf32>
    %142 = tpu.concatenate %0, %141 in 2 : vector<2x3x64xf32>, vector<2x3x32xf32> -> vector<2x3x96xf32>
    %143 = vector.shape_cast %142 : vector<2x3x96xf32> to vector<6x96xf32>
    %c0_35 = arith.constant 0 : index
    %c0_36 = arith.constant 0 : index
    %144 = vector.load %arg8[%c0_35, %c0_36] : memref<96x288xf32, #tpu.memory_space<vmem>>, vector<96x288xf32>
    %c0_37 = arith.constant 0 : index
    %c0_38 = arith.constant 0 : index
    %145 = vector.load %arg9[%c0_37, %c0_38] : memref<1x288xf32, #tpu.memory_space<vmem>>, vector<1x288xf32>
    %c0_39 = arith.constant 0 : index
    %c0_40 = arith.constant 0 : index
    %146 = vector.load %arg10[%c0_39, %c0_40] : memref<96x96xf32, #tpu.memory_space<vmem>>, vector<96x96xf32>
    %c0_41 = arith.constant 0 : index
    %c0_42 = arith.constant 0 : index
    %147 = vector.load %arg11[%c0_41, %c0_42] : memref<1x96xf32, #tpu.memory_space<vmem>>, vector<1x96xf32>
    %cst_43 = arith.constant dense<0.000000e+00> : vector<6x288xf32>
    %148 = tpu.matmul %143, %144, %cst_43 {dimension_numbers = #tpu.dot_dimension_numbers<[1], [0], [0], [1], [0, 0, 1, 1], [], []>} : vector<6x96xf32>, vector<96x288xf32>, vector<6x288xf32> -> vector<6x288xf32>
    %149 = vector.broadcast %145 : vector<1x288xf32> to vector<6x288xf32>
    %150 = arith.addf %148, %149 : vector<6x288xf32>
    %151 = vector.shape_cast %150 : vector<6x288xf32> to vector<2x3x288xf32>
    %152 = vector.extract_strided_slice %151 {offsets = [0, 0, 0], sizes = [2, 3, 96], strides = [1, 1, 1]} : vector<2x3x288xf32> to vector<2x3x96xf32>
    %cst_44 = arith.constant 0.102062076 : f32
    %153 = vector.broadcast %cst_44 : f32 to vector<2x3x96xf32>
    %154 = arith.mulf %152, %153 : vector<2x3x96xf32>
    %155 = vector.extract_strided_slice %151 {offsets = [0, 0, 96], sizes = [2, 3, 96], strides = [1, 1, 1]} : vector<2x3x288xf32> to vector<2x3x96xf32>
    %156 = vector.extract_strided_slice %151 {offsets = [0, 0, 192], sizes = [2, 3, 96], strides = [1, 1, 1]} : vector<2x3x288xf32> to vector<2x3x96xf32>
    "tpu.trace_start"() <{level = 10 : i32, message = "bqd,bkd->bqk"}> : () -> ()
    %cst_45 = arith.constant dense<0.000000e+00> : vector<2x3x3xf32>
    %157 = tpu.matmul %154, %155, %cst_45 {dimension_numbers = #tpu.dot_dimension_numbers<[2], [2], [1], [1], [0, 0, 0, 1, 1, 1], [0], [0]>} : vector<2x3x96xf32>, vector<2x3x96xf32>, vector<2x3x3xf32> -> vector<2x3x3xf32>
    "tpu.trace_stop"() : () -> ()
    %cst_46 = arith.constant dense<0xFF800000> : vector<2x3xf32>
    %158 = vector.multi_reduction <maximumf>, %157, %cst_46 [2] : vector<2x3x3xf32> to vector<2x3xf32>
    %159 = vector.shape_cast %158 : vector<2x3xf32> to vector<2x3x1xf32>
    %160 = vector.broadcast %159 : vector<2x3x1xf32> to vector<2x3x3xf32>
    %161 = arith.subf %157, %160 : vector<2x3x3xf32>
    %162 = math.exp %161 : vector<2x3x3xf32>
    %cst_47 = arith.constant dense<0.000000e+00> : vector<2x3xf32>
    %163 = vector.multi_reduction <add>, %162, %cst_47 [2] : vector<2x3x3xf32> to vector<2x3xf32>
    %164 = vector.shape_cast %163 : vector<2x3xf32> to vector<2x3x1xf32>
    %165 = vector.broadcast %164 : vector<2x3x1xf32> to vector<2x3x3xf32>
    %166 = arith.divf %162, %165 : vector<2x3x3xf32>
    "tpu.trace_start"() <{level = 10 : i32, message = "bqk,bkd->bqd"}> : () -> ()
    %cst_48 = arith.constant dense<0.000000e+00> : vector<2x3x96xf32>
    %167 = tpu.matmul %166, %156, %cst_48 {dimension_numbers = #tpu.dot_dimension_numbers<[2], [1], [1], [2], [0, 0, 0, 1, 1, 2], [0], [0]>} : vector<2x3x3xf32>, vector<2x3x96xf32>, vector<2x3x96xf32> -> vector<2x3x96xf32>
    "tpu.trace_stop"() : () -> ()
    %168 = vector.shape_cast %167 : vector<2x3x96xf32> to vector<6x96xf32>
    %cst_49 = arith.constant dense<0.000000e+00> : vector<6x96xf32>
    %169 = tpu.matmul %168, %146, %cst_49 {dimension_numbers = #tpu.dot_dimension_numbers<[1], [0], [0], [1], [0, 0, 1, 1], [], []>} : vector<6x96xf32>, vector<96x96xf32>, vector<6x96xf32> -> vector<6x96xf32>
    %170 = vector.broadcast %147 : vector<1x96xf32> to vector<6x96xf32>
    %171 = arith.addf %169, %170 : vector<6x96xf32>
    %c0_50 = arith.constant 0 : index
    %c0_51 = arith.constant 0 : index
    %172 = vector.load %arg12[%c0_50, %c0_51] : memref<96x128xf32, #tpu.memory_space<vmem>>, vector<96x128xf32>
    %cst_52 = arith.constant dense<0.000000e+00> : vector<6x128xf32>
    %173 = tpu.matmul %171, %172, %cst_52 {dimension_numbers = #tpu.dot_dimension_numbers<[1], [0], [0], [1], [0, 0, 1, 1], [], []>} : vector<6x96xf32>, vector<96x128xf32>, vector<6x128xf32> -> vector<6x128xf32>
    %c0_53 = arith.constant 0 : index
    %c0_54 = arith.constant 0 : index
    %174 = vector.load %arg13[%c0_53, %c0_54] : memref<1x128xf32, #tpu.memory_space<vmem>>, vector<1x128xf32>
    %175 = vector.broadcast %174 : vector<1x128xf32> to vector<6x128xf32>
    %176 = arith.addf %173, %175 : vector<6x128xf32>
    %177 = vector.shape_cast %176 : vector<6x128xf32> to vector<2x3x128xf32>
    %c0_55 = arith.constant 0 : index
    %c0_56 = arith.constant 0 : index
    %178 = vector.load %arg14[%c0_55, %c0_56] : memref<32x128xf32, #tpu.memory_space<vmem>>, vector<32x128xf32>
    %cst_57 = arith.constant 0.000000e+00 : f32
    %179 = vector.broadcast %cst_57 : f32 to vector<2x32xf32>
    %cst_58 = arith.constant 0.000000e+00 : f32
    %180 = vector.broadcast %cst_58 : f32 to vector<2x32xf32>
    %181 = vector.extract_strided_slice %177 {offsets = [0, 0, 0], sizes = [2, 1, 128], strides = [1, 1, 1]} : vector<2x3x128xf32> to vector<2x1x128xf32>
    %182 = vector.shape_cast %181 : vector<2x1x128xf32> to vector<2x128xf32>
    %183 = vector.extract_strided_slice %177 {offsets = [0, 2, 0], sizes = [2, 1, 128], strides = [1, 1, 1]} : vector<2x3x128xf32> to vector<2x1x128xf32>
    %184 = vector.shape_cast %183 : vector<2x1x128xf32> to vector<2x128xf32>
    %185 = arith.select %19, %182, %184 : vector<2x128xi1>, vector<2x128xf32>
    %cst_59 = arith.constant dense<0.000000e+00> : vector<2x128xf32>
    %186 = tpu.matmul %179, %178, %cst_59 {dimension_numbers = #tpu.dot_dimension_numbers<[1], [0], [0], [1], [0, 0, 1, 1], [], []>} : vector<2x32xf32>, vector<32x128xf32>, vector<2x128xf32> -> vector<2x128xf32>
    %187 = arith.addf %185, %186 : vector<2x128xf32>
    %188 = math.tanh %187 : vector<2x128xf32>
    %189 = arith.negf %187 : vector<2x128xf32>
    %190 = math.exp %189 : vector<2x128xf32>
    %cst_60 = arith.constant 1.000000e+00 : f32
    %191 = vector.broadcast %cst_60 : f32 to vector<2x128xf32>
    %192 = arith.addf %191, %190 : vector<2x128xf32>
    %193 = arith.divf %191, %192 : vector<2x128xf32>
    %194 = arith.select %24, %188, %193 : vector<2x128xi1>, vector<2x128xf32>
    %195 = vector.extract_strided_slice %194 {offsets = [0, 0], sizes = [2, 32], strides = [1, 1]} : vector<2x128xf32> to vector<2x32xf32>
    %196 = vector.extract_strided_slice %194 {offsets = [0, 32], sizes = [2, 32], strides = [1, 1]} : vector<2x128xf32> to vector<2x32xf32>
    %197 = vector.extract_strided_slice %194 {offsets = [0, 64], sizes = [2, 32], strides = [1, 1]} : vector<2x128xf32> to vector<2x32xf32>
    %198 = vector.extract_strided_slice %194 {offsets = [0, 96], sizes = [2, 32], strides = [1, 1]} : vector<2x128xf32> to vector<2x32xf32>
    %199 = arith.mulf %196, %180 : vector<2x32xf32>
    %200 = arith.mulf %195, %197 : vector<2x32xf32>
    %201 = arith.addf %199, %200 : vector<2x32xf32>
    %202 = math.tanh %201 : vector<2x32xf32>
    %203 = arith.mulf %198, %202 : vector<2x32xf32>
    %204 = vector.extract_strided_slice %177 {offsets = [0, 1, 0], sizes = [2, 1, 128], strides = [1, 1, 1]} : vector<2x3x128xf32> to vector<2x1x128xf32>
    %205 = vector.shape_cast %204 : vector<2x1x128xf32> to vector<2x128xf32>
    %206 = vector.extract_strided_slice %177 {offsets = [0, 1, 0], sizes = [2, 1, 128], strides = [1, 1, 1]} : vector<2x3x128xf32> to vector<2x1x128xf32>
    %207 = vector.shape_cast %206 : vector<2x1x128xf32> to vector<2x128xf32>
    %208 = arith.select %19, %205, %207 : vector<2x128xi1>, vector<2x128xf32>
    %cst_61 = arith.constant dense<0.000000e+00> : vector<2x128xf32>
    %209 = tpu.matmul %203, %178, %cst_61 {dimension_numbers = #tpu.dot_dimension_numbers<[1], [0], [0], [1], [0, 0, 1, 1], [], []>} : vector<2x32xf32>, vector<32x128xf32>, vector<2x128xf32> -> vector<2x128xf32>
    %210 = arith.addf %208, %209 : vector<2x128xf32>
    %211 = math.tanh %210 : vector<2x128xf32>
    %212 = arith.negf %210 : vector<2x128xf32>
    %213 = math.exp %212 : vector<2x128xf32>
    %cst_62 = arith.constant 1.000000e+00 : f32
    %214 = vector.broadcast %cst_62 : f32 to vector<2x128xf32>
    %215 = arith.addf %214, %213 : vector<2x128xf32>
    %216 = arith.divf %214, %215 : vector<2x128xf32>
    %217 = arith.select %24, %211, %216 : vector<2x128xi1>, vector<2x128xf32>
    %218 = vector.extract_strided_slice %217 {offsets = [0, 0], sizes = [2, 32], strides = [1, 1]} : vector<2x128xf32> to vector<2x32xf32>
    %219 = vector.extract_strided_slice %217 {offsets = [0, 32], sizes = [2, 32], strides = [1, 1]} : vector<2x128xf32> to vector<2x32xf32>
    %220 = vector.extract_strided_slice %217 {offsets = [0, 64], sizes = [2, 32], strides = [1, 1]} : vector<2x128xf32> to vector<2x32xf32>
    %221 = vector.extract_strided_slice %217 {offsets = [0, 96], sizes = [2, 32], strides = [1, 1]} : vector<2x128xf32> to vector<2x32xf32>
    %222 = arith.mulf %219, %201 : vector<2x32xf32>
    %223 = arith.mulf %218, %220 : vector<2x32xf32>
    %224 = arith.addf %222, %223 : vector<2x32xf32>
    %225 = math.tanh %224 : vector<2x32xf32>
    %226 = arith.mulf %221, %225 : vector<2x32xf32>
    %227 = vector.extract_strided_slice %177 {offsets = [0, 2, 0], sizes = [2, 1, 128], strides = [1, 1, 1]} : vector<2x3x128xf32> to vector<2x1x128xf32>
    %228 = vector.shape_cast %227 : vector<2x1x128xf32> to vector<2x128xf32>
    %229 = vector.extract_strided_slice %177 {offsets = [0, 0, 0], sizes = [2, 1, 128], strides = [1, 1, 1]} : vector<2x3x128xf32> to vector<2x1x128xf32>
    %230 = vector.shape_cast %229 : vector<2x1x128xf32> to vector<2x128xf32>
    %231 = arith.select %19, %228, %230 : vector<2x128xi1>, vector<2x128xf32>
    %cst_63 = arith.constant dense<0.000000e+00> : vector<2x128xf32>
    %232 = tpu.matmul %226, %178, %cst_63 {dimension_numbers = #tpu.dot_dimension_numbers<[1], [0], [0], [1], [0, 0, 1, 1], [], []>} : vector<2x32xf32>, vector<32x128xf32>, vector<2x128xf32> -> vector<2x128xf32>
    %233 = arith.addf %231, %232 : vector<2x128xf32>
    %234 = math.tanh %233 : vector<2x128xf32>
    %235 = arith.negf %233 : vector<2x128xf32>
    %236 = math.exp %235 : vector<2x128xf32>
    %cst_64 = arith.constant 1.000000e+00 : f32
    %237 = vector.broadcast %cst_64 : f32 to vector<2x128xf32>
    %238 = arith.addf %237, %236 : vector<2x128xf32>
    %239 = arith.divf %237, %238 : vector<2x128xf32>
    %240 = arith.select %24, %234, %239 : vector<2x128xi1>, vector<2x128xf32>
    %241 = vector.extract_strided_slice %240 {offsets = [0, 0], sizes = [2, 32], strides = [1, 1]} : vector<2x128xf32> to vector<2x32xf32>
    %242 = vector.extract_strided_slice %240 {offsets = [0, 32], sizes = [2, 32], strides = [1, 1]} : vector<2x128xf32> to vector<2x32xf32>
    %243 = vector.extract_strided_slice %240 {offsets = [0, 64], sizes = [2, 32], strides = [1, 1]} : vector<2x128xf32> to vector<2x32xf32>
    %244 = vector.extract_strided_slice %240 {offsets = [0, 96], sizes = [2, 32], strides = [1, 1]} : vector<2x128xf32> to vector<2x32xf32>
    %245 = arith.mulf %242, %224 : vector<2x32xf32>
    %246 = arith.mulf %241, %243 : vector<2x32xf32>
    %247 = arith.addf %245, %246 : vector<2x32xf32>
    %248 = math.tanh %247 : vector<2x32xf32>
    %249 = arith.mulf %244, %248 : vector<2x32xf32>
    %250 = arith.select %27, %249, %203 : vector<2x32xi1>, vector<2x32xf32>
    %c0_65 = arith.constant 0 : index
    %c0_66 = arith.constant 0 : index
    %251 = vector.load %arg15[%c0_65, %c0_66] : memref<2x32xf32, #tpu.memory_space<vmem>>, vector<2x32xf32>
    tpu.vector_store %arg15[%c0_65, %c0_66], %250 {strides = array<i32>} : memref<2x32xf32, #tpu.memory_space<vmem>>, vector<2x32xf32>,
    return
  }
}

module attributes {stable_mosaic.version = 11 : i64} {
  func.func @_alstm_track_kernel(%arg0: memref<2x10x36xf32, #tpu.memory_space<vmem>>, %arg1: memref<36x108xf32, #tpu.memory_space<vmem>>, %arg2: memref<1x108xf32, #tpu.memory_space<vmem>>, %arg3: memref<36x36xf32, #tpu.memory_space<vmem>>, %arg4: memref<1x36xf32, #tpu.memory_space<vmem>>, %arg5: memref<36x128xf32, #tpu.memory_space<vmem>>, %arg6: memref<1x128xf32, #tpu.memory_space<vmem>>, %arg7: memref<32x128xf32, #tpu.memory_space<vmem>>, %arg8: memref<68x204xf32, #tpu.memory_space<vmem>>, %arg9: memref<1x204xf32, #tpu.memory_space<vmem>>, %arg10: memref<68x68xf32, #tpu.memory_space<vmem>>, %arg11: memref<1x68xf32, #tpu.memory_space<vmem>>, %arg12: memref<68x128xf32, #tpu.memory_space<vmem>>, %arg13: memref<1x128xf32, #tpu.memory_space<vmem>>, %arg14: memref<32x128xf32, #tpu.memory_space<vmem>>, %arg15: memref<2x32xf32, #tpu.memory_space<vmem>>) attributes {dimension_semantics = [], scalar_prefetch = 0 : i64, scratch_operands = 0 : i64, tpu.core_type = #tpu.core_type<tc>} {
    %c0 = arith.constant 0 : index
    %c0_0 = arith.constant 0 : index
    %c0_1 = arith.constant 0 : index
    %0 = vector.load %arg0[%c0, %c0_0, %c0_1] : memref<2x10x36xf32, #tpu.memory_space<vmem>>, vector<2x10x36xf32>
    %1 = tpu.iota {dimensions = array<i32: 1>} : vector<2x128xi32>
    %c32_i32 = arith.constant 32 : i32
    %c0_i32 = arith.constant 0 : i32
    %2 = arith.cmpi eq, %c32_i32, %c0_i32 : i32
    %c1_i32 = arith.constant 1 : i32
    %3 = arith.select %2, %c1_i32, %c32_i32 : i32
    %4 = vector.broadcast %3 : i32 to vector<2x128xi32>
    %5 = arith.remsi %1, %4 : vector<2x128xi32>
    %c0_i32_2 = arith.constant 0 : i32
    %6 = vector.broadcast %c0_i32_2 : i32 to vector<2x128xi32>
    %7 = arith.cmpi ne, %5, %6 : vector<2x128xi32>
    %c0_i32_3 = arith.constant 0 : i32
    %8 = vector.broadcast %c0_i32_3 : i32 to vector<2x128xi32>
    %9 = arith.cmpi slt, %5, %8 : vector<2x128xi32>
    %c0_i32_4 = arith.constant 0 : i32
    %10 = arith.cmpi slt, %3, %c0_i32_4 : i32
    %11 = vector.broadcast %10 : i1 to vector<2x128xi1>
    %12 = vector.broadcast %11 : vector<2x128xi1> to vector<2x128xi1>
    %13 = arith.xori %9, %12 : vector<2x128xi1>
    %14 = arith.andi %13, %7 : vector<2x128xi1>
    %15 = vector.broadcast %3 : i32 to vector<2x128xi32>
    %16 = arith.addi %5, %15 : vector<2x128xi32>
    %17 = arith.select %14, %16, %5 : vector<2x128xi1>, vector<2x128xi32>
    %c16_i32 = arith.constant 16 : i32
    %18 = vector.broadcast %c16_i32 : i32 to vector<2x128xi32>
    %19 = arith.cmpi slt, %17, %18 : vector<2x128xi32>
    %c64_i32 = arith.constant 64 : i32
    %20 = vector.broadcast %c64_i32 : i32 to vector<2x128xi32>
    %21 = arith.cmpi sge, %1, %20 : vector<2x128xi32>
    %c96_i32 = arith.constant 96 : i32
    %22 = vector.broadcast %c96_i32 : i32 to vector<2x128xi32>
    %23 = arith.cmpi slt, %1, %22 : vector<2x128xi32>
    %24 = arith.andi %21, %23 : vector<2x128xi1>
    %25 = tpu.iota {dimensions = array<i32: 1>} : vector<2x32xi32>
    %c16_i32_5 = arith.constant 16 : i32
    %26 = vector.broadcast %c16_i32_5 : i32 to vector<2x32xi32>
    %27 = arith.cmpi slt, %25, %26 : vector<2x32xi32>
    %28 = vector.shape_cast %0 : vector<2x10x36xf32> to vector<20x36xf32>
    %c0_6 = arith.constant 0 : index
    %c0_7 = arith.constant 0 : index
    %29 = vector.load %arg1[%c0_6, %c0_7] : memref<36x108xf32, #tpu.memory_space<vmem>>, vector<36x108xf32>
    %c0_8 = arith.constant 0 : index
    %c0_9 = arith.constant 0 : index
    %30 = vector.load %arg2[%c0_8, %c0_9] : memref<1x108xf32, #tpu.memory_space<vmem>>, vector<1x108xf32>
    %c0_10 = arith.constant 0 : index
    %c0_11 = arith.constant 0 : index
    %31 = vector.load %arg3[%c0_10, %c0_11] : memref<36x36xf32, #tpu.memory_space<vmem>>, vector<36x36xf32>
    %c0_12 = arith.constant 0 : index
    %c0_13 = arith.constant 0 : index
    %32 = vector.load %arg4[%c0_12, %c0_13] : memref<1x36xf32, #tpu.memory_space<vmem>>, vector<1x36xf32>
    %cst = arith.constant dense<0.000000e+00> : vector<20x108xf32>
    %33 = tpu.matmul %28, %29, %cst {dimension_numbers = #tpu.dot_dimension_numbers<[1], [0], [0], [1], [0, 0, 1, 1], [], []>} : vector<20x36xf32>, vector<36x108xf32>, vector<20x108xf32> -> vector<20x108xf32>
    %34 = vector.broadcast %30 : vector<1x108xf32> to vector<20x108xf32>
    %35 = arith.addf %33, %34 : vector<20x108xf32>
    %36 = vector.shape_cast %35 : vector<20x108xf32> to vector<2x10x108xf32>
    %37 = vector.extract_strided_slice %36 {offsets = [0, 0, 0], sizes = [2, 10, 36], strides = [1, 1, 1]} : vector<2x10x108xf32> to vector<2x10x36xf32>
    %cst_14 = arith.constant 0.166666672 : f32
    %38 = vector.broadcast %cst_14 : f32 to vector<2x10x36xf32>
    %39 = arith.mulf %37, %38 : vector<2x10x36xf32>
    %40 = vector.extract_strided_slice %36 {offsets = [0, 0, 36], sizes = [2, 10, 36], strides = [1, 1, 1]} : vector<2x10x108xf32> to vector<2x10x36xf32>
    %41 = vector.extract_strided_slice %36 {offsets = [0, 0, 72], sizes = [2, 10, 36], strides = [1, 1, 1]} : vector<2x10x108xf32> to vector<2x10x36xf32>
    "tpu.trace_start"() <{level = 10 : i32, message = "bqd,bkd->bqk"}> : () -> ()
    %cst_15 = arith.constant dense<0.000000e+00> : vector<2x10x10xf32>
    %42 = tpu.matmul %39, %40, %cst_15 {dimension_numbers = #tpu.dot_dimension_numbers<[2], [2], [1], [1], [0, 0, 0, 1, 1, 1], [0], [0]>} : vector<2x10x36xf32>, vector<2x10x36xf32>, vector<2x10x10xf32> -> vector<2x10x10xf32>
    "tpu.trace_stop"() : () -> ()
    %cst_16 = arith.constant dense<0xFF800000> : vector<2x10xf32>
    %43 = vector.multi_reduction <maximumf>, %42, %cst_16 [2] : vector<2x10x10xf32> to vector<2x10xf32>
    %44 = vector.shape_cast %43 : vector<2x10xf32> to vector<2x10x1xf32>
    %45 = vector.broadcast %44 : vector<2x10x1xf32> to vector<2x10x10xf32>
    %46 = arith.subf %42, %45 : vector<2x10x10xf32>
    %47 = math.exp %46 : vector<2x10x10xf32>
    %cst_17 = arith.constant dense<0.000000e+00> : vector<2x10xf32>
    %48 = vector.multi_reduction <add>, %47, %cst_17 [2] : vector<2x10x10xf32> to vector<2x10xf32>
    %49 = vector.shape_cast %48 : vector<2x10xf32> to vector<2x10x1xf32>
    %50 = vector.broadcast %49 : vector<2x10x1xf32> to vector<2x10x10xf32>
    %51 = arith.divf %47, %50 : vector<2x10x10xf32>
    "tpu.trace_start"() <{level = 10 : i32, message = "bqk,bkd->bqd"}> : () -> ()
    %cst_18 = arith.constant dense<0.000000e+00> : vector<2x10x36xf32>
    %52 = tpu.matmul %51, %41, %cst_18 {dimension_numbers = #tpu.dot_dimension_numbers<[2], [1], [1], [2], [0, 0, 0, 1, 1, 2], [0], [0]>} : vector<2x10x10xf32>, vector<2x10x36xf32>, vector<2x10x36xf32> -> vector<2x10x36xf32>
    "tpu.trace_stop"() : () -> ()
    %53 = vector.shape_cast %52 : vector<2x10x36xf32> to vector<20x36xf32>
    %cst_19 = arith.constant dense<0.000000e+00> : vector<20x36xf32>
    %54 = tpu.matmul %53, %31, %cst_19 {dimension_numbers = #tpu.dot_dimension_numbers<[1], [0], [0], [1], [0, 0, 1, 1], [], []>} : vector<20x36xf32>, vector<36x36xf32>, vector<20x36xf32> -> vector<20x36xf32>
    %55 = vector.broadcast %32 : vector<1x36xf32> to vector<20x36xf32>
    %56 = arith.addf %54, %55 : vector<20x36xf32>
    %c0_20 = arith.constant 0 : index
    %c0_21 = arith.constant 0 : index
    %57 = vector.load %arg5[%c0_20, %c0_21] : memref<36x128xf32, #tpu.memory_space<vmem>>, vector<36x128xf32>
    %cst_22 = arith.constant dense<0.000000e+00> : vector<20x128xf32>
    %58 = tpu.matmul %56, %57, %cst_22 {dimension_numbers = #tpu.dot_dimension_numbers<[1], [0], [0], [1], [0, 0, 1, 1], [], []>} : vector<20x36xf32>, vector<36x128xf32>, vector<20x128xf32> -> vector<20x128xf32>
    %c0_23 = arith.constant 0 : index
    %c0_24 = arith.constant 0 : index
    %59 = vector.load %arg6[%c0_23, %c0_24] : memref<1x128xf32, #tpu.memory_space<vmem>>, vector<1x128xf32>
    %60 = vector.broadcast %59 : vector<1x128xf32> to vector<20x128xf32>
    %61 = arith.addf %58, %60 : vector<20x128xf32>
    %62 = vector.shape_cast %61 : vector<20x128xf32> to vector<2x10x128xf32>
    %c0_25 = arith.constant 0 : index
    %c0_26 = arith.constant 0 : index
    %63 = vector.load %arg7[%c0_25, %c0_26] : memref<32x128xf32, #tpu.memory_space<vmem>>, vector<32x128xf32>
    %cst_27 = arith.constant 0.000000e+00 : f32
    %64 = vector.broadcast %cst_27 : f32 to vector<2x32xf32>
    %cst_28 = arith.constant 0.000000e+00 : f32
    %65 = vector.broadcast %cst_28 : f32 to vector<2x32xf32>
    %66 = vector.extract_strided_slice %62 {offsets = [0, 0, 0], sizes = [2, 1, 128], strides = [1, 1, 1]} : vector<2x10x128xf32> to vector<2x1x128xf32>
    %67 = vector.shape_cast %66 : vector<2x1x128xf32> to vector<2x128xf32>
    %68 = vector.extract_strided_slice %62 {offsets = [0, 9, 0], sizes = [2, 1, 128], strides = [1, 1, 1]} : vector<2x10x128xf32> to vector<2x1x128xf32>
    %69 = vector.shape_cast %68 : vector<2x1x128xf32> to vector<2x128xf32>
    %70 = arith.select %19, %67, %69 : vector<2x128xi1>, vector<2x128xf32>
    %cst_29 = arith.constant dense<0.000000e+00> : vector<2x128xf32>
    %71 = tpu.matmul %64, %63, %cst_29 {dimension_numbers = #tpu.dot_dimension_numbers<[1], [0], [0], [1], [0, 0, 1, 1], [], []>} : vector<2x32xf32>, vector<32x128xf32>, vector<2x128xf32> -> vector<2x128xf32>
    %72 = arith.addf %70, %71 : vector<2x128xf32>
    %73 = math.tanh %72 : vector<2x128xf32>
    %74 = arith.negf %72 : vector<2x128xf32>
    %75 = math.exp %74 : vector<2x128xf32>
    %cst_30 = arith.constant 1.000000e+00 : f32
    %76 = vector.broadcast %cst_30 : f32 to vector<2x128xf32>
    %77 = arith.addf %76, %75 : vector<2x128xf32>
    %78 = arith.divf %76, %77 : vector<2x128xf32>
    %79 = arith.select %24, %73, %78 : vector<2x128xi1>, vector<2x128xf32>
    %80 = vector.extract_strided_slice %79 {offsets = [0, 0], sizes = [2, 32], strides = [1, 1]} : vector<2x128xf32> to vector<2x32xf32>
    %81 = vector.extract_strided_slice %79 {offsets = [0, 32], sizes = [2, 32], strides = [1, 1]} : vector<2x128xf32> to vector<2x32xf32>
    %82 = vector.extract_strided_slice %79 {offsets = [0, 64], sizes = [2, 32], strides = [1, 1]} : vector<2x128xf32> to vector<2x32xf32>
    %83 = vector.extract_strided_slice %79 {offsets = [0, 96], sizes = [2, 32], strides = [1, 1]} : vector<2x128xf32> to vector<2x32xf32>
    %84 = arith.mulf %81, %65 : vector<2x32xf32>
    %85 = arith.mulf %80, %82 : vector<2x32xf32>
    %86 = arith.addf %84, %85 : vector<2x32xf32>
    %87 = math.tanh %86 : vector<2x32xf32>
    %88 = arith.mulf %83, %87 : vector<2x32xf32>
    %89 = vector.extract_strided_slice %62 {offsets = [0, 1, 0], sizes = [2, 1, 128], strides = [1, 1, 1]} : vector<2x10x128xf32> to vector<2x1x128xf32>
    %90 = vector.shape_cast %89 : vector<2x1x128xf32> to vector<2x128xf32>
    %91 = vector.extract_strided_slice %62 {offsets = [0, 8, 0], sizes = [2, 1, 128], strides = [1, 1, 1]} : vector<2x10x128xf32> to vector<2x1x128xf32>
    %92 = vector.shape_cast %91 : vector<2x1x128xf32> to vector<2x128xf32>
    %93 = arith.select %19, %90, %92 : vector<2x128xi1>, vector<2x128xf32>
    %cst_31 = arith.constant dense<0.000000e+00> : vector<2x128xf32>
    %94 = tpu.matmul %88, %63, %cst_31 {dimension_numbers = #tpu.dot_dimension_numbers<[1], [0], [0], [1], [0, 0, 1, 1], [], []>} : vector<2x32xf32>, vector<32x128xf32>, vector<2x128xf32> -> vector<2x128xf32>
    %95 = arith.addf %93, %94 : vector<2x128xf32>
    %96 = math.tanh %95 : vector<2x128xf32>
    %97 = arith.negf %95 : vector<2x128xf32>
    %98 = math.exp %97 : vector<2x128xf32>
    %cst_32 = arith.constant 1.000000e+00 : f32
    %99 = vector.broadcast %cst_32 : f32 to vector<2x128xf32>
    %100 = arith.addf %99, %98 : vector<2x128xf32>
    %101 = arith.divf %99, %100 : vector<2x128xf32>
    %102 = arith.select %24, %96, %101 : vector<2x128xi1>, vector<2x128xf32>
    %103 = vector.extract_strided_slice %102 {offsets = [0, 0], sizes = [2, 32], strides = [1, 1]} : vector<2x128xf32> to vector<2x32xf32>
    %104 = vector.extract_strided_slice %102 {offsets = [0, 32], sizes = [2, 32], strides = [1, 1]} : vector<2x128xf32> to vector<2x32xf32>
    %105 = vector.extract_strided_slice %102 {offsets = [0, 64], sizes = [2, 32], strides = [1, 1]} : vector<2x128xf32> to vector<2x32xf32>
    %106 = vector.extract_strided_slice %102 {offsets = [0, 96], sizes = [2, 32], strides = [1, 1]} : vector<2x128xf32> to vector<2x32xf32>
    %107 = arith.mulf %104, %86 : vector<2x32xf32>
    %108 = arith.mulf %103, %105 : vector<2x32xf32>
    %109 = arith.addf %107, %108 : vector<2x32xf32>
    %110 = math.tanh %109 : vector<2x32xf32>
    %111 = arith.mulf %106, %110 : vector<2x32xf32>
    %112 = vector.extract_strided_slice %62 {offsets = [0, 2, 0], sizes = [2, 1, 128], strides = [1, 1, 1]} : vector<2x10x128xf32> to vector<2x1x128xf32>
    %113 = vector.shape_cast %112 : vector<2x1x128xf32> to vector<2x128xf32>
    %114 = vector.extract_strided_slice %62 {offsets = [0, 7, 0], sizes = [2, 1, 128], strides = [1, 1, 1]} : vector<2x10x128xf32> to vector<2x1x128xf32>
    %115 = vector.shape_cast %114 : vector<2x1x128xf32> to vector<2x128xf32>
    %116 = arith.select %19, %113, %115 : vector<2x128xi1>, vector<2x128xf32>
    %cst_33 = arith.constant dense<0.000000e+00> : vector<2x128xf32>
    %117 = tpu.matmul %111, %63, %cst_33 {dimension_numbers = #tpu.dot_dimension_numbers<[1], [0], [0], [1], [0, 0, 1, 1], [], []>} : vector<2x32xf32>, vector<32x128xf32>, vector<2x128xf32> -> vector<2x128xf32>
    %118 = arith.addf %116, %117 : vector<2x128xf32>
    %119 = math.tanh %118 : vector<2x128xf32>
    %120 = arith.negf %118 : vector<2x128xf32>
    %121 = math.exp %120 : vector<2x128xf32>
    %cst_34 = arith.constant 1.000000e+00 : f32
    %122 = vector.broadcast %cst_34 : f32 to vector<2x128xf32>
    %123 = arith.addf %122, %121 : vector<2x128xf32>
    %124 = arith.divf %122, %123 : vector<2x128xf32>
    %125 = arith.select %24, %119, %124 : vector<2x128xi1>, vector<2x128xf32>
    %126 = vector.extract_strided_slice %125 {offsets = [0, 0], sizes = [2, 32], strides = [1, 1]} : vector<2x128xf32> to vector<2x32xf32>
    %127 = vector.extract_strided_slice %125 {offsets = [0, 32], sizes = [2, 32], strides = [1, 1]} : vector<2x128xf32> to vector<2x32xf32>
    %128 = vector.extract_strided_slice %125 {offsets = [0, 64], sizes = [2, 32], strides = [1, 1]} : vector<2x128xf32> to vector<2x32xf32>
    %129 = vector.extract_strided_slice %125 {offsets = [0, 96], sizes = [2, 32], strides = [1, 1]} : vector<2x128xf32> to vector<2x32xf32>
    %130 = arith.mulf %127, %109 : vector<2x32xf32>
    %131 = arith.mulf %126, %128 : vector<2x32xf32>
    %132 = arith.addf %130, %131 : vector<2x32xf32>
    %133 = math.tanh %132 : vector<2x32xf32>
    %134 = arith.mulf %129, %133 : vector<2x32xf32>
    %135 = vector.extract_strided_slice %62 {offsets = [0, 3, 0], sizes = [2, 1, 128], strides = [1, 1, 1]} : vector<2x10x128xf32> to vector<2x1x128xf32>
    %136 = vector.shape_cast %135 : vector<2x1x128xf32> to vector<2x128xf32>
    %137 = vector.extract_strided_slice %62 {offsets = [0, 6, 0], sizes = [2, 1, 128], strides = [1, 1, 1]} : vector<2x10x128xf32> to vector<2x1x128xf32>
    %138 = vector.shape_cast %137 : vector<2x1x128xf32> to vector<2x128xf32>
    %139 = arith.select %19, %136, %138 : vector<2x128xi1>, vector<2x128xf32>
    %cst_35 = arith.constant dense<0.000000e+00> : vector<2x128xf32>
    %140 = tpu.matmul %134, %63, %cst_35 {dimension_numbers = #tpu.dot_dimension_numbers<[1], [0], [0], [1], [0, 0, 1, 1], [], []>} : vector<2x32xf32>, vector<32x128xf32>, vector<2x128xf32> -> vector<2x128xf32>
    %141 = arith.addf %139, %140 : vector<2x128xf32>
    %142 = math.tanh %141 : vector<2x128xf32>
    %143 = arith.negf %141 : vector<2x128xf32>
    %144 = math.exp %143 : vector<2x128xf32>
    %cst_36 = arith.constant 1.000000e+00 : f32
    %145 = vector.broadcast %cst_36 : f32 to vector<2x128xf32>
    %146 = arith.addf %145, %144 : vector<2x128xf32>
    %147 = arith.divf %145, %146 : vector<2x128xf32>
    %148 = arith.select %24, %142, %147 : vector<2x128xi1>, vector<2x128xf32>
    %149 = vector.extract_strided_slice %148 {offsets = [0, 0], sizes = [2, 32], strides = [1, 1]} : vector<2x128xf32> to vector<2x32xf32>
    %150 = vector.extract_strided_slice %148 {offsets = [0, 32], sizes = [2, 32], strides = [1, 1]} : vector<2x128xf32> to vector<2x32xf32>
    %151 = vector.extract_strided_slice %148 {offsets = [0, 64], sizes = [2, 32], strides = [1, 1]} : vector<2x128xf32> to vector<2x32xf32>
    %152 = vector.extract_strided_slice %148 {offsets = [0, 96], sizes = [2, 32], strides = [1, 1]} : vector<2x128xf32> to vector<2x32xf32>
    %153 = arith.mulf %150, %132 : vector<2x32xf32>
    %154 = arith.mulf %149, %151 : vector<2x32xf32>
    %155 = arith.addf %153, %154 : vector<2x32xf32>
    %156 = math.tanh %155 : vector<2x32xf32>
    %157 = arith.mulf %152, %156 : vector<2x32xf32>
    %158 = vector.extract_strided_slice %62 {offsets = [0, 4, 0], sizes = [2, 1, 128], strides = [1, 1, 1]} : vector<2x10x128xf32> to vector<2x1x128xf32>
    %159 = vector.shape_cast %158 : vector<2x1x128xf32> to vector<2x128xf32>
    %160 = vector.extract_strided_slice %62 {offsets = [0, 5, 0], sizes = [2, 1, 128], strides = [1, 1, 1]} : vector<2x10x128xf32> to vector<2x1x128xf32>
    %161 = vector.shape_cast %160 : vector<2x1x128xf32> to vector<2x128xf32>
    %162 = arith.select %19, %159, %161 : vector<2x128xi1>, vector<2x128xf32>
    %cst_37 = arith.constant dense<0.000000e+00> : vector<2x128xf32>
    %163 = tpu.matmul %157, %63, %cst_37 {dimension_numbers = #tpu.dot_dimension_numbers<[1], [0], [0], [1], [0, 0, 1, 1], [], []>} : vector<2x32xf32>, vector<32x128xf32>, vector<2x128xf32> -> vector<2x128xf32>
    %164 = arith.addf %162, %163 : vector<2x128xf32>
    %165 = math.tanh %164 : vector<2x128xf32>
    %166 = arith.negf %164 : vector<2x128xf32>
    %167 = math.exp %166 : vector<2x128xf32>
    %cst_38 = arith.constant 1.000000e+00 : f32
    %168 = vector.broadcast %cst_38 : f32 to vector<2x128xf32>
    %169 = arith.addf %168, %167 : vector<2x128xf32>
    %170 = arith.divf %168, %169 : vector<2x128xf32>
    %171 = arith.select %24, %165, %170 : vector<2x128xi1>, vector<2x128xf32>
    %172 = vector.extract_strided_slice %171 {offsets = [0, 0], sizes = [2, 32], strides = [1, 1]} : vector<2x128xf32> to vector<2x32xf32>
    %173 = vector.extract_strided_slice %171 {offsets = [0, 32], sizes = [2, 32], strides = [1, 1]} : vector<2x128xf32> to vector<2x32xf32>
    %174 = vector.extract_strided_slice %171 {offsets = [0, 64], sizes = [2, 32], strides = [1, 1]} : vector<2x128xf32> to vector<2x32xf32>
    %175 = vector.extract_strided_slice %171 {offsets = [0, 96], sizes = [2, 32], strides = [1, 1]} : vector<2x128xf32> to vector<2x32xf32>
    %176 = arith.mulf %173, %155 : vector<2x32xf32>
    %177 = arith.mulf %172, %174 : vector<2x32xf32>
    %178 = arith.addf %176, %177 : vector<2x32xf32>
    %179 = math.tanh %178 : vector<2x32xf32>
    %180 = arith.mulf %175, %179 : vector<2x32xf32>
    %181 = vector.extract_strided_slice %62 {offsets = [0, 5, 0], sizes = [2, 1, 128], strides = [1, 1, 1]} : vector<2x10x128xf32> to vector<2x1x128xf32>
    %182 = vector.shape_cast %181 : vector<2x1x128xf32> to vector<2x128xf32>
    %183 = vector.extract_strided_slice %62 {offsets = [0, 4, 0], sizes = [2, 1, 128], strides = [1, 1, 1]} : vector<2x10x128xf32> to vector<2x1x128xf32>
    %184 = vector.shape_cast %183 : vector<2x1x128xf32> to vector<2x128xf32>
    %185 = arith.select %19, %182, %184 : vector<2x128xi1>, vector<2x128xf32>
    %cst_39 = arith.constant dense<0.000000e+00> : vector<2x128xf32>
    %186 = tpu.matmul %180, %63, %cst_39 {dimension_numbers = #tpu.dot_dimension_numbers<[1], [0], [0], [1], [0, 0, 1, 1], [], []>} : vector<2x32xf32>, vector<32x128xf32>, vector<2x128xf32> -> vector<2x128xf32>
    %187 = arith.addf %185, %186 : vector<2x128xf32>
    %188 = math.tanh %187 : vector<2x128xf32>
    %189 = arith.negf %187 : vector<2x128xf32>
    %190 = math.exp %189 : vector<2x128xf32>
    %cst_40 = arith.constant 1.000000e+00 : f32
    %191 = vector.broadcast %cst_40 : f32 to vector<2x128xf32>
    %192 = arith.addf %191, %190 : vector<2x128xf32>
    %193 = arith.divf %191, %192 : vector<2x128xf32>
    %194 = arith.select %24, %188, %193 : vector<2x128xi1>, vector<2x128xf32>
    %195 = vector.extract_strided_slice %194 {offsets = [0, 0], sizes = [2, 32], strides = [1, 1]} : vector<2x128xf32> to vector<2x32xf32>
    %196 = vector.extract_strided_slice %194 {offsets = [0, 32], sizes = [2, 32], strides = [1, 1]} : vector<2x128xf32> to vector<2x32xf32>
    %197 = vector.extract_strided_slice %194 {offsets = [0, 64], sizes = [2, 32], strides = [1, 1]} : vector<2x128xf32> to vector<2x32xf32>
    %198 = vector.extract_strided_slice %194 {offsets = [0, 96], sizes = [2, 32], strides = [1, 1]} : vector<2x128xf32> to vector<2x32xf32>
    %199 = arith.mulf %196, %178 : vector<2x32xf32>
    %200 = arith.mulf %195, %197 : vector<2x32xf32>
    %201 = arith.addf %199, %200 : vector<2x32xf32>
    %202 = math.tanh %201 : vector<2x32xf32>
    %203 = arith.mulf %198, %202 : vector<2x32xf32>
    %204 = vector.extract_strided_slice %62 {offsets = [0, 6, 0], sizes = [2, 1, 128], strides = [1, 1, 1]} : vector<2x10x128xf32> to vector<2x1x128xf32>
    %205 = vector.shape_cast %204 : vector<2x1x128xf32> to vector<2x128xf32>
    %206 = vector.extract_strided_slice %62 {offsets = [0, 3, 0], sizes = [2, 1, 128], strides = [1, 1, 1]} : vector<2x10x128xf32> to vector<2x1x128xf32>
    %207 = vector.shape_cast %206 : vector<2x1x128xf32> to vector<2x128xf32>
    %208 = arith.select %19, %205, %207 : vector<2x128xi1>, vector<2x128xf32>
    %cst_41 = arith.constant dense<0.000000e+00> : vector<2x128xf32>
    %209 = tpu.matmul %203, %63, %cst_41 {dimension_numbers = #tpu.dot_dimension_numbers<[1], [0], [0], [1], [0, 0, 1, 1], [], []>} : vector<2x32xf32>, vector<32x128xf32>, vector<2x128xf32> -> vector<2x128xf32>
    %210 = arith.addf %208, %209 : vector<2x128xf32>
    %211 = math.tanh %210 : vector<2x128xf32>
    %212 = arith.negf %210 : vector<2x128xf32>
    %213 = math.exp %212 : vector<2x128xf32>
    %cst_42 = arith.constant 1.000000e+00 : f32
    %214 = vector.broadcast %cst_42 : f32 to vector<2x128xf32>
    %215 = arith.addf %214, %213 : vector<2x128xf32>
    %216 = arith.divf %214, %215 : vector<2x128xf32>
    %217 = arith.select %24, %211, %216 : vector<2x128xi1>, vector<2x128xf32>
    %218 = vector.extract_strided_slice %217 {offsets = [0, 0], sizes = [2, 32], strides = [1, 1]} : vector<2x128xf32> to vector<2x32xf32>
    %219 = vector.extract_strided_slice %217 {offsets = [0, 32], sizes = [2, 32], strides = [1, 1]} : vector<2x128xf32> to vector<2x32xf32>
    %220 = vector.extract_strided_slice %217 {offsets = [0, 64], sizes = [2, 32], strides = [1, 1]} : vector<2x128xf32> to vector<2x32xf32>
    %221 = vector.extract_strided_slice %217 {offsets = [0, 96], sizes = [2, 32], strides = [1, 1]} : vector<2x128xf32> to vector<2x32xf32>
    %222 = arith.mulf %219, %201 : vector<2x32xf32>
    %223 = arith.mulf %218, %220 : vector<2x32xf32>
    %224 = arith.addf %222, %223 : vector<2x32xf32>
    %225 = math.tanh %224 : vector<2x32xf32>
    %226 = arith.mulf %221, %225 : vector<2x32xf32>
    %227 = vector.extract_strided_slice %62 {offsets = [0, 7, 0], sizes = [2, 1, 128], strides = [1, 1, 1]} : vector<2x10x128xf32> to vector<2x1x128xf32>
    %228 = vector.shape_cast %227 : vector<2x1x128xf32> to vector<2x128xf32>
    %229 = vector.extract_strided_slice %62 {offsets = [0, 2, 0], sizes = [2, 1, 128], strides = [1, 1, 1]} : vector<2x10x128xf32> to vector<2x1x128xf32>
    %230 = vector.shape_cast %229 : vector<2x1x128xf32> to vector<2x128xf32>
    %231 = arith.select %19, %228, %230 : vector<2x128xi1>, vector<2x128xf32>
    %cst_43 = arith.constant dense<0.000000e+00> : vector<2x128xf32>
    %232 = tpu.matmul %226, %63, %cst_43 {dimension_numbers = #tpu.dot_dimension_numbers<[1], [0], [0], [1], [0, 0, 1, 1], [], []>} : vector<2x32xf32>, vector<32x128xf32>, vector<2x128xf32> -> vector<2x128xf32>
    %233 = arith.addf %231, %232 : vector<2x128xf32>
    %234 = math.tanh %233 : vector<2x128xf32>
    %235 = arith.negf %233 : vector<2x128xf32>
    %236 = math.exp %235 : vector<2x128xf32>
    %cst_44 = arith.constant 1.000000e+00 : f32
    %237 = vector.broadcast %cst_44 : f32 to vector<2x128xf32>
    %238 = arith.addf %237, %236 : vector<2x128xf32>
    %239 = arith.divf %237, %238 : vector<2x128xf32>
    %240 = arith.select %24, %234, %239 : vector<2x128xi1>, vector<2x128xf32>
    %241 = vector.extract_strided_slice %240 {offsets = [0, 0], sizes = [2, 32], strides = [1, 1]} : vector<2x128xf32> to vector<2x32xf32>
    %242 = vector.extract_strided_slice %240 {offsets = [0, 32], sizes = [2, 32], strides = [1, 1]} : vector<2x128xf32> to vector<2x32xf32>
    %243 = vector.extract_strided_slice %240 {offsets = [0, 64], sizes = [2, 32], strides = [1, 1]} : vector<2x128xf32> to vector<2x32xf32>
    %244 = vector.extract_strided_slice %240 {offsets = [0, 96], sizes = [2, 32], strides = [1, 1]} : vector<2x128xf32> to vector<2x32xf32>
    %245 = arith.mulf %242, %224 : vector<2x32xf32>
    %246 = arith.mulf %241, %243 : vector<2x32xf32>
    %247 = arith.addf %245, %246 : vector<2x32xf32>
    %248 = math.tanh %247 : vector<2x32xf32>
    %249 = arith.mulf %244, %248 : vector<2x32xf32>
    %250 = vector.extract_strided_slice %62 {offsets = [0, 8, 0], sizes = [2, 1, 128], strides = [1, 1, 1]} : vector<2x10x128xf32> to vector<2x1x128xf32>
    %251 = vector.shape_cast %250 : vector<2x1x128xf32> to vector<2x128xf32>
    %252 = vector.extract_strided_slice %62 {offsets = [0, 1, 0], sizes = [2, 1, 128], strides = [1, 1, 1]} : vector<2x10x128xf32> to vector<2x1x128xf32>
    %253 = vector.shape_cast %252 : vector<2x1x128xf32> to vector<2x128xf32>
    %254 = arith.select %19, %251, %253 : vector<2x128xi1>, vector<2x128xf32>
    %cst_45 = arith.constant dense<0.000000e+00> : vector<2x128xf32>
    %255 = tpu.matmul %249, %63, %cst_45 {dimension_numbers = #tpu.dot_dimension_numbers<[1], [0], [0], [1], [0, 0, 1, 1], [], []>} : vector<2x32xf32>, vector<32x128xf32>, vector<2x128xf32> -> vector<2x128xf32>
    %256 = arith.addf %254, %255 : vector<2x128xf32>
    %257 = math.tanh %256 : vector<2x128xf32>
    %258 = arith.negf %256 : vector<2x128xf32>
    %259 = math.exp %258 : vector<2x128xf32>
    %cst_46 = arith.constant 1.000000e+00 : f32
    %260 = vector.broadcast %cst_46 : f32 to vector<2x128xf32>
    %261 = arith.addf %260, %259 : vector<2x128xf32>
    %262 = arith.divf %260, %261 : vector<2x128xf32>
    %263 = arith.select %24, %257, %262 : vector<2x128xi1>, vector<2x128xf32>
    %264 = vector.extract_strided_slice %263 {offsets = [0, 0], sizes = [2, 32], strides = [1, 1]} : vector<2x128xf32> to vector<2x32xf32>
    %265 = vector.extract_strided_slice %263 {offsets = [0, 32], sizes = [2, 32], strides = [1, 1]} : vector<2x128xf32> to vector<2x32xf32>
    %266 = vector.extract_strided_slice %263 {offsets = [0, 64], sizes = [2, 32], strides = [1, 1]} : vector<2x128xf32> to vector<2x32xf32>
    %267 = vector.extract_strided_slice %263 {offsets = [0, 96], sizes = [2, 32], strides = [1, 1]} : vector<2x128xf32> to vector<2x32xf32>
    %268 = arith.mulf %265, %247 : vector<2x32xf32>
    %269 = arith.mulf %264, %266 : vector<2x32xf32>
    %270 = arith.addf %268, %269 : vector<2x32xf32>
    %271 = math.tanh %270 : vector<2x32xf32>
    %272 = arith.mulf %267, %271 : vector<2x32xf32>
    %273 = vector.extract_strided_slice %62 {offsets = [0, 9, 0], sizes = [2, 1, 128], strides = [1, 1, 1]} : vector<2x10x128xf32> to vector<2x1x128xf32>
    %274 = vector.shape_cast %273 : vector<2x1x128xf32> to vector<2x128xf32>
    %275 = vector.extract_strided_slice %62 {offsets = [0, 0, 0], sizes = [2, 1, 128], strides = [1, 1, 1]} : vector<2x10x128xf32> to vector<2x1x128xf32>
    %276 = vector.shape_cast %275 : vector<2x1x128xf32> to vector<2x128xf32>
    %277 = arith.select %19, %274, %276 : vector<2x128xi1>, vector<2x128xf32>
    %cst_47 = arith.constant dense<0.000000e+00> : vector<2x128xf32>
    %278 = tpu.matmul %272, %63, %cst_47 {dimension_numbers = #tpu.dot_dimension_numbers<[1], [0], [0], [1], [0, 0, 1, 1], [], []>} : vector<2x32xf32>, vector<32x128xf32>, vector<2x128xf32> -> vector<2x128xf32>
    %279 = arith.addf %277, %278 : vector<2x128xf32>
    %280 = math.tanh %279 : vector<2x128xf32>
    %281 = arith.negf %279 : vector<2x128xf32>
    %282 = math.exp %281 : vector<2x128xf32>
    %cst_48 = arith.constant 1.000000e+00 : f32
    %283 = vector.broadcast %cst_48 : f32 to vector<2x128xf32>
    %284 = arith.addf %283, %282 : vector<2x128xf32>
    %285 = arith.divf %283, %284 : vector<2x128xf32>
    %286 = arith.select %24, %280, %285 : vector<2x128xi1>, vector<2x128xf32>
    %287 = vector.extract_strided_slice %286 {offsets = [0, 0], sizes = [2, 32], strides = [1, 1]} : vector<2x128xf32> to vector<2x32xf32>
    %288 = vector.extract_strided_slice %286 {offsets = [0, 32], sizes = [2, 32], strides = [1, 1]} : vector<2x128xf32> to vector<2x32xf32>
    %289 = vector.extract_strided_slice %286 {offsets = [0, 64], sizes = [2, 32], strides = [1, 1]} : vector<2x128xf32> to vector<2x32xf32>
    %290 = vector.extract_strided_slice %286 {offsets = [0, 96], sizes = [2, 32], strides = [1, 1]} : vector<2x128xf32> to vector<2x32xf32>
    %291 = arith.mulf %288, %270 : vector<2x32xf32>
    %292 = arith.mulf %287, %289 : vector<2x32xf32>
    %293 = arith.addf %291, %292 : vector<2x32xf32>
    %294 = math.tanh %293 : vector<2x32xf32>
    %295 = arith.mulf %290, %294 : vector<2x32xf32>
    %296 = arith.select %27, %88, %295 : vector<2x32xi1>, vector<2x32xf32>
    %297 = arith.select %27, %111, %272 : vector<2x32xi1>, vector<2x32xf32>
    %298 = arith.select %27, %134, %249 : vector<2x32xi1>, vector<2x32xf32>
    %299 = arith.select %27, %157, %226 : vector<2x32xi1>, vector<2x32xf32>
    %300 = arith.select %27, %180, %203 : vector<2x32xi1>, vector<2x32xf32>
    %301 = arith.select %27, %203, %180 : vector<2x32xi1>, vector<2x32xf32>
    %302 = arith.select %27, %226, %157 : vector<2x32xi1>, vector<2x32xf32>
    %303 = arith.select %27, %249, %134 : vector<2x32xi1>, vector<2x32xf32>
    %304 = arith.select %27, %272, %111 : vector<2x32xi1>, vector<2x32xf32>
    %305 = arith.select %27, %295, %88 : vector<2x32xi1>, vector<2x32xf32>
    %306 = vector.shape_cast %296 : vector<2x32xf32> to vector<2x1x32xf32>
    %307 = vector.shape_cast %297 : vector<2x32xf32> to vector<2x1x32xf32>
    %308 = vector.shape_cast %298 : vector<2x32xf32> to vector<2x1x32xf32>
    %309 = vector.shape_cast %299 : vector<2x32xf32> to vector<2x1x32xf32>
    %310 = vector.shape_cast %300 : vector<2x32xf32> to vector<2x1x32xf32>
    %311 = vector.shape_cast %301 : vector<2x32xf32> to vector<2x1x32xf32>
    %312 = vector.shape_cast %302 : vector<2x32xf32> to vector<2x1x32xf32>
    %313 = vector.shape_cast %303 : vector<2x32xf32> to vector<2x1x32xf32>
    %314 = vector.shape_cast %304 : vector<2x32xf32> to vector<2x1x32xf32>
    %315 = vector.shape_cast %305 : vector<2x32xf32> to vector<2x1x32xf32>
    %316 = tpu.concatenate %306, %307, %308, %309, %310, %311, %312, %313, %314, %315 in 1 : vector<2x1x32xf32>, vector<2x1x32xf32>, vector<2x1x32xf32>, vector<2x1x32xf32>, vector<2x1x32xf32>, vector<2x1x32xf32>, vector<2x1x32xf32>, vector<2x1x32xf32>, vector<2x1x32xf32>, vector<2x1x32xf32> -> vector<2x10x32xf32>
    %317 = tpu.concatenate %0, %316 in 2 : vector<2x10x36xf32>, vector<2x10x32xf32> -> vector<2x10x68xf32>
    %318 = vector.shape_cast %317 : vector<2x10x68xf32> to vector<20x68xf32>
    %c0_49 = arith.constant 0 : index
    %c0_50 = arith.constant 0 : index
    %319 = vector.load %arg8[%c0_49, %c0_50] : memref<68x204xf32, #tpu.memory_space<vmem>>, vector<68x204xf32>
    %c0_51 = arith.constant 0 : index
    %c0_52 = arith.constant 0 : index
    %320 = vector.load %arg9[%c0_51, %c0_52] : memref<1x204xf32, #tpu.memory_space<vmem>>, vector<1x204xf32>
    %c0_53 = arith.constant 0 : index
    %c0_54 = arith.constant 0 : index
    %321 = vector.load %arg10[%c0_53, %c0_54] : memref<68x68xf32, #tpu.memory_space<vmem>>, vector<68x68xf32>
    %c0_55 = arith.constant 0 : index
    %c0_56 = arith.constant 0 : index
    %322 = vector.load %arg11[%c0_55, %c0_56] : memref<1x68xf32, #tpu.memory_space<vmem>>, vector<1x68xf32>
    %cst_57 = arith.constant dense<0.000000e+00> : vector<20x204xf32>
    %323 = tpu.matmul %318, %319, %cst_57 {dimension_numbers = #tpu.dot_dimension_numbers<[1], [0], [0], [1], [0, 0, 1, 1], [], []>} : vector<20x68xf32>, vector<68x204xf32>, vector<20x204xf32> -> vector<20x204xf32>
    %324 = vector.broadcast %320 : vector<1x204xf32> to vector<20x204xf32>
    %325 = arith.addf %323, %324 : vector<20x204xf32>
    %326 = vector.shape_cast %325 : vector<20x204xf32> to vector<2x10x204xf32>
    %327 = vector.extract_strided_slice %326 {offsets = [0, 0, 0], sizes = [2, 10, 68], strides = [1, 1, 1]} : vector<2x10x204xf32> to vector<2x10x68xf32>
    %cst_58 = arith.constant 0.12126781 : f32
    %328 = vector.broadcast %cst_58 : f32 to vector<2x10x68xf32>
    %329 = arith.mulf %327, %328 : vector<2x10x68xf32>
    %330 = vector.extract_strided_slice %326 {offsets = [0, 0, 68], sizes = [2, 10, 68], strides = [1, 1, 1]} : vector<2x10x204xf32> to vector<2x10x68xf32>
    %331 = vector.extract_strided_slice %326 {offsets = [0, 0, 136], sizes = [2, 10, 68], strides = [1, 1, 1]} : vector<2x10x204xf32> to vector<2x10x68xf32>
    "tpu.trace_start"() <{level = 10 : i32, message = "bqd,bkd->bqk"}> : () -> ()
    %cst_59 = arith.constant dense<0.000000e+00> : vector<2x10x10xf32>
    %332 = tpu.matmul %329, %330, %cst_59 {dimension_numbers = #tpu.dot_dimension_numbers<[2], [2], [1], [1], [0, 0, 0, 1, 1, 1], [0], [0]>} : vector<2x10x68xf32>, vector<2x10x68xf32>, vector<2x10x10xf32> -> vector<2x10x10xf32>
    "tpu.trace_stop"() : () -> ()
    %cst_60 = arith.constant dense<0xFF800000> : vector<2x10xf32>
    %333 = vector.multi_reduction <maximumf>, %332, %cst_60 [2] : vector<2x10x10xf32> to vector<2x10xf32>
    %334 = vector.shape_cast %333 : vector<2x10xf32> to vector<2x10x1xf32>
    %335 = vector.broadcast %334 : vector<2x10x1xf32> to vector<2x10x10xf32>
    %336 = arith.subf %332, %335 : vector<2x10x10xf32>
    %337 = math.exp %336 : vector<2x10x10xf32>
    %cst_61 = arith.constant dense<0.000000e+00> : vector<2x10xf32>
    %338 = vector.multi_reduction <add>, %337, %cst_61 [2] : vector<2x10x10xf32> to vector<2x10xf32>
    %339 = vector.shape_cast %338 : vector<2x10xf32> to vector<2x10x1xf32>
    %340 = vector.broadcast %339 : vector<2x10x1xf32> to vector<2x10x10xf32>
    %341 = arith.divf %337, %340 : vector<2x10x10xf32>
    "tpu.trace_start"() <{level = 10 : i32, message = "bqk,bkd->bqd"}> : () -> ()
    %cst_62 = arith.constant dense<0.000000e+00> : vector<2x10x68xf32>
    %342 = tpu.matmul %341, %331, %cst_62 {dimension_numbers = #tpu.dot_dimension_numbers<[2], [1], [1], [2], [0, 0, 0, 1, 1, 2], [0], [0]>} : vector<2x10x10xf32>, vector<2x10x68xf32>, vector<2x10x68xf32> -> vector<2x10x68xf32>
    "tpu.trace_stop"() : () -> ()
    %343 = vector.shape_cast %342 : vector<2x10x68xf32> to vector<20x68xf32>
    %cst_63 = arith.constant dense<0.000000e+00> : vector<20x68xf32>
    %344 = tpu.matmul %343, %321, %cst_63 {dimension_numbers = #tpu.dot_dimension_numbers<[1], [0], [0], [1], [0, 0, 1, 1], [], []>} : vector<20x68xf32>, vector<68x68xf32>, vector<20x68xf32> -> vector<20x68xf32>
    %345 = vector.broadcast %322 : vector<1x68xf32> to vector<20x68xf32>
    %346 = arith.addf %344, %345 : vector<20x68xf32>
    %c0_64 = arith.constant 0 : index
    %c0_65 = arith.constant 0 : index
    %347 = vector.load %arg12[%c0_64, %c0_65] : memref<68x128xf32, #tpu.memory_space<vmem>>, vector<68x128xf32>
    %cst_66 = arith.constant dense<0.000000e+00> : vector<20x128xf32>
    %348 = tpu.matmul %346, %347, %cst_66 {dimension_numbers = #tpu.dot_dimension_numbers<[1], [0], [0], [1], [0, 0, 1, 1], [], []>} : vector<20x68xf32>, vector<68x128xf32>, vector<20x128xf32> -> vector<20x128xf32>
    %c0_67 = arith.constant 0 : index
    %c0_68 = arith.constant 0 : index
    %349 = vector.load %arg13[%c0_67, %c0_68] : memref<1x128xf32, #tpu.memory_space<vmem>>, vector<1x128xf32>
    %350 = vector.broadcast %349 : vector<1x128xf32> to vector<20x128xf32>
    %351 = arith.addf %348, %350 : vector<20x128xf32>
    %352 = vector.shape_cast %351 : vector<20x128xf32> to vector<2x10x128xf32>
    %c0_69 = arith.constant 0 : index
    %c0_70 = arith.constant 0 : index
    %353 = vector.load %arg14[%c0_69, %c0_70] : memref<32x128xf32, #tpu.memory_space<vmem>>, vector<32x128xf32>
    %cst_71 = arith.constant 0.000000e+00 : f32
    %354 = vector.broadcast %cst_71 : f32 to vector<2x32xf32>
    %cst_72 = arith.constant 0.000000e+00 : f32
    %355 = vector.broadcast %cst_72 : f32 to vector<2x32xf32>
    %356 = vector.extract_strided_slice %352 {offsets = [0, 0, 0], sizes = [2, 1, 128], strides = [1, 1, 1]} : vector<2x10x128xf32> to vector<2x1x128xf32>
    %357 = vector.shape_cast %356 : vector<2x1x128xf32> to vector<2x128xf32>
    %358 = vector.extract_strided_slice %352 {offsets = [0, 9, 0], sizes = [2, 1, 128], strides = [1, 1, 1]} : vector<2x10x128xf32> to vector<2x1x128xf32>
    %359 = vector.shape_cast %358 : vector<2x1x128xf32> to vector<2x128xf32>
    %360 = arith.select %19, %357, %359 : vector<2x128xi1>, vector<2x128xf32>
    %cst_73 = arith.constant dense<0.000000e+00> : vector<2x128xf32>
    %361 = tpu.matmul %354, %353, %cst_73 {dimension_numbers = #tpu.dot_dimension_numbers<[1], [0], [0], [1], [0, 0, 1, 1], [], []>} : vector<2x32xf32>, vector<32x128xf32>, vector<2x128xf32> -> vector<2x128xf32>
    %362 = arith.addf %360, %361 : vector<2x128xf32>
    %363 = math.tanh %362 : vector<2x128xf32>
    %364 = arith.negf %362 : vector<2x128xf32>
    %365 = math.exp %364 : vector<2x128xf32>
    %cst_74 = arith.constant 1.000000e+00 : f32
    %366 = vector.broadcast %cst_74 : f32 to vector<2x128xf32>
    %367 = arith.addf %366, %365 : vector<2x128xf32>
    %368 = arith.divf %366, %367 : vector<2x128xf32>
    %369 = arith.select %24, %363, %368 : vector<2x128xi1>, vector<2x128xf32>
    %370 = vector.extract_strided_slice %369 {offsets = [0, 0], sizes = [2, 32], strides = [1, 1]} : vector<2x128xf32> to vector<2x32xf32>
    %371 = vector.extract_strided_slice %369 {offsets = [0, 32], sizes = [2, 32], strides = [1, 1]} : vector<2x128xf32> to vector<2x32xf32>
    %372 = vector.extract_strided_slice %369 {offsets = [0, 64], sizes = [2, 32], strides = [1, 1]} : vector<2x128xf32> to vector<2x32xf32>
    %373 = vector.extract_strided_slice %369 {offsets = [0, 96], sizes = [2, 32], strides = [1, 1]} : vector<2x128xf32> to vector<2x32xf32>
    %374 = arith.mulf %371, %355 : vector<2x32xf32>
    %375 = arith.mulf %370, %372 : vector<2x32xf32>
    %376 = arith.addf %374, %375 : vector<2x32xf32>
    %377 = math.tanh %376 : vector<2x32xf32>
    %378 = arith.mulf %373, %377 : vector<2x32xf32>
    %379 = vector.extract_strided_slice %352 {offsets = [0, 1, 0], sizes = [2, 1, 128], strides = [1, 1, 1]} : vector<2x10x128xf32> to vector<2x1x128xf32>
    %380 = vector.shape_cast %379 : vector<2x1x128xf32> to vector<2x128xf32>
    %381 = vector.extract_strided_slice %352 {offsets = [0, 8, 0], sizes = [2, 1, 128], strides = [1, 1, 1]} : vector<2x10x128xf32> to vector<2x1x128xf32>
    %382 = vector.shape_cast %381 : vector<2x1x128xf32> to vector<2x128xf32>
    %383 = arith.select %19, %380, %382 : vector<2x128xi1>, vector<2x128xf32>
    %cst_75 = arith.constant dense<0.000000e+00> : vector<2x128xf32>
    %384 = tpu.matmul %378, %353, %cst_75 {dimension_numbers = #tpu.dot_dimension_numbers<[1], [0], [0], [1], [0, 0, 1, 1], [], []>} : vector<2x32xf32>, vector<32x128xf32>, vector<2x128xf32> -> vector<2x128xf32>
    %385 = arith.addf %383, %384 : vector<2x128xf32>
    %386 = math.tanh %385 : vector<2x128xf32>
    %387 = arith.negf %385 : vector<2x128xf32>
    %388 = math.exp %387 : vector<2x128xf32>
    %cst_76 = arith.constant 1.000000e+00 : f32
    %389 = vector.broadcast %cst_76 : f32 to vector<2x128xf32>
    %390 = arith.addf %389, %388 : vector<2x128xf32>
    %391 = arith.divf %389, %390 : vector<2x128xf32>
    %392 = arith.select %24, %386, %391 : vector<2x128xi1>, vector<2x128xf32>
    %393 = vector.extract_strided_slice %392 {offsets = [0, 0], sizes = [2, 32], strides = [1, 1]} : vector<2x128xf32> to vector<2x32xf32>
    %394 = vector.extract_strided_slice %392 {offsets = [0, 32], sizes = [2, 32], strides = [1, 1]} : vector<2x128xf32> to vector<2x32xf32>
    %395 = vector.extract_strided_slice %392 {offsets = [0, 64], sizes = [2, 32], strides = [1, 1]} : vector<2x128xf32> to vector<2x32xf32>
    %396 = vector.extract_strided_slice %392 {offsets = [0, 96], sizes = [2, 32], strides = [1, 1]} : vector<2x128xf32> to vector<2x32xf32>
    %397 = arith.mulf %394, %376 : vector<2x32xf32>
    %398 = arith.mulf %393, %395 : vector<2x32xf32>
    %399 = arith.addf %397, %398 : vector<2x32xf32>
    %400 = math.tanh %399 : vector<2x32xf32>
    %401 = arith.mulf %396, %400 : vector<2x32xf32>
    %402 = vector.extract_strided_slice %352 {offsets = [0, 2, 0], sizes = [2, 1, 128], strides = [1, 1, 1]} : vector<2x10x128xf32> to vector<2x1x128xf32>
    %403 = vector.shape_cast %402 : vector<2x1x128xf32> to vector<2x128xf32>
    %404 = vector.extract_strided_slice %352 {offsets = [0, 7, 0], sizes = [2, 1, 128], strides = [1, 1, 1]} : vector<2x10x128xf32> to vector<2x1x128xf32>
    %405 = vector.shape_cast %404 : vector<2x1x128xf32> to vector<2x128xf32>
    %406 = arith.select %19, %403, %405 : vector<2x128xi1>, vector<2x128xf32>
    %cst_77 = arith.constant dense<0.000000e+00> : vector<2x128xf32>
    %407 = tpu.matmul %401, %353, %cst_77 {dimension_numbers = #tpu.dot_dimension_numbers<[1], [0], [0], [1], [0, 0, 1, 1], [], []>} : vector<2x32xf32>, vector<32x128xf32>, vector<2x128xf32> -> vector<2x128xf32>
    %408 = arith.addf %406, %407 : vector<2x128xf32>
    %409 = math.tanh %408 : vector<2x128xf32>
    %410 = arith.negf %408 : vector<2x128xf32>
    %411 = math.exp %410 : vector<2x128xf32>
    %cst_78 = arith.constant 1.000000e+00 : f32
    %412 = vector.broadcast %cst_78 : f32 to vector<2x128xf32>
    %413 = arith.addf %412, %411 : vector<2x128xf32>
    %414 = arith.divf %412, %413 : vector<2x128xf32>
    %415 = arith.select %24, %409, %414 : vector<2x128xi1>, vector<2x128xf32>
    %416 = vector.extract_strided_slice %415 {offsets = [0, 0], sizes = [2, 32], strides = [1, 1]} : vector<2x128xf32> to vector<2x32xf32>
    %417 = vector.extract_strided_slice %415 {offsets = [0, 32], sizes = [2, 32], strides = [1, 1]} : vector<2x128xf32> to vector<2x32xf32>
    %418 = vector.extract_strided_slice %415 {offsets = [0, 64], sizes = [2, 32], strides = [1, 1]} : vector<2x128xf32> to vector<2x32xf32>
    %419 = vector.extract_strided_slice %415 {offsets = [0, 96], sizes = [2, 32], strides = [1, 1]} : vector<2x128xf32> to vector<2x32xf32>
    %420 = arith.mulf %417, %399 : vector<2x32xf32>
    %421 = arith.mulf %416, %418 : vector<2x32xf32>
    %422 = arith.addf %420, %421 : vector<2x32xf32>
    %423 = math.tanh %422 : vector<2x32xf32>
    %424 = arith.mulf %419, %423 : vector<2x32xf32>
    %425 = vector.extract_strided_slice %352 {offsets = [0, 3, 0], sizes = [2, 1, 128], strides = [1, 1, 1]} : vector<2x10x128xf32> to vector<2x1x128xf32>
    %426 = vector.shape_cast %425 : vector<2x1x128xf32> to vector<2x128xf32>
    %427 = vector.extract_strided_slice %352 {offsets = [0, 6, 0], sizes = [2, 1, 128], strides = [1, 1, 1]} : vector<2x10x128xf32> to vector<2x1x128xf32>
    %428 = vector.shape_cast %427 : vector<2x1x128xf32> to vector<2x128xf32>
    %429 = arith.select %19, %426, %428 : vector<2x128xi1>, vector<2x128xf32>
    %cst_79 = arith.constant dense<0.000000e+00> : vector<2x128xf32>
    %430 = tpu.matmul %424, %353, %cst_79 {dimension_numbers = #tpu.dot_dimension_numbers<[1], [0], [0], [1], [0, 0, 1, 1], [], []>} : vector<2x32xf32>, vector<32x128xf32>, vector<2x128xf32> -> vector<2x128xf32>
    %431 = arith.addf %429, %430 : vector<2x128xf32>
    %432 = math.tanh %431 : vector<2x128xf32>
    %433 = arith.negf %431 : vector<2x128xf32>
    %434 = math.exp %433 : vector<2x128xf32>
    %cst_80 = arith.constant 1.000000e+00 : f32
    %435 = vector.broadcast %cst_80 : f32 to vector<2x128xf32>
    %436 = arith.addf %435, %434 : vector<2x128xf32>
    %437 = arith.divf %435, %436 : vector<2x128xf32>
    %438 = arith.select %24, %432, %437 : vector<2x128xi1>, vector<2x128xf32>
    %439 = vector.extract_strided_slice %438 {offsets = [0, 0], sizes = [2, 32], strides = [1, 1]} : vector<2x128xf32> to vector<2x32xf32>
    %440 = vector.extract_strided_slice %438 {offsets = [0, 32], sizes = [2, 32], strides = [1, 1]} : vector<2x128xf32> to vector<2x32xf32>
    %441 = vector.extract_strided_slice %438 {offsets = [0, 64], sizes = [2, 32], strides = [1, 1]} : vector<2x128xf32> to vector<2x32xf32>
    %442 = vector.extract_strided_slice %438 {offsets = [0, 96], sizes = [2, 32], strides = [1, 1]} : vector<2x128xf32> to vector<2x32xf32>
    %443 = arith.mulf %440, %422 : vector<2x32xf32>
    %444 = arith.mulf %439, %441 : vector<2x32xf32>
    %445 = arith.addf %443, %444 : vector<2x32xf32>
    %446 = math.tanh %445 : vector<2x32xf32>
    %447 = arith.mulf %442, %446 : vector<2x32xf32>
    %448 = vector.extract_strided_slice %352 {offsets = [0, 4, 0], sizes = [2, 1, 128], strides = [1, 1, 1]} : vector<2x10x128xf32> to vector<2x1x128xf32>
    %449 = vector.shape_cast %448 : vector<2x1x128xf32> to vector<2x128xf32>
    %450 = vector.extract_strided_slice %352 {offsets = [0, 5, 0], sizes = [2, 1, 128], strides = [1, 1, 1]} : vector<2x10x128xf32> to vector<2x1x128xf32>
    %451 = vector.shape_cast %450 : vector<2x1x128xf32> to vector<2x128xf32>
    %452 = arith.select %19, %449, %451 : vector<2x128xi1>, vector<2x128xf32>
    %cst_81 = arith.constant dense<0.000000e+00> : vector<2x128xf32>
    %453 = tpu.matmul %447, %353, %cst_81 {dimension_numbers = #tpu.dot_dimension_numbers<[1], [0], [0], [1], [0, 0, 1, 1], [], []>} : vector<2x32xf32>, vector<32x128xf32>, vector<2x128xf32> -> vector<2x128xf32>
    %454 = arith.addf %452, %453 : vector<2x128xf32>
    %455 = math.tanh %454 : vector<2x128xf32>
    %456 = arith.negf %454 : vector<2x128xf32>
    %457 = math.exp %456 : vector<2x128xf32>
    %cst_82 = arith.constant 1.000000e+00 : f32
    %458 = vector.broadcast %cst_82 : f32 to vector<2x128xf32>
    %459 = arith.addf %458, %457 : vector<2x128xf32>
    %460 = arith.divf %458, %459 : vector<2x128xf32>
    %461 = arith.select %24, %455, %460 : vector<2x128xi1>, vector<2x128xf32>
    %462 = vector.extract_strided_slice %461 {offsets = [0, 0], sizes = [2, 32], strides = [1, 1]} : vector<2x128xf32> to vector<2x32xf32>
    %463 = vector.extract_strided_slice %461 {offsets = [0, 32], sizes = [2, 32], strides = [1, 1]} : vector<2x128xf32> to vector<2x32xf32>
    %464 = vector.extract_strided_slice %461 {offsets = [0, 64], sizes = [2, 32], strides = [1, 1]} : vector<2x128xf32> to vector<2x32xf32>
    %465 = vector.extract_strided_slice %461 {offsets = [0, 96], sizes = [2, 32], strides = [1, 1]} : vector<2x128xf32> to vector<2x32xf32>
    %466 = arith.mulf %463, %445 : vector<2x32xf32>
    %467 = arith.mulf %462, %464 : vector<2x32xf32>
    %468 = arith.addf %466, %467 : vector<2x32xf32>
    %469 = math.tanh %468 : vector<2x32xf32>
    %470 = arith.mulf %465, %469 : vector<2x32xf32>
    %471 = vector.extract_strided_slice %352 {offsets = [0, 5, 0], sizes = [2, 1, 128], strides = [1, 1, 1]} : vector<2x10x128xf32> to vector<2x1x128xf32>
    %472 = vector.shape_cast %471 : vector<2x1x128xf32> to vector<2x128xf32>
    %473 = vector.extract_strided_slice %352 {offsets = [0, 4, 0], sizes = [2, 1, 128], strides = [1, 1, 1]} : vector<2x10x128xf32> to vector<2x1x128xf32>
    %474 = vector.shape_cast %473 : vector<2x1x128xf32> to vector<2x128xf32>
    %475 = arith.select %19, %472, %474 : vector<2x128xi1>, vector<2x128xf32>
    %cst_83 = arith.constant dense<0.000000e+00> : vector<2x128xf32>
    %476 = tpu.matmul %470, %353, %cst_83 {dimension_numbers = #tpu.dot_dimension_numbers<[1], [0], [0], [1], [0, 0, 1, 1], [], []>} : vector<2x32xf32>, vector<32x128xf32>, vector<2x128xf32> -> vector<2x128xf32>
    %477 = arith.addf %475, %476 : vector<2x128xf32>
    %478 = math.tanh %477 : vector<2x128xf32>
    %479 = arith.negf %477 : vector<2x128xf32>
    %480 = math.exp %479 : vector<2x128xf32>
    %cst_84 = arith.constant 1.000000e+00 : f32
    %481 = vector.broadcast %cst_84 : f32 to vector<2x128xf32>
    %482 = arith.addf %481, %480 : vector<2x128xf32>
    %483 = arith.divf %481, %482 : vector<2x128xf32>
    %484 = arith.select %24, %478, %483 : vector<2x128xi1>, vector<2x128xf32>
    %485 = vector.extract_strided_slice %484 {offsets = [0, 0], sizes = [2, 32], strides = [1, 1]} : vector<2x128xf32> to vector<2x32xf32>
    %486 = vector.extract_strided_slice %484 {offsets = [0, 32], sizes = [2, 32], strides = [1, 1]} : vector<2x128xf32> to vector<2x32xf32>
    %487 = vector.extract_strided_slice %484 {offsets = [0, 64], sizes = [2, 32], strides = [1, 1]} : vector<2x128xf32> to vector<2x32xf32>
    %488 = vector.extract_strided_slice %484 {offsets = [0, 96], sizes = [2, 32], strides = [1, 1]} : vector<2x128xf32> to vector<2x32xf32>
    %489 = arith.mulf %486, %468 : vector<2x32xf32>
    %490 = arith.mulf %485, %487 : vector<2x32xf32>
    %491 = arith.addf %489, %490 : vector<2x32xf32>
    %492 = math.tanh %491 : vector<2x32xf32>
    %493 = arith.mulf %488, %492 : vector<2x32xf32>
    %494 = vector.extract_strided_slice %352 {offsets = [0, 6, 0], sizes = [2, 1, 128], strides = [1, 1, 1]} : vector<2x10x128xf32> to vector<2x1x128xf32>
    %495 = vector.shape_cast %494 : vector<2x1x128xf32> to vector<2x128xf32>
    %496 = vector.extract_strided_slice %352 {offsets = [0, 3, 0], sizes = [2, 1, 128], strides = [1, 1, 1]} : vector<2x10x128xf32> to vector<2x1x128xf32>
    %497 = vector.shape_cast %496 : vector<2x1x128xf32> to vector<2x128xf32>
    %498 = arith.select %19, %495, %497 : vector<2x128xi1>, vector<2x128xf32>
    %cst_85 = arith.constant dense<0.000000e+00> : vector<2x128xf32>
    %499 = tpu.matmul %493, %353, %cst_85 {dimension_numbers = #tpu.dot_dimension_numbers<[1], [0], [0], [1], [0, 0, 1, 1], [], []>} : vector<2x32xf32>, vector<32x128xf32>, vector<2x128xf32> -> vector<2x128xf32>
    %500 = arith.addf %498, %499 : vector<2x128xf32>
    %501 = math.tanh %500 : vector<2x128xf32>
    %502 = arith.negf %500 : vector<2x128xf32>
    %503 = math.exp %502 : vector<2x128xf32>
    %cst_86 = arith.constant 1.000000e+00 : f32
    %504 = vector.broadcast %cst_86 : f32 to vector<2x128xf32>
    %505 = arith.addf %504, %503 : vector<2x128xf32>
    %506 = arith.divf %504, %505 : vector<2x128xf32>
    %507 = arith.select %24, %501, %506 : vector<2x128xi1>, vector<2x128xf32>
    %508 = vector.extract_strided_slice %507 {offsets = [0, 0], sizes = [2, 32], strides = [1, 1]} : vector<2x128xf32> to vector<2x32xf32>
    %509 = vector.extract_strided_slice %507 {offsets = [0, 32], sizes = [2, 32], strides = [1, 1]} : vector<2x128xf32> to vector<2x32xf32>
    %510 = vector.extract_strided_slice %507 {offsets = [0, 64], sizes = [2, 32], strides = [1, 1]} : vector<2x128xf32> to vector<2x32xf32>
    %511 = vector.extract_strided_slice %507 {offsets = [0, 96], sizes = [2, 32], strides = [1, 1]} : vector<2x128xf32> to vector<2x32xf32>
    %512 = arith.mulf %509, %491 : vector<2x32xf32>
    %513 = arith.mulf %508, %510 : vector<2x32xf32>
    %514 = arith.addf %512, %513 : vector<2x32xf32>
    %515 = math.tanh %514 : vector<2x32xf32>
    %516 = arith.mulf %511, %515 : vector<2x32xf32>
    %517 = vector.extract_strided_slice %352 {offsets = [0, 7, 0], sizes = [2, 1, 128], strides = [1, 1, 1]} : vector<2x10x128xf32> to vector<2x1x128xf32>
    %518 = vector.shape_cast %517 : vector<2x1x128xf32> to vector<2x128xf32>
    %519 = vector.extract_strided_slice %352 {offsets = [0, 2, 0], sizes = [2, 1, 128], strides = [1, 1, 1]} : vector<2x10x128xf32> to vector<2x1x128xf32>
    %520 = vector.shape_cast %519 : vector<2x1x128xf32> to vector<2x128xf32>
    %521 = arith.select %19, %518, %520 : vector<2x128xi1>, vector<2x128xf32>
    %cst_87 = arith.constant dense<0.000000e+00> : vector<2x128xf32>
    %522 = tpu.matmul %516, %353, %cst_87 {dimension_numbers = #tpu.dot_dimension_numbers<[1], [0], [0], [1], [0, 0, 1, 1], [], []>} : vector<2x32xf32>, vector<32x128xf32>, vector<2x128xf32> -> vector<2x128xf32>
    %523 = arith.addf %521, %522 : vector<2x128xf32>
    %524 = math.tanh %523 : vector<2x128xf32>
    %525 = arith.negf %523 : vector<2x128xf32>
    %526 = math.exp %525 : vector<2x128xf32>
    %cst_88 = arith.constant 1.000000e+00 : f32
    %527 = vector.broadcast %cst_88 : f32 to vector<2x128xf32>
    %528 = arith.addf %527, %526 : vector<2x128xf32>
    %529 = arith.divf %527, %528 : vector<2x128xf32>
    %530 = arith.select %24, %524, %529 : vector<2x128xi1>, vector<2x128xf32>
    %531 = vector.extract_strided_slice %530 {offsets = [0, 0], sizes = [2, 32], strides = [1, 1]} : vector<2x128xf32> to vector<2x32xf32>
    %532 = vector.extract_strided_slice %530 {offsets = [0, 32], sizes = [2, 32], strides = [1, 1]} : vector<2x128xf32> to vector<2x32xf32>
    %533 = vector.extract_strided_slice %530 {offsets = [0, 64], sizes = [2, 32], strides = [1, 1]} : vector<2x128xf32> to vector<2x32xf32>
    %534 = vector.extract_strided_slice %530 {offsets = [0, 96], sizes = [2, 32], strides = [1, 1]} : vector<2x128xf32> to vector<2x32xf32>
    %535 = arith.mulf %532, %514 : vector<2x32xf32>
    %536 = arith.mulf %531, %533 : vector<2x32xf32>
    %537 = arith.addf %535, %536 : vector<2x32xf32>
    %538 = math.tanh %537 : vector<2x32xf32>
    %539 = arith.mulf %534, %538 : vector<2x32xf32>
    %540 = vector.extract_strided_slice %352 {offsets = [0, 8, 0], sizes = [2, 1, 128], strides = [1, 1, 1]} : vector<2x10x128xf32> to vector<2x1x128xf32>
    %541 = vector.shape_cast %540 : vector<2x1x128xf32> to vector<2x128xf32>
    %542 = vector.extract_strided_slice %352 {offsets = [0, 1, 0], sizes = [2, 1, 128], strides = [1, 1, 1]} : vector<2x10x128xf32> to vector<2x1x128xf32>
    %543 = vector.shape_cast %542 : vector<2x1x128xf32> to vector<2x128xf32>
    %544 = arith.select %19, %541, %543 : vector<2x128xi1>, vector<2x128xf32>
    %cst_89 = arith.constant dense<0.000000e+00> : vector<2x128xf32>
    %545 = tpu.matmul %539, %353, %cst_89 {dimension_numbers = #tpu.dot_dimension_numbers<[1], [0], [0], [1], [0, 0, 1, 1], [], []>} : vector<2x32xf32>, vector<32x128xf32>, vector<2x128xf32> -> vector<2x128xf32>
    %546 = arith.addf %544, %545 : vector<2x128xf32>
    %547 = math.tanh %546 : vector<2x128xf32>
    %548 = arith.negf %546 : vector<2x128xf32>
    %549 = math.exp %548 : vector<2x128xf32>
    %cst_90 = arith.constant 1.000000e+00 : f32
    %550 = vector.broadcast %cst_90 : f32 to vector<2x128xf32>
    %551 = arith.addf %550, %549 : vector<2x128xf32>
    %552 = arith.divf %550, %551 : vector<2x128xf32>
    %553 = arith.select %24, %547, %552 : vector<2x128xi1>, vector<2x128xf32>
    %554 = vector.extract_strided_slice %553 {offsets = [0, 0], sizes = [2, 32], strides = [1, 1]} : vector<2x128xf32> to vector<2x32xf32>
    %555 = vector.extract_strided_slice %553 {offsets = [0, 32], sizes = [2, 32], strides = [1, 1]} : vector<2x128xf32> to vector<2x32xf32>
    %556 = vector.extract_strided_slice %553 {offsets = [0, 64], sizes = [2, 32], strides = [1, 1]} : vector<2x128xf32> to vector<2x32xf32>
    %557 = vector.extract_strided_slice %553 {offsets = [0, 96], sizes = [2, 32], strides = [1, 1]} : vector<2x128xf32> to vector<2x32xf32>
    %558 = arith.mulf %555, %537 : vector<2x32xf32>
    %559 = arith.mulf %554, %556 : vector<2x32xf32>
    %560 = arith.addf %558, %559 : vector<2x32xf32>
    %561 = math.tanh %560 : vector<2x32xf32>
    %562 = arith.mulf %557, %561 : vector<2x32xf32>
    %563 = vector.extract_strided_slice %352 {offsets = [0, 9, 0], sizes = [2, 1, 128], strides = [1, 1, 1]} : vector<2x10x128xf32> to vector<2x1x128xf32>
    %564 = vector.shape_cast %563 : vector<2x1x128xf32> to vector<2x128xf32>
    %565 = vector.extract_strided_slice %352 {offsets = [0, 0, 0], sizes = [2, 1, 128], strides = [1, 1, 1]} : vector<2x10x128xf32> to vector<2x1x128xf32>
    %566 = vector.shape_cast %565 : vector<2x1x128xf32> to vector<2x128xf32>
    %567 = arith.select %19, %564, %566 : vector<2x128xi1>, vector<2x128xf32>
    %cst_91 = arith.constant dense<0.000000e+00> : vector<2x128xf32>
    %568 = tpu.matmul %562, %353, %cst_91 {dimension_numbers = #tpu.dot_dimension_numbers<[1], [0], [0], [1], [0, 0, 1, 1], [], []>} : vector<2x32xf32>, vector<32x128xf32>, vector<2x128xf32> -> vector<2x128xf32>
    %569 = arith.addf %567, %568 : vector<2x128xf32>
    %570 = math.tanh %569 : vector<2x128xf32>
    %571 = arith.negf %569 : vector<2x128xf32>
    %572 = math.exp %571 : vector<2x128xf32>
    %cst_92 = arith.constant 1.000000e+00 : f32
    %573 = vector.broadcast %cst_92 : f32 to vector<2x128xf32>
    %574 = arith.addf %573, %572 : vector<2x128xf32>
    %575 = arith.divf %573, %574 : vector<2x128xf32>
    %576 = arith.select %24, %570, %575 : vector<2x128xi1>, vector<2x128xf32>
    %577 = vector.extract_strided_slice %576 {offsets = [0, 0], sizes = [2, 32], strides = [1, 1]} : vector<2x128xf32> to vector<2x32xf32>
    %578 = vector.extract_strided_slice %576 {offsets = [0, 32], sizes = [2, 32], strides = [1, 1]} : vector<2x128xf32> to vector<2x32xf32>
    %579 = vector.extract_strided_slice %576 {offsets = [0, 64], sizes = [2, 32], strides = [1, 1]} : vector<2x128xf32> to vector<2x32xf32>
    %580 = vector.extract_strided_slice %576 {offsets = [0, 96], sizes = [2, 32], strides = [1, 1]} : vector<2x128xf32> to vector<2x32xf32>
    %581 = arith.mulf %578, %560 : vector<2x32xf32>
    %582 = arith.mulf %577, %579 : vector<2x32xf32>
    %583 = arith.addf %581, %582 : vector<2x32xf32>
    %584 = math.tanh %583 : vector<2x32xf32>
    %585 = arith.mulf %580, %584 : vector<2x32xf32>
    %586 = arith.select %27, %585, %378 : vector<2x32xi1>, vector<2x32xf32>
    %c0_93 = arith.constant 0 : index
    %c0_94 = arith.constant 0 : index
    %587 = vector.load %arg15[%c0_93, %c0_94] : memref<2x32xf32, #tpu.memory_space<vmem>>, vector<2x32xf32>
    tpu.vector_store %arg15[%c0_93, %c0_94], %586 {strides = array<i32>} : memref<2x32xf32, #tpu.memory_space<vmem>>, vector<2x32xf32>,
    return
  }
}

module attributes {stable_mosaic.version = 11 : i64} {
  func.func @_condenser_kernel(%arg0: memref<2x160xf32, #tpu.memory_space<vmem>>, %arg1: memref<2x32xf32, #tpu.memory_space<vmem>>, %arg2: memref<160x16xf32, #tpu.memory_space<vmem>>, %arg3: memref<1x16xf32, #tpu.memory_space<vmem>>, %arg4: memref<176x16xf32, #tpu.memory_space<vmem>>, %arg5: memref<1x16xf32, #tpu.memory_space<vmem>>, %arg6: memref<192x32xf32, #tpu.memory_space<vmem>>, %arg7: memref<1x32xf32, #tpu.memory_space<vmem>>, %arg8: memref<1x32xf32, #tpu.memory_space<vmem>>, %arg9: memref<1x1xf32, #tpu.memory_space<vmem>>, %arg10: memref<2x1xf32, #tpu.memory_space<vmem>>, %arg11: memref<2x32xf32, #tpu.memory_space<vmem>>, %arg12: memref<2x192xf32, #tpu.memory_space<vmem>>) attributes {dimension_semantics = [], scalar_prefetch = 0 : i64, scratch_operands = 1 : i64, tpu.core_type = #tpu.core_type<tc>} {
    %c0 = arith.constant 0 : index
    %c0_0 = arith.constant 0 : index
    %0 = vector.load %arg0[%c0, %c0_0] : memref<2x160xf32, #tpu.memory_space<vmem>>, vector<2x160xf32>
    %c0_1 = arith.constant 0 : index
    %c0_2 = arith.constant 0 : index
    %1 = vector.load %arg12[%c0_1, %c0_2] : memref<2x192xf32, #tpu.memory_space<vmem>>, vector<2x160xf32>
    tpu.vector_store %arg12[%c0_1, %c0_2], %0 {strides = array<i32>} : memref<2x192xf32, #tpu.memory_space<vmem>>, vector<2x160xf32>,
    %c0_3 = arith.constant 0 : index
    %c0_4 = arith.constant 0 : index
    %2 = vector.load %arg2[%c0_3, %c0_4] : memref<160x16xf32, #tpu.memory_space<vmem>>, vector<160x16xf32>
    %c0_5 = arith.constant 0 : index
    %c0_6 = arith.constant 0 : index
    %3 = vector.load %arg3[%c0_5, %c0_6] : memref<1x16xf32, #tpu.memory_space<vmem>>, vector<1x16xf32>
    %c0_7 = arith.constant 0 : index
    %c0_8 = arith.constant 0 : index
    %4 = vector.load %arg12[%c0_7, %c0_8] : memref<2x192xf32, #tpu.memory_space<vmem>>, vector<2x160xf32>
    %cst = arith.constant dense<0.000000e+00> : vector<2x16xf32>
    %5 = tpu.matmul %4, %2, %cst {dimension_numbers = #tpu.dot_dimension_numbers<[1], [0], [0], [1], [0, 0, 1, 1], [], []>} : vector<2x160xf32>, vector<160x16xf32>, vector<2x16xf32> -> vector<2x16xf32>
    %6 = vector.broadcast %3 : vector<1x16xf32> to vector<2x16xf32>
    %7 = arith.addf %5, %6 : vector<2x16xf32>
    %8 = math.tanh %7 : vector<2x16xf32>
    %c0_9 = arith.constant 0 : index
    %c160 = arith.constant 160 : index
    %9 = vector.load %arg12[%c0_9, %c160] : memref<2x192xf32, #tpu.memory_space<vmem>>, vector<2x16xf32>
    tpu.vector_store %arg12[%c0_9, %c160], %8 {strides = array<i32>} : memref<2x192xf32, #tpu.memory_space<vmem>>, vector<2x16xf32>,
    %c0_10 = arith.constant 0 : index
    %c0_11 = arith.constant 0 : index
    %10 = vector.load %arg4[%c0_10, %c0_11] : memref<176x16xf32, #tpu.memory_space<vmem>>, vector<176x16xf32>
    %c0_12 = arith.constant 0 : index
    %c0_13 = arith.constant 0 : index
    %11 = vector.load %arg5[%c0_12, %c0_13] : memref<1x16xf32, #tpu.memory_space<vmem>>, vector<1x16xf32>
    %c0_14 = arith.constant 0 : index
    %c0_15 = arith.constant 0 : index
    %12 = vector.load %arg12[%c0_14, %c0_15] : memref<2x192xf32, #tpu.memory_space<vmem>>, vector<2x176xf32>
    %cst_16 = arith.constant dense<0.000000e+00> : vector<2x16xf32>
    %13 = tpu.matmul %12, %10, %cst_16 {dimension_numbers = #tpu.dot_dimension_numbers<[1], [0], [0], [1], [0, 0, 1, 1], [], []>} : vector<2x176xf32>, vector<176x16xf32>, vector<2x16xf32> -> vector<2x16xf32>
    %14 = vector.broadcast %11 : vector<1x16xf32> to vector<2x16xf32>
    %15 = arith.addf %13, %14 : vector<2x16xf32>
    %16 = math.tanh %15 : vector<2x16xf32>
    %c0_17 = arith.constant 0 : index
    %c176 = arith.constant 176 : index
    %17 = vector.load %arg12[%c0_17, %c176] : memref<2x192xf32, #tpu.memory_space<vmem>>, vector<2x16xf32>
    tpu.vector_store %arg12[%c0_17, %c176], %16 {strides = array<i32>} : memref<2x192xf32, #tpu.memory_space<vmem>>, vector<2x16xf32>,
    %c0_18 = arith.constant 0 : index
    %c0_19 = arith.constant 0 : index
    %18 = vector.load %arg12[%c0_18, %c0_19] : memref<2x192xf32, #tpu.memory_space<vmem>>, vector<2x192xf32>
    %c0_20 = arith.constant 0 : index
    %c0_21 = arith.constant 0 : index
    %19 = vector.load %arg6[%c0_20, %c0_21] : memref<192x32xf32, #tpu.memory_space<vmem>>, vector<192x32xf32>
    %cst_22 = arith.constant dense<0.000000e+00> : vector<2x32xf32>
    %20 = tpu.matmul %18, %19, %cst_22 {dimension_numbers = #tpu.dot_dimension_numbers<[1], [0], [0], [1], [0, 0, 1, 1], [], []>} : vector<2x192xf32>, vector<192x32xf32>, vector<2x32xf32> -> vector<2x32xf32>
    %c0_23 = arith.constant 0 : index
    %c0_24 = arith.constant 0 : index
    %21 = vector.load %arg7[%c0_23, %c0_24] : memref<1x32xf32, #tpu.memory_space<vmem>>, vector<1x32xf32>
    %22 = vector.broadcast %21 : vector<1x32xf32> to vector<2x32xf32>
    %23 = arith.addf %20, %22 : vector<2x32xf32>
    %c0_25 = arith.constant 0 : index
    %c0_26 = arith.constant 0 : index
    %24 = vector.load %arg8[%c0_25, %c0_26] : memref<1x32xf32, #tpu.memory_space<vmem>>, vector<1x32xf32>
    %25 = vector.broadcast %24 : vector<1x32xf32> to vector<2x32xf32>
    %26 = arith.mulf %25, %23 : vector<2x32xf32>
    %c0_27 = arith.constant 0 : index
    %c0_28 = arith.constant 0 : index
    %27 = vector.load %arg1[%c0_27, %c0_28] : memref<2x32xf32, #tpu.memory_space<vmem>>, vector<2x32xf32>
    %cst_29 = arith.constant 0.000000e+00 : f32
    %28 = vector.broadcast %cst_29 : f32 to vector<2x32xf32>
    %29 = arith.cmpf one, %27, %28 : vector<2x32xf32>
    %30 = arith.extui %29 : vector<2x32xi1> to vector<2x32xi32>
    %31 = arith.sitofp %30 : vector<2x32xi32> to vector<2x32xf32>
    %32 = arith.mulf %26, %31 : vector<2x32xf32>
    %c0_30 = arith.constant 0 : index
    %c0_31 = arith.constant 0 : index
    %33 = vector.load %arg11[%c0_30, %c0_31] : memref<2x32xf32, #tpu.memory_space<vmem>>, vector<2x32xf32>
    tpu.vector_store %arg11[%c0_30, %c0_31], %32 {strides = array<i32>} : memref<2x32xf32, #tpu.memory_space<vmem>>, vector<2x32xf32>,
    %cst_32 = arith.constant dense<0.000000e+00> : vector<2xf32>
    %34 = vector.multi_reduction <add>, %32, %cst_32 [1] : vector<2x32xf32> to vector<2xf32>
    %35 = vector.shape_cast %34 : vector<2xf32> to vector<2x1xf32>
    %c0_33 = arith.constant 0 : index
    %c0_34 = arith.constant 0 : index
    %36 = vector.load %arg9[%c0_33, %c0_34] : memref<1x1xf32, #tpu.memory_space<vmem>>, vector<1x1xf32>
    %37 = vector.broadcast %36 : vector<1x1xf32> to vector<2x1xf32>
    %38 = arith.addf %35, %37 : vector<2x1xf32>
    %39 = arith.negf %38 : vector<2x1xf32>
    %40 = math.exp %39 : vector<2x1xf32>
    %cst_35 = arith.constant 1.000000e+00 : f32
    %41 = vector.broadcast %cst_35 : f32 to vector<2x1xf32>
    %42 = arith.addf %41, %40 : vector<2x1xf32>
    %43 = arith.divf %41, %42 : vector<2x1xf32>
    %c0_36 = arith.constant 0 : index
    %c0_37 = arith.constant 0 : index
    %44 = vector.load %arg10[%c0_36, %c0_37] : memref<2x1xf32, #tpu.memory_space<vmem>>, vector<2x1xf32>
    tpu.vector_store %arg10[%c0_36, %c0_37], %43 {strides = array<i32>} : memref<2x1xf32, #tpu.memory_space<vmem>>, vector<2x1xf32>,
    return
  }
}

</mosaic_0001>

<llo_original>
// kernel: bigmhc_core.4
$region0: #{bigmhc_core.4}
  #allocation0 [shape = 'u32[]', space=smem, size = 0x4, offset = 0x4, fixed_abs, tag = 'smem constant byte address 0x4 - core index']
  #allocation1 [shape = 'u32[144,128]{1,0:T(1,128)}', space=vmem, size = 0x12000, scoped, tag = 'internal scratch']
  %s0 = inlined_call_operand.vmem [shape: f32[2,64], index: 0, kind: input, shape index: {}]
  %s1 = inlined_call_operand.vmem [shape: f32[64,16], index: 1, kind: input, shape index: {}]
  %s2 = inlined_call_operand.vmem [shape: f32[1,16], index: 2, kind: input, shape index: {}]
  %s3 = inlined_call_operand.vmem [shape: f32[80,16], index: 3, kind: input, shape index: {}]
  %s4 = inlined_call_operand.vmem [shape: f32[1,16], index: 4, kind: input, shape index: {}]
  %s5 = inlined_call_operand.vmem [shape: f32[2,96], index: 5, kind: output, shape index: {}]
  %s6 = sld [smem:[#allocation0]]
  $region30: #{bigmhc_core.4} parent=0
    _
  %s8 = ssub.s32 1, %s6
  %s9 = scalar_select 0, %s8, %s6
  // Predicated region
  $region2: #{bigmhc_core.4} parent=0 // pred_check
    _
  $region3: #{bigmhc_core.4} parent=0 // pred_check_branch
    %11 = sbr.rel (0) target = $region5
  $region4: #{bigmhc_core.4} parent=0 // pred_region
    _
  $region5: #{bigmhc_core.4} parent=0 // pred_fallthru
    _
  // Predicated region
  $region6: #{bigmhc_core.4} parent=0 // pred_check
    _
  $region7: #{bigmhc_core.4} parent=0 // pred_check_branch
    %13 = sbr.rel (0) target = $region9
  $region8: #{bigmhc_core.4} parent=0 // pred_region
    _
  $region9: #{bigmhc_core.4} parent=0 // pred_fallthru
    _
  // Predicated region
  $region10: #{bigmhc_core.4} parent=0 // pred_check
    _
  $region11: #{bigmhc_core.4} parent=0 // pred_check_branch
    %15 = sbr.rel (0) target = $region13
  $region12: #{bigmhc_core.4} parent=0 // pred_region
    _
  $region13: #{bigmhc_core.4} parent=0 // pred_fallthru
    _
  // Predicated region
  $region14: #{bigmhc_core.4} parent=0 // pred_check
    _
  $region15: #{bigmhc_core.4} parent=0 // pred_check_branch
    %17 = sbr.rel (0) target = $region17
  $region16: #{bigmhc_core.4} parent=0 // pred_region
    _
  $region17: #{bigmhc_core.4} parent=0 // pred_fallthru
    _
  // Predicated region
  $region18: #{bigmhc_core.4} parent=0 // pred_check
    _
  $region19: #{bigmhc_core.4} parent=0 // pred_check_branch
    %19 = sbr.rel (0) target = $region21
  $region20: #{bigmhc_core.4} parent=0 // pred_region
    _
  $region21: #{bigmhc_core.4} parent=0 // pred_fallthru
    _
  %v20 = vld [vmem:[%s0] sm:$0x3]
  %vm21 = vcmask 517120
  %22 = vst.msk [vmem:[%s5] sm:$0x3] %vm21, %v20
  %v23 = vld [vmem:[%s1] sm:$0xff]
  %v24 = vld [vmem:[%s1 + $0x8] sm:$0xff]
  %v25 = vld [vmem:[%s1 + $0x10] sm:$0xff]
  %v26 = vld [vmem:[%s1 + $0x18] sm:$0xff]
  %v27 = vld [vmem:[%s1 + $0x20] sm:$0xff]
  %v28 = vld [vmem:[%s1 + $0x28] sm:$0xff]
  %v29 = vld [vmem:[%s1 + $0x30] sm:$0xff]
  %v30 = vld [vmem:[%s1 + $0x38] sm:$0xff]
  %v31 = vld [vmem:[%s2] sm:$0x1]
  %v32 = vld [vmem:[%s5] sm:$0x3]
  %v34 = vlaneseq
  %v35 = vshrl.u32 %v34, 7
  %v36 = vsub.s32 0, %v35
  %v37 = vrot.slane %v31, %v36
  %vm39 = vcmask 523264
  %v41 = vsel %vm39, %v32, 0
  %43 = vmatprep.subr.mxu0 0.0
  %44 = vmatpush1.msra.mxu0 %v23
  %45 = vmatprep.subr.mxu0 0.0
  %46 = vmatpush1.msra.mxu0 %v24
  %47 = vmatprep.subr.mxu0 0.0
  %48 = vmatpush1.msra.mxu0 %v25
  %49 = vmatprep.subr.mxu0 0.0
  %50 = vmatpush1.msra.mxu0 %v26
  %51 = vmatprep.subr.mxu0 0.0
  %52 = vmatpush1.msra.mxu0 %v27
  %53 = vmatprep.subr.mxu0 0.0
  %54 = vmatpush1.msra.mxu0 %v28
  %55 = vmatprep.subr.mxu0 0.0
  %56 = vmatpush1.msra.mxu0 %v29
  %57 = vmatprep.subr.mxu0 0.0
  %58 = vmatpush1.msra.mxu0 %v30
  %59 = vmatprep.subr.mxu0 0.0
  %60 = vmatpush1.msra.mxu0 0.0
  %61 = vmatprep.subr.mxu0 0.0
  %62 = vmatpush1.msra.mxu0 0.0
  %63 = vmatprep.subr.mxu0 0.0
  %64 = vmatpush1.msra.mxu0 0.0
  %65 = vmatprep.subr.mxu0 0.0
  %66 = vmatpush1.msra.mxu0 0.0
  %67 = vmatprep.subr.mxu0 0.0
  %68 = vmatpush1.msra.mxu0 0.0
  %69 = vmatprep.subr.mxu0 0.0
  %70 = vmatpush1.msra.mxu0 0.0
  %71 = vmatprep.subr.mxu0 0.0
  %72 = vmatpush1.msra.mxu0 0.0
  %73 = vmatprep.subr.mxu0 0.0
  %74 = vmatpush1.msra.mxu0 0.0
  %75 = vmatprep.subr.mxu0 0.0
  %76 = vmatpush1.msra.mxu0 0.0
  %77 = vmatprep.subr.mxu0 0.0
  %78 = vmatpush1.msra.mxu0 0.0
  %79 = vmatprep.subr.mxu0 0.0
  %80 = vmatpush1.msra.mxu0 0.0
  %81 = vmatprep.subr.mxu0 0.0
  %82 = vmatpush1.msra.mxu0 0.0
  %83 = vmatprep.subr.mxu0 0.0
  %84 = vmatpush1.msra.mxu0 0.0
  %85 = vmatprep.subr.mxu0 0.0
  %86 = vmatpush1.msra.mxu0 0.0
  %87 = vmatprep.subr.mxu0 0.0
  %88 = vmatpush1.msra.mxu0 0.0
  %89 = vmatprep.subr.mxu0 0.0
  %90 = vmatpush1.msra.mxu0 0.0
  %91 = vmatprep.subr.mxu0 0.0
  %92 = vmatpush1.msra.mxu0 0.0
  %93 = vmatprep.subr.mxu0 0.0
  %94 = vmatpush1.msra.mxu0 0.0
  %95 = vmatprep.subr.mxu0 0.0
  %96 = vmatpush1.msra.mxu0 0.0
  %97 = vmatprep.subr.mxu0 0.0
  %98 = vmatpush1.msra.mxu0 0.0
  %99 = vmatprep.subr.mxu0 0.0
  %100 = vmatpush1.msra.mxu0 0.0
  %101 = vmatprep.subr.mxu0 0.0
  %102 = vmatpush1.msra.mxu0 0.0
  %103 = vmatprep.subr.mxu0 0.0
  %104 = vmatpush1.msra.mxu0 0.0
  %105 = vmatprep.subr.mxu0 0.0
  %106 = vmatpush1.msra.mxu0 0.0
  %107 = vmatprep.mubr.f32.mxu0 0.0
  %108 = vmatmul.mubr.f32.gmra.mrb[0].mxu0 %v41
  %v109 = vpop.f32.mrb[0].mxu0
  %v110 = vadd.f32 %v37, %v109
  %v111 = vpop.f32.mrb[0].mxu0
  %112 = vdwg.mxu0
  %v113 = vtanh.pop %v110
  %115 = vrot.lane.b32.xlu0 %v113, 64
  %v116 = vpop.permute.xlu0 %115
  %vm118 = vcmask 648704
  %119 = vst.msk [vmem:[%s5] sm:$0x3] %vm118, %v116
  %v120 = vld [vmem:[%s3] sm:$0xff]
  %v121 = vld [vmem:[%s3 + $0x8] sm:$0xff]
  %v122 = vld [vmem:[%s3 + $0x10] sm:$0xff]
  %v123 = vld [vmem:[%s3 + $0x18] sm:$0xff]
  %v124 = vld [vmem:[%s3 + $0x20] sm:$0xff]
  %v125 = vld [vmem:[%s3 + $0x28] sm:$0xff]
  %v126 = vld [vmem:[%s3 + $0x30] sm:$0xff]
  %v127 = vld [vmem:[%s3 + $0x38] sm:$0xff]
  %v128 = vld [vmem:[%s3 + $0x40] sm:$0xff]
  %v129 = vld [vmem:[%s3 + $0x48] sm:$0xff]
  %v130 = vld [vmem:[%s4] sm:$0x1]
  %v131 = vld [vmem:[%s5] sm:$0x3]
  %v133 = vlaneseq
  %v134 = vshrl.u32 %v133, 7
  %v135 = vsub.s32 0, %v134
  %v136 = vrot.slane %v130, %v135
  %vm138 = vcmask 654336
  %v140 = vsel %vm138, %v131, 0
  %142 = vmatprep.subr.mxu0 0.0
  %143 = vmatpush1.msra.mxu0 %v120
  %144 = vmatprep.subr.mxu0 0.0
  %145 = vmatpush1.msra.mxu0 %v121
  %146 = vmatprep.subr.mxu0 0.0
  %147 = vmatpush1.msra.mxu0 %v122
  %148 = vmatprep.subr.mxu0 0.0
  %149 = vmatpush1.msra.mxu0 %v123
  %150 = vmatprep.subr.mxu0 0.0
  %151 = vmatpush1.msra.mxu0 %v124
  %152 = vmatprep.subr.mxu0 0.0
  %153 = vmatpush1.msra.mxu0 %v125
  %154 = vmatprep.subr.mxu0 0.0
  %155 = vmatpush1.msra.mxu0 %v126
  %156 = vmatprep.subr.mxu0 0.0
  %157 = vmatpush1.msra.mxu0 %v127
  %158 = vmatprep.subr.mxu0 0.0
  %159 = vmatpush1.msra.mxu0 %v128
  %160 = vmatprep.subr.mxu0 0.0
  %161 = vmatpush1.msra.mxu0 %v129
  %162 = vmatprep.subr.mxu0 0.0
  %163 = vmatpush1.msra.mxu0 0.0
  %164 = vmatprep.subr.mxu0 0.0
  %165 = vmatpush1.msra.mxu0 0.0
  %166 = vmatprep.subr.mxu0 0.0
  %167 = vmatpush1.msra.mxu0 0.0
  %168 = vmatprep.subr.mxu0 0.0
  %169 = vmatpush1.msra.mxu0 0.0
  %170 = vmatprep.subr.mxu0 0.0
  %171 = vmatpush1.msra.mxu0 0.0
  %172 = vmatprep.subr.mxu0 0.0
  %173 = vmatpush1.msra.mxu0 0.0
  %174 = vmatprep.subr.mxu0 0.0
  %175 = vmatpush1.msra.mxu0 0.0
  %176 = vmatprep.subr.mxu0 0.0
  %177 = vmatpush1.msra.mxu0 0.0
  %178 = vmatprep.subr.mxu0 0.0
  %179 = vmatpush1.msra.mxu0 0.0
  %180 = vmatprep.subr.mxu0 0.0
  %181 = vmatpush1.msra.mxu0 0.0
  %182 = vmatprep.subr.mxu0 0.0
  %183 = vmatpush1.msra.mxu0 0.0
  %184 = vmatprep.subr.mxu0 0.0
  %185 = vmatpush1.msra.mxu0 0.0
  %186 = vmatprep.subr.mxu0 0.0
  %187 = vmatpush1.msra.mxu0 0.0
  %188 = vmatprep.subr.mxu0 0.0
  %189 = vmatpush1.msra.mxu0 0.0
  %190 = vmatprep.subr.mxu0 0.0
  %191 = vmatpush1.msra.mxu0 0.0
  %192 = vmatprep.subr.mxu0 0.0
  %193 = vmatpush1.msra.mxu0 0.0
  %194 = vmatprep.subr.mxu0 0.0
  %195 = vmatpush1.msra.mxu0 0.0
  %196 = vmatprep.subr.mxu0 0.0
  %197 = vmatpush1.msra.mxu0 0.0
  %198 = vmatprep.subr.mxu0 0.0
  %199 = vmatpush1.msra.mxu0 0.0
  %200 = vmatprep.subr.mxu0 0.0
  %201 = vmatpush1.msra.mxu0 0.0
  %202 = vmatprep.subr.mxu0 0.0
  %203 = vmatpush1.msra.mxu0 0.0
  %204 = vmatprep.subr.mxu0 0.0
  %205 = vmatpush1.msra.mxu0 0.0
  %206 = vmatprep.mubr.f32.mxu0 0.0
  %207 = vmatmul.mubr.f32.gmra.mrb[0].mxu0 %v140
  %v208 = vpop.f32.mrb[0].mxu0
  %v209 = vadd.f32 %v136, %v208
  %v210 = vpop.f32.mrb[0].mxu0
  %211 = vdwg.mxu0
  %v212 = vtanh.pop %v209
  %214 = vrot.lane.b32.xlu0 %v212, 80
  %v215 = vpop.permute.xlu0 %214
  %vm217 = vcmask 779904
  %218 = vst.msk [vmem:[%s5] sm:$0x3] %vm217, %v215
  // Predicated region
  $region22: #{bigmhc_core.4} parent=0 // pred_check
    _
  $region23: #{bigmhc_core.4} parent=0 // pred_check_branch
    %220 = sbr.rel (0) target = $region25
  $region24: #{bigmhc_core.4} parent=0 // pred_region
    _
  $region25: #{bigmhc_core.4} parent=0 // pred_fallthru
    _
  // Predicated region
  $region26: #{bigmhc_core.4} parent=0 // pred_check
    _
  $region27: #{bigmhc_core.4} parent=0 // pred_check_branch
    %222 = sbr.rel (0) target = $region29
  $region28: #{bigmhc_core.4} parent=0 // pred_region
    _
  $region29: #{bigmhc_core.4} parent=0 // pred_fallthru
    _

// kernel: bigmhc_core.7
$region0: #{bigmhc_core.7}
  #allocation0 [shape = 'u32[]', space=smem, size = 0x4, offset = 0x4, fixed_abs, tag = 'smem constant byte address 0x4 - core index']
  #allocation1 [shape = 'u32[144,128]{1,0:T(1,128)}', space=vmem, size = 0x12000, scoped, tag = 'internal scratch']
  #allocation2 [shape = 'f32[2,192]{1,0:T(2,128)}', space=vmem, size = 0x800, scoped, tag = 'scratch operand']
  #allocation3 [shape = 'f32[1,1]{1,0:T(1,128)S(1)}', space=vmem, size = 0x200, scoped, tag = 'scoped memory for bigmhc_core.7']
  %s0 = inlined_call_operand.vmem [shape: f32[2,160], index: 0, kind: input, shape index: {}]
  %s1 = inlined_call_operand.vmem [shape: f32[2,32], index: 1, kind: input, shape index: {}]
  %s2 = inlined_call_operand.vmem [shape: f32[160,16], index: 2, kind: input, shape index: {}]
  %s3 = inlined_call_operand.vmem [shape: f32[1,16], index: 3, kind: input, shape index: {}]
  %s4 = inlined_call_operand.vmem [shape: f32[176,16], index: 4, kind: input, shape index: {}]
  %s5 = inlined_call_operand.vmem [shape: f32[1,16], index: 5, kind: input, shape index: {}]
  %s6 = inlined_call_operand.vmem [shape: f32[192,32], index: 6, kind: input, shape index: {}]
  %s7 = inlined_call_operand.vmem [shape: f32[1,32], index: 7, kind: input, shape index: {}]
  %s8 = inlined_call_operand.vmem [shape: f32[1,32], index: 8, kind: input, shape index: {}]
  %s9 = inlined_call_operand.<no memory space> [shape: f32[1,1], index: 9, kind: input, shape index: {}]
  %s10 = inlined_call_operand.vmem [shape: f32[2,1], index: 10, kind: output, shape index: {0}]
  %s11 = inlined_call_operand.hbm [shape: f32[2,32], index: 11, kind: output, shape index: {1}]
  %12 = xla_tuple %s10, %s11
  %s13 = sld [smem:[#allocation0]]
  $region58: #{bigmhc_core.7} parent=0
    _
  %s15 = ssub.s32 1, %s13
  %s16 = scalar_select 0, %s15, %s13
  %v17 = vstv %s9
  %18 = vst [vmem:[#allocation3] sm:$0x1] %v17
  $region1: #{bigmhc_core.7} parent=0
    #allocation4 [shape = 'u8[1024]{0}', space=vmem, size = 0x400, scoped, tag = 'output window, operand 1, single buffered']
    #allocation5 [shape = 's32[1]{0}', space=sflag, size = 0x4, scoped, tag = 'scoped memory for bigmhc_core.7']
    %19 = vsyncpa [#allocation5], 0
    // Predicated region
    $region2: #{bigmhc_core.7} parent=1 // pred_check
      _
    $region3: #{bigmhc_core.7} parent=1 // pred_check_branch
      %21 = sbr.rel (0) target = $region5
    $region4: #{bigmhc_core.7} parent=1 // pred_region
      _
    $region5: #{bigmhc_core.7} parent=1 // pred_fallthru
      _
    // Predicated region
    $region6: #{bigmhc_core.7} parent=1 // pred_check
      _
    $region7: #{bigmhc_core.7} parent=1 // pred_check_branch
      %23 = sbr.rel (0) target = $region9
    $region8: #{bigmhc_core.7} parent=1 // pred_region
      _
    $region9: #{bigmhc_core.7} parent=1 // pred_fallthru
      _
    // Predicated region
    $region10: #{bigmhc_core.7} parent=1 // pred_check
      _
    $region11: #{bigmhc_core.7} parent=1 // pred_check_branch
      %25 = sbr.rel (0) target = $region13
    $region12: #{bigmhc_core.7} parent=1 // pred_region
      _
    $region13: #{bigmhc_core.7} parent=1 // pred_fallthru
      _
    // Predicated region
    $region14: #{bigmhc_core.7} parent=1 // pred_check
      _
    $region15: #{bigmhc_core.7} parent=1 // pred_check_branch
      %27 = sbr.rel (0) target = $region17
    $region16: #{bigmhc_core.7} parent=1 // pred_region
      _
    $region17: #{bigmhc_core.7} parent=1 // pred_fallthru
      _
    // Predicated region
    $region18: #{bigmhc_core.7} parent=1 // pred_check
      _
    $region19: #{bigmhc_core.7} parent=1 // pred_check_branch
      %29 = sbr.rel (0) target = $region21
    $region20: #{bigmhc_core.7} parent=1 // pred_region
      _
    $region21: #{bigmhc_core.7} parent=1 // pred_fallthru
      _
    // Predicated region
    $region22: #{bigmhc_core.7} parent=1 // pred_check
      _
    $region23: #{bigmhc_core.7} parent=1 // pred_check_branch
      %31 = sbr.rel (0) target = $region25
    $region24: #{bigmhc_core.7} parent=1 // pred_region
      _
    $region25: #{bigmhc_core.7} parent=1 // pred_fallthru
      _
    // Predicated region
    $region26: #{bigmhc_core.7} parent=1 // pred_check
      _
    $region27: #{bigmhc_core.7} parent=1 // pred_check_branch
      %33 = sbr.rel (0) target = $region29
    $region28: #{bigmhc_core.7} parent=1 // pred_region
      _
    $region29: #{bigmhc_core.7} parent=1 // pred_fallthru
      _
    // Predicated region
    $region30: #{bigmhc_core.7} parent=1 // pred_check
      _
    $region31: #{bigmhc_core.7} parent=1 // pred_check_branch
      %35 = sbr.rel (0) target = $region33
    $region32: #{bigmhc_core.7} parent=1 // pred_region
      _
    $region33: #{bigmhc_core.7} parent=1 // pred_fallthru
      _
    // Predicated region
    $region34: #{bigmhc_core.7} parent=1 // pred_check
      _
    $region35: #{bigmhc_core.7} parent=1 // pred_check_branch
      %37 = sbr.rel (0) target = $region37
    $region36: #{bigmhc_core.7} parent=1 // pred_region
      _
    $region37: #{bigmhc_core.7} parent=1 // pred_fallthru
      _
    // Predicated region
    $region38: #{bigmhc_core.7} parent=1 // pred_check
      _
    $region39: #{bigmhc_core.7} parent=1 // pred_check_branch
      %39 = sbr.rel (0) target = $region41
    $region40: #{bigmhc_core.7} parent=1 // pred_region
      _
    $region41: #{bigmhc_core.7} parent=1 // pred_fallthru
      _
    %v40 = vld [vmem:[%s0] sm:$0xf]
    %vm41 = vcmask 1041408
    %vm42 = vcmask 257026
    %vm43 = vmor %vm42, %vm41
    %44 = vst.msk [vmem:[#allocation2] sm:$0xf] %vm43, %v40
    %v45 = vld [vmem:[%s2] sm:$0xff]
    %v46 = vld [vmem:[%s2 + $0x8] sm:$0xff]
    %v47 = vld [vmem:[%s2 + $0x10] sm:$0xff]
    %v48 = vld [vmem:[%s2 + $0x18] sm:$0xff]
    %v49 = vld [vmem:[%s2 + $0x20] sm:$0xff]
    %v50 = vld [vmem:[%s2 + $0x28] sm:$0xff]
    %v51 = vld [vmem:[%s2 + $0x30] sm:$0xff]
    %v52 = vld [vmem:[%s2 + $0x38] sm:$0xff]
    %v53 = vld [vmem:[%s2 + $0x40] sm:$0xff]
    %v54 = vld [vmem:[%s2 + $0x48] sm:$0xff]
    %v55 = vld [vmem:[%s2 + $0x50] sm:$0xff]
    %v56 = vld [vmem:[%s2 + $0x58] sm:$0xff]
    %v57 = vld [vmem:[%s2 + $0x60] sm:$0xff]
    %v58 = vld [vmem:[%s2 + $0x68] sm:$0xff]
    %v59 = vld [vmem:[%s2 + $0x70] sm:$0xff]
    %v60 = vld [vmem:[%s2 + $0x78] sm:$0xff]
    %v61 = vld [vmem:[%s2 + $0x80] sm:$0xff]
    %v62 = vld [vmem:[%s2 + $0x88] sm:$0xff]
    %v63 = vld [vmem:[%s2 + $0x90] sm:$0xff]
    %v64 = vld [vmem:[%s2 + $0x98] sm:$0xff]
    %v65 = vld [vmem:[%s3] sm:$0x1]
    %v66 = vld [vmem:[#allocation2] sm:$0xf]
    %v68 = vlaneseq
    %v69 = vshrl.u32 %v68, 7
    %v70 = vsub.s32 0, %v69
    %v71 = vrot.slane %v65, %v70
    %v75 = vunpack.c.l.s4 1983009808
    %v76 = vunpack.c.0.s8 %v75
    %v77 = vlaneseq
    %v78 = vshrl.u32 %v77, 7
    %v79 = vsub.s32 %v76, %v78
    %v80 = vrot.slane %v66, %v79
    %v81 = vcombine.high %v80, %v80
    %vm83 = vcmask 261120
    %v84 = vsel %vm83, %v81, 0
    %86 = vmatprep.subr.mxu0 0.0
    %87 = vmatpush1.msra.mxu0 %v45
    %88 = vmatprep.subr.mxu0 0.0
    %89 = vmatpush1.msra.mxu0 %v46
    %90 = vmatprep.subr.mxu0 0.0
    %91 = vmatpush1.msra.mxu0 %v47
    %92 = vmatprep.subr.mxu0 0.0
    %93 = vmatpush1.msra.mxu0 %v48
    %94 = vmatprep.subr.mxu0 0.0
    %95 = vmatpush1.msra.mxu0 %v49
    %96 = vmatprep.subr.mxu0 0.0
    %97 = vmatpush1.msra.mxu0 %v50
    %98 = vmatprep.subr.mxu0 0.0
    %99 = vmatpush1.msra.mxu0 %v51
    %100 = vmatprep.subr.mxu0 0.0
    %101 = vmatpush1.msra.mxu0 %v52
    %102 = vmatprep.subr.mxu0 0.0
    %103 = vmatpush1.msra.mxu0 %v53
    %104 = vmatprep.subr.mxu0 0.0
    %105 = vmatpush1.msra.mxu0 %v54
    %106 = vmatprep.subr.mxu0 0.0
    %107 = vmatpush1.msra.mxu0 %v55
    %108 = vmatprep.subr.mxu0 0.0
    %109 = vmatpush1.msra.mxu0 %v56
    %110 = vmatprep.subr.mxu0 0.0
    %111 = vmatpush1.msra.mxu0 %v57
    %112 = vmatprep.subr.mxu0 0.0
    %113 = vmatpush1.msra.mxu0 %v58
    %114 = vmatprep.subr.mxu0 0.0
    %115 = vmatpush1.msra.mxu0 %v59
    %116 = vmatprep.subr.mxu0 0.0
    %117 = vmatpush1.msra.mxu0 %v60
    %118 = vmatprep.subr.mxu0 0.0
    %119 = vmatpush1.msra.mxu0 %v61
    %120 = vmatprep.subr.mxu0 0.0
    %121 = vmatpush1.msra.mxu0 %v62
    %122 = vmatprep.subr.mxu0 0.0
    %123 = vmatpush1.msra.mxu0 %v63
    %124 = vmatprep.subr.mxu0 0.0
    %125 = vmatpush1.msra.mxu0 %v64
    %126 = vmatprep.subr.mxu0 0.0
    %127 = vmatpush1.msra.mxu0 0.0
    %128 = vmatprep.subr.mxu0 0.0
    %129 = vmatpush1.msra.mxu0 0.0
    %130 = vmatprep.subr.mxu0 0.0
    %131 = vmatpush1.msra.mxu0 0.0
    %132 = vmatprep.subr.mxu0 0.0
    %133 = vmatpush1.msra.mxu0 0.0
    %134 = vmatprep.subr.mxu0 0.0
    %135 = vmatpush1.msra.mxu0 0.0
    %136 = vmatprep.subr.mxu0 0.0
    %137 = vmatpush1.msra.mxu0 0.0
    %138 = vmatprep.subr.mxu0 0.0
    %139 = vmatpush1.msra.mxu0 0.0
    %140 = vmatprep.subr.mxu0 0.0
    %141 = vmatpush1.msra.mxu0 0.0
    %142 = vmatprep.subr.mxu0 0.0
    %143 = vmatpush1.msra.mxu0 0.0
    %144 = vmatprep.subr.mxu0 0.0
    %145 = vmatpush1.msra.mxu0 0.0
    %146 = vmatprep.subr.mxu0 0.0
    %147 = vmatpush1.msra.mxu0 0.0
    %148 = vmatprep.subr.mxu0 0.0
    %149 = vmatpush1.msra.mxu0 0.0
    %150 = vmatprep.mubr.f32.mxu0 %v84
    %151 = vmatmul.mubr.f32.gmra.mrb[0].mxu0 %v80
    %v152 = vpop.f32.mrb[0].mxu0
    %v153 = vadd.f32 %v71, %v152
    %v154 = vpop.f32.mrb[0].mxu0
    %155 = vdwg.mxu0
    %v156 = vtanh.pop %v153
    %v159 = vunpack.c.l.s4 1983009808
    %v160 = vunpack.c.0.s8 %v159
    %v161 = vlaneseq
    %v162 = vshrl.u32 %v161, 7
    %v163 = vsub.s32 %v160, %v162
    %v164 = vrot.slane %v156, %v163
    %165 = vrot.lane.b32.xlu0 %v164, 32
    %v166 = vpop.permute.xlu0 %165
    %vm168 = vcmask 386304
    %169 = vst.msk [vmem:[#allocation2 + $0x2] sm:$0x3] %vm168, %v166
    %v170 = vld [vmem:[%s4] sm:$0xff]
    %v171 = vld [vmem:[%s4 + $0x8] sm:$0xff]
    %v172 = vld [vmem:[%s4 + $0x10] sm:$0xff]
    %v173 = vld [vmem:[%s4 + $0x18] sm:$0xff]
    %v174 = vld [vmem:[%s4 + $0x20] sm:$0xff]
    %v175 = vld [vmem:[%s4 + $0x28] sm:$0xff]
    %v176 = vld [vmem:[%s4 + $0x30] sm:$0xff]
    %v177 = vld [vmem:[%s4 + $0x38] sm:$0xff]
    %v178 = vld [vmem:[%s4 + $0x40] sm:$0xff]
    %v179 = vld [vmem:[%s4 + $0x48] sm:$0xff]
    %v180 = vld [vmem:[%s4 + $0x50] sm:$0xff]
    %v181 = vld [vmem:[%s4 + $0x58] sm:$0xff]
    %v182 = vld [vmem:[%s4 + $0x60] sm:$0xff]
    %v183 = vld [vmem:[%s4 + $0x68] sm:$0xff]
    %v184 = vld [vmem:[%s4 + $0x70] sm:$0xff]
    %v185 = vld [vmem:[%s4 + $0x78] sm:$0xff]
    %v186 = vld [vmem:[%s4 + $0x80] sm:$0xff]
    %v187 = vld [vmem:[%s4 + $0x88] sm:$0xff]
    %v188 = vld [vmem:[%s4 + $0x90] sm:$0xff]
    %v189 = vld [vmem:[%s4 + $0x98] sm:$0xff]
    %v190 = vld [vmem:[%s4 + $0xa0] sm:$0xff]
    %v191 = vld [vmem:[%s4 + $0xa8] sm:$0xff]
    %v192 = vld [vmem:[%s5] sm:$0x1]
    %v193 = vld [vmem:[#allocation2] sm:$0xf]
    %v195 = vlaneseq
    %v196 = vshrl.u32 %v195, 7
    %v197 = vsub.s32 0, %v196
    %v198 = vrot.slane %v192, %v197
    %v202 = vunpack.c.l.s4 1983009808
    %v203 = vunpack.c.0.s8 %v202
    %v204 = vlaneseq
    %v205 = vshrl.u32 %v204, 7
    %v206 = vsub.s32 %v203, %v205
    %v207 = vrot.slane %v193, %v206
    %v208 = vcombine.high %v207, %v207
    %vm210 = vcmask 392192
    %v211 = vsel %vm210, %v208, 0
    %213 = vmatprep.subr.mxu0 0.0
    %214 = vmatpush1.msra.mxu0 %v170
    %215 = vmatprep.subr.mxu0 0.0
    %216 = vmatpush1.msra.mxu0 %v171
    %217 = vmatprep.subr.mxu0 0.0
    %218 = vmatpush1.msra.mxu0 %v172
    %219 = vmatprep.subr.mxu0 0.0
    %220 = vmatpush1.msra.mxu0 %v173
    %221 = vmatprep.subr.mxu0 0.0
    %222 = vmatpush1.msra.mxu0 %v174
    %223 = vmatprep.subr.mxu0 0.0
    %224 = vmatpush1.msra.mxu0 %v175
    %225 = vmatprep.subr.mxu0 0.0
    %226 = vmatpush1.msra.mxu0 %v176
    %227 = vmatprep.subr.mxu0 0.0
    %228 = vmatpush1.msra.mxu0 %v177
    %229 = vmatprep.subr.mxu0 0.0
    %230 = vmatpush1.msra.mxu0 %v178
    %231 = vmatprep.subr.mxu0 0.0
    %232 = vmatpush1.msra.mxu0 %v179
    %233 = vmatprep.subr.mxu0 0.0
    %234 = vmatpush1.msra.mxu0 %v180
    %235 = vmatprep.subr.mxu0 0.0
    %236 = vmatpush1.msra.mxu0 %v181
    %237 = vmatprep.subr.mxu0 0.0
    %238 = vmatpush1.msra.mxu0 %v182
    %239 = vmatprep.subr.mxu0 0.0
    %240 = vmatpush1.msra.mxu0 %v183
    %241 = vmatprep.subr.mxu0 0.0
    %242 = vmatpush1.msra.mxu0 %v184
    %243 = vmatprep.subr.mxu0 0.0
    %244 = vmatpush1.msra.mxu0 %v185
    %245 = vmatprep.subr.mxu0 0.0
    %246 = vmatpush1.msra.mxu0 %v186
    %247 = vmatprep.subr.mxu0 0.0
    %248 = vmatpush1.msra.mxu0 %v187
    %249 = vmatprep.subr.mxu0 0.0
    %250 = vmatpush1.msra.mxu0 %v188
    %251 = vmatprep.subr.mxu0 0.0
    %252 = vmatpush1.msra.mxu0 %v189
    %253 = vmatprep.subr.mxu0 0.0
    %254 = vmatpush1.msra.mxu0 %v190
    %255 = vmatprep.subr.mxu0 0.0
    %256 = vmatpush1.msra.mxu0 %v191
    %257 = vmatprep.subr.mxu0 0.0
    %258 = vmatpush1.msra.mxu0 0.0
    %259 = vmatprep.subr.mxu0 0.0
    %260 = vmatpush1.msra.mxu0 0.0
    %261 = vmatprep.subr.mxu0 0.0
    %262 = vmatpush1.msra.mxu0 0.0
    %263 = vmatprep.subr.mxu0 0.0
    %264 = vmatpush1.msra.mxu0 0.0
    %265 = vmatprep.subr.mxu0 0.0
    %266 = vmatpush1.msra.mxu0 0.0
    %267 = vmatprep.subr.mxu0 0.0
    %268 = vmatpush1.msra.mxu0 0.0
    %269 = vmatprep.subr.mxu0 0.0
    %270 = vmatpush1.msra.mxu0 0.0
    %271 = vmatprep.subr.mxu0 0.0
    %272 = vmatpush1.msra.mxu0 0.0
    %273 = vmatprep.subr.mxu0 0.0
    %274 = vmatpush1.msra.mxu0 0.0
    %275 = vmatprep.subr.mxu0 0.0
    %276 = vmatpush1.msra.mxu0 0.0
    %277 = vmatprep.mubr.f32.mxu0 %v211
    %278 = vmatmul.mubr.f32.gmra.mrb[0].mxu0 %v207
    %v279 = vpop.f32.mrb[0].mxu0
    %v280 = vadd.f32 %v198, %v279
    %v281 = vpop.f32.mrb[0].mxu0
    %282 = vdwg.mxu0
    %v283 = vtanh.pop %v280
    %v286 = vunpack.c.l.s4 1983009808
    %v287 = vunpack.c.0.s8 %v286
    %v288 = vlaneseq
    %v289 = vshrl.u32 %v288, 7
    %v290 = vsub.s32 %v287, %v289
    %v291 = vrot.slane %v283, %v290
    %292 = vrot.lane.b32.xlu0 %v291, 48
    %v293 = vpop.permute.xlu0 %292
    %vm295 = vcmask 517504
    %296 = vst.msk [vmem:[#allocation2 + $0x2] sm:$0x3] %vm295, %v293
    %v297 = vld [vmem:[#allocation2] sm:$0xf]
    %v298 = vld [vmem:[%s6] sm:$0xff]
    %v299 = vld [vmem:[%s6 + $0x8] sm:$0xff]
    %v300 = vld [vmem:[%s6 + $0x10] sm:$0xff]
    %v301 = vld [vmem:[%s6 + $0x18] sm:$0xff]
    %v302 = vld [vmem:[%s6 + $0x20] sm:$0xff]
    %v303 = vld [vmem:[%s6 + $0x28] sm:$0xff]
    %v304 = vld [vmem:[%s6 + $0x30] sm:$0xff]
    %v305 = vld [vmem:[%s6 + $0x38] sm:$0xff]
    %v306 = vld [vmem:[%s6 + $0x40] sm:$0xff]
    %v307 = vld [vmem:[%s6 + $0x48] sm:$0xff]
    %v308 = vld [vmem:[%s6 + $0x50] sm:$0xff]
    %v309 = vld [vmem:[%s6 + $0x58] sm:$0xff]
    %v310 = vld [vmem:[%s6 + $0x60] sm:$0xff]
    %v311 = vld [vmem:[%s6 + $0x68] sm:$0xff]
    %v312 = vld [vmem:[%s6 + $0x70] sm:$0xff]
    %v313 = vld [vmem:[%s6 + $0x78] sm:$0xff]
    %v314 = vld [vmem:[%s6 + $0x80] sm:$0xff]
    %v315 = vld [vmem:[%s6 + $0x88] sm:$0xff]
    %v316 = vld [vmem:[%s6 + $0x90] sm:$0xff]
    %v317 = vld [vmem:[%s6 + $0x98] sm:$0xff]
    %v318 = vld [vmem:[%s6 + $0xa0] sm:$0xff]
    %v319 = vld [vmem:[%s6 + $0xa8] sm:$0xff]
    %v320 = vld [vmem:[%s6 + $0xb0] sm:$0xff]
    %v321 = vld [vmem:[%s6 + $0xb8] sm:$0xff]
    %v322 = vld [vmem:[%s7] sm:$0x1]
    %v324 = vlaneseq
    %v325 = vshrl.u32 %v324, 7
    %v326 = vsub.s32 0, %v325
    %v327 = vrot.slane %v322, %v326
    %v331 = vunpack.c.l.s4 1983009808
    %v332 = vunpack.c.0.s8 %v331
    %v333 = vlaneseq
    %v334 = vshrl.u32 %v333, 7
    %v335 = vsub.s32 %v332, %v334
    %v336 = vrot.slane %v297, %v335
    %v337 = vcombine.high %v336, %v336
    %vm339 = vcmask 523264
    %v340 = vsel %vm339, %v337, 0
    %342 = vmatprep.subr.mxu0 0.0
    %343 = vmatpush1.msra.mxu0 %v298
    %344 = vmatprep.subr.mxu0 0.0
    %345 = vmatpush1.msra.mxu0 %v299
    %346 = vmatprep.subr.mxu0 0.0
    %347 = vmatpush1.msra.mxu0 %v300
    %348 = vmatprep.subr.mxu0 0.0
    %349 = vmatpush1.msra.mxu0 %v301
    %350 = vmatprep.subr.mxu0 0.0
    %351 = vmatpush1.msra.mxu0 %v302
    %352 = vmatprep.subr.mxu0 0.0
    %353 = vmatpush1.msra.mxu0 %v303
    %354 = vmatprep.subr.mxu0 0.0
    %355 = vmatpush1.msra.mxu0 %v304
    %356 = vmatprep.subr.mxu0 0.0
    %357 = vmatpush1.msra.mxu0 %v305
    %358 = vmatprep.subr.mxu0 0.0
    %359 = vmatpush1.msra.mxu0 %v306
    %360 = vmatprep.subr.mxu0 0.0
    %361 = vmatpush1.msra.mxu0 %v307
    %362 = vmatprep.subr.mxu0 0.0
    %363 = vmatpush1.msra.mxu0 %v308
    %364 = vmatprep.subr.mxu0 0.0
    %365 = vmatpush1.msra.mxu0 %v309
    %366 = vmatprep.subr.mxu0 0.0
    %367 = vmatpush1.msra.mxu0 %v310
    %368 = vmatprep.subr.mxu0 0.0
    %369 = vmatpush1.msra.mxu0 %v311
    %370 = vmatprep.subr.mxu0 0.0
    %371 = vmatpush1.msra.mxu0 %v312
    %372 = vmatprep.subr.mxu0 0.0
    %373 = vmatpush1.msra.mxu0 %v313
    %374 = vmatprep.subr.mxu0 0.0
    %375 = vmatpush1.msra.mxu0 %v314
    %376 = vmatprep.subr.mxu0 0.0
    %377 = vmatpush1.msra.mxu0 %v315
    %378 = vmatprep.subr.mxu0 0.0
    %379 = vmatpush1.msra.mxu0 %v316
    %380 = vmatprep.subr.mxu0 0.0
    %381 = vmatpush1.msra.mxu0 %v317
    %382 = vmatprep.subr.mxu0 0.0
    %383 = vmatpush1.msra.mxu0 %v318
    %384 = vmatprep.subr.mxu0 0.0
    %385 = vmatpush1.msra.mxu0 %v319
    %386 = vmatprep.subr.mxu0 0.0
    %387 = vmatpush1.msra.mxu0 %v320
    %388 = vmatprep.subr.mxu0 0.0
    %389 = vmatpush1.msra.mxu0 %v321
    %390 = vmatprep.subr.mxu0 0.0
    %391 = vmatpush1.msra.mxu0 0.0
    %392 = vmatprep.subr.mxu0 0.0
    %393 = vmatpush1.msra.mxu0 0.0
    %394 = vmatprep.subr.mxu0 0.0
    %395 = vmatpush1.msra.mxu0 0.0
    %396 = vmatprep.subr.mxu0 0.0
    %397 = vmatpush1.msra.mxu0 0.0
    %398 = vmatprep.subr.mxu0 0.0
    %399 = vmatpush1.msra.mxu0 0.0
    %400 = vmatprep.subr.mxu0 0.0
    %401 = vmatpush1.msra.mxu0 0.0
    %402 = vmatprep.subr.mxu0 0.0
    %403 = vmatpush1.msra.mxu0 0.0
    %404 = vmatprep.subr.mxu0 0.0
    %405 = vmatpush1.msra.mxu0 0.0
    %406 = vmatprep.mubr.f32.mxu0 %v340
    %407 = vmatmul.mubr.f32.gmra.mrb[0].mxu0 %v336
    %v408 = vpop.f32.mrb[0].mxu0
    %v409 = vadd.f32 %v327, %v408
    %v410 = vpop.f32.mrb[0].mxu0
    %411 = vdwg.mxu0
    %v412 = vld [vmem:[%s8] sm:$0x1]
    %v414 = vlaneseq
    %v415 = vshrl.u32 %v414, 7
    %v416 = vsub.s32 0, %v415
    %v417 = vrot.slane %v412, %v416
    %v419 = vmul.f32 %v417, %v409
    %v420 = vld [vmem:[%s1] sm:$0x3]
    %vm421 = vcmp.ne.f32.partialorder %v420, 0.0
    %v422 = vsel %vm421, 1, 0
    %v423 = vcvt.s32.f32 %v422
    %v424 = vmul.f32 %v419, %v423
    %vm425 = vcmask 254976
    %426 = vst.msk [vmem:[#allocation4] sm:$0x3] %vm425, %v424
    %v427 = vsel %vm425, %v424, 0.0
    %428 = vadd.xlane.f32.xlu0 %v427
    %v429 = vpop.xlane.xlu0 %428
    %v430 = vld [vmem:[#allocation3] sm:$0x1]
    %v432 = vlaneseq
    %v433 = vshrl.u32 %v432, 7
    %v434 = vsub.s32 0, %v433
    %v435 = vrot.slane %v430, %v434
    %v437 = vadd.f32 %v429, %v435
    %v438 = vxor.u32 %v437, 2147483648
    %v439 = vmul.f32 %v438, 1.442695
    %v440 = vpow.pop %v439
    %v441 = vadd.f32 %v440, 1.0
    %v442 = vrcp.pop %v441
    %v443 = vmul.f32 1.0, %v442
    %vm444 = vcmask 1024
    %445 = vst.msk [vmem:[%s10] sm:$0x3] %vm444, %v443
    // Predicated region
    $region42: #{bigmhc_core.7} parent=1 // pred_check
      _
    $region43: #{bigmhc_core.7} parent=1 // pred_check_branch
      %447 = sbr.rel (0) target = $region45
    $region44: #{bigmhc_core.7} parent=1 // pred_region
      _
    $region45: #{bigmhc_core.7} parent=1 // pred_fallthru
      _
    // Predicated region
    $region46: #{bigmhc_core.7} parent=1 // pred_check
      _
    $region47: #{bigmhc_core.7} parent=1 // pred_check_branch
      %449 = sbr.rel (0) target = $region49
    $region48: #{bigmhc_core.7} parent=1 // pred_region
      %s451 = ssub.s32 32, 32
      %452 = vsyncadd [#allocation5], %s451
      %s454 = sshll.u32 [#allocation4], 4
      %s455 = int_to_ptr.vmem [resolvable:$true] %s454
      %457 = dma.vmem_to_hbm [thread:$0]  %s455, 32, %s11, [#allocation5]
    $region49: #{bigmhc_core.7} parent=1 // pred_fallthru
      _
    // Predicated region
    $region50: #{bigmhc_core.7} parent=1 // pred_check
      _
    $region51: #{bigmhc_core.7} parent=1 // pred_check_branch
      %459 = sbr.rel (0) target = $region53
    $region52: #{bigmhc_core.7} parent=1 // pred_region
      _
    $region53: #{bigmhc_core.7} parent=1 // pred_fallthru
      _
    // Predicated region
    $region54: #{bigmhc_core.7} parent=1 // pred_check
      _
    $region55: #{bigmhc_core.7} parent=1 // pred_check_branch
      %461 = sbr.rel (0) target = $region57
    $region56: #{bigmhc_core.7} parent=1 // pred_region
      %462 = dma.done [#allocation5], 32
    $region57: #{bigmhc_core.7} parent=1 // pred_fallthru
      _
    %463 = vsyncpa [#allocation5], 1

// kernel: bigmhc_core.6
$region0: #{bigmhc_core.6}
  #allocation0 [shape = 'u32[]', space=smem, size = 0x4, offset = 0x4, fixed_abs, tag = 'smem constant byte address 0x4 - core index']
  #allocation1 [shape = 'u32[144,128]{1,0:T(1,128)}', space=vmem, size = 0x12000, scoped, tag = 'internal scratch']
  %s0 = inlined_call_operand.vmem [shape: f32[2,3,64], index: 0, kind: input, shape index: {}]
  %s1 = inlined_call_operand.hbm [shape: f32[64,192], index: 1, kind: input, shape index: {}]
  %s2 = inlined_call_operand.vmem [shape: f32[1,192], index: 2, kind: input, shape index: {}]
  %s3 = inlined_call_operand.vmem [shape: f32[64,64], index: 3, kind: input, shape index: {}]
  %s4 = inlined_call_operand.vmem [shape: f32[1,64], index: 4, kind: input, shape index: {}]
  %s5 = inlined_call_operand.hbm [shape: f32[64,128], index: 5, kind: input, shape index: {}]
  %s6 = inlined_call_operand.vmem [shape: f32[1,128], index: 6, kind: input, shape index: {}]
  %s7 = inlined_call_operand.hbm [shape: f32[32,128], index: 7, kind: input, shape index: {}]
  %s8 = inlined_call_operand.hbm [shape: f32[96,288], index: 8, kind: input, shape index: {}]
  %s9 = inlined_call_operand.vmem [shape: f32[1,288], index: 9, kind: input, shape index: {}]
  %s10 = inlined_call_operand.vmem [shape: f32[96,96], index: 10, kind: input, shape index: {}]
  %s11 = inlined_call_operand.vmem [shape: f32[1,96], index: 11, kind: input, shape index: {}]
  %s12 = inlined_call_operand.hbm [shape: f32[96,128], index: 12, kind: input, shape index: {}]
  %s13 = inlined_call_operand.vmem [shape: f32[1,128], index: 13, kind: input, shape index: {}]
  %s14 = inlined_call_operand.vmem [shape: f32[32,128], index: 14, kind: input, shape index: {}]
  %s15 = inlined_call_operand.vmem [shape: f32[2,32], index: 15, kind: output, shape index: {}]
  %s16 = sld [smem:[#allocation0]]
  $region90: #{bigmhc_core.6} parent=0
    _
  %s18 = ssub.s32 1, %s16
  %s19 = scalar_select 0, %s18, %s16
  $region1: #{bigmhc_core.6} parent=0
    #allocation2 [shape = 'u8[65536]{0}', space=vmem, size = 0x10000, scoped, tag = 'input window, operand 1, single buffered']
    #allocation3 [shape = 's32[1]{0}', space=sflag, size = 0x4, scoped, tag = 'scoped memory for bigmhc_core.6']
    #allocation4 [shape = 'u8[32768]{0}', space=vmem, size = 0x8000, scoped, tag = 'input window, operand 5, single buffered']
    #allocation5 [shape = 's32[1]{0}', space=sflag, size = 0x4, scoped, tag = 'scoped memory for bigmhc_core.6']
    #allocation6 [shape = 'u8[16384]{0}', space=vmem, size = 0x4000, scoped, tag = 'input window, operand 7, single buffered']
    #allocation7 [shape = 'u8[147456]{0}', space=vmem, size = 0x24000, scoped, tag = 'input window, operand 8, single buffered']
    #allocation8 [shape = 's32[1]{0}', space=sflag, size = 0x4, scoped, tag = 'scoped memory for bigmhc_core.6']
    #allocation9 [shape = 'u8[49152]{0}', space=vmem, size = 0xc000, scoped, tag = 'input window, operand 12, single buffered']
    %20 = vsyncpa [#allocation3], 0
    %21 = vsyncpa [#allocation5], 0
    %22 = vsyncpa [#allocation8], 0
    // Predicated region
    $region2: #{bigmhc_core.6} parent=1 // pred_check
      _
    $region3: #{bigmhc_core.6} parent=1 // pred_check_branch
      %24 = sbr.rel (0) target = $region5
    $region4: #{bigmhc_core.6} parent=1 // pred_region
      _
    $region5: #{bigmhc_core.6} parent=1 // pred_fallthru
      _
    // Predicated region
    $region6: #{bigmhc_core.6} parent=1 // pred_check
      _
    $region7: #{bigmhc_core.6} parent=1 // pred_check_branch
      %26 = sbr.rel (0) target = $region9
    $region8: #{bigmhc_core.6} parent=1 // pred_region
      %s28 = ssub.s32 2048, 2048
      %29 = vsyncadd [#allocation3], %s28
      %s30 = sshll.u32 [#allocation2], 4
      %s31 = int_to_ptr.vmem [resolvable:$true] %s30
      %36 = dma.hbm_to_vmem [thread:$0]  %s1, 2048, %s31, [#allocation3], 256, 256, 16
    $region9: #{bigmhc_core.6} parent=1 // pred_fallthru
      _
    // Predicated region
    $region10: #{bigmhc_core.6} parent=1 // pred_check
      _
    $region11: #{bigmhc_core.6} parent=1 // pred_check_branch
      %38 = sbr.rel (0) target = $region13
    $region12: #{bigmhc_core.6} parent=1 // pred_region
      _
    $region13: #{bigmhc_core.6} parent=1 // pred_fallthru
      _
    // Predicated region
    $region14: #{bigmhc_core.6} parent=1 // pred_check
      _
    $region15: #{bigmhc_core.6} parent=1 // pred_check_branch
      %40 = sbr.rel (0) target = $region17
    $region16: #{bigmhc_core.6} parent=1 // pred_region
      _
    $region17: #{bigmhc_core.6} parent=1 // pred_fallthru
      _
    // Predicated region
    $region18: #{bigmhc_core.6} parent=1 // pred_check
      _
    $region19: #{bigmhc_core.6} parent=1 // pred_check_branch
      %42 = sbr.rel (0) target = $region21
    $region20: #{bigmhc_core.6} parent=1 // pred_region
      _
    $region21: #{bigmhc_core.6} parent=1 // pred_fallthru
      _
    // Predicated region
    $region22: #{bigmhc_core.6} parent=1 // pred_check
      _
    $region23: #{bigmhc_core.6} parent=1 // pred_check_branch
      %44 = sbr.rel (0) target = $region25
    $region24: #{bigmhc_core.6} parent=1 // pred_region
      %s46 = ssub.s32 1024, 1024
      %47 = vsyncadd [#allocation5], %s46
      %s48 = sshll.u32 [#allocation4], 4
      %s49 = int_to_ptr.vmem [resolvable:$true] %s48
      %54 = dma.hbm_to_vmem [thread:$0]  %s5, 1024, %s49, [#allocation5], 128, 128, 8
    $region25: #{bigmhc_core.6} parent=1 // pred_fallthru
      _
    // Predicated region
    $region26: #{bigmhc_core.6} parent=1 // pred_check
      _
    $region27: #{bigmhc_core.6} parent=1 // pred_check_branch
      %56 = sbr.rel (0) target = $region29
    $region28: #{bigmhc_core.6} parent=1 // pred_region
      _
    $region29: #{bigmhc_core.6} parent=1 // pred_fallthru
      _
    // Predicated region
    $region30: #{bigmhc_core.6} parent=1 // pred_check
      _
    $region31: #{bigmhc_core.6} parent=1 // pred_check_branch
      %58 = sbr.rel (0) target = $region33
    $region32: #{bigmhc_core.6} parent=1 // pred_region
      %s60 = ssub.s32 512, 512
      %61 = vsyncadd [#allocation5], %s60
      %s62 = sshll.u32 [#allocation6], 4
      %s63 = int_to_ptr.vmem [resolvable:$true] %s62
      %68 = dma.hbm_to_vmem [thread:$0]  %s7, 512, %s63, [#allocation5], 128, 128, 8
    $region33: #{bigmhc_core.6} parent=1 // pred_fallthru
      _
    // Predicated region
    $region34: #{bigmhc_core.6} parent=1 // pred_check
      _
    $region35: #{bigmhc_core.6} parent=1 // pred_check_branch
      %70 = sbr.rel (0) target = $region37
    $region36: #{bigmhc_core.6} parent=1 // pred_region
      %s72 = ssub.s32 4608, 4608
      %73 = vsyncadd [#allocation8], %s72
      %s74 = sshll.u32 [#allocation7], 4
      %s75 = int_to_ptr.vmem [resolvable:$true] %s74
      %80 = dma.hbm_to_vmem [thread:$0]  %s8, 4608, %s75, [#allocation8], 384, 384, 24
    $region37: #{bigmhc_core.6} parent=1 // pred_fallthru
      _
    // Predicated region
    $region38: #{bigmhc_core.6} parent=1 // pred_check
      _
    $region39: #{bigmhc_core.6} parent=1 // pred_check_branch
      %82 = sbr.rel (0) target = $region41
    $region40: #{bigmhc_core.6} parent=1 // pred_region
      _
    $region41: #{bigmhc_core.6} parent=1 // pred_fallthru
      _
    // Predicated region
    $region42: #{bigmhc_core.6} parent=1 // pred_check
      _
    $region43: #{bigmhc_core.6} parent=1 // pred_check_branch
      %84 = sbr.rel (0) target = $region45
    $region44: #{bigmhc_core.6} parent=1 // pred_region
      _
    $region45: #{bigmhc_core.6} parent=1 // pred_fallthru
      _
    // Predicated region
    $region46: #{bigmhc_core.6} parent=1 // pred_check
      _
    $region47: #{bigmhc_core.6} parent=1 // pred_check_branch
      %86 = sbr.rel (0) target = $region49
    $region48: #{bigmhc_core.6} parent=1 // pred_region
      _
    $region49: #{bigmhc_core.6} parent=1 // pred_fallthru
      _
    // Predicated region
    $region50: #{bigmhc_core.6} parent=1 // pred_check
      _
    $region51: #{bigmhc_core.6} parent=1 // pred_check_branch
      %88 = sbr.rel (0) target = $region53
    $region52: #{bigmhc_core.6} parent=1 // pred_region
      %s90 = ssub.s32 1536, 1536
      %91 = vsyncadd [#allocation8], %s90
      %s92 = sshll.u32 [#allocation9], 4
      %s93 = int_to_ptr.vmem [resolvable:$true] %s92
      %98 = dma.hbm_to_vmem [thread:$0]  %s12, 1536, %s93, [#allocation8], 128, 128, 8
    $region53: #{bigmhc_core.6} parent=1 // pred_fallthru
      _
    // Predicated region
    $region54: #{bigmhc_core.6} parent=1 // pred_check
      _
    $region55: #{bigmhc_core.6} parent=1 // pred_check_branch
      %100 = sbr.rel (0) target = $region57
    $region56: #{bigmhc_core.6} parent=1 // pred_region
      _
    $region57: #{bigmhc_core.6} parent=1 // pred_fallthru
      _
    // Predicated region
    $region58: #{bigmhc_core.6} parent=1 // pred_check
      _
    $region59: #{bigmhc_core.6} parent=1 // pred_check_branch
      %102 = sbr.rel (0) target = $region61
    $region60: #{bigmhc_core.6} parent=1 // pred_region
      _
    $region61: #{bigmhc_core.6} parent=1 // pred_fallthru
      _
    // Predicated region
    $region62: #{bigmhc_core.6} parent=1 // pred_check
      _
    $region63: #{bigmhc_core.6} parent=1 // pred_check_branch
      %104 = sbr.rel (0) target = $region65
    $region64: #{bigmhc_core.6} parent=1 // pred_region
      %105 = dma.done [#allocation3], 2048
    $region65: #{bigmhc_core.6} parent=1 // pred_fallthru
      _
    // Predicated region
    $region66: #{bigmhc_core.6} parent=1 // pred_check
      _
    $region67: #{bigmhc_core.6} parent=1 // pred_check_branch
      %107 = sbr.rel (0) target = $region69
    $region68: #{bigmhc_core.6} parent=1 // pred_region
      %108 = dma.done [#allocation5], 1024
    $region69: #{bigmhc_core.6} parent=1 // pred_fallthru
      _
    // Predicated region
    $region70: #{bigmhc_core.6} parent=1 // pred_check
      _
    $region71: #{bigmhc_core.6} parent=1 // pred_check_branch
      %110 = sbr.rel (0) target = $region73
    $region72: #{bigmhc_core.6} parent=1 // pred_region
      %111 = dma.done [#allocation5], 512
    $region73: #{bigmhc_core.6} parent=1 // pred_fallthru
      _
    // Predicated region
    $region74: #{bigmhc_core.6} parent=1 // pred_check
      _
    $region75: #{bigmhc_core.6} parent=1 // pred_check_branch
      %113 = sbr.rel (0) target = $region77
    $region76: #{bigmhc_core.6} parent=1 // pred_region
      %114 = dma.done [#allocation8], 4608
    $region77: #{bigmhc_core.6} parent=1 // pred_fallthru
      _
    // Predicated region
    $region78: #{bigmhc_core.6} parent=1 // pred_check
      _
    $region79: #{bigmhc_core.6} parent=1 // pred_check_branch
      %116 = sbr.rel (0) target = $region81
    $region80: #{bigmhc_core.6} parent=1 // pred_region
      %117 = dma.done [#allocation8], 1536
    $region81: #{bigmhc_core.6} parent=1 // pred_fallthru
      _
    %v118 = vld [vmem:[%s0] sm:$0x7]
    %v119 = vld [vmem:[%s0 + $0x4] sm:$0x7]
    %v120 = vlaneseq
    %v121 = vand.u32 %v120, 127
    %vm122 = vcmp.lt.s32.totalorder %v121, 0
    %v123 = vsub.s32 0, %v121
    %v124 = vsel %vm122, %v123, %v121
    %v125 = vshrl.u32 %v124, 5
    %v126 = vand.u32 %v124, 31
    %v127 = vsub.s32 0, %v126
    %v128 = vsel %vm122, %v127, %v126
    %vm129 = vcmp.ne.s32.totalorder %v128, 0
    %vm130 = vcmp.lt.s32.totalorder %v128, 0
    %vm131 = vmand %vm130, %vm129
    %v132 = vadd.s32 %v128, 32
    %v133 = vsel %vm131, %v132, %v128
    %vm134 = vcmp.lt.s32.totalorder %v133, 16
    %vm135 = vcmp.ge.s32.totalorder %v121, 64
    %vm136 = vcmp.lt.s32.totalorder %v121, 96
    %vm137 = vmand %vm135, %vm136
    %vm138 = vcmp.lt.s32.totalorder %v121, 16
    %v142 = vunpack.c.l.s4 1966171168
    %v143 = vunpack.c.0.s8 %v142
    %v144 = vlaneseq
    %v145 = vshrl.u32 %v144, 7
    %v146 = vsub.s32 %v143, %v145
    %v147 = vrot.slane %v118, %v146
    %v148 = vcombine.high %v147, %v147
    %v150 = vunpack.c.l.s4 1966171168
    %v151 = vunpack.c.0.s8 %v150
    %v152 = vlaneseq
    %v153 = vshrl.u32 %v152, 7
    %v154 = vsub.s32 %v151, %v153
    %v155 = vrot.slane %v147, %v154
    %v157 = vunpack.c.l.s4 1966171168
    %v158 = vunpack.c.0.s8 %v157
    %v159 = vlaneseq
    %v160 = vshrl.u32 %v159, 7
    %v161 = vsub.s32 %v158, %v160
    %v162 = vrot.slane %v148, %v161
    %v163 = vcombine.high %v155, %v155
    %v165 = vunpack.c.l.s4 1966171168
    %v166 = vunpack.c.0.s8 %v165
    %v167 = vlaneseq
    %v168 = vshrl.u32 %v167, 7
    %v169 = vsub.s32 %v166, %v168
    %v170 = vrot.slane %v119, %v169
    %v171 = vcombine.high %v170, %v170
    %v173 = vunpack.c.l.s4 1966171168
    %v174 = vunpack.c.0.s8 %v173
    %v175 = vlaneseq
    %v176 = vshrl.u32 %v175, 7
    %v177 = vsub.s32 %v174, %v176
    %v178 = vrot.slane %v170, %v177
    %v180 = vunpack.c.l.s4 1966171168
    %v181 = vunpack.c.0.s8 %v180
    %v182 = vlaneseq
    %v183 = vshrl.u32 %v182, 7
    %v184 = vsub.s32 %v181, %v183
    %v185 = vrot.slane %v171, %v184
    %v186 = vcombine.high %v178, %v178
    %v187 = vld [vmem:[#allocation2] sm:$0xff]
    %v188 = vld [vmem:[#allocation2 + $0x8] sm:$0xff]
    %v189 = vld [vmem:[#allocation2 + $0x10] sm:$0xff]
    %v190 = vld [vmem:[#allocation2 + $0x18] sm:$0xff]
    %v191 = vld [vmem:[#allocation2 + $0x20] sm:$0xff]
    %v192 = vld [vmem:[#allocation2 + $0x28] sm:$0xff]
    %v193 = vld [vmem:[#allocation2 + $0x30] sm:$0xff]
    %v194 = vld [vmem:[#allocation2 + $0x38] sm:$0xff]
    %v195 = vld [vmem:[#allocation2 + $0x40] sm:$0xff]
    %v196 = vld [vmem:[#allocation2 + $0x48] sm:$0xff]
    %v197 = vld [vmem:[#allocation2 + $0x50] sm:$0xff]
    %v198 = vld [vmem:[#allocation2 + $0x58] sm:$0xff]
    %v199 = vld [vmem:[#allocation2 + $0x60] sm:$0xff]
    %v200 = vld [vmem:[#allocation2 + $0x68] sm:$0xff]
    %v201 = vld [vmem:[#allocation2 + $0x70] sm:$0xff]
    %v202 = vld [vmem:[#allocation2 + $0x78] sm:$0xff]
    %v203 = vld [vmem:[%s2] sm:$0x3]
    %v204 = vld [vmem:[%s3] sm:$0xff]
    %v205 = vld [vmem:[%s3 + $0x8] sm:$0xff]
    %v206 = vld [vmem:[%s3 + $0x10] sm:$0xff]
    %v207 = vld [vmem:[%s3 + $0x18] sm:$0xff]
    %v208 = vld [vmem:[%s3 + $0x20] sm:$0xff]
    %v209 = vld [vmem:[%s3 + $0x28] sm:$0xff]
    %v210 = vld [vmem:[%s3 + $0x30] sm:$0xff]
    %v211 = vld [vmem:[%s3 + $0x38] sm:$0xff]
    %v212 = vld [vmem:[%s4] sm:$0x1]
    %v214 = vlaneseq
    %v215 = vshrl.u32 %v214, 7
    %v216 = vsub.s32 0, %v215
    %v217 = vrot.slane %v203, %v216
    %v218 = vlaneseq
    %v219 = vshrl.u32 %v218, 7
    %v220 = vsub.s32 1, %v219
    %v221 = vrot.slane %v203, %v220
    %v224 = vcombine.low %v155, %v162
    %v225 = vcombine.low %v163, %v178
    %v226 = vcombine.low %v185, %v186
    %v228 = vunpack.c.l.s4 1966171168
    %v229 = vunpack.c.0.s8 %v228
    %v230 = vlaneseq
    %v231 = vshrl.u32 %v230, 7
    %v232 = vsub.s32 %v229, %v231
    %v233 = vrot.slane %v224, %v232
    %v235 = vunpack.c.l.s4 1966171168
    %v236 = vunpack.c.0.s8 %v235
    %v237 = vlaneseq
    %v238 = vshrl.u32 %v237, 7
    %v239 = vsub.s32 %v236, %v238
    %v240 = vrot.slane %v225, %v239
    %v242 = vunpack.c.l.s4 1966171168
    %v243 = vunpack.c.0.s8 %v242
    %v244 = vlaneseq
    %v245 = vshrl.u32 %v244, 7
    %v246 = vsub.s32 %v243, %v245
    %v247 = vrot.slane %v226, %v246
    %v248 = vcombine.low %v233, %v240
    %v250 = vunpack.c.l.s4 1966171168
    %v251 = vunpack.c.0.s8 %v250
    %v252 = vlaneseq
    %v253 = vshrl.u32 %v252, 7
    %v254 = vsub.s32 %v251, %v253
    %v255 = vrot.slane %v248, %v254
    %v257 = vunpack.c.l.s4 1966171168
    %v258 = vunpack.c.0.s8 %v257
    %v259 = vlaneseq
    %v260 = vshrl.u32 %v259, 7
    %v261 = vsub.s32 %v258, %v260
    %v262 = vrot.slane %v247, %v261
    %v263 = vcombine.low %v255, %v262
    %vm264 = vcmask 523264
    %v265 = vsel %vm264, %v263, 0
    %267 = vmatprep.subr.mxu0 %v188
    %268 = vmatpush1.msra.mxu0 %v187
    %269 = vmatprep.subr.mxu0 %v190
    %270 = vmatpush1.msra.mxu0 %v189
    %271 = vmatprep.subr.mxu0 %v192
    %272 = vmatpush1.msra.mxu0 %v191
    %273 = vmatprep.subr.mxu0 %v194
    %274 = vmatpush1.msra.mxu0 %v193
    %275 = vmatprep.subr.mxu0 %v196
    %276 = vmatpush1.msra.mxu0 %v195
    %277 = vmatprep.subr.mxu0 %v198
    %278 = vmatpush1.msra.mxu0 %v197
    %279 = vmatprep.subr.mxu0 %v200
    %280 = vmatpush1.msra.mxu0 %v199
    %281 = vmatprep.subr.mxu0 %v202
    %282 = vmatpush1.msra.mxu0 %v201
    %283 = vmatprep.subr.mxu0 0.0
    %284 = vmatpush1.msra.mxu0 0.0
    %285 = vmatprep.subr.mxu0 0.0
    %286 = vmatpush1.msra.mxu0 0.0
    %287 = vmatprep.subr.mxu0 0.0
    %288 = vmatpush1.msra.mxu0 0.0
    %289 = vmatprep.subr.mxu0 0.0
    %290 = vmatpush1.msra.mxu0 0.0
    %291 = vmatprep.subr.mxu0 0.0
    %292 = vmatpush1.msra.mxu0 0.0
    %293 = vmatprep.subr.mxu0 0.0
    %294 = vmatpush1.msra.mxu0 0.0
    %295 = vmatprep.subr.mxu0 0.0
    %296 = vmatpush1.msra.mxu0 0.0
    %297 = vmatprep.subr.mxu0 0.0
    %298 = vmatpush1.msra.mxu0 0.0
    %299 = vmatprep.subr.mxu0 0.0
    %300 = vmatpush1.msra.mxu0 0.0
    %301 = vmatprep.subr.mxu0 0.0
    %302 = vmatpush1.msra.mxu0 0.0
    %303 = vmatprep.subr.mxu0 0.0
    %304 = vmatpush1.msra.mxu0 0.0
    %305 = vmatprep.subr.mxu0 0.0
    %306 = vmatpush1.msra.mxu0 0.0
    %307 = vmatprep.subr.mxu0 0.0
    %308 = vmatpush1.msra.mxu0 0.0
    %309 = vmatprep.subr.mxu0 0.0
    %310 = vmatpush1.msra.mxu0 0.0
    %311 = vmatprep.subr.mxu0 0.0
    %312 = vmatpush1.msra.mxu0 0.0
    %313 = vmatprep.subr.mxu0 0.0
    %314 = vmatpush1.msra.mxu0 0.0
    %315 = vmatprep.subr.mxu0 0.0
    %316 = vmatpush1.msra.mxu0 0.0
    %317 = vmatprep.subr.mxu0 0.0
    %318 = vmatpush1.msra.mxu0 0.0
    %319 = vmatprep.subr.mxu0 0.0
    %320 = vmatpush1.msra.mxu0 0.0
    %321 = vmatprep.subr.mxu0 0.0
    %322 = vmatpush1.msra.mxu0 0.0
    %323 = vmatprep.subr.mxu0 0.0
    %324 = vmatpush1.msra.mxu0 0.0
    %325 = vmatprep.subr.mxu0 0.0
    %326 = vmatpush1.msra.mxu0 0.0
    %327 = vmatprep.subr.mxu0 0.0
    %328 = vmatpush1.msra.mxu0 0.0
    %329 = vmatprep.subr.mxu0 0.0
    %330 = vmatpush1.msra.mxu0 0.0
    %331 = vmatprep.mubr.f32.mxu0 0.0
    %332 = vmatmul.mubr.f32.gmra.mrb[0].mxu0 %v265
    %v333 = vpop.f32.mrb[0].mxu0
    %v334 = vadd.f32 %v217, %v333
    %v335 = vpop.f32.mrb[0].mxu0
    %v336 = vadd.f32 %v221, %v335
    %337 = vdwg.mxu0
    %v340 = vcombine.low %v334, %v336
    %v341 = vcombine.high %v334, %v336
    %v343 = vunpack.c.l.s4 1966171168
    %v344 = vunpack.c.0.s8 %v343
    %v345 = vlaneseq
    %v346 = vshrl.u32 %v345, 7
    %v347 = vsub.s32 %v344, %v346
    %v348 = vrot.slane %v340, %v347
    %v350 = vunpack.c.l.s4 1966171168
    %v351 = vunpack.c.0.s8 %v350
    %v352 = vlaneseq
    %v353 = vshrl.u32 %v352, 7
    %v354 = vsub.s32 %v351, %v353
    %v355 = vrot.slane %v341, %v354
    %v356 = vcombine.high %v348, %v348
    %v357 = vcombine.high %v355, %v355
    %v359 = vunpack.c.l.s4 1966171168
    %v360 = vunpack.c.0.s8 %v359
    %v361 = vlaneseq
    %v362 = vshrl.u32 %v361, 7
    %v363 = vsub.s32 %v360, %v362
    %v364 = vrot.slane %v348, %v363
    %v366 = vunpack.c.l.s4 1966171168
    %v367 = vunpack.c.0.s8 %v366
    %v368 = vlaneseq
    %v369 = vshrl.u32 %v368, 7
    %v370 = vsub.s32 %v367, %v369
    %v371 = vrot.slane %v355, %v370
    %v373 = vunpack.c.l.s4 1966171168
    %v374 = vunpack.c.0.s8 %v373
    %v375 = vlaneseq
    %v376 = vshrl.u32 %v375, 7
    %v377 = vsub.s32 %v374, %v376
    %v378 = vrot.slane %v356, %v377
    %v380 = vunpack.c.l.s4 1966171168
    %v381 = vunpack.c.0.s8 %v380
    %v382 = vlaneseq
    %v383 = vshrl.u32 %v382, 7
    %v384 = vsub.s32 %v381, %v383
    %v385 = vrot.slane %v357, %v384
    %v386 = vcombine.high %v364, %v364
    %v387 = vcombine.high %v378, %v378
    %v394 = vmul.f32 %v364, 0.125
    %v395 = vmul.f32 %v378, 0.125
    %v396 = vmul.f32 %v386, 0.125
    %v397 = vmul.f32 %v387, 0.125
    %v398 = vmul.f32 %v371, 0.125
    %v399 = vmul.f32 %v385, 0.125
    %v403 = vcombine.low %v394, %v395
    %v405 = vunpack.c.l.s4 1966171168
    %v406 = vunpack.c.0.s8 %v405
    %v407 = vlaneseq
    %v408 = vshrl.u32 %v407, 7
    %v409 = vsub.s32 %v406, %v408
    %v410 = vrot.slane %v403, %v409
    %v412 = vunpack.c.l.s4 1966171168
    %v413 = vunpack.c.0.s8 %v412
    %v414 = vlaneseq
    %v415 = vshrl.u32 %v414, 7
    %v416 = vsub.s32 %v413, %v415
    %v417 = vrot.slane %v396, %v416
    %v418 = vcombine.low %v410, %v417
    %v420 = vunpack.c.l.s4 1966171168
    %v421 = vunpack.c.0.s8 %v420
    %v422 = vlaneseq
    %v423 = vshrl.u32 %v422, 7
    %v424 = vsub.s32 %v421, %v423
    %v425 = vrot.slane %v418, %v424
    %v426 = vcombine.low %v364, %v378
    %v428 = vunpack.c.l.s4 1966171168
    %v429 = vunpack.c.0.s8 %v428
    %v430 = vlaneseq
    %v431 = vshrl.u32 %v430, 7
    %v432 = vsub.s32 %v429, %v431
    %v433 = vrot.slane %v426, %v432
    %v435 = vunpack.c.l.s4 1966171168
    %v436 = vunpack.c.0.s8 %v435
    %v437 = vlaneseq
    %v438 = vshrl.u32 %v437, 7
    %v439 = vsub.s32 %v436, %v438
    %v440 = vrot.slane %v386, %v439
    %v441 = vcombine.low %v433, %v440
    %v443 = vunpack.c.l.s4 1966171168
    %v444 = vunpack.c.0.s8 %v443
    %v445 = vlaneseq
    %v446 = vshrl.u32 %v445, 7
    %v447 = vsub.s32 %v444, %v446
    %v448 = vrot.slane %v441, %v447
    %449 = vrot.lane.b32.xlu0 %v448, 64
    %v450 = vpop.permute.xlu0 %449
    %v451 = vsel %vm264, %v425, 0
    %v453 = vsel %vm264, %v450, 0
    %455 = vmatprep.subr.mxu0 0.0
    %456 = vmatpush1.xpose.msra.mxu0 %v453
    %457 = vmatprep.subr.mxu0 0.0
    %458 = vmatpush1.xpose.msra.mxu0 0.0
    %459 = vmatprep.subr.mxu0 0.0
    %460 = vmatpush1.xpose.msra.mxu0 0.0
    %461 = vmatprep.subr.mxu0 0.0
    %462 = vmatpush1.xpose.msra.mxu0 0.0
    %463 = vmatprep.subr.mxu0 0.0
    %464 = vmatpush1.xpose.msra.mxu0 0.0
    %465 = vmatprep.subr.mxu0 0.0
    %466 = vmatpush1.xpose.msra.mxu0 0.0
    %467 = vmatprep.subr.mxu0 0.0
    %468 = vmatpush1.xpose.msra.mxu0 0.0
    %469 = vmatprep.subr.mxu0 0.0
    %470 = vmatpush1.xpose.msra.mxu0 0.0
    %471 = vmatprep.subr.mxu0 0.0
    %472 = vmatpush1.xpose.msra.mxu0 0.0
    %473 = vmatprep.subr.mxu0 0.0
    %474 = vmatpush1.xpose.msra.mxu0 0.0
    %475 = vmatprep.subr.mxu0 0.0
    %476 = vmatpush1.xpose.msra.mxu0 0.0
    %477 = vmatprep.subr.mxu0 0.0
    %478 = vmatpush1.xpose.msra.mxu0 0.0
    %479 = vmatprep.subr.mxu0 0.0
    %480 = vmatpush1.xpose.msra.mxu0 0.0
    %481 = vmatprep.subr.mxu0 0.0
    %482 = vmatpush1.xpose.msra.mxu0 0.0
    %483 = vmatprep.subr.mxu0 0.0
    %484 = vmatpush1.xpose.msra.mxu0 0.0
    %485 = vmatprep.subr.mxu0 0.0
    %486 = vmatpush1.xpose.msra.mxu0 0.0
    %487 = vmatprep.subr.mxu0 0.0
    %488 = vmatpush1.xpose.msra.mxu0 0.0
    %489 = vmatprep.subr.mxu0 0.0
    %490 = vmatpush1.xpose.msra.mxu0 0.0
    %491 = vmatprep.subr.mxu0 0.0
    %492 = vmatpush1.xpose.msra.mxu0 0.0
    %493 = vmatprep.subr.mxu0 0.0
    %494 = vmatpush1.xpose.msra.mxu0 0.0
    %495 = vmatprep.subr.mxu0 0.0
    %496 = vmatpush1.xpose.msra.mxu0 0.0
    %497 = vmatprep.subr.mxu0 0.0
    %498 = vmatpush1.xpose.msra.mxu0 0.0
    %499 = vmatprep.subr.mxu0 0.0
    %500 = vmatpush1.xpose.msra.mxu0 0.0
    %501 = vmatprep.subr.mxu0 0.0
    %502 = vmatpush1.xpose.msra.mxu0 0.0
    %503 = vmatprep.subr.mxu0 0.0
    %504 = vmatpush1.xpose.msra.mxu0 0.0
    %505 = vmatprep.subr.mxu0 0.0
    %506 = vmatpush1.xpose.msra.mxu0 0.0
    %507 = vmatprep.subr.mxu0 0.0
    %508 = vmatpush1.xpose.msra.mxu0 0.0
    %509 = vmatprep.subr.mxu0 0.0
    %510 = vmatpush1.xpose.msra.mxu0 0.0
    %511 = vmatprep.subr.mxu0 0.0
    %512 = vmatpush1.xpose.msra.mxu0 0.0
    %513 = vmatprep.subr.mxu0 0.0
    %514 = vmatpush1.xpose.msra.mxu0 0.0
    %515 = vmatprep.subr.mxu0 0.0
    %516 = vmatpush1.xpose.msra.mxu0 0.0
    %517 = vmatprep.subr.mxu0 0.0
    %518 = vmatpush1.xpose.msra.mxu0 0.0
    %519 = vmatprep.mubr.f32.mxu0 0.0
    %520 = vmatmul.mubr.f32.gmra.mrb[0].mxu0 %v451
    %v521 = vpop.f32.mrb[0].mxu0
    %v522 = vadd.f32 0.0, %v521
    %v523 = vpop.f32.mrb[0].mxu0
    %524 = vdwg.mxu0
    %v528 = vcombine.low %v397, %v398
    %v530 = vunpack.c.l.s4 1966171168
    %v531 = vunpack.c.0.s8 %v530
    %v532 = vlaneseq
    %v533 = vshrl.u32 %v532, 7
    %v534 = vsub.s32 %v531, %v533
    %v535 = vrot.slane %v528, %v534
    %v537 = vunpack.c.l.s4 1966171168
    %v538 = vunpack.c.0.s8 %v537
    %v539 = vlaneseq
    %v540 = vshrl.u32 %v539, 7
    %v541 = vsub.s32 %v538, %v540
    %v542 = vrot.slane %v399, %v541
    %v543 = vcombine.low %v535, %v542
    %v545 = vunpack.c.l.s4 1966171168
    %v546 = vunpack.c.0.s8 %v545
    %v547 = vlaneseq
    %v548 = vshrl.u32 %v547, 7
    %v549 = vsub.s32 %v546, %v548
    %v550 = vrot.slane %v543, %v549
    %v551 = vcombine.low %v387, %v371
    %v553 = vunpack.c.l.s4 1966171168
    %v554 = vunpack.c.0.s8 %v553
    %v555 = vlaneseq
    %v556 = vshrl.u32 %v555, 7
    %v557 = vsub.s32 %v554, %v556
    %v558 = vrot.slane %v551, %v557
    %v560 = vunpack.c.l.s4 1966171168
    %v561 = vunpack.c.0.s8 %v560
    %v562 = vlaneseq
    %v563 = vshrl.u32 %v562, 7
    %v564 = vsub.s32 %v561, %v563
    %v565 = vrot.slane %v385, %v564
    %v566 = vcombine.low %v558, %v565
    %v568 = vunpack.c.l.s4 1966171168
    %v569 = vunpack.c.0.s8 %v568
    %v570 = vlaneseq
    %v571 = vshrl.u32 %v570, 7
    %v572 = vsub.s32 %v569, %v571
    %v573 = vrot.slane %v566, %v572
    %574 = vrot.lane.b32.xlu0 %v573, 64
    %v575 = vpop.permute.xlu0 %574
    %v576 = vsel %vm264, %v550, 0
    %v578 = vsel %vm264, %v575, 0
    %580 = vmatprep.subr.mxu0 0.0
    %581 = vmatpush1.xpose.msra.mxu0 %v578
    %582 = vmatprep.subr.mxu0 0.0
    %583 = vmatpush1.xpose.msra.mxu0 0.0
    %584 = vmatprep.subr.mxu0 0.0
    %585 = vmatpush1.xpose.msra.mxu0 0.0
    %586 = vmatprep.subr.mxu0 0.0
    %587 = vmatpush1.xpose.msra.mxu0 0.0
    %588 = vmatprep.subr.mxu0 0.0
    %589 = vmatpush1.xpose.msra.mxu0 0.0
    %590 = vmatprep.subr.mxu0 0.0
    %591 = vmatpush1.xpose.msra.mxu0 0.0
    %592 = vmatprep.subr.mxu0 0.0
    %593 = vmatpush1.xpose.msra.mxu0 0.0
    %594 = vmatprep.subr.mxu0 0.0
    %595 = vmatpush1.xpose.msra.mxu0 0.0
    %596 = vmatprep.subr.mxu0 0.0
    %597 = vmatpush1.xpose.msra.mxu0 0.0
    %598 = vmatprep.subr.mxu0 0.0
    %599 = vmatpush1.xpose.msra.mxu0 0.0
    %600 = vmatprep.subr.mxu0 0.0
    %601 = vmatpush1.xpose.msra.mxu0 0.0
    %602 = vmatprep.subr.mxu0 0.0
    %603 = vmatpush1.xpose.msra.mxu0 0.0
    %604 = vmatprep.subr.mxu0 0.0
    %605 = vmatpush1.xpose.msra.mxu0 0.0
    %606 = vmatprep.subr.mxu0 0.0
    %607 = vmatpush1.xpose.msra.mxu0 0.0
    %608 = vmatprep.subr.mxu0 0.0
    %609 = vmatpush1.xpose.msra.mxu0 0.0
    %610 = vmatprep.subr.mxu0 0.0
    %611 = vmatpush1.xpose.msra.mxu0 0.0
    %612 = vmatprep.subr.mxu0 0.0
    %613 = vmatpush1.xpose.msra.mxu0 0.0
    %614 = vmatprep.subr.mxu0 0.0
    %615 = vmatpush1.xpose.msra.mxu0 0.0
    %616 = vmatprep.subr.mxu0 0.0
    %617 = vmatpush1.xpose.msra.mxu0 0.0
    %618 = vmatprep.subr.mxu0 0.0
    %619 = vmatpush1.xpose.msra.mxu0 0.0
    %620 = vmatprep.subr.mxu0 0.0
    %621 = vmatpush1.xpose.msra.mxu0 0.0
    %622 = vmatprep.subr.mxu0 0.0
    %623 = vmatpush1.xpose.msra.mxu0 0.0
    %624 = vmatprep.subr.mxu0 0.0
    %625 = vmatpush1.xpose.msra.mxu0 0.0
    %626 = vmatprep.subr.mxu0 0.0
    %627 = vmatpush1.xpose.msra.mxu0 0.0
    %628 = vmatprep.subr.mxu0 0.0
    %629 = vmatpush1.xpose.msra.mxu0 0.0
    %630 = vmatprep.subr.mxu0 0.0
    %631 = vmatpush1.xpose.msra.mxu0 0.0
    %632 = vmatprep.subr.mxu0 0.0
    %633 = vmatpush1.xpose.msra.mxu0 0.0
    %634 = vmatprep.subr.mxu0 0.0
    %635 = vmatpush1.xpose.msra.mxu0 0.0
    %636 = vmatprep.subr.mxu0 0.0
    %637 = vmatpush1.xpose.msra.mxu0 0.0
    %638 = vmatprep.subr.mxu0 0.0
    %639 = vmatpush1.xpose.msra.mxu0 0.0
    %640 = vmatprep.subr.mxu0 0.0
    %641 = vmatpush1.xpose.msra.mxu0 0.0
    %642 = vmatprep.subr.mxu0 0.0
    %643 = vmatpush1.xpose.msra.mxu0 0.0
    %644 = vmatprep.mubr.f32.mxu0 0.0
    %645 = vmatmul.mubr.f32.gmra.mrb[0].mxu0 %v576
    %v646 = vpop.f32.mrb[0].mxu0
    %v647 = vadd.f32 0.0, %v646
    %v648 = vpop.f32.mrb[0].mxu0
    %649 = vdwg.mxu0
    %vm650 = vcmask 18432
    %v651 = vsel %vm650, %v522, -inf
    %652 = vmax.xlane.f32.xlu0 %v651
    %v653 = vpop.xlane.xlu0 %652
    %v654 = vsel %vm650, %v647, -inf
    %655 = vmax.xlane.f32.xlu0 %v654
    %v656 = vpop.xlane.xlu0 %655
    %v657 = vsub.f32 %v522, %v653
    %v658 = vsub.f32 %v647, %v656
    %v659 = vmul.f32 %v657, 1.442695
    %v660 = vpow.pop %v659
    %v661 = vmul.f32 %v658, 1.442695
    %v662 = vpow.pop %v661
    %v663 = vsel %vm650, %v660, 0.0
    %664 = vadd.xlane.f32.xlu0 %v663
    %v665 = vpop.xlane.xlu0 %664
    %v666 = vsel %vm650, %v662, 0.0
    %667 = vadd.xlane.f32.xlu0 %v666
    %v668 = vpop.xlane.xlu0 %667
    %v669 = vrcp.pop %v665
    %v670 = vmul.f32 %v660, %v669
    %v671 = vrcp.pop %v668
    %v672 = vmul.f32 %v662, %v671
    %v673 = vrot.slane %v364, 1
    %v674 = vrot.slane %v378, 1
    %v675 = vrot.slane %v386, 1
    %v676 = vcombine.low %v673, %v674
    %v678 = vunpack.c.l.s4 1966171168
    %v679 = vunpack.c.0.s8 %v678
    %v680 = vlaneseq
    %v681 = vshrl.u32 %v680, 7
    %v682 = vsub.s32 %v679, %v681
    %v683 = vrot.slane %v676, %v682
    %v685 = vunpack.c.l.s4 1966171168
    %v686 = vunpack.c.0.s8 %v685
    %v687 = vlaneseq
    %v688 = vshrl.u32 %v687, 7
    %v689 = vsub.s32 %v686, %v688
    %v690 = vrot.slane %v675, %v689
    %v691 = vcombine.low %v683, %v690
    %v693 = vunpack.c.l.s4 1966171168
    %v694 = vunpack.c.0.s8 %v693
    %v695 = vlaneseq
    %v696 = vshrl.u32 %v695, 7
    %v697 = vsub.s32 %v694, %v696
    %v698 = vrot.slane %v691, %v697
    %vm699 = vcmask 23552
    %v701 = vsel %vm699, %v670, 0
    %vm703 = vcmask 1042432
    %v704 = vsel %vm703, %v698, 0
    %706 = vmatprep.subr.mxu0 0.0
    %707 = vmatpush1.msra.mxu0 %v704
    %708 = vmatprep.subr.mxu0 0.0
    %709 = vmatpush1.msra.mxu0 0.0
    %710 = vmatprep.subr.mxu0 0.0
    %711 = vmatpush1.msra.mxu0 0.0
    %712 = vmatprep.subr.mxu0 0.0
    %713 = vmatpush1.msra.mxu0 0.0
    %714 = vmatprep.subr.mxu0 0.0
    %715 = vmatpush1.msra.mxu0 0.0
    %716 = vmatprep.subr.mxu0 0.0
    %717 = vmatpush1.msra.mxu0 0.0
    %718 = vmatprep.subr.mxu0 0.0
    %719 = vmatpush1.msra.mxu0 0.0
    %720 = vmatprep.subr.mxu0 0.0
    %721 = vmatpush1.msra.mxu0 0.0
    %722 = vmatprep.subr.mxu0 0.0
    %723 = vmatpush1.msra.mxu0 0.0
    %724 = vmatprep.subr.mxu0 0.0
    %725 = vmatpush1.msra.mxu0 0.0
    %726 = vmatprep.subr.mxu0 0.0
    %727 = vmatpush1.msra.mxu0 0.0
    %728 = vmatprep.subr.mxu0 0.0
    %729 = vmatpush1.msra.mxu0 0.0
    %730 = vmatprep.subr.mxu0 0.0
    %731 = vmatpush1.msra.mxu0 0.0
    %732 = vmatprep.subr.mxu0 0.0
    %733 = vmatpush1.msra.mxu0 0.0
    %734 = vmatprep.subr.mxu0 0.0
    %735 = vmatpush1.msra.mxu0 0.0
    %736 = vmatprep.subr.mxu0 0.0
    %737 = vmatpush1.msra.mxu0 0.0
    %738 = vmatprep.subr.mxu0 0.0
    %739 = vmatpush1.msra.mxu0 0.0
    %740 = vmatprep.subr.mxu0 0.0
    %741 = vmatpush1.msra.mxu0 0.0
    %742 = vmatprep.subr.mxu0 0.0
    %743 = vmatpush1.msra.mxu0 0.0
    %744 = vmatprep.subr.mxu0 0.0
    %745 = vmatpush1.msra.mxu0 0.0
    %746 = vmatprep.subr.mxu0 0.0
    %747 = vmatpush1.msra.mxu0 0.0
    %748 = vmatprep.subr.mxu0 0.0
    %749 = vmatpush1.msra.mxu0 0.0
    %750 = vmatprep.subr.mxu0 0.0
    %751 = vmatpush1.msra.mxu0 0.0
    %752 = vmatprep.subr.mxu0 0.0
    %753 = vmatpush1.msra.mxu0 0.0
    %754 = vmatprep.subr.mxu0 0.0
    %755 = vmatpush1.msra.mxu0 0.0
    %756 = vmatprep.subr.mxu0 0.0
    %757 = vmatpush1.msra.mxu0 0.0
    %758 = vmatprep.subr.mxu0 0.0
    %759 = vmatpush1.msra.mxu0 0.0
    %760 = vmatprep.subr.mxu0 0.0
    %761 = vmatpush1.msra.mxu0 0.0
    %762 = vmatprep.subr.mxu0 0.0
    %763 = vmatpush1.msra.mxu0 0.0
    %764 = vmatprep.subr.mxu0 0.0
    %765 = vmatpush1.msra.mxu0 0.0
    %766 = vmatprep.subr.mxu0 0.0
    %767 = vmatpush1.msra.mxu0 0.0
    %768 = vmatprep.subr.mxu0 0.0
    %769 = vmatpush1.msra.mxu0 0.0
    %770 = vmatprep.mubr.f32.mxu0 0.0
    %771 = vmatmul.mubr.f32.gmra.mrb[0].mxu0 %v701
    %v772 = vpop.f32.mrb[0].mxu0
    %v773 = vadd.f32 0.0, %v772
    %v774 = vpop.f32.mrb[0].mxu0
    %775 = vdwg.mxu0
    %v776 = vrot.slane %v387, 1
    %v777 = vrot.slane %v371, 1
    %v778 = vrot.slane %v385, 1
    %v779 = vcombine.low %v776, %v777
    %v781 = vunpack.c.l.s4 1966171168
    %v782 = vunpack.c.0.s8 %v781
    %v783 = vlaneseq
    %v784 = vshrl.u32 %v783, 7
    %v785 = vsub.s32 %v782, %v784
    %v786 = vrot.slane %v779, %v785
    %v788 = vunpack.c.l.s4 1966171168
    %v789 = vunpack.c.0.s8 %v788
    %v790 = vlaneseq
    %v791 = vshrl.u32 %v790, 7
    %v792 = vsub.s32 %v789, %v791
    %v793 = vrot.slane %v778, %v792
    %v794 = vcombine.low %v786, %v793
    %v796 = vunpack.c.l.s4 1966171168
    %v797 = vunpack.c.0.s8 %v796
    %v798 = vlaneseq
    %v799 = vshrl.u32 %v798, 7
    %v800 = vsub.s32 %v797, %v799
    %v801 = vrot.slane %v794, %v800
    %v803 = vsel %vm699, %v672, 0
    %v805 = vsel %vm703, %v801, 0
    %807 = vmatprep.subr.mxu0 0.0
    %808 = vmatpush1.msra.mxu0 %v805
    %809 = vmatprep.subr.mxu0 0.0
    %810 = vmatpush1.msra.mxu0 0.0
    %811 = vmatprep.subr.mxu0 0.0
    %812 = vmatpush1.msra.mxu0 0.0
    %813 = vmatprep.subr.mxu0 0.0
    %814 = vmatpush1.msra.mxu0 0.0
    %815 = vmatprep.subr.mxu0 0.0
    %816 = vmatpush1.msra.mxu0 0.0
    %817 = vmatprep.subr.mxu0 0.0
    %818 = vmatpush1.msra.mxu0 0.0
    %819 = vmatprep.subr.mxu0 0.0
    %820 = vmatpush1.msra.mxu0 0.0
    %821 = vmatprep.subr.mxu0 0.0
    %822 = vmatpush1.msra.mxu0 0.0
    %823 = vmatprep.subr.mxu0 0.0
    %824 = vmatpush1.msra.mxu0 0.0
    %825 = vmatprep.subr.mxu0 0.0
    %826 = vmatpush1.msra.mxu0 0.0
    %827 = vmatprep.subr.mxu0 0.0
    %828 = vmatpush1.msra.mxu0 0.0
    %829 = vmatprep.subr.mxu0 0.0
    %830 = vmatpush1.msra.mxu0 0.0
    %831 = vmatprep.subr.mxu0 0.0
    %832 = vmatpush1.msra.mxu0 0.0
    %833 = vmatprep.subr.mxu0 0.0
    %834 = vmatpush1.msra.mxu0 0.0
    %835 = vmatprep.subr.mxu0 0.0
    %836 = vmatpush1.msra.mxu0 0.0
    %837 = vmatprep.subr.mxu0 0.0
    %838 = vmatpush1.msra.mxu0 0.0
    %839 = vmatprep.subr.mxu0 0.0
    %840 = vmatpush1.msra.mxu0 0.0
    %841 = vmatprep.subr.mxu0 0.0
    %842 = vmatpush1.msra.mxu0 0.0
    %843 = vmatprep.subr.mxu0 0.0
    %844 = vmatpush1.msra.mxu0 0.0
    %845 = vmatprep.subr.mxu0 0.0
    %846 = vmatpush1.msra.mxu0 0.0
    %847 = vmatprep.subr.mxu0 0.0
    %848 = vmatpush1.msra.mxu0 0.0
    %849 = vmatprep.subr.mxu0 0.0
    %850 = vmatpush1.msra.mxu0 0.0
    %851 = vmatprep.subr.mxu0 0.0
    %852 = vmatpush1.msra.mxu0 0.0
    %853 = vmatprep.subr.mxu0 0.0
    %854 = vmatpush1.msra.mxu0 0.0
    %855 = vmatprep.subr.mxu0 0.0
    %856 = vmatpush1.msra.mxu0 0.0
    %857 = vmatprep.subr.mxu0 0.0
    %858 = vmatpush1.msra.mxu0 0.0
    %859 = vmatprep.subr.mxu0 0.0
    %860 = vmatpush1.msra.mxu0 0.0
    %861 = vmatprep.subr.mxu0 0.0
    %862 = vmatpush1.msra.mxu0 0.0
    %863 = vmatprep.subr.mxu0 0.0
    %864 = vmatpush1.msra.mxu0 0.0
    %865 = vmatprep.subr.mxu0 0.0
    %866 = vmatpush1.msra.mxu0 0.0
    %867 = vmatprep.subr.mxu0 0.0
    %868 = vmatpush1.msra.mxu0 0.0
    %869 = vmatprep.subr.mxu0 0.0
    %870 = vmatpush1.msra.mxu0 0.0
    %871 = vmatprep.mubr.f32.mxu0 0.0
    %872 = vmatmul.mubr.f32.gmra.mrb[0].mxu0 %v803
    %v873 = vpop.f32.mrb[0].mxu0
    %v874 = vadd.f32 0.0, %v873
    %v875 = vpop.f32.mrb[0].mxu0
    %876 = vdwg.mxu0
    %v880 = vunpack.c.l.s4 1966171168
    %v881 = vunpack.c.0.s8 %v880
    %v882 = vlaneseq
    %v883 = vshrl.u32 %v882, 7
    %v884 = vsub.s32 %v881, %v883
    %v885 = vrot.slane %v773, %v884
    %v886 = vcombine.high %v885, %v885
    %v888 = vunpack.c.l.s4 1966171168
    %v889 = vunpack.c.0.s8 %v888
    %v890 = vlaneseq
    %v891 = vshrl.u32 %v890, 7
    %v892 = vsub.s32 %v889, %v891
    %v893 = vrot.slane %v885, %v892
    %v895 = vunpack.c.l.s4 1966171168
    %v896 = vunpack.c.0.s8 %v895
    %v897 = vlaneseq
    %v898 = vshrl.u32 %v897, 7
    %v899 = vsub.s32 %v896, %v898
    %v900 = vrot.slane %v886, %v899
    %v901 = vcombine.high %v893, %v893
    %v903 = vunpack.c.l.s4 1966171168
    %v904 = vunpack.c.0.s8 %v903
    %v905 = vlaneseq
    %v906 = vshrl.u32 %v905, 7
    %v907 = vsub.s32 %v904, %v906
    %v908 = vrot.slane %v874, %v907
    %v909 = vcombine.high %v908, %v908
    %v911 = vunpack.c.l.s4 1966171168
    %v912 = vunpack.c.0.s8 %v911
    %v913 = vlaneseq
    %v914 = vshrl.u32 %v913, 7
    %v915 = vsub.s32 %v912, %v914
    %v916 = vrot.slane %v908, %v915
    %v918 = vunpack.c.l.s4 1966171168
    %v919 = vunpack.c.0.s8 %v918
    %v920 = vlaneseq
    %v921 = vshrl.u32 %v920, 7
    %v922 = vsub.s32 %v919, %v921
    %v923 = vrot.slane %v909, %v922
    %v924 = vcombine.high %v916, %v916
    %v926 = vlaneseq
    %v927 = vshrl.u32 %v926, 7
    %v928 = vsub.s32 0, %v927
    %v929 = vrot.slane %v212, %v928
    %v931 = vcombine.low %v893, %v900
    %v932 = vcombine.low %v901, %v916
    %v933 = vcombine.low %v923, %v924
    %v935 = vunpack.c.l.s4 1966171168
    %v936 = vunpack.c.0.s8 %v935
    %v937 = vlaneseq
    %v938 = vshrl.u32 %v937, 7
    %v939 = vsub.s32 %v936, %v938
    %v940 = vrot.slane %v931, %v939
    %v942 = vunpack.c.l.s4 1966171168
    %v943 = vunpack.c.0.s8 %v942
    %v944 = vlaneseq
    %v945 = vshrl.u32 %v944, 7
    %v946 = vsub.s32 %v943, %v945
    %v947 = vrot.slane %v932, %v946
    %v949 = vunpack.c.l.s4 1966171168
    %v950 = vunpack.c.0.s8 %v949
    %v951 = vlaneseq
    %v952 = vshrl.u32 %v951, 7
    %v953 = vsub.s32 %v950, %v952
    %v954 = vrot.slane %v933, %v953
    %v955 = vcombine.low %v940, %v947
    %v957 = vunpack.c.l.s4 1966171168
    %v958 = vunpack.c.0.s8 %v957
    %v959 = vlaneseq
    %v960 = vshrl.u32 %v959, 7
    %v961 = vsub.s32 %v958, %v960
    %v962 = vrot.slane %v955, %v961
    %v964 = vunpack.c.l.s4 1966171168
    %v965 = vunpack.c.0.s8 %v964
    %v966 = vlaneseq
    %v967 = vshrl.u32 %v966, 7
    %v968 = vsub.s32 %v965, %v967
    %v969 = vrot.slane %v954, %v968
    %v970 = vcombine.low %v962, %v969
    %v971 = vsel %vm264, %v970, 0
    %973 = vmatprep.subr.mxu0 0.0
    %974 = vmatpush1.msra.mxu0 %v204
    %975 = vmatprep.subr.mxu0 0.0
    %976 = vmatpush1.msra.mxu0 %v205
    %977 = vmatprep.subr.mxu0 0.0
    %978 = vmatpush1.msra.mxu0 %v206
    %979 = vmatprep.subr.mxu0 0.0
    %980 = vmatpush1.msra.mxu0 %v207
    %981 = vmatprep.subr.mxu0 0.0
    %982 = vmatpush1.msra.mxu0 %v208
    %983 = vmatprep.subr.mxu0 0.0
    %984 = vmatpush1.msra.mxu0 %v209
    %985 = vmatprep.subr.mxu0 0.0
    %986 = vmatpush1.msra.mxu0 %v210
    %987 = vmatprep.subr.mxu0 0.0
    %988 = vmatpush1.msra.mxu0 %v211
    %989 = vmatprep.subr.mxu0 0.0
    %990 = vmatpush1.msra.mxu0 0.0
    %991 = vmatprep.subr.mxu0 0.0
    %992 = vmatpush1.msra.mxu0 0.0
    %993 = vmatprep.subr.mxu0 0.0
    %994 = vmatpush1.msra.mxu0 0.0
    %995 = vmatprep.subr.mxu0 0.0
    %996 = vmatpush1.msra.mxu0 0.0
    %997 = vmatprep.subr.mxu0 0.0
    %998 = vmatpush1.msra.mxu0 0.0
    %999 = vmatprep.subr.mxu0 0.0
    %1000 = vmatpush1.msra.mxu0 0.0
    %1001 = vmatprep.subr.mxu0 0.0
    %1002 = vmatpush1.msra.mxu0 0.0
    %1003 = vmatprep.subr.mxu0 0.0
    %1004 = vmatpush1.msra.mxu0 0.0
    %1005 = vmatprep.subr.mxu0 0.0
    %1006 = vmatpush1.msra.mxu0 0.0
    %1007 = vmatprep.subr.mxu0 0.0
    %1008 = vmatpush1.msra.mxu0 0.0
    %1009 = vmatprep.subr.mxu0 0.0
    %1010 = vmatpush1.msra.mxu0 0.0
    %1011 = vmatprep.subr.mxu0 0.0
    %1012 = vmatpush1.msra.mxu0 0.0
    %1013 = vmatprep.subr.mxu0 0.0
    %1014 = vmatpush1.msra.mxu0 0.0
    %1015 = vmatprep.subr.mxu0 0.0
    %1016 = vmatpush1.msra.mxu0 0.0
    %1017 = vmatprep.subr.mxu0 0.0
    %1018 = vmatpush1.msra.mxu0 0.0
    %1019 = vmatprep.subr.mxu0 0.0
    %1020 = vmatpush1.msra.mxu0 0.0
    %1021 = vmatprep.subr.mxu0 0.0
    %1022 = vmatpush1.msra.mxu0 0.0
    %1023 = vmatprep.subr.mxu0 0.0
    %1024 = vmatpush1.msra.mxu0 0.0
    %1025 = vmatprep.subr.mxu0 0.0
    %1026 = vmatpush1.msra.mxu0 0.0
    %1027 = vmatprep.subr.mxu0 0.0
    %1028 = vmatpush1.msra.mxu0 0.0
    %1029 = vmatprep.subr.mxu0 0.0
    %1030 = vmatpush1.msra.mxu0 0.0
    %1031 = vmatprep.subr.mxu0 0.0
    %1032 = vmatpush1.msra.mxu0 0.0
    %1033 = vmatprep.subr.mxu0 0.0
    %1034 = vmatpush1.msra.mxu0 0.0
    %1035 = vmatprep.subr.mxu0 0.0
    %1036 = vmatpush1.msra.mxu0 0.0
    %1037 = vmatprep.mubr.f32.mxu0 0.0
    %1038 = vmatmul.mubr.f32.gmra.mrb[0].mxu0 %v971
    %v1039 = vpop.f32.mrb[0].mxu0
    %v1040 = vadd.f32 %v929, %v1039
    %v1041 = vpop.f32.mrb[0].mxu0
    %1042 = vdwg.mxu0
    %v1043 = vld [vmem:[#allocation4] sm:$0xff]
    %v1044 = vld [vmem:[#allocation4 + $0x8] sm:$0xff]
    %v1045 = vld [vmem:[#allocation4 + $0x10] sm:$0xff]
    %v1046 = vld [vmem:[#allocation4 + $0x18] sm:$0xff]
    %v1047 = vld [vmem:[#allocation4 + $0x20] sm:$0xff]
    %v1048 = vld [vmem:[#allocation4 + $0x28] sm:$0xff]
    %v1049 = vld [vmem:[#allocation4 + $0x30] sm:$0xff]
    %v1050 = vld [vmem:[#allocation4 + $0x38] sm:$0xff]
    %v1051 = vld [vmem:[%s6] sm:$0x1]
    %v1053 = vlaneseq
    %v1054 = vshrl.u32 %v1053, 7
    %v1055 = vsub.s32 0, %v1054
    %v1056 = vrot.slane %v1051, %v1055
    %v1059 = vsel %vm264, %v1040, 0
    %1061 = vmatprep.subr.mxu0 0.0
    %1062 = vmatpush1.msra.mxu0 %v1043
    %1063 = vmatprep.subr.mxu0 0.0
    %1064 = vmatpush1.msra.mxu0 %v1044
    %1065 = vmatprep.subr.mxu0 0.0
    %1066 = vmatpush1.msra.mxu0 %v1045
    %1067 = vmatprep.subr.mxu0 0.0
    %1068 = vmatpush1.msra.mxu0 %v1046
    %1069 = vmatprep.subr.mxu0 0.0
    %1070 = vmatpush1.msra.mxu0 %v1047
    %1071 = vmatprep.subr.mxu0 0.0
    %1072 = vmatpush1.msra.mxu0 %v1048
    %1073 = vmatprep.subr.mxu0 0.0
    %1074 = vmatpush1.msra.mxu0 %v1049
    %1075 = vmatprep.subr.mxu0 0.0
    %1076 = vmatpush1.msra.mxu0 %v1050
    %1077 = vmatprep.subr.mxu0 0.0
    %1078 = vmatpush1.msra.mxu0 0.0
    %1079 = vmatprep.subr.mxu0 0.0
    %1080 = vmatpush1.msra.mxu0 0.0
    %1081 = vmatprep.subr.mxu0 0.0
    %1082 = vmatpush1.msra.mxu0 0.0
    %1083 = vmatprep.subr.mxu0 0.0
    %1084 = vmatpush1.msra.mxu0 0.0
    %1085 = vmatprep.subr.mxu0 0.0
    %1086 = vmatpush1.msra.mxu0 0.0
    %1087 = vmatprep.subr.mxu0 0.0
    %1088 = vmatpush1.msra.mxu0 0.0
    %1089 = vmatprep.subr.mxu0 0.0
    %1090 = vmatpush1.msra.mxu0 0.0
    %1091 = vmatprep.subr.mxu0 0.0
    %1092 = vmatpush1.msra.mxu0 0.0
    %1093 = vmatprep.subr.mxu0 0.0
    %1094 = vmatpush1.msra.mxu0 0.0
    %1095 = vmatprep.subr.mxu0 0.0
    %1096 = vmatpush1.msra.mxu0 0.0
    %1097 = vmatprep.subr.mxu0 0.0
    %1098 = vmatpush1.msra.mxu0 0.0
    %1099 = vmatprep.subr.mxu0 0.0
    %1100 = vmatpush1.msra.mxu0 0.0
    %1101 = vmatprep.subr.mxu0 0.0
    %1102 = vmatpush1.msra.mxu0 0.0
    %1103 = vmatprep.subr.mxu0 0.0
    %1104 = vmatpush1.msra.mxu0 0.0
    %1105 = vmatprep.subr.mxu0 0.0
    %1106 = vmatpush1.msra.mxu0 0.0
    %1107 = vmatprep.subr.mxu0 0.0
    %1108 = vmatpush1.msra.mxu0 0.0
    %1109 = vmatprep.subr.mxu0 0.0
    %1110 = vmatpush1.msra.mxu0 0.0
    %1111 = vmatprep.subr.mxu0 0.0
    %1112 = vmatpush1.msra.mxu0 0.0
    %1113 = vmatprep.subr.mxu0 0.0
    %1114 = vmatpush1.msra.mxu0 0.0
    %1115 = vmatprep.subr.mxu0 0.0
    %1116 = vmatpush1.msra.mxu0 0.0
    %1117 = vmatprep.subr.mxu0 0.0
    %1118 = vmatpush1.msra.mxu0 0.0
    %1119 = vmatprep.subr.mxu0 0.0
    %1120 = vmatpush1.msra.mxu0 0.0
    %1121 = vmatprep.subr.mxu0 0.0
    %1122 = vmatpush1.msra.mxu0 0.0
    %1123 = vmatprep.subr.mxu0 0.0
    %1124 = vmatpush1.msra.mxu0 0.0
    %1125 = vmatprep.mubr.f32.mxu0 0.0
    %1126 = vmatmul.mubr.f32.gmra.mrb[0].mxu0 %v1059
    %v1127 = vpop.f32.mrb[0].mxu0
    %v1128 = vadd.f32 %v1056, %v1127
    %v1129 = vpop.f32.mrb[0].mxu0
    %1130 = vdwg.mxu0
    %v1132 = vcombine.high %v1128, %v1128
    %v1134 = vunpack.c.l.s4 1966171168
    %v1135 = vunpack.c.0.s8 %v1134
    %v1136 = vlaneseq
    %v1137 = vshrl.u32 %v1136, 7
    %v1138 = vsub.s32 %v1135, %v1137
    %v1139 = vrot.slane %v1128, %v1138
    %v1141 = vunpack.c.l.s4 1966171168
    %v1142 = vunpack.c.0.s8 %v1141
    %v1143 = vlaneseq
    %v1144 = vshrl.u32 %v1143, 7
    %v1145 = vsub.s32 %v1142, %v1144
    %v1146 = vrot.slane %v1132, %v1145
    %v1147 = vcombine.high %v1139, %v1139
    %v1148 = vcombine.high %v1146, %v1146
    %v1150 = vunpack.c.l.s4 1966171168
    %v1151 = vunpack.c.0.s8 %v1150
    %v1152 = vlaneseq
    %v1153 = vshrl.u32 %v1152, 7
    %v1154 = vsub.s32 %v1151, %v1153
    %v1155 = vrot.slane %v1139, %v1154
    %v1157 = vunpack.c.l.s4 1966171168
    %v1158 = vunpack.c.0.s8 %v1157
    %v1159 = vlaneseq
    %v1160 = vshrl.u32 %v1159, 7
    %v1161 = vsub.s32 %v1158, %v1160
    %v1162 = vrot.slane %v1146, %v1161
    %v1164 = vunpack.c.l.s4 1966171168
    %v1165 = vunpack.c.0.s8 %v1164
    %v1166 = vlaneseq
    %v1167 = vshrl.u32 %v1166, 7
    %v1168 = vsub.s32 %v1165, %v1167
    %v1169 = vrot.slane %v1147, %v1168
    %v1171 = vunpack.c.l.s4 1966171168
    %v1172 = vunpack.c.0.s8 %v1171
    %v1173 = vlaneseq
    %v1174 = vshrl.u32 %v1173, 7
    %v1175 = vsub.s32 %v1172, %v1174
    %v1176 = vrot.slane %v1148, %v1175
    %v1177 = vcombine.high %v1155, %v1155
    %v1178 = vcombine.high %v1169, %v1169
    %v1181 = vld [vmem:[#allocation6] sm:$0xff]
    %v1182 = vld [vmem:[#allocation6 + $0x8] sm:$0xff]
    %v1183 = vld [vmem:[#allocation6 + $0x10] sm:$0xff]
    %v1184 = vld [vmem:[#allocation6 + $0x18] sm:$0xff]
    %v1185 = vcombine.low %v1155, %v1178
    %v1187 = vunpack.c.l.s4 1966171168
    %v1188 = vunpack.c.0.s8 %v1187
    %v1189 = vlaneseq
    %v1190 = vshrl.u32 %v1189, 7
    %v1191 = vsub.s32 %v1188, %v1190
    %v1192 = vrot.slane %v1185, %v1191
    %v1194 = vunpack.c.l.s4 1966171168
    %v1195 = vunpack.c.0.s8 %v1194
    %v1196 = vlaneseq
    %v1197 = vshrl.u32 %v1196, 7
    %v1198 = vsub.s32 %v1195, %v1197
    %v1199 = vrot.slane %v1192, %v1198
    %v1201 = vcombine.low %v1177, %v1176
    %v1203 = vunpack.c.l.s4 1966171168
    %v1204 = vunpack.c.0.s8 %v1203
    %v1205 = vlaneseq
    %v1206 = vshrl.u32 %v1205, 7
    %v1207 = vsub.s32 %v1204, %v1206
    %v1208 = vrot.slane %v1201, %v1207
    %v1210 = vunpack.c.l.s4 1966171168
    %v1211 = vunpack.c.0.s8 %v1210
    %v1212 = vlaneseq
    %v1213 = vshrl.u32 %v1212, 7
    %v1214 = vsub.s32 %v1211, %v1213
    %v1215 = vrot.slane %v1208, %v1214
    %v1217 = vsel %vm134, %v1199, %v1215
    %vm1218 = vcmask 261120
    %v1220 = vsel %vm1218, 0.0, 0
    %1222 = vmatprep.subr.mxu0 0.0
    %1223 = vmatpush1.msra.mxu0 %v1181
    %1224 = vmatprep.subr.mxu0 0.0
    %1225 = vmatpush1.msra.mxu0 %v1182
    %1226 = vmatprep.subr.mxu0 0.0
    %1227 = vmatpush1.msra.mxu0 %v1183
    %1228 = vmatprep.subr.mxu0 0.0
    %1229 = vmatpush1.msra.mxu0 %v1184
    %1230 = vmatprep.subr.mxu0 0.0
    %1231 = vmatpush1.msra.mxu0 0.0
    %1232 = vmatprep.subr.mxu0 0.0
    %1233 = vmatpush1.msra.mxu0 0.0
    %1234 = vmatprep.subr.mxu0 0.0
    %1235 = vmatpush1.msra.mxu0 0.0
    %1236 = vmatprep.subr.mxu0 0.0
    %1237 = vmatpush1.msra.mxu0 0.0
    %1238 = vmatprep.subr.mxu0 0.0
    %1239 = vmatpush1.msra.mxu0 0.0
    %1240 = vmatprep.subr.mxu0 0.0
    %1241 = vmatpush1.msra.mxu0 0.0
    %1242 = vmatprep.subr.mxu0 0.0
    %1243 = vmatpush1.msra.mxu0 0.0
    %1244 = vmatprep.subr.mxu0 0.0
    %1245 = vmatpush1.msra.mxu0 0.0
    %1246 = vmatprep.subr.mxu0 0.0
    %1247 = vmatpush1.msra.mxu0 0.0
    %1248 = vmatprep.subr.mxu0 0.0
    %1249 = vmatpush1.msra.mxu0 0.0
    %1250 = vmatprep.subr.mxu0 0.0
    %1251 = vmatpush1.msra.mxu0 0.0
    %1252 = vmatprep.subr.mxu0 0.0
    %1253 = vmatpush1.msra.mxu0 0.0
    %1254 = vmatprep.subr.mxu0 0.0
    %1255 = vmatpush1.msra.mxu0 0.0
    %1256 = vmatprep.subr.mxu0 0.0
    %1257 = vmatpush1.msra.mxu0 0.0
    %1258 = vmatprep.subr.mxu0 0.0
    %1259 = vmatpush1.msra.mxu0 0.0
    %1260 = vmatprep.subr.mxu0 0.0
    %1261 = vmatpush1.msra.mxu0 0.0
    %1262 = vmatprep.subr.mxu0 0.0
    %1263 = vmatpush1.msra.mxu0 0.0
    %1264 = vmatprep.subr.mxu0 0.0
    %1265 = vmatpush1.msra.mxu0 0.0
    %1266 = vmatprep.subr.mxu0 0.0
    %1267 = vmatpush1.msra.mxu0 0.0
    %1268 = vmatprep.subr.mxu0 0.0
    %1269 = vmatpush1.msra.mxu0 0.0
    %1270 = vmatprep.subr.mxu0 0.0
    %1271 = vmatpush1.msra.mxu0 0.0
    %1272 = vmatprep.subr.mxu0 0.0
    %1273 = vmatpush1.msra.mxu0 0.0
    %1274 = vmatprep.subr.mxu0 0.0
    %1275 = vmatpush1.msra.mxu0 0.0
    %1276 = vmatprep.subr.mxu0 0.0
    %1277 = vmatpush1.msra.mxu0 0.0
    %1278 = vmatprep.subr.mxu0 0.0
    %1279 = vmatpush1.msra.mxu0 0.0
    %1280 = vmatprep.subr.mxu0 0.0
    %1281 = vmatpush1.msra.mxu0 0.0
    %1282 = vmatprep.subr.mxu0 0.0
    %1283 = vmatpush1.msra.mxu0 0.0
    %1284 = vmatprep.subr.mxu0 0.0
    %1285 = vmatpush1.msra.mxu0 0.0
    %1286 = vmatprep.mubr.f32.mxu0 0.0
    %1287 = vmatmul.mubr.f32.gmra.mrb[0].mxu0 %v1220
    %v1288 = vpop.f32.mrb[0].mxu0
    %v1289 = vadd.f32 0.0, %v1288
    %v1290 = vpop.f32.mrb[0].mxu0
    %1291 = vdwg.mxu0
    %v1292 = vadd.f32 %v1217, %v1289
    %v1293 = vtanh.pop %v1292
    %v1294 = vxor.u32 %v1292, 2147483648
    %v1295 = vmul.f32 %v1294, 1.442695
    %v1296 = vpow.pop %v1295
    %v1297 = vadd.f32 %v1296, 1.0
    %v1298 = vrcp.pop %v1297
    %v1299 = vmul.f32 1.0, %v1298
    %v1300 = vsel %vm137, %v1293, %v1299
    %v1301 = vmul.f32 %v1300, 0.0
    %1303 = vrot.lane.b32.xlu0 %v1300, 64
    %v1304 = vpop.permute.xlu0 %1303
    %v1306 = vmul.f32 %v1300, %v1304
    %1308 = vrot.lane.b32.xlu0 %v1306, 32
    %v1309 = vpop.permute.xlu0 %1308
    %v1311 = vadd.f32 %v1301, %v1309
    %v1312 = vtanh.pop %v1311
    %1314 = vrot.lane.b32.xlu0 %v1312, 64
    %v1315 = vpop.permute.xlu0 %1314
    %v1317 = vmul.f32 %v1300, %v1315
    %1319 = vrot.lane.b32.xlu0 %v1317, 32
    %v1320 = vpop.permute.xlu0 %1319
    %v1321 = vsel %vm1218, %v1320, 0
    %1323 = vmatprep.subr.mxu0 0.0
    %1324 = vmatpush1.msra.mxu0 %v1181
    %1325 = vmatprep.subr.mxu0 0.0
    %1326 = vmatpush1.msra.mxu0 %v1182
    %1327 = vmatprep.subr.mxu0 0.0
    %1328 = vmatpush1.msra.mxu0 %v1183
    %1329 = vmatprep.subr.mxu0 0.0
    %1330 = vmatpush1.msra.mxu0 %v1184
    %1331 = vmatprep.subr.mxu0 0.0
    %1332 = vmatpush1.msra.mxu0 0.0
    %1333 = vmatprep.subr.mxu0 0.0
    %1334 = vmatpush1.msra.mxu0 0.0
    %1335 = vmatprep.subr.mxu0 0.0
    %1336 = vmatpush1.msra.mxu0 0.0
    %1337 = vmatprep.subr.mxu0 0.0
    %1338 = vmatpush1.msra.mxu0 0.0
    %1339 = vmatprep.subr.mxu0 0.0
    %1340 = vmatpush1.msra.mxu0 0.0
    %1341 = vmatprep.subr.mxu0 0.0
    %1342 = vmatpush1.msra.mxu0 0.0
    %1343 = vmatprep.subr.mxu0 0.0
    %1344 = vmatpush1.msra.mxu0 0.0
    %1345 = vmatprep.subr.mxu0 0.0
    %1346 = vmatpush1.msra.mxu0 0.0
    %1347 = vmatprep.subr.mxu0 0.0
    %1348 = vmatpush1.msra.mxu0 0.0
    %1349 = vmatprep.subr.mxu0 0.0
    %1350 = vmatpush1.msra.mxu0 0.0
    %1351 = vmatprep.subr.mxu0 0.0
    %1352 = vmatpush1.msra.mxu0 0.0
    %1353 = vmatprep.subr.mxu0 0.0
    %1354 = vmatpush1.msra.mxu0 0.0
    %1355 = vmatprep.subr.mxu0 0.0
    %1356 = vmatpush1.msra.mxu0 0.0
    %1357 = vmatprep.subr.mxu0 0.0
    %1358 = vmatpush1.msra.mxu0 0.0
    %1359 = vmatprep.subr.mxu0 0.0
    %1360 = vmatpush1.msra.mxu0 0.0
    %1361 = vmatprep.subr.mxu0 0.0
    %1362 = vmatpush1.msra.mxu0 0.0
    %1363 = vmatprep.subr.mxu0 0.0
    %1364 = vmatpush1.msra.mxu0 0.0
    %1365 = vmatprep.subr.mxu0 0.0
    %1366 = vmatpush1.msra.mxu0 0.0
    %1367 = vmatprep.subr.mxu0 0.0
    %1368 = vmatpush1.msra.mxu0 0.0
    %1369 = vmatprep.subr.mxu0 0.0
    %1370 = vmatpush1.msra.mxu0 0.0
    %1371 = vmatprep.subr.mxu0 0.0
    %1372 = vmatpush1.msra.mxu0 0.0
    %1373 = vmatprep.subr.mxu0 0.0
    %1374 = vmatpush1.msra.mxu0 0.0
    %1375 = vmatprep.subr.mxu0 0.0
    %1376 = vmatpush1.msra.mxu0 0.0
    %1377 = vmatprep.subr.mxu0 0.0
    %1378 = vmatpush1.msra.mxu0 0.0
    %1379 = vmatprep.subr.mxu0 0.0
    %1380 = vmatpush1.msra.mxu0 0.0
    %1381 = vmatprep.subr.mxu0 0.0
    %1382 = vmatpush1.msra.mxu0 0.0
    %1383 = vmatprep.subr.mxu0 0.0
    %1384 = vmatpush1.msra.mxu0 0.0
    %1385 = vmatprep.subr.mxu0 0.0
    %1386 = vmatpush1.msra.mxu0 0.0
    %1387 = vmatprep.mubr.f32.mxu0 0.0
    %1388 = vmatmul.mubr.f32.gmra.mrb[0].mxu0 %v1321
    %v1389 = vpop.f32.mrb[0].mxu0
    %v1390 = vadd.f32 0.0, %v1389
    %v1391 = vpop.f32.mrb[0].mxu0
    %1392 = vdwg.mxu0
    %v1395 = vunpack.c.l.s4 1966171168
    %v1396 = vunpack.c.0.s8 %v1395
    %v1397 = vlaneseq
    %v1398 = vshrl.u32 %v1397, 7
    %v1399 = vsub.s32 %v1396, %v1398
    %v1400 = vrot.slane %v1390, %v1399
    %v1401 = vcombine.high %v1400, %v1400
    %v1403 = vunpack.c.l.s4 1966171168
    %v1404 = vunpack.c.0.s8 %v1403
    %v1405 = vlaneseq
    %v1406 = vshrl.u32 %v1405, 7
    %v1407 = vsub.s32 %v1404, %v1406
    %v1408 = vrot.slane %v1400, %v1407
    %v1410 = vunpack.c.l.s4 1966171168
    %v1411 = vunpack.c.0.s8 %v1410
    %v1412 = vlaneseq
    %v1413 = vshrl.u32 %v1412, 7
    %v1414 = vsub.s32 %v1411, %v1413
    %v1415 = vrot.slane %v1401, %v1414
    %v1418 = vadd.f32 %v1169, %v1408
    %v1419 = vadd.f32 %v1162, %v1415
    %v1420 = vtanh.pop %v1418
    %v1421 = vtanh.pop %v1419
    %v1422 = vxor.u32 %v1418, 2147483648
    %v1423 = vxor.u32 %v1419, 2147483648
    %v1424 = vmul.f32 %v1422, 1.442695
    %v1425 = vpow.pop %v1424
    %v1426 = vmul.f32 %v1423, 1.442695
    %v1427 = vpow.pop %v1426
    %v1428 = vadd.f32 %v1425, 1.0
    %v1429 = vadd.f32 %v1427, 1.0
    %v1430 = vrcp.pop %v1428
    %v1431 = vmul.f32 1.0, %v1430
    %v1432 = vrcp.pop %v1429
    %v1433 = vmul.f32 1.0, %v1432
    %v1436 = vcombine.low %v1420, %v1421
    %v1438 = vunpack.c.l.s4 1966171168
    %v1439 = vunpack.c.0.s8 %v1438
    %v1440 = vlaneseq
    %v1441 = vshrl.u32 %v1440, 7
    %v1442 = vsub.s32 %v1439, %v1441
    %v1443 = vrot.slane %v1436, %v1442
    %v1445 = vunpack.c.l.s4 1966171168
    %v1446 = vunpack.c.0.s8 %v1445
    %v1447 = vlaneseq
    %v1448 = vshrl.u32 %v1447, 7
    %v1449 = vsub.s32 %v1446, %v1448
    %v1450 = vrot.slane %v1443, %v1449
    %v1454 = vcombine.low %v1431, %v1433
    %v1456 = vunpack.c.l.s4 1966171168
    %v1457 = vunpack.c.0.s8 %v1456
    %v1458 = vlaneseq
    %v1459 = vshrl.u32 %v1458, 7
    %v1460 = vsub.s32 %v1457, %v1459
    %v1461 = vrot.slane %v1454, %v1460
    %v1463 = vunpack.c.l.s4 1966171168
    %v1464 = vunpack.c.0.s8 %v1463
    %v1465 = vlaneseq
    %v1466 = vshrl.u32 %v1465, 7
    %v1467 = vsub.s32 %v1464, %v1466
    %v1468 = vrot.slane %v1461, %v1467
    %v1470 = vsel %vm137, %v1450, %v1468
    %v1471 = vmul.f32 %v1470, %v1311
    %1473 = vrot.lane.b32.xlu0 %v1470, 64
    %v1474 = vpop.permute.xlu0 %1473
    %v1476 = vmul.f32 %v1470, %v1474
    %1478 = vrot.lane.b32.xlu0 %v1476, 32
    %v1479 = vpop.permute.xlu0 %1478
    %v1481 = vadd.f32 %v1471, %v1479
    %v1482 = vtanh.pop %v1481
    %1484 = vrot.lane.b32.xlu0 %v1482, 64
    %v1485 = vpop.permute.xlu0 %1484
    %v1487 = vmul.f32 %v1470, %v1485
    %v1488 = vsel %vm134, %v1215, %v1199
    %1490 = vrot.lane.b32.xlu0 %v1487, 32
    %v1491 = vpop.permute.xlu0 %1490
    %v1492 = vsel %vm1218, %v1491, 0
    %1494 = vmatprep.subr.mxu0 0.0
    %1495 = vmatpush1.msra.mxu0 %v1181
    %1496 = vmatprep.subr.mxu0 0.0
    %1497 = vmatpush1.msra.mxu0 %v1182
    %1498 = vmatprep.subr.mxu0 0.0
    %1499 = vmatpush1.msra.mxu0 %v1183
    %1500 = vmatprep.subr.mxu0 0.0
    %1501 = vmatpush1.msra.mxu0 %v1184
    %1502 = vmatprep.subr.mxu0 0.0
    %1503 = vmatpush1.msra.mxu0 0.0
    %1504 = vmatprep.subr.mxu0 0.0
    %1505 = vmatpush1.msra.mxu0 0.0
    %1506 = vmatprep.subr.mxu0 0.0
    %1507 = vmatpush1.msra.mxu0 0.0
    %1508 = vmatprep.subr.mxu0 0.0
    %1509 = vmatpush1.msra.mxu0 0.0
    %1510 = vmatprep.subr.mxu0 0.0
    %1511 = vmatpush1.msra.mxu0 0.0
    %1512 = vmatprep.subr.mxu0 0.0
    %1513 = vmatpush1.msra.mxu0 0.0
    %1514 = vmatprep.subr.mxu0 0.0
    %1515 = vmatpush1.msra.mxu0 0.0
    %1516 = vmatprep.subr.mxu0 0.0
    %1517 = vmatpush1.msra.mxu0 0.0
    %1518 = vmatprep.subr.mxu0 0.0
    %1519 = vmatpush1.msra.mxu0 0.0
    %1520 = vmatprep.subr.mxu0 0.0
    %1521 = vmatpush1.msra.mxu0 0.0
    %1522 = vmatprep.subr.mxu0 0.0
    %1523 = vmatpush1.msra.mxu0 0.0
    %1524 = vmatprep.subr.mxu0 0.0
    %1525 = vmatpush1.msra.mxu0 0.0
    %1526 = vmatprep.subr.mxu0 0.0
    %1527 = vmatpush1.msra.mxu0 0.0
    %1528 = vmatprep.subr.mxu0 0.0
    %1529 = vmatpush1.msra.mxu0 0.0
    %1530 = vmatprep.subr.mxu0 0.0
    %1531 = vmatpush1.msra.mxu0 0.0
    %1532 = vmatprep.subr.mxu0 0.0
    %1533 = vmatpush1.msra.mxu0 0.0
    %1534 = vmatprep.subr.mxu0 0.0
    %1535 = vmatpush1.msra.mxu0 0.0
    %1536 = vmatprep.subr.mxu0 0.0
    %1537 = vmatpush1.msra.mxu0 0.0
    %1538 = vmatprep.subr.mxu0 0.0
    %1539 = vmatpush1.msra.mxu0 0.0
    %1540 = vmatprep.subr.mxu0 0.0
    %1541 = vmatpush1.msra.mxu0 0.0
    %1542 = vmatprep.subr.mxu0 0.0
    %1543 = vmatpush1.msra.mxu0 0.0
    %1544 = vmatprep.subr.mxu0 0.0
    %1545 = vmatpush1.msra.mxu0 0.0
    %1546 = vmatprep.subr.mxu0 0.0
    %1547 = vmatpush1.msra.mxu0 0.0
    %1548 = vmatprep.subr.mxu0 0.0
    %1549 = vmatpush1.msra.mxu0 0.0
    %1550 = vmatprep.subr.mxu0 0.0
    %1551 = vmatpush1.msra.mxu0 0.0
    %1552 = vmatprep.subr.mxu0 0.0
    %1553 = vmatpush1.msra.mxu0 0.0
    %1554 = vmatprep.subr.mxu0 0.0
    %1555 = vmatpush1.msra.mxu0 0.0
    %1556 = vmatprep.subr.mxu0 0.0
    %1557 = vmatpush1.msra.mxu0 0.0
    %1558 = vmatprep.mubr.f32.mxu0 0.0
    %1559 = vmatmul.mubr.f32.gmra.mrb[0].mxu0 %v1492
    %v1560 = vpop.f32.mrb[0].mxu0
    %v1561 = vadd.f32 0.0, %v1560
    %v1562 = vpop.f32.mrb[0].mxu0
    %1563 = vdwg.mxu0
    %v1564 = vadd.f32 %v1488, %v1561
    %v1565 = vtanh.pop %v1564
    %v1566 = vxor.u32 %v1564, 2147483648
    %v1567 = vmul.f32 %v1566, 1.442695
    %v1568 = vpow.pop %v1567
    %v1569 = vadd.f32 %v1568, 1.0
    %v1570 = vrcp.pop %v1569
    %v1571 = vmul.f32 1.0, %v1570
    %v1572 = vsel %vm137, %v1565, %v1571
    %v1573 = vmul.f32 %v1572, %v1481
    %1575 = vrot.lane.b32.xlu0 %v1572, 64
    %v1576 = vpop.permute.xlu0 %1575
    %v1578 = vmul.f32 %v1572, %v1576
    %1580 = vrot.lane.b32.xlu0 %v1578, 32
    %v1581 = vpop.permute.xlu0 %1580
    %v1583 = vadd.f32 %v1573, %v1581
    %v1584 = vtanh.pop %v1583
    %1586 = vrot.lane.b32.xlu0 %v1584, 64
    %v1587 = vpop.permute.xlu0 %1586
    %v1589 = vmul.f32 %v1572, %v1587
    %1592 = vrot.lane.b32.xlu0 %v1589, 32
    %v1593 = vpop.permute.xlu0 %1592
    %v1595 = vsel %vm138, %v1320, %v1593
    %v1596 = vsel %vm138, %v1593, %v1320
    %v1599 = vunpack.c.l.s4 1966171168
    %v1600 = vunpack.c.0.s8 %v1599
    %v1601 = vlaneseq
    %v1602 = vshrl.u32 %v1601, 7
    %v1603 = vsub.s32 %v1600, %v1602
    %v1604 = vrot.slane %v1595, %v1603
    %v1605 = vcombine.high %v1604, %v1604
    %v1607 = vunpack.c.l.s4 1966171168
    %v1608 = vunpack.c.0.s8 %v1607
    %v1609 = vlaneseq
    %v1610 = vshrl.u32 %v1609, 7
    %v1611 = vsub.s32 %v1608, %v1610
    %v1612 = vrot.slane %v1604, %v1611
    %v1614 = vunpack.c.l.s4 1966171168
    %v1615 = vunpack.c.0.s8 %v1614
    %v1616 = vlaneseq
    %v1617 = vshrl.u32 %v1616, 7
    %v1618 = vsub.s32 %v1615, %v1617
    %v1619 = vrot.slane %v1605, %v1618
    %v1623 = vunpack.c.l.s4 1966171168
    %v1624 = vunpack.c.0.s8 %v1623
    %v1625 = vlaneseq
    %v1626 = vshrl.u32 %v1625, 7
    %v1627 = vsub.s32 %v1624, %v1626
    %v1628 = vrot.slane %v1487, %v1627
    %v1629 = vcombine.high %v1628, %v1628
    %v1631 = vunpack.c.l.s4 1966171168
    %v1632 = vunpack.c.0.s8 %v1631
    %v1633 = vlaneseq
    %v1634 = vshrl.u32 %v1633, 7
    %v1635 = vsub.s32 %v1632, %v1634
    %v1636 = vrot.slane %v1628, %v1635
    %v1638 = vunpack.c.l.s4 1966171168
    %v1639 = vunpack.c.0.s8 %v1638
    %v1640 = vlaneseq
    %v1641 = vshrl.u32 %v1640, 7
    %v1642 = vsub.s32 %v1639, %v1641
    %v1643 = vrot.slane %v1629, %v1642
    %v1646 = vunpack.c.l.s4 1966171168
    %v1647 = vunpack.c.0.s8 %v1646
    %v1648 = vlaneseq
    %v1649 = vshrl.u32 %v1648, 7
    %v1650 = vsub.s32 %v1647, %v1649
    %v1651 = vrot.slane %v1596, %v1650
    %v1652 = vcombine.high %v1651, %v1651
    %v1654 = vunpack.c.l.s4 1966171168
    %v1655 = vunpack.c.0.s8 %v1654
    %v1656 = vlaneseq
    %v1657 = vshrl.u32 %v1656, 7
    %v1658 = vsub.s32 %v1655, %v1657
    %v1659 = vrot.slane %v1651, %v1658
    %v1661 = vunpack.c.l.s4 1966171168
    %v1662 = vunpack.c.0.s8 %v1661
    %v1663 = vlaneseq
    %v1664 = vshrl.u32 %v1663, 7
    %v1665 = vsub.s32 %v1662, %v1664
    %v1666 = vrot.slane %v1652, %v1665
    %v1667 = vlaneseq
    %v1668 = vshrl.u32 %v1667, 7
    %v1669 = vsub.s32 0, %v1668
    %v1670 = vrot.slane %v1636, %v1669
    %v1671 = vlaneseq
    %v1672 = vshrl.u32 %v1671, 7
    %v1673 = vsub.s32 0, %v1672
    %v1674 = vrot.slane %v1643, %v1673
    %1675 = vrot.lane.b32.xlu0 %v1670, 32
    %v1676 = vpop.permute.xlu0 %1675
    %1677 = vrot.lane.b32.xlu0 %v1674, 32
    %v1678 = vpop.permute.xlu0 %1677
    %v1681 = vlaneseq
    %v1682 = vshrl.u32 %v1681, 7
    %v1683 = vsub.s32 0, %v1682
    %v1684 = vrot.slane %v1659, %v1683
    %v1685 = vlaneseq
    %v1686 = vshrl.u32 %v1685, 7
    %v1687 = vsub.s32 0, %v1686
    %v1688 = vrot.slane %v1666, %v1687
    %vm1691 = vcmask 1040384
    %v1692 = vsel %vm1691, %v1612, %v1676
    %v1693 = vsel %vm1691, %v1619, %v1678
    %vm1694 = vcmask 1041408
    %v1695 = vsel %vm1694, %v1692, %v1684
    %v1696 = vsel %vm1694, %v1693, %v1688
    %1699 = vrot.lane.b32.xlu0 %v1695, 64
    %v1700 = vpop.permute.xlu0 %1699
    %1701 = vrot.lane.b32.xlu0 %v1696, 64
    %v1702 = vpop.permute.xlu0 %1701
    %v1705 = vsel %vm264, %v118, %v1700
    %v1706 = vsel %vm264, %v119, %v1702
    %v1710 = vunpack.c.l.s4 1966171168
    %v1711 = vunpack.c.0.s8 %v1710
    %v1712 = vlaneseq
    %v1713 = vshrl.u32 %v1712, 7
    %v1714 = vsub.s32 %v1711, %v1713
    %v1715 = vrot.slane %v1705, %v1714
    %v1716 = vcombine.high %v1715, %v1715
    %v1718 = vunpack.c.l.s4 1966171168
    %v1719 = vunpack.c.0.s8 %v1718
    %v1720 = vlaneseq
    %v1721 = vshrl.u32 %v1720, 7
    %v1722 = vsub.s32 %v1719, %v1721
    %v1723 = vrot.slane %v1715, %v1722
    %v1725 = vunpack.c.l.s4 1966171168
    %v1726 = vunpack.c.0.s8 %v1725
    %v1727 = vlaneseq
    %v1728 = vshrl.u32 %v1727, 7
    %v1729 = vsub.s32 %v1726, %v1728
    %v1730 = vrot.slane %v1716, %v1729
    %v1731 = vcombine.high %v1723, %v1723
    %v1733 = vunpack.c.l.s4 1966171168
    %v1734 = vunpack.c.0.s8 %v1733
    %v1735 = vlaneseq
    %v1736 = vshrl.u32 %v1735, 7
    %v1737 = vsub.s32 %v1734, %v1736
    %v1738 = vrot.slane %v1706, %v1737
    %v1739 = vcombine.high %v1738, %v1738
    %v1741 = vunpack.c.l.s4 1966171168
    %v1742 = vunpack.c.0.s8 %v1741
    %v1743 = vlaneseq
    %v1744 = vshrl.u32 %v1743, 7
    %v1745 = vsub.s32 %v1742, %v1744
    %v1746 = vrot.slane %v1738, %v1745
    %v1748 = vunpack.c.l.s4 1966171168
    %v1749 = vunpack.c.0.s8 %v1748
    %v1750 = vlaneseq
    %v1751 = vshrl.u32 %v1750, 7
    %v1752 = vsub.s32 %v1749, %v1751
    %v1753 = vrot.slane %v1739, %v1752
    %v1754 = vcombine.high %v1746, %v1746
    %v1755 = vld [vmem:[#allocation7] sm:$0xff]
    %v1756 = vld [vmem:[#allocation7 + $0x8] sm:$0xff]
    %v1757 = vld [vmem:[#allocation7 + $0x10] sm:$0xff]
    %v1758 = vld [vmem:[#allocation7 + $0x18] sm:$0xff]
    %v1759 = vld [vmem:[#allocation7 + $0x20] sm:$0xff]
    %v1760 = vld [vmem:[#allocation7 + $0x28] sm:$0xff]
    %v1761 = vld [vmem:[#allocation7 + $0x30] sm:$0xff]
    %v1762 = vld [vmem:[#allocation7 + $0x38] sm:$0xff]
    %v1763 = vld [vmem:[#allocation7 + $0x40] sm:$0xff]
    %v1764 = vld [vmem:[#allocation7 + $0x48] sm:$0xff]
    %v1765 = vld [vmem:[#allocation7 + $0x50] sm:$0xff]
    %v1766 = vld [vmem:[#allocation7 + $0x58] sm:$0xff]
    %v1767 = vld [vmem:[#allocation7 + $0x60] sm:$0xff]
    %v1768 = vld [vmem:[#allocation7 + $0x68] sm:$0xff]
    %v1769 = vld [vmem:[#allocation7 + $0x70] sm:$0xff]
    %v1770 = vld [vmem:[#allocation7 + $0x78] sm:$0xff]
    %v1771 = vld [vmem:[#allocation7 + $0x80] sm:$0xff]
    %v1772 = vld [vmem:[#allocation7 + $0x88] sm:$0xff]
    %v1773 = vld [vmem:[#allocation7 + $0x90] sm:$0xff]
    %v1774 = vld [vmem:[#allocation7 + $0x98] sm:$0xff]
    %v1775 = vld [vmem:[#allocation7 + $0xa0] sm:$0xff]
    %v1776 = vld [vmem:[#allocation7 + $0xa8] sm:$0xff]
    %v1777 = vld [vmem:[#allocation7 + $0xb0] sm:$0xff]
    %v1778 = vld [vmem:[#allocation7 + $0xb8] sm:$0xff]
    %v1779 = vld [vmem:[#allocation7 + $0xc0] sm:$0xff]
    %v1780 = vld [vmem:[#allocation7 + $0xc8] sm:$0xff]
    %v1781 = vld [vmem:[#allocation7 + $0xd0] sm:$0xff]
    %v1782 = vld [vmem:[#allocation7 + $0xd8] sm:$0xff]
    %v1783 = vld [vmem:[#allocation7 + $0xe0] sm:$0xff]
    %v1784 = vld [vmem:[#allocation7 + $0xe8] sm:$0xff]
    %v1785 = vld [vmem:[#allocation7 + $0xf0] sm:$0xff]
    %v1786 = vld [vmem:[#allocation7 + $0xf8] sm:$0xff]
    %v1787 = vld [vmem:[#allocation7 + $0x100] sm:$0xff]
    %v1788 = vld [vmem:[#allocation7 + $0x108] sm:$0xff]
    %v1789 = vld [vmem:[#allocation7 + $0x110] sm:$0xff]
    %v1790 = vld [vmem:[#allocation7 + $0x118] sm:$0xff]
    %v1791 = vld [vmem:[%s9] sm:$0x7]
    %v1792 = vld [vmem:[%s10] sm:$0xff]
    %v1793 = vld [vmem:[%s10 + $0x8] sm:$0xff]
    %v1794 = vld [vmem:[%s10 + $0x10] sm:$0xff]
    %v1795 = vld [vmem:[%s10 + $0x18] sm:$0xff]
    %v1796 = vld [vmem:[%s10 + $0x20] sm:$0xff]
    %v1797 = vld [vmem:[%s10 + $0x28] sm:$0xff]
    %v1798 = vld [vmem:[%s10 + $0x30] sm:$0xff]
    %v1799 = vld [vmem:[%s10 + $0x38] sm:$0xff]
    %v1800 = vld [vmem:[%s10 + $0x40] sm:$0xff]
    %v1801 = vld [vmem:[%s10 + $0x48] sm:$0xff]
    %v1802 = vld [vmem:[%s10 + $0x50] sm:$0xff]
    %v1803 = vld [vmem:[%s10 + $0x58] sm:$0xff]
    %v1804 = vld [vmem:[%s11] sm:$0x1]
    %v1806 = vlaneseq
    %v1807 = vshrl.u32 %v1806, 7
    %v1808 = vsub.s32 0, %v1807
    %v1809 = vrot.slane %v1791, %v1808
    %v1810 = vlaneseq
    %v1811 = vshrl.u32 %v1810, 7
    %v1812 = vsub.s32 1, %v1811
    %v1813 = vrot.slane %v1791, %v1812
    %v1814 = vlaneseq
    %v1815 = vshrl.u32 %v1814, 7
    %v1816 = vsub.s32 2, %v1815
    %v1817 = vrot.slane %v1791, %v1816
    %v1821 = vcombine.low %v1723, %v1730
    %v1822 = vcombine.low %v1731, %v1746
    %v1823 = vcombine.low %v1753, %v1754
    %v1825 = vunpack.c.l.s4 1966171168
    %v1826 = vunpack.c.0.s8 %v1825
    %v1827 = vlaneseq
    %v1828 = vshrl.u32 %v1827, 7
    %v1829 = vsub.s32 %v1826, %v1828
    %v1830 = vrot.slane %v1821, %v1829
    %v1832 = vunpack.c.l.s4 1966171168
    %v1833 = vunpack.c.0.s8 %v1832
    %v1834 = vlaneseq
    %v1835 = vshrl.u32 %v1834, 7
    %v1836 = vsub.s32 %v1833, %v1835
    %v1837 = vrot.slane %v1822, %v1836
    %v1839 = vunpack.c.l.s4 1966171168
    %v1840 = vunpack.c.0.s8 %v1839
    %v1841 = vlaneseq
    %v1842 = vshrl.u32 %v1841, 7
    %v1843 = vsub.s32 %v1840, %v1842
    %v1844 = vrot.slane %v1823, %v1843
    %v1845 = vcombine.low %v1830, %v1837
    %v1847 = vunpack.c.l.s4 1966171168
    %v1848 = vunpack.c.0.s8 %v1847
    %v1849 = vlaneseq
    %v1850 = vshrl.u32 %v1849, 7
    %v1851 = vsub.s32 %v1848, %v1850
    %v1852 = vrot.slane %v1845, %v1851
    %v1854 = vunpack.c.l.s4 1966171168
    %v1855 = vunpack.c.0.s8 %v1854
    %v1856 = vlaneseq
    %v1857 = vshrl.u32 %v1856, 7
    %v1858 = vsub.s32 %v1855, %v1857
    %v1859 = vrot.slane %v1844, %v1858
    %v1860 = vcombine.low %v1852, %v1859
    %vm1861 = vcmask 785408
    %v1862 = vsel %vm1861, %v1860, 0
    %1864 = vmatprep.subr.mxu0 %v1756
    %1865 = vmatpush1.msra.mxu0 %v1755
    %1866 = vmatprep.subr.mxu0 %v1759
    %1867 = vmatpush1.msra.mxu0 %v1758
    %1868 = vmatprep.subr.mxu0 %v1762
    %1869 = vmatpush1.msra.mxu0 %v1761
    %1870 = vmatprep.subr.mxu0 %v1765
    %1871 = vmatpush1.msra.mxu0 %v1764
    %1872 = vmatprep.subr.mxu0 %v1768
    %1873 = vmatpush1.msra.mxu0 %v1767
    %1874 = vmatprep.subr.mxu0 %v1771
    %1875 = vmatpush1.msra.mxu0 %v1770
    %1876 = vmatprep.subr.mxu0 %v1774
    %1877 = vmatpush1.msra.mxu0 %v1773
    %1878 = vmatprep.subr.mxu0 %v1777
    %1879 = vmatpush1.msra.mxu0 %v1776
    %1880 = vmatprep.subr.mxu0 %v1780
    %1881 = vmatpush1.msra.mxu0 %v1779
    %1882 = vmatprep.subr.mxu0 %v1783
    %1883 = vmatpush1.msra.mxu0 %v1782
    %1884 = vmatprep.subr.mxu0 %v1786
    %1885 = vmatpush1.msra.mxu0 %v1785
    %1886 = vmatprep.subr.mxu0 %v1789
    %1887 = vmatpush1.msra.mxu0 %v1788
    %1888 = vmatprep.subr.mxu0 0.0
    %1889 = vmatpush1.msra.mxu0 0.0
    %1890 = vmatprep.subr.mxu0 0.0
    %1891 = vmatpush1.msra.mxu0 0.0
    %1892 = vmatprep.subr.mxu0 0.0
    %1893 = vmatpush1.msra.mxu0 0.0
    %1894 = vmatprep.subr.mxu0 0.0
    %1895 = vmatpush1.msra.mxu0 0.0
    %1896 = vmatprep.subr.mxu0 0.0
    %1897 = vmatpush1.msra.mxu0 0.0
    %1898 = vmatprep.subr.mxu0 0.0
    %1899 = vmatpush1.msra.mxu0 0.0
    %1900 = vmatprep.subr.mxu0 0.0
    %1901 = vmatpush1.msra.mxu0 0.0
    %1902 = vmatprep.subr.mxu0 0.0
    %1903 = vmatpush1.msra.mxu0 0.0
    %1904 = vmatprep.subr.mxu0 0.0
    %1905 = vmatpush1.msra.mxu0 0.0
    %1906 = vmatprep.subr.mxu0 0.0
    %1907 = vmatpush1.msra.mxu0 0.0
    %1908 = vmatprep.subr.mxu0 0.0
    %1909 = vmatpush1.msra.mxu0 0.0
    %1910 = vmatprep.subr.mxu0 0.0
    %1911 = vmatpush1.msra.mxu0 0.0
    %1912 = vmatprep.subr.mxu0 0.0
    %1913 = vmatpush1.msra.mxu0 0.0
    %1914 = vmatprep.subr.mxu0 0.0
    %1915 = vmatpush1.msra.mxu0 0.0
    %1916 = vmatprep.subr.mxu0 0.0
    %1917 = vmatpush1.msra.mxu0 0.0
    %1918 = vmatprep.subr.mxu0 0.0
    %1919 = vmatpush1.msra.mxu0 0.0
    %1920 = vmatprep.subr.mxu0 0.0
    %1921 = vmatpush1.msra.mxu0 0.0
    %1922 = vmatprep.subr.mxu0 0.0
    %1923 = vmatpush1.msra.mxu0 0.0
    %1924 = vmatprep.subr.mxu0 0.0
    %1925 = vmatpush1.msra.mxu0 0.0
    %1926 = vmatprep.subr.mxu0 0.0
    %1927 = vmatpush1.msra.mxu0 0.0
    %1928 = vmatprep.mubr.f32.mxu0 0.0
    %1929 = vmatmul.mubr.f32.gmra.mrb[0].mxu0 %v1862
    %v1930 = vpop.f32.mrb[0].mxu0
    %v1931 = vadd.f32 %v1809, %v1930
    %v1932 = vpop.f32.mrb[0].mxu0
    %v1933 = vadd.f32 %v1813, %v1932
    %1934 = vdwg.mxu0
    %1935 = vmatprep.subr.mxu0 0.0
    %1936 = vmatpush1.msra.mxu0 %v1757
    %1937 = vmatprep.subr.mxu0 0.0
    %1938 = vmatpush1.msra.mxu0 %v1760
    %1939 = vmatprep.subr.mxu0 0.0
    %1940 = vmatpush1.msra.mxu0 %v1763
    %1941 = vmatprep.subr.mxu0 0.0
    %1942 = vmatpush1.msra.mxu0 %v1766
    %1943 = vmatprep.subr.mxu0 0.0
    %1944 = vmatpush1.msra.mxu0 %v1769
    %1945 = vmatprep.subr.mxu0 0.0
    %1946 = vmatpush1.msra.mxu0 %v1772
    %1947 = vmatprep.subr.mxu0 0.0
    %1948 = vmatpush1.msra.mxu0 %v1775
    %1949 = vmatprep.subr.mxu0 0.0
    %1950 = vmatpush1.msra.mxu0 %v1778
    %1951 = vmatprep.subr.mxu0 0.0
    %1952 = vmatpush1.msra.mxu0 %v1781
    %1953 = vmatprep.subr.mxu0 0.0
    %1954 = vmatpush1.msra.mxu0 %v1784
    %1955 = vmatprep.subr.mxu0 0.0
    %1956 = vmatpush1.msra.mxu0 %v1787
    %1957 = vmatprep.subr.mxu0 0.0
    %1958 = vmatpush1.msra.mxu0 %v1790
    %1959 = vmatprep.subr.mxu0 0.0
    %1960 = vmatpush1.msra.mxu0 0.0
    %1961 = vmatprep.subr.mxu0 0.0
    %1962 = vmatpush1.msra.mxu0 0.0
    %1963 = vmatprep.subr.mxu0 0.0
    %1964 = vmatpush1.msra.mxu0 0.0
    %1965 = vmatprep.subr.mxu0 0.0
    %1966 = vmatpush1.msra.mxu0 0.0
    %1967 = vmatprep.subr.mxu0 0.0
    %1968 = vmatpush1.msra.mxu0 0.0
    %1969 = vmatprep.subr.mxu0 0.0
    %1970 = vmatpush1.msra.mxu0 0.0
    %1971 = vmatprep.subr.mxu0 0.0
    %1972 = vmatpush1.msra.mxu0 0.0
    %1973 = vmatprep.subr.mxu0 0.0
    %1974 = vmatpush1.msra.mxu0 0.0
    %1975 = vmatprep.subr.mxu0 0.0
    %1976 = vmatpush1.msra.mxu0 0.0
    %1977 = vmatprep.subr.mxu0 0.0
    %1978 = vmatpush1.msra.mxu0 0.0
    %1979 = vmatprep.subr.mxu0 0.0
    %1980 = vmatpush1.msra.mxu0 0.0
    %1981 = vmatprep.subr.mxu0 0.0
    %1982 = vmatpush1.msra.mxu0 0.0
    %1983 = vmatprep.subr.mxu0 0.0
    %1984 = vmatpush1.msra.mxu0 0.0
    %1985 = vmatprep.subr.mxu0 0.0
    %1986 = vmatpush1.msra.mxu0 0.0
    %1987 = vmatprep.subr.mxu0 0.0
    %1988 = vmatpush1.msra.mxu0 0.0
    %1989 = vmatprep.subr.mxu0 0.0
    %1990 = vmatpush1.msra.mxu0 0.0
    %1991 = vmatprep.subr.mxu0 0.0
    %1992 = vmatpush1.msra.mxu0 0.0
    %1993 = vmatprep.subr.mxu0 0.0
    %1994 = vmatpush1.msra.mxu0 0.0
    %1995 = vmatprep.subr.mxu0 0.0
    %1996 = vmatpush1.msra.mxu0 0.0
    %1997 = vmatprep.subr.mxu0 0.0
    %1998 = vmatpush1.msra.mxu0 0.0
    %1999 = vmatprep.mubr.f32.mxu0 0.0
    %2000 = vmatmul.mubr.f32.gmra.mrb[0].mxu0 %v1862
    %v2001 = vpop.f32.mrb[0].mxu0
    %v2002 = vadd.f32 %v1817, %v2001
    %v2003 = vpop.f32.mrb[0].mxu0
    %2004 = vdwg.mxu0
    %v2008 = vcombine.low %v1931, %v1933
    %v2009 = vcombine.high %v1931, %v1933
    %v2010 = vcombine.high %v2002, %v2002
    %v2012 = vunpack.c.l.s4 1966171168
    %v2013 = vunpack.c.0.s8 %v2012
    %v2014 = vlaneseq
    %v2015 = vshrl.u32 %v2014, 7
    %v2016 = vsub.s32 %v2013, %v2015
    %v2017 = vrot.slane %v2008, %v2016
    %v2019 = vunpack.c.l.s4 1966171168
    %v2020 = vunpack.c.0.s8 %v2019
    %v2021 = vlaneseq
    %v2022 = vshrl.u32 %v2021, 7
    %v2023 = vsub.s32 %v2020, %v2022
    %v2024 = vrot.slane %v2009, %v2023
    %v2026 = vunpack.c.l.s4 1966171168
    %v2027 = vunpack.c.0.s8 %v2026
    %v2028 = vlaneseq
    %v2029 = vshrl.u32 %v2028, 7
    %v2030 = vsub.s32 %v2027, %v2029
    %v2031 = vrot.slane %v2002, %v2030
    %v2033 = vunpack.c.l.s4 1966171168
    %v2034 = vunpack.c.0.s8 %v2033
    %v2035 = vlaneseq
    %v2036 = vshrl.u32 %v2035, 7
    %v2037 = vsub.s32 %v2034, %v2036
    %v2038 = vrot.slane %v2010, %v2037
    %v2039 = vcombine.low %v2017, %v2031
    %v2040 = vcombine.high %v2017, %v2031
    %v2041 = vcombine.low %v2024, %v2038
    %v2042 = vcombine.high %v2024, %v2038
    %v2044 = vunpack.c.l.s4 1966171168
    %v2045 = vunpack.c.0.s8 %v2044
    %v2046 = vlaneseq
    %v2047 = vshrl.u32 %v2046, 7
    %v2048 = vsub.s32 %v2045, %v2047
    %v2049 = vrot.slane %v2039, %v2048
    %v2051 = vunpack.c.l.s4 1966171168
    %v2052 = vunpack.c.0.s8 %v2051
    %v2053 = vlaneseq
    %v2054 = vshrl.u32 %v2053, 7
    %v2055 = vsub.s32 %v2052, %v2054
    %v2056 = vrot.slane %v2041, %v2055
    %v2058 = vunpack.c.l.s4 1966171168
    %v2059 = vunpack.c.0.s8 %v2058
    %v2060 = vlaneseq
    %v2061 = vshrl.u32 %v2060, 7
    %v2062 = vsub.s32 %v2059, %v2061
    %v2063 = vrot.slane %v2040, %v2062
    %v2065 = vunpack.c.l.s4 1966171168
    %v2066 = vunpack.c.0.s8 %v2065
    %v2067 = vlaneseq
    %v2068 = vshrl.u32 %v2067, 7
    %v2069 = vsub.s32 %v2066, %v2068
    %v2070 = vrot.slane %v2042, %v2069
    %v2071 = vcombine.high %v2049, %v2049
    %v2072 = vcombine.high %v2063, %v2063
    %v2079 = vmul.f32 %v2049, 0.10206208
    %v2080 = vmul.f32 %v2063, 0.10206208
    %v2081 = vmul.f32 %v2071, 0.10206208
    %v2082 = vmul.f32 %v2072, 0.10206208
    %v2083 = vmul.f32 %v2056, 0.10206208
    %v2084 = vmul.f32 %v2070, 0.10206208
    %v2088 = vcombine.low %v2079, %v2080
    %v2090 = vunpack.c.l.s4 1966171168
    %v2091 = vunpack.c.0.s8 %v2090
    %v2092 = vlaneseq
    %v2093 = vshrl.u32 %v2092, 7
    %v2094 = vsub.s32 %v2091, %v2093
    %v2095 = vrot.slane %v2088, %v2094
    %v2097 = vunpack.c.l.s4 1966171168
    %v2098 = vunpack.c.0.s8 %v2097
    %v2099 = vlaneseq
    %v2100 = vshrl.u32 %v2099, 7
    %v2101 = vsub.s32 %v2098, %v2100
    %v2102 = vrot.slane %v2081, %v2101
    %v2103 = vcombine.low %v2095, %v2102
    %v2105 = vunpack.c.l.s4 1966171168
    %v2106 = vunpack.c.0.s8 %v2105
    %v2107 = vlaneseq
    %v2108 = vshrl.u32 %v2107, 7
    %v2109 = vsub.s32 %v2106, %v2108
    %v2110 = vrot.slane %v2103, %v2109
    %v2111 = vcombine.low %v2049, %v2063
    %v2113 = vunpack.c.l.s4 1966171168
    %v2114 = vunpack.c.0.s8 %v2113
    %v2115 = vlaneseq
    %v2116 = vshrl.u32 %v2115, 7
    %v2117 = vsub.s32 %v2114, %v2116
    %v2118 = vrot.slane %v2111, %v2117
    %v2120 = vunpack.c.l.s4 1966171168
    %v2121 = vunpack.c.0.s8 %v2120
    %v2122 = vlaneseq
    %v2123 = vshrl.u32 %v2122, 7
    %v2124 = vsub.s32 %v2121, %v2123
    %v2125 = vrot.slane %v2071, %v2124
    %v2126 = vcombine.low %v2118, %v2125
    %v2127 = vcombine.high %v2118, %v2125
    %v2129 = vunpack.c.l.s4 1966171168
    %v2130 = vunpack.c.0.s8 %v2129
    %v2131 = vlaneseq
    %v2132 = vshrl.u32 %v2131, 7
    %v2133 = vsub.s32 %v2130, %v2132
    %v2134 = vrot.slane %v2126, %v2133
    %v2136 = vunpack.c.l.s4 1966171168
    %v2137 = vunpack.c.0.s8 %v2136
    %v2138 = vlaneseq
    %v2139 = vshrl.u32 %v2138, 7
    %v2140 = vsub.s32 %v2137, %v2139
    %v2141 = vrot.slane %v2127, %v2140
    %2142 = vrot.lane.b32.xlu0 %v2134, 32
    %v2143 = vpop.permute.xlu0 %2142
    %2144 = vrot.lane.b32.xlu0 %v2141, 32
    %v2145 = vpop.permute.xlu0 %2144
    %v2146 = vsel %vm1218, %v2143, %v2145
    %v2147 = vsel %vm1861, %v2110, 0
    %v2149 = vsel %vm1861, %v2146, 0
    %2151 = vmatprep.subr.mxu0 0.0
    %2152 = vmatpush1.xpose.msra.mxu0 %v2149
    %2153 = vmatprep.subr.mxu0 0.0
    %2154 = vmatpush1.xpose.msra.mxu0 0.0
    %2155 = vmatprep.subr.mxu0 0.0
    %2156 = vmatpush1.xpose.msra.mxu0 0.0
    %2157 = vmatprep.subr.mxu0 0.0
    %2158 = vmatpush1.xpose.msra.mxu0 0.0
    %2159 = vmatprep.subr.mxu0 0.0
    %2160 = vmatpush1.xpose.msra.mxu0 0.0
    %2161 = vmatprep.subr.mxu0 0.0
    %2162 = vmatpush1.xpose.msra.mxu0 0.0
    %2163 = vmatprep.subr.mxu0 0.0
    %2164 = vmatpush1.xpose.msra.mxu0 0.0
    %2165 = vmatprep.subr.mxu0 0.0
    %2166 = vmatpush1.xpose.msra.mxu0 0.0
    %2167 = vmatprep.subr.mxu0 0.0
    %2168 = vmatpush1.xpose.msra.mxu0 0.0
    %2169 = vmatprep.subr.mxu0 0.0
    %2170 = vmatpush1.xpose.msra.mxu0 0.0
    %2171 = vmatprep.subr.mxu0 0.0
    %2172 = vmatpush1.xpose.msra.mxu0 0.0
    %2173 = vmatprep.subr.mxu0 0.0
    %2174 = vmatpush1.xpose.msra.mxu0 0.0
    %2175 = vmatprep.subr.mxu0 0.0
    %2176 = vmatpush1.xpose.msra.mxu0 0.0
    %2177 = vmatprep.subr.mxu0 0.0
    %2178 = vmatpush1.xpose.msra.mxu0 0.0
    %2179 = vmatprep.subr.mxu0 0.0
    %2180 = vmatpush1.xpose.msra.mxu0 0.0
    %2181 = vmatprep.subr.mxu0 0.0
    %2182 = vmatpush1.xpose.msra.mxu0 0.0
    %2183 = vmatprep.subr.mxu0 0.0
    %2184 = vmatpush1.xpose.msra.mxu0 0.0
    %2185 = vmatprep.subr.mxu0 0.0
    %2186 = vmatpush1.xpose.msra.mxu0 0.0
    %2187 = vmatprep.subr.mxu0 0.0
    %2188 = vmatpush1.xpose.msra.mxu0 0.0
    %2189 = vmatprep.subr.mxu0 0.0
    %2190 = vmatpush1.xpose.msra.mxu0 0.0
    %2191 = vmatprep.subr.mxu0 0.0
    %2192 = vmatpush1.xpose.msra.mxu0 0.0
    %2193 = vmatprep.subr.mxu0 0.0
    %2194 = vmatpush1.xpose.msra.mxu0 0.0
    %2195 = vmatprep.subr.mxu0 0.0
    %2196 = vmatpush1.xpose.msra.mxu0 0.0
    %2197 = vmatprep.subr.mxu0 0.0
    %2198 = vmatpush1.xpose.msra.mxu0 0.0
    %2199 = vmatprep.subr.mxu0 0.0
    %2200 = vmatpush1.xpose.msra.mxu0 0.0
    %2201 = vmatprep.subr.mxu0 0.0
    %2202 = vmatpush1.xpose.msra.mxu0 0.0
    %2203 = vmatprep.subr.mxu0 0.0
    %2204 = vmatpush1.xpose.msra.mxu0 0.0
    %2205 = vmatprep.subr.mxu0 0.0
    %2206 = vmatpush1.xpose.msra.mxu0 0.0
    %2207 = vmatprep.subr.mxu0 0.0
    %2208 = vmatpush1.xpose.msra.mxu0 0.0
    %2209 = vmatprep.subr.mxu0 0.0
    %2210 = vmatpush1.xpose.msra.mxu0 0.0
    %2211 = vmatprep.subr.mxu0 0.0
    %2212 = vmatpush1.xpose.msra.mxu0 0.0
    %2213 = vmatprep.subr.mxu0 0.0
    %2214 = vmatpush1.xpose.msra.mxu0 0.0
    %2215 = vmatprep.mubr.f32.mxu0 0.0
    %2216 = vmatmul.mubr.f32.gmra.mrb[0].mxu0 %v2147
    %v2217 = vpop.f32.mrb[0].mxu0
    %v2218 = vadd.f32 0.0, %v2217
    %v2219 = vpop.f32.mrb[0].mxu0
    %2220 = vdwg.mxu0
    %v2224 = vcombine.low %v2082, %v2083
    %v2226 = vunpack.c.l.s4 1966171168
    %v2227 = vunpack.c.0.s8 %v2226
    %v2228 = vlaneseq
    %v2229 = vshrl.u32 %v2228, 7
    %v2230 = vsub.s32 %v2227, %v2229
    %v2231 = vrot.slane %v2224, %v2230
    %v2233 = vunpack.c.l.s4 1966171168
    %v2234 = vunpack.c.0.s8 %v2233
    %v2235 = vlaneseq
    %v2236 = vshrl.u32 %v2235, 7
    %v2237 = vsub.s32 %v2234, %v2236
    %v2238 = vrot.slane %v2084, %v2237
    %v2239 = vcombine.low %v2231, %v2238
    %v2241 = vunpack.c.l.s4 1966171168
    %v2242 = vunpack.c.0.s8 %v2241
    %v2243 = vlaneseq
    %v2244 = vshrl.u32 %v2243, 7
    %v2245 = vsub.s32 %v2242, %v2244
    %v2246 = vrot.slane %v2239, %v2245
    %v2247 = vcombine.low %v2072, %v2056
    %v2249 = vunpack.c.l.s4 1966171168
    %v2250 = vunpack.c.0.s8 %v2249
    %v2251 = vlaneseq
    %v2252 = vshrl.u32 %v2251, 7
    %v2253 = vsub.s32 %v2250, %v2252
    %v2254 = vrot.slane %v2247, %v2253
    %v2256 = vunpack.c.l.s4 1966171168
    %v2257 = vunpack.c.0.s8 %v2256
    %v2258 = vlaneseq
    %v2259 = vshrl.u32 %v2258, 7
    %v2260 = vsub.s32 %v2257, %v2259
    %v2261 = vrot.slane %v2070, %v2260
    %v2262 = vcombine.low %v2254, %v2261
    %v2263 = vcombine.high %v2254, %v2261
    %v2265 = vunpack.c.l.s4 1966171168
    %v2266 = vunpack.c.0.s8 %v2265
    %v2267 = vlaneseq
    %v2268 = vshrl.u32 %v2267, 7
    %v2269 = vsub.s32 %v2266, %v2268
    %v2270 = vrot.slane %v2262, %v2269
    %v2272 = vunpack.c.l.s4 1966171168
    %v2273 = vunpack.c.0.s8 %v2272
    %v2274 = vlaneseq
    %v2275 = vshrl.u32 %v2274, 7
    %v2276 = vsub.s32 %v2273, %v2275
    %v2277 = vrot.slane %v2263, %v2276
    %2278 = vrot.lane.b32.xlu0 %v2270, 32
    %v2279 = vpop.permute.xlu0 %2278
    %2280 = vrot.lane.b32.xlu0 %v2277, 32
    %v2281 = vpop.permute.xlu0 %2280
    %v2282 = vsel %vm1218, %v2279, %v2281
    %v2283 = vsel %vm1861, %v2246, 0
    %v2285 = vsel %vm1861, %v2282, 0
    %2287 = vmatprep.subr.mxu0 0.0
    %2288 = vmatpush1.xpose.msra.mxu0 %v2285
    %2289 = vmatprep.subr.mxu0 0.0
    %2290 = vmatpush1.xpose.msra.mxu0 0.0
    %2291 = vmatprep.subr.mxu0 0.0
    %2292 = vmatpush1.xpose.msra.mxu0 0.0
    %2293 = vmatprep.subr.mxu0 0.0
    %2294 = vmatpush1.xpose.msra.mxu0 0.0
    %2295 = vmatprep.subr.mxu0 0.0
    %2296 = vmatpush1.xpose.msra.mxu0 0.0
    %2297 = vmatprep.subr.mxu0 0.0
    %2298 = vmatpush1.xpose.msra.mxu0 0.0
    %2299 = vmatprep.subr.mxu0 0.0
    %2300 = vmatpush1.xpose.msra.mxu0 0.0
    %2301 = vmatprep.subr.mxu0 0.0
    %2302 = vmatpush1.xpose.msra.mxu0 0.0
    %2303 = vmatprep.subr.mxu0 0.0
    %2304 = vmatpush1.xpose.msra.mxu0 0.0
    %2305 = vmatprep.subr.mxu0 0.0
    %2306 = vmatpush1.xpose.msra.mxu0 0.0
    %2307 = vmatprep.subr.mxu0 0.0
    %2308 = vmatpush1.xpose.msra.mxu0 0.0
    %2309 = vmatprep.subr.mxu0 0.0
    %2310 = vmatpush1.xpose.msra.mxu0 0.0
    %2311 = vmatprep.subr.mxu0 0.0
    %2312 = vmatpush1.xpose.msra.mxu0 0.0
    %2313 = vmatprep.subr.mxu0 0.0
    %2314 = vmatpush1.xpose.msra.mxu0 0.0
    %2315 = vmatprep.subr.mxu0 0.0
    %2316 = vmatpush1.xpose.msra.mxu0 0.0
    %2317 = vmatprep.subr.mxu0 0.0
    %2318 = vmatpush1.xpose.msra.mxu0 0.0
    %2319 = vmatprep.subr.mxu0 0.0
    %2320 = vmatpush1.xpose.msra.mxu0 0.0
    %2321 = vmatprep.subr.mxu0 0.0
    %2322 = vmatpush1.xpose.msra.mxu0 0.0
    %2323 = vmatprep.subr.mxu0 0.0
    %2324 = vmatpush1.xpose.msra.mxu0 0.0
    %2325 = vmatprep.subr.mxu0 0.0
    %2326 = vmatpush1.xpose.msra.mxu0 0.0
    %2327 = vmatprep.subr.mxu0 0.0
    %2328 = vmatpush1.xpose.msra.mxu0 0.0
    %2329 = vmatprep.subr.mxu0 0.0
    %2330 = vmatpush1.xpose.msra.mxu0 0.0
    %2331 = vmatprep.subr.mxu0 0.0
    %2332 = vmatpush1.xpose.msra.mxu0 0.0
    %2333 = vmatprep.subr.mxu0 0.0
    %2334 = vmatpush1.xpose.msra.mxu0 0.0
    %2335 = vmatprep.subr.mxu0 0.0
    %2336 = vmatpush1.xpose.msra.mxu0 0.0
    %2337 = vmatprep.subr.mxu0 0.0
    %2338 = vmatpush1.xpose.msra.mxu0 0.0
    %2339 = vmatprep.subr.mxu0 0.0
    %2340 = vmatpush1.xpose.msra.mxu0 0.0
    %2341 = vmatprep.subr.mxu0 0.0
    %2342 = vmatpush1.xpose.msra.mxu0 0.0
    %2343 = vmatprep.subr.mxu0 0.0
    %2344 = vmatpush1.xpose.msra.mxu0 0.0
    %2345 = vmatprep.subr.mxu0 0.0
    %2346 = vmatpush1.xpose.msra.mxu0 0.0
    %2347 = vmatprep.subr.mxu0 0.0
    %2348 = vmatpush1.xpose.msra.mxu0 0.0
    %2349 = vmatprep.subr.mxu0 0.0
    %2350 = vmatpush1.xpose.msra.mxu0 0.0
    %2351 = vmatprep.mubr.f32.mxu0 0.0
    %2352 = vmatmul.mubr.f32.gmra.mrb[0].mxu0 %v2283
    %v2353 = vpop.f32.mrb[0].mxu0
    %v2354 = vadd.f32 0.0, %v2353
    %v2355 = vpop.f32.mrb[0].mxu0
    %2356 = vdwg.mxu0
    %v2357 = vsel %vm650, %v2218, -inf
    %2358 = vmax.xlane.f32.xlu0 %v2357
    %v2359 = vpop.xlane.xlu0 %2358
    %v2360 = vsel %vm650, %v2354, -inf
    %2361 = vmax.xlane.f32.xlu0 %v2360
    %v2362 = vpop.xlane.xlu0 %2361
    %v2363 = vsub.f32 %v2218, %v2359
    %v2364 = vsub.f32 %v2354, %v2362
    %v2365 = vmul.f32 %v2363, 1.442695
    %v2366 = vpow.pop %v2365
    %v2367 = vmul.f32 %v2364, 1.442695
    %v2368 = vpow.pop %v2367
    %v2369 = vsel %vm650, %v2366, 0.0
    %2370 = vadd.xlane.f32.xlu0 %v2369
    %v2371 = vpop.xlane.xlu0 %2370
    %v2372 = vsel %vm650, %v2368, 0.0
    %2373 = vadd.xlane.f32.xlu0 %v2372
    %v2374 = vpop.xlane.xlu0 %2373
    %v2375 = vrcp.pop %v2371
    %v2376 = vmul.f32 %v2366, %v2375
    %v2377 = vrcp.pop %v2374
    %v2378 = vmul.f32 %v2368, %v2377
    %2379 = vrot.lane.b32.xlu0 %v2049, 64
    %v2380 = vpop.permute.xlu0 %2379
    %2381 = vrot.lane.b32.xlu0 %v2063, 64
    %v2382 = vpop.permute.xlu0 %2381
    %2383 = vrot.lane.b32.xlu0 %v2071, 64
    %v2384 = vpop.permute.xlu0 %2383
    %v2385 = vrot.slane %v2380, 1
    %v2386 = vrot.slane %v2382, 1
    %v2387 = vrot.slane %v2384, 1
    %v2388 = vrot.slane %v2380, 2
    %v2389 = vrot.slane %v2382, 2
    %v2390 = vrot.slane %v2384, 2
    %v2391 = vsel %vm264, %v2385, %v2388
    %v2392 = vsel %vm264, %v2386, %v2389
    %v2393 = vsel %vm264, %v2387, %v2390
    %v2394 = vcombine.low %v2391, %v2392
    %v2396 = vunpack.c.l.s4 1966171168
    %v2397 = vunpack.c.0.s8 %v2396
    %v2398 = vlaneseq
    %v2399 = vshrl.u32 %v2398, 7
    %v2400 = vsub.s32 %v2397, %v2399
    %v2401 = vrot.slane %v2394, %v2400
    %v2403 = vunpack.c.l.s4 1966171168
    %v2404 = vunpack.c.0.s8 %v2403
    %v2405 = vlaneseq
    %v2406 = vshrl.u32 %v2405, 7
    %v2407 = vsub.s32 %v2404, %v2406
    %v2408 = vrot.slane %v2393, %v2407
    %v2409 = vcombine.low %v2401, %v2408
    %v2411 = vunpack.c.l.s4 1966171168
    %v2412 = vunpack.c.0.s8 %v2411
    %v2413 = vlaneseq
    %v2414 = vshrl.u32 %v2413, 7
    %v2415 = vsub.s32 %v2412, %v2414
    %v2416 = vrot.slane %v2409, %v2415
    %v2418 = vsel %vm699, %v2376, 0
    %v2420 = vsel %vm703, %v2416, 0
    %2422 = vmatprep.subr.mxu0 0.0
    %2423 = vmatpush1.msra.mxu0 %v2420
    %2424 = vmatprep.subr.mxu0 0.0
    %2425 = vmatpush1.msra.mxu0 0.0
    %2426 = vmatprep.subr.mxu0 0.0
    %2427 = vmatpush1.msra.mxu0 0.0
    %2428 = vmatprep.subr.mxu0 0.0
    %2429 = vmatpush1.msra.mxu0 0.0
    %2430 = vmatprep.subr.mxu0 0.0
    %2431 = vmatpush1.msra.mxu0 0.0
    %2432 = vmatprep.subr.mxu0 0.0
    %2433 = vmatpush1.msra.mxu0 0.0
    %2434 = vmatprep.subr.mxu0 0.0
    %2435 = vmatpush1.msra.mxu0 0.0
    %2436 = vmatprep.subr.mxu0 0.0
    %2437 = vmatpush1.msra.mxu0 0.0
    %2438 = vmatprep.subr.mxu0 0.0
    %2439 = vmatpush1.msra.mxu0 0.0
    %2440 = vmatprep.subr.mxu0 0.0
    %2441 = vmatpush1.msra.mxu0 0.0
    %2442 = vmatprep.subr.mxu0 0.0
    %2443 = vmatpush1.msra.mxu0 0.0
    %2444 = vmatprep.subr.mxu0 0.0
    %2445 = vmatpush1.msra.mxu0 0.0
    %2446 = vmatprep.subr.mxu0 0.0
    %2447 = vmatpush1.msra.mxu0 0.0
    %2448 = vmatprep.subr.mxu0 0.0
    %2449 = vmatpush1.msra.mxu0 0.0
    %2450 = vmatprep.subr.mxu0 0.0
    %2451 = vmatpush1.msra.mxu0 0.0
    %2452 = vmatprep.subr.mxu0 0.0
    %2453 = vmatpush1.msra.mxu0 0.0
    %2454 = vmatprep.subr.mxu0 0.0
    %2455 = vmatpush1.msra.mxu0 0.0
    %2456 = vmatprep.subr.mxu0 0.0
    %2457 = vmatpush1.msra.mxu0 0.0
    %2458 = vmatprep.subr.mxu0 0.0
    %2459 = vmatpush1.msra.mxu0 0.0
    %2460 = vmatprep.subr.mxu0 0.0
    %2461 = vmatpush1.msra.mxu0 0.0
    %2462 = vmatprep.subr.mxu0 0.0
    %2463 = vmatpush1.msra.mxu0 0.0
    %2464 = vmatprep.subr.mxu0 0.0
    %2465 = vmatpush1.msra.mxu0 0.0
    %2466 = vmatprep.subr.mxu0 0.0
    %2467 = vmatpush1.msra.mxu0 0.0
    %2468 = vmatprep.subr.mxu0 0.0
    %2469 = vmatpush1.msra.mxu0 0.0
    %2470 = vmatprep.subr.mxu0 0.0
    %2471 = vmatpush1.msra.mxu0 0.0
    %2472 = vmatprep.subr.mxu0 0.0
    %2473 = vmatpush1.msra.mxu0 0.0
    %2474 = vmatprep.subr.mxu0 0.0
    %2475 = vmatpush1.msra.mxu0 0.0
    %2476 = vmatprep.subr.mxu0 0.0
    %2477 = vmatpush1.msra.mxu0 0.0
    %2478 = vmatprep.subr.mxu0 0.0
    %2479 = vmatpush1.msra.mxu0 0.0
    %2480 = vmatprep.subr.mxu0 0.0
    %2481 = vmatpush1.msra.mxu0 0.0
    %2482 = vmatprep.subr.mxu0 0.0
    %2483 = vmatpush1.msra.mxu0 0.0
    %2484 = vmatprep.subr.mxu0 0.0
    %2485 = vmatpush1.msra.mxu0 0.0
    %2486 = vmatprep.mubr.f32.mxu0 0.0
    %2487 = vmatmul.mubr.f32.gmra.mrb[0].mxu0 %v2418
    %v2488 = vpop.f32.mrb[0].mxu0
    %v2489 = vadd.f32 0.0, %v2488
    %v2490 = vpop.f32.mrb[0].mxu0
    %2491 = vdwg.mxu0
    %2492 = vrot.lane.b32.xlu0 %v2072, 64
    %v2493 = vpop.permute.xlu0 %2492
    %2494 = vrot.lane.b32.xlu0 %v2056, 64
    %v2495 = vpop.permute.xlu0 %2494
    %2496 = vrot.lane.b32.xlu0 %v2070, 64
    %v2497 = vpop.permute.xlu0 %2496
    %v2498 = vrot.slane %v2493, 1
    %v2499 = vrot.slane %v2495, 1
    %v2500 = vrot.slane %v2497, 1
    %v2501 = vrot.slane %v2493, 2
    %v2502 = vrot.slane %v2495, 2
    %v2503 = vrot.slane %v2497, 2
    %v2504 = vsel %vm264, %v2498, %v2501
    %v2505 = vsel %vm264, %v2499, %v2502
    %v2506 = vsel %vm264, %v2500, %v2503
    %v2507 = vcombine.low %v2504, %v2505
    %v2509 = vunpack.c.l.s4 1966171168
    %v2510 = vunpack.c.0.s8 %v2509
    %v2511 = vlaneseq
    %v2512 = vshrl.u32 %v2511, 7
    %v2513 = vsub.s32 %v2510, %v2512
    %v2514 = vrot.slane %v2507, %v2513
    %v2516 = vunpack.c.l.s4 1966171168
    %v2517 = vunpack.c.0.s8 %v2516
    %v2518 = vlaneseq
    %v2519 = vshrl.u32 %v2518, 7
    %v2520 = vsub.s32 %v2517, %v2519
    %v2521 = vrot.slane %v2506, %v2520
    %v2522 = vcombine.low %v2514, %v2521
    %v2524 = vunpack.c.l.s4 1966171168
    %v2525 = vunpack.c.0.s8 %v2524
    %v2526 = vlaneseq
    %v2527 = vshrl.u32 %v2526, 7
    %v2528 = vsub.s32 %v2525, %v2527
    %v2529 = vrot.slane %v2522, %v2528
    %v2531 = vsel %vm699, %v2378, 0
    %v2533 = vsel %vm703, %v2529, 0
    %2535 = vmatprep.subr.mxu0 0.0
    %2536 = vmatpush1.msra.mxu0 %v2533
    %2537 = vmatprep.subr.mxu0 0.0
    %2538 = vmatpush1.msra.mxu0 0.0
    %2539 = vmatprep.subr.mxu0 0.0
    %2540 = vmatpush1.msra.mxu0 0.0
    %2541 = vmatprep.subr.mxu0 0.0
    %2542 = vmatpush1.msra.mxu0 0.0
    %2543 = vmatprep.subr.mxu0 0.0
    %2544 = vmatpush1.msra.mxu0 0.0
    %2545 = vmatprep.subr.mxu0 0.0
    %2546 = vmatpush1.msra.mxu0 0.0
    %2547 = vmatprep.subr.mxu0 0.0
    %2548 = vmatpush1.msra.mxu0 0.0
    %2549 = vmatprep.subr.mxu0 0.0
    %2550 = vmatpush1.msra.mxu0 0.0
    %2551 = vmatprep.subr.mxu0 0.0
    %2552 = vmatpush1.msra.mxu0 0.0
    %2553 = vmatprep.subr.mxu0 0.0
    %2554 = vmatpush1.msra.mxu0 0.0
    %2555 = vmatprep.subr.mxu0 0.0
    %2556 = vmatpush1.msra.mxu0 0.0
    %2557 = vmatprep.subr.mxu0 0.0
    %2558 = vmatpush1.msra.mxu0 0.0
    %2559 = vmatprep.subr.mxu0 0.0
    %2560 = vmatpush1.msra.mxu0 0.0
    %2561 = vmatprep.subr.mxu0 0.0
    %2562 = vmatpush1.msra.mxu0 0.0
    %2563 = vmatprep.subr.mxu0 0.0
    %2564 = vmatpush1.msra.mxu0 0.0
    %2565 = vmatprep.subr.mxu0 0.0
    %2566 = vmatpush1.msra.mxu0 0.0
    %2567 = vmatprep.subr.mxu0 0.0
    %2568 = vmatpush1.msra.mxu0 0.0
    %2569 = vmatprep.subr.mxu0 0.0
    %2570 = vmatpush1.msra.mxu0 0.0
    %2571 = vmatprep.subr.mxu0 0.0
    %2572 = vmatpush1.msra.mxu0 0.0
    %2573 = vmatprep.subr.mxu0 0.0
    %2574 = vmatpush1.msra.mxu0 0.0
    %2575 = vmatprep.subr.mxu0 0.0
    %2576 = vmatpush1.msra.mxu0 0.0
    %2577 = vmatprep.subr.mxu0 0.0
    %2578 = vmatpush1.msra.mxu0 0.0
    %2579 = vmatprep.subr.mxu0 0.0
    %2580 = vmatpush1.msra.mxu0 0.0
    %2581 = vmatprep.subr.mxu0 0.0
    %2582 = vmatpush1.msra.mxu0 0.0
    %2583 = vmatprep.subr.mxu0 0.0
    %2584 = vmatpush1.msra.mxu0 0.0
    %2585 = vmatprep.subr.mxu0 0.0
    %2586 = vmatpush1.msra.mxu0 0.0
    %2587 = vmatprep.subr.mxu0 0.0
    %2588 = vmatpush1.msra.mxu0 0.0
    %2589 = vmatprep.subr.mxu0 0.0
    %2590 = vmatpush1.msra.mxu0 0.0
    %2591 = vmatprep.subr.mxu0 0.0
    %2592 = vmatpush1.msra.mxu0 0.0
    %2593 = vmatprep.subr.mxu0 0.0
    %2594 = vmatpush1.msra.mxu0 0.0
    %2595 = vmatprep.subr.mxu0 0.0
    %2596 = vmatpush1.msra.mxu0 0.0
    %2597 = vmatprep.subr.mxu0 0.0
    %2598 = vmatpush1.msra.mxu0 0.0
    %2599 = vmatprep.mubr.f32.mxu0 0.0
    %2600 = vmatmul.mubr.f32.gmra.mrb[0].mxu0 %v2531
    %v2601 = vpop.f32.mrb[0].mxu0
    %v2602 = vadd.f32 0.0, %v2601
    %v2603 = vpop.f32.mrb[0].mxu0
    %2604 = vdwg.mxu0
    %v2608 = vunpack.c.l.s4 1966171168
    %v2609 = vunpack.c.0.s8 %v2608
    %v2610 = vlaneseq
    %v2611 = vshrl.u32 %v2610, 7
    %v2612 = vsub.s32 %v2609, %v2611
    %v2613 = vrot.slane %v2489, %v2612
    %v2614 = vcombine.high %v2613, %v2613
    %v2616 = vunpack.c.l.s4 1966171168
    %v2617 = vunpack.c.0.s8 %v2616
    %v2618 = vlaneseq
    %v2619 = vshrl.u32 %v2618, 7
    %v2620 = vsub.s32 %v2617, %v2619
    %v2621 = vrot.slane %v2613, %v2620
    %v2623 = vunpack.c.l.s4 1966171168
    %v2624 = vunpack.c.0.s8 %v2623
    %v2625 = vlaneseq
    %v2626 = vshrl.u32 %v2625, 7
    %v2627 = vsub.s32 %v2624, %v2626
    %v2628 = vrot.slane %v2614, %v2627
    %v2629 = vcombine.high %v2621, %v2621
    %v2631 = vunpack.c.l.s4 1966171168
    %v2632 = vunpack.c.0.s8 %v2631
    %v2633 = vlaneseq
    %v2634 = vshrl.u32 %v2633, 7
    %v2635 = vsub.s32 %v2632, %v2634
    %v2636 = vrot.slane %v2602, %v2635
    %v2637 = vcombine.high %v2636, %v2636
    %v2639 = vunpack.c.l.s4 1966171168
    %v2640 = vunpack.c.0.s8 %v2639
    %v2641 = vlaneseq
    %v2642 = vshrl.u32 %v2641, 7
    %v2643 = vsub.s32 %v2640, %v2642
    %v2644 = vrot.slane %v2636, %v2643
    %v2646 = vunpack.c.l.s4 1966171168
    %v2647 = vunpack.c.0.s8 %v2646
    %v2648 = vlaneseq
    %v2649 = vshrl.u32 %v2648, 7
    %v2650 = vsub.s32 %v2647, %v2649
    %v2651 = vrot.slane %v2637, %v2650
    %v2652 = vcombine.high %v2644, %v2644
    %v2654 = vlaneseq
    %v2655 = vshrl.u32 %v2654, 7
    %v2656 = vsub.s32 0, %v2655
    %v2657 = vrot.slane %v1804, %v2656
    %v2659 = vcombine.low %v2621, %v2628
    %v2660 = vcombine.low %v2629, %v2644
    %v2661 = vcombine.low %v2651, %v2652
    %v2663 = vunpack.c.l.s4 1966171168
    %v2664 = vunpack.c.0.s8 %v2663
    %v2665 = vlaneseq
    %v2666 = vshrl.u32 %v2665, 7
    %v2667 = vsub.s32 %v2664, %v2666
    %v2668 = vrot.slane %v2659, %v2667
    %v2670 = vunpack.c.l.s4 1966171168
    %v2671 = vunpack.c.0.s8 %v2670
    %v2672 = vlaneseq
    %v2673 = vshrl.u32 %v2672, 7
    %v2674 = vsub.s32 %v2671, %v2673
    %v2675 = vrot.slane %v2660, %v2674
    %v2677 = vunpack.c.l.s4 1966171168
    %v2678 = vunpack.c.0.s8 %v2677
    %v2679 = vlaneseq
    %v2680 = vshrl.u32 %v2679, 7
    %v2681 = vsub.s32 %v2678, %v2680
    %v2682 = vrot.slane %v2661, %v2681
    %v2683 = vcombine.low %v2668, %v2675
    %v2685 = vunpack.c.l.s4 1966171168
    %v2686 = vunpack.c.0.s8 %v2685
    %v2687 = vlaneseq
    %v2688 = vshrl.u32 %v2687, 7
    %v2689 = vsub.s32 %v2686, %v2688
    %v2690 = vrot.slane %v2683, %v2689
    %v2692 = vunpack.c.l.s4 1966171168
    %v2693 = vunpack.c.0.s8 %v2692
    %v2694 = vlaneseq
    %v2695 = vshrl.u32 %v2694, 7
    %v2696 = vsub.s32 %v2693, %v2695
    %v2697 = vrot.slane %v2682, %v2696
    %v2698 = vcombine.low %v2690, %v2697
    %v2699 = vsel %vm1861, %v2698, 0
    %2701 = vmatprep.subr.mxu0 0.0
    %2702 = vmatpush1.msra.mxu0 %v1792
    %2703 = vmatprep.subr.mxu0 0.0
    %2704 = vmatpush1.msra.mxu0 %v1793
    %2705 = vmatprep.subr.mxu0 0.0
    %2706 = vmatpush1.msra.mxu0 %v1794
    %2707 = vmatprep.subr.mxu0 0.0
    %2708 = vmatpush1.msra.mxu0 %v1795
    %2709 = vmatprep.subr.mxu0 0.0
    %2710 = vmatpush1.msra.mxu0 %v1796
    %2711 = vmatprep.subr.mxu0 0.0
    %2712 = vmatpush1.msra.mxu0 %v1797
    %2713 = vmatprep.subr.mxu0 0.0
    %2714 = vmatpush1.msra.mxu0 %v1798
    %2715 = vmatprep.subr.mxu0 0.0
    %2716 = vmatpush1.msra.mxu0 %v1799
    %2717 = vmatprep.subr.mxu0 0.0
    %2718 = vmatpush1.msra.mxu0 %v1800
    %2719 = vmatprep.subr.mxu0 0.0
    %2720 = vmatpush1.msra.mxu0 %v1801
    %2721 = vmatprep.subr.mxu0 0.0
    %2722 = vmatpush1.msra.mxu0 %v1802
    %2723 = vmatprep.subr.mxu0 0.0
    %2724 = vmatpush1.msra.mxu0 %v1803
    %2725 = vmatprep.subr.mxu0 0.0
    %2726 = vmatpush1.msra.mxu0 0.0
    %2727 = vmatprep.subr.mxu0 0.0
    %2728 = vmatpush1.msra.mxu0 0.0
    %2729 = vmatprep.subr.mxu0 0.0
    %2730 = vmatpush1.msra.mxu0 0.0
    %2731 = vmatprep.subr.mxu0 0.0
    %2732 = vmatpush1.msra.mxu0 0.0
    %2733 = vmatprep.subr.mxu0 0.0
    %2734 = vmatpush1.msra.mxu0 0.0
    %2735 = vmatprep.subr.mxu0 0.0
    %2736 = vmatpush1.msra.mxu0 0.0
    %2737 = vmatprep.subr.mxu0 0.0
    %2738 = vmatpush1.msra.mxu0 0.0
    %2739 = vmatprep.subr.mxu0 0.0
    %2740 = vmatpush1.msra.mxu0 0.0
    %2741 = vmatprep.subr.mxu0 0.0
    %2742 = vmatpush1.msra.mxu0 0.0
    %2743 = vmatprep.subr.mxu0 0.0
    %2744 = vmatpush1.msra.mxu0 0.0
    %2745 = vmatprep.subr.mxu0 0.0
    %2746 = vmatpush1.msra.mxu0 0.0
    %2747 = vmatprep.subr.mxu0 0.0
    %2748 = vmatpush1.msra.mxu0 0.0
    %2749 = vmatprep.subr.mxu0 0.0
    %2750 = vmatpush1.msra.mxu0 0.0
    %2751 = vmatprep.subr.mxu0 0.0
    %2752 = vmatpush1.msra.mxu0 0.0
    %2753 = vmatprep.subr.mxu0 0.0
    %2754 = vmatpush1.msra.mxu0 0.0
    %2755 = vmatprep.subr.mxu0 0.0
    %2756 = vmatpush1.msra.mxu0 0.0
    %2757 = vmatprep.subr.mxu0 0.0
    %2758 = vmatpush1.msra.mxu0 0.0
    %2759 = vmatprep.subr.mxu0 0.0
    %2760 = vmatpush1.msra.mxu0 0.0
    %2761 = vmatprep.subr.mxu0 0.0
    %2762 = vmatpush1.msra.mxu0 0.0
    %2763 = vmatprep.subr.mxu0 0.0
    %2764 = vmatpush1.msra.mxu0 0.0
    %2765 = vmatprep.mubr.f32.mxu0 0.0
    %2766 = vmatmul.mubr.f32.gmra.mrb[0].mxu0 %v2699
    %v2767 = vpop.f32.mrb[0].mxu0
    %v2768 = vadd.f32 %v2657, %v2767
    %v2769 = vpop.f32.mrb[0].mxu0
    %2770 = vdwg.mxu0
    %v2771 = vld [vmem:[#allocation9] sm:$0xff]
    %v2772 = vld [vmem:[#allocation9 + $0x8] sm:$0xff]
    %v2773 = vld [vmem:[#allocation9 + $0x10] sm:$0xff]
    %v2774 = vld [vmem:[#allocation9 + $0x18] sm:$0xff]
    %v2775 = vld [vmem:[#allocation9 + $0x20] sm:$0xff]
    %v2776 = vld [vmem:[#allocation9 + $0x28] sm:$0xff]
    %v2777 = vld [vmem:[#allocation9 + $0x30] sm:$0xff]
    %v2778 = vld [vmem:[#allocation9 + $0x38] sm:$0xff]
    %v2779 = vld [vmem:[#allocation9 + $0x40] sm:$0xff]
    %v2780 = vld [vmem:[#allocation9 + $0x48] sm:$0xff]
    %v2781 = vld [vmem:[#allocation9 + $0x50] sm:$0xff]
    %v2782 = vld [vmem:[#allocation9 + $0x58] sm:$0xff]
    %v2783 = vld [vmem:[%s13] sm:$0x1]
    %v2785 = vlaneseq
    %v2786 = vshrl.u32 %v2785, 7
    %v2787 = vsub.s32 0, %v2786
    %v2788 = vrot.slane %v2783, %v2787
    %v2791 = vsel %vm1861, %v2768, 0
    %2793 = vmatprep.subr.mxu0 0.0
    %2794 = vmatpush1.msra.mxu0 %v2771
    %2795 = vmatprep.subr.mxu0 0.0
    %2796 = vmatpush1.msra.mxu0 %v2772
    %2797 = vmatprep.subr.mxu0 0.0
    %2798 = vmatpush1.msra.mxu0 %v2773
    %2799 = vmatprep.subr.mxu0 0.0
    %2800 = vmatpush1.msra.mxu0 %v2774
    %2801 = vmatprep.subr.mxu0 0.0
    %2802 = vmatpush1.msra.mxu0 %v2775
    %2803 = vmatprep.subr.mxu0 0.0
    %2804 = vmatpush1.msra.mxu0 %v2776
    %2805 = vmatprep.subr.mxu0 0.0
    %2806 = vmatpush1.msra.mxu0 %v2777
    %2807 = vmatprep.subr.mxu0 0.0
    %2808 = vmatpush1.msra.mxu0 %v2778
    %2809 = vmatprep.subr.mxu0 0.0
    %2810 = vmatpush1.msra.mxu0 %v2779
    %2811 = vmatprep.subr.mxu0 0.0
    %2812 = vmatpush1.msra.mxu0 %v2780
    %2813 = vmatprep.subr.mxu0 0.0
    %2814 = vmatpush1.msra.mxu0 %v2781
    %2815 = vmatprep.subr.mxu0 0.0
    %2816 = vmatpush1.msra.mxu0 %v2782
    %2817 = vmatprep.subr.mxu0 0.0
    %2818 = vmatpush1.msra.mxu0 0.0
    %2819 = vmatprep.subr.mxu0 0.0
    %2820 = vmatpush1.msra.mxu0 0.0
    %2821 = vmatprep.subr.mxu0 0.0
    %2822 = vmatpush1.msra.mxu0 0.0
    %2823 = vmatprep.subr.mxu0 0.0
    %2824 = vmatpush1.msra.mxu0 0.0
    %2825 = vmatprep.subr.mxu0 0.0
    %2826 = vmatpush1.msra.mxu0 0.0
    %2827 = vmatprep.subr.mxu0 0.0
    %2828 = vmatpush1.msra.mxu0 0.0
    %2829 = vmatprep.subr.mxu0 0.0
    %2830 = vmatpush1.msra.mxu0 0.0
    %2831 = vmatprep.subr.mxu0 0.0
    %2832 = vmatpush1.msra.mxu0 0.0
    %2833 = vmatprep.subr.mxu0 0.0
    %2834 = vmatpush1.msra.mxu0 0.0
    %2835 = vmatprep.subr.mxu0 0.0
    %2836 = vmatpush1.msra.mxu0 0.0
    %2837 = vmatprep.subr.mxu0 0.0
    %2838 = vmatpush1.msra.mxu0 0.0
    %2839 = vmatprep.subr.mxu0 0.0
    %2840 = vmatpush1.msra.mxu0 0.0
    %2841 = vmatprep.subr.mxu0 0.0
    %2842 = vmatpush1.msra.mxu0 0.0
    %2843 = vmatprep.subr.mxu0 0.0
    %2844 = vmatpush1.msra.mxu0 0.0
    %2845 = vmatprep.subr.mxu0 0.0
    %2846 = vmatpush1.msra.mxu0 0.0
    %2847 = vmatprep.subr.mxu0 0.0
    %2848 = vmatpush1.msra.mxu0 0.0
    %2849 = vmatprep.subr.mxu0 0.0
    %2850 = vmatpush1.msra.mxu0 0.0
    %2851 = vmatprep.subr.mxu0 0.0
    %2852 = vmatpush1.msra.mxu0 0.0
    %2853 = vmatprep.subr.mxu0 0.0
    %2854 = vmatpush1.msra.mxu0 0.0
    %2855 = vmatprep.subr.mxu0 0.0
    %2856 = vmatpush1.msra.mxu0 0.0
    %2857 = vmatprep.mubr.f32.mxu0 0.0
    %2858 = vmatmul.mubr.f32.gmra.mrb[0].mxu0 %v2791
    %v2859 = vpop.f32.mrb[0].mxu0
    %v2860 = vadd.f32 %v2788, %v2859
    %v2861 = vpop.f32.mrb[0].mxu0
    %2862 = vdwg.mxu0
    %v2864 = vcombine.high %v2860, %v2860
    %v2866 = vunpack.c.l.s4 1966171168
    %v2867 = vunpack.c.0.s8 %v2866
    %v2868 = vlaneseq
    %v2869 = vshrl.u32 %v2868, 7
    %v2870 = vsub.s32 %v2867, %v2869
    %v2871 = vrot.slane %v2860, %v2870
    %v2873 = vunpack.c.l.s4 1966171168
    %v2874 = vunpack.c.0.s8 %v2873
    %v2875 = vlaneseq
    %v2876 = vshrl.u32 %v2875, 7
    %v2877 = vsub.s32 %v2874, %v2876
    %v2878 = vrot.slane %v2864, %v2877
    %v2879 = vcombine.high %v2871, %v2871
    %v2880 = vcombine.high %v2878, %v2878
    %v2882 = vunpack.c.l.s4 1966171168
    %v2883 = vunpack.c.0.s8 %v2882
    %v2884 = vlaneseq
    %v2885 = vshrl.u32 %v2884, 7
    %v2886 = vsub.s32 %v2883, %v2885
    %v2887 = vrot.slane %v2871, %v2886
    %v2889 = vunpack.c.l.s4 1966171168
    %v2890 = vunpack.c.0.s8 %v2889
    %v2891 = vlaneseq
    %v2892 = vshrl.u32 %v2891, 7
    %v2893 = vsub.s32 %v2890, %v2892
    %v2894 = vrot.slane %v2878, %v2893
    %v2896 = vunpack.c.l.s4 1966171168
    %v2897 = vunpack.c.0.s8 %v2896
    %v2898 = vlaneseq
    %v2899 = vshrl.u32 %v2898, 7
    %v2900 = vsub.s32 %v2897, %v2899
    %v2901 = vrot.slane %v2879, %v2900
    %v2903 = vunpack.c.l.s4 1966171168
    %v2904 = vunpack.c.0.s8 %v2903
    %v2905 = vlaneseq
    %v2906 = vshrl.u32 %v2905, 7
    %v2907 = vsub.s32 %v2904, %v2906
    %v2908 = vrot.slane %v2880, %v2907
    %v2909 = vcombine.high %v2887, %v2887
    %v2910 = vcombine.high %v2901, %v2901
    %v2913 = vld [vmem:[%s14] sm:$0xff]
    %v2914 = vld [vmem:[%s14 + $0x8] sm:$0xff]
    %v2915 = vld [vmem:[%s14 + $0x10] sm:$0xff]
    %v2916 = vld [vmem:[%s14 + $0x18] sm:$0xff]
    %v2917 = vcombine.low %v2887, %v2910
    %v2919 = vunpack.c.l.s4 1966171168
    %v2920 = vunpack.c.0.s8 %v2919
    %v2921 = vlaneseq
    %v2922 = vshrl.u32 %v2921, 7
    %v2923 = vsub.s32 %v2920, %v2922
    %v2924 = vrot.slane %v2917, %v2923
    %v2926 = vunpack.c.l.s4 1966171168
    %v2927 = vunpack.c.0.s8 %v2926
    %v2928 = vlaneseq
    %v2929 = vshrl.u32 %v2928, 7
    %v2930 = vsub.s32 %v2927, %v2929
    %v2931 = vrot.slane %v2924, %v2930
    %v2933 = vcombine.low %v2909, %v2908
    %v2935 = vunpack.c.l.s4 1966171168
    %v2936 = vunpack.c.0.s8 %v2935
    %v2937 = vlaneseq
    %v2938 = vshrl.u32 %v2937, 7
    %v2939 = vsub.s32 %v2936, %v2938
    %v2940 = vrot.slane %v2933, %v2939
    %v2942 = vunpack.c.l.s4 1966171168
    %v2943 = vunpack.c.0.s8 %v2942
    %v2944 = vlaneseq
    %v2945 = vshrl.u32 %v2944, 7
    %v2946 = vsub.s32 %v2943, %v2945
    %v2947 = vrot.slane %v2940, %v2946
    %v2949 = vsel %vm134, %v2931, %v2947
    %2950 = vmatprep.subr.mxu0 0.0
    %2951 = vmatpush1.msra.mxu0 %v2913
    %2952 = vmatprep.subr.mxu0 0.0
    %2953 = vmatpush1.msra.mxu0 %v2914
    %2954 = vmatprep.subr.mxu0 0.0
    %2955 = vmatpush1.msra.mxu0 %v2915
    %2956 = vmatprep.subr.mxu0 0.0
    %2957 = vmatpush1.msra.mxu0 %v2916
    %2958 = vmatprep.subr.mxu0 0.0
    %2959 = vmatpush1.msra.mxu0 0.0
    %2960 = vmatprep.subr.mxu0 0.0
    %2961 = vmatpush1.msra.mxu0 0.0
    %2962 = vmatprep.subr.mxu0 0.0
    %2963 = vmatpush1.msra.mxu0 0.0
    %2964 = vmatprep.subr.mxu0 0.0
    %2965 = vmatpush1.msra.mxu0 0.0
    %2966 = vmatprep.subr.mxu0 0.0
    %2967 = vmatpush1.msra.mxu0 0.0
    %2968 = vmatprep.subr.mxu0 0.0
    %2969 = vmatpush1.msra.mxu0 0.0
    %2970 = vmatprep.subr.mxu0 0.0
    %2971 = vmatpush1.msra.mxu0 0.0
    %2972 = vmatprep.subr.mxu0 0.0
    %2973 = vmatpush1.msra.mxu0 0.0
    %2974 = vmatprep.subr.mxu0 0.0
    %2975 = vmatpush1.msra.mxu0 0.0
    %2976 = vmatprep.subr.mxu0 0.0
    %2977 = vmatpush1.msra.mxu0 0.0
    %2978 = vmatprep.subr.mxu0 0.0
    %2979 = vmatpush1.msra.mxu0 0.0
    %2980 = vmatprep.subr.mxu0 0.0
    %2981 = vmatpush1.msra.mxu0 0.0
    %2982 = vmatprep.subr.mxu0 0.0
    %2983 = vmatpush1.msra.mxu0 0.0
    %2984 = vmatprep.subr.mxu0 0.0
    %2985 = vmatpush1.msra.mxu0 0.0
    %2986 = vmatprep.subr.mxu0 0.0
    %2987 = vmatpush1.msra.mxu0 0.0
    %2988 = vmatprep.subr.mxu0 0.0
    %2989 = vmatpush1.msra.mxu0 0.0
    %2990 = vmatprep.subr.mxu0 0.0
    %2991 = vmatpush1.msra.mxu0 0.0
    %2992 = vmatprep.subr.mxu0 0.0
    %2993 = vmatpush1.msra.mxu0 0.0
    %2994 = vmatprep.subr.mxu0 0.0
    %2995 = vmatpush1.msra.mxu0 0.0
    %2996 = vmatprep.subr.mxu0 0.0
    %2997 = vmatpush1.msra.mxu0 0.0
    %2998 = vmatprep.subr.mxu0 0.0
    %2999 = vmatpush1.msra.mxu0 0.0
    %3000 = vmatprep.subr.mxu0 0.0
    %3001 = vmatpush1.msra.mxu0 0.0
    %3002 = vmatprep.subr.mxu0 0.0
    %3003 = vmatpush1.msra.mxu0 0.0
    %3004 = vmatprep.subr.mxu0 0.0
    %3005 = vmatpush1.msra.mxu0 0.0
    %3006 = vmatprep.subr.mxu0 0.0
    %3007 = vmatpush1.msra.mxu0 0.0
    %3008 = vmatprep.subr.mxu0 0.0
    %3009 = vmatpush1.msra.mxu0 0.0
    %3010 = vmatprep.subr.mxu0 0.0
    %3011 = vmatpush1.msra.mxu0 0.0
    %3012 = vmatprep.subr.mxu0 0.0
    %3013 = vmatpush1.msra.mxu0 0.0
    %3014 = vmatprep.mubr.f32.mxu0 0.0
    %3015 = vmatmul.mubr.f32.gmra.mrb[0].mxu0 %v1220
    %v3016 = vpop.f32.mrb[0].mxu0
    %v3017 = vadd.f32 0.0, %v3016
    %v3018 = vpop.f32.mrb[0].mxu0
    %3019 = vdwg.mxu0
    %v3020 = vadd.f32 %v2949, %v3017
    %v3021 = vtanh.pop %v3020
    %v3022 = vxor.u32 %v3020, 2147483648
    %v3023 = vmul.f32 %v3022, 1.442695
    %v3024 = vpow.pop %v3023
    %v3025 = vadd.f32 %v3024, 1.0
    %v3026 = vrcp.pop %v3025
    %v3027 = vmul.f32 1.0, %v3026
    %v3028 = vsel %vm137, %v3021, %v3027
    %v3029 = vmul.f32 %v3028, 0.0
    %3031 = vrot.lane.b32.xlu0 %v3028, 64
    %v3032 = vpop.permute.xlu0 %3031
    %v3034 = vmul.f32 %v3028, %v3032
    %3036 = vrot.lane.b32.xlu0 %v3034, 32
    %v3037 = vpop.permute.xlu0 %3036
    %v3039 = vadd.f32 %v3029, %v3037
    %v3040 = vtanh.pop %v3039
    %3042 = vrot.lane.b32.xlu0 %v3040, 64
    %v3043 = vpop.permute.xlu0 %3042
    %v3045 = vmul.f32 %v3028, %v3043
    %3047 = vrot.lane.b32.xlu0 %v3045, 32
    %v3048 = vpop.permute.xlu0 %3047
    %v3049 = vsel %vm1218, %v3048, 0
    %3051 = vmatprep.subr.mxu0 0.0
    %3052 = vmatpush1.msra.mxu0 %v2913
    %3053 = vmatprep.subr.mxu0 0.0
    %3054 = vmatpush1.msra.mxu0 %v2914
    %3055 = vmatprep.subr.mxu0 0.0
    %3056 = vmatpush1.msra.mxu0 %v2915
    %3057 = vmatprep.subr.mxu0 0.0
    %3058 = vmatpush1.msra.mxu0 %v2916
    %3059 = vmatprep.subr.mxu0 0.0
    %3060 = vmatpush1.msra.mxu0 0.0
    %3061 = vmatprep.subr.mxu0 0.0
    %3062 = vmatpush1.msra.mxu0 0.0
    %3063 = vmatprep.subr.mxu0 0.0
    %3064 = vmatpush1.msra.mxu0 0.0
    %3065 = vmatprep.subr.mxu0 0.0
    %3066 = vmatpush1.msra.mxu0 0.0
    %3067 = vmatprep.subr.mxu0 0.0
    %3068 = vmatpush1.msra.mxu0 0.0
    %3069 = vmatprep.subr.mxu0 0.0
    %3070 = vmatpush1.msra.mxu0 0.0
    %3071 = vmatprep.subr.mxu0 0.0
    %3072 = vmatpush1.msra.mxu0 0.0
    %3073 = vmatprep.subr.mxu0 0.0
    %3074 = vmatpush1.msra.mxu0 0.0
    %3075 = vmatprep.subr.mxu0 0.0
    %3076 = vmatpush1.msra.mxu0 0.0
    %3077 = vmatprep.subr.mxu0 0.0
    %3078 = vmatpush1.msra.mxu0 0.0
    %3079 = vmatprep.subr.mxu0 0.0
    %3080 = vmatpush1.msra.mxu0 0.0
    %3081 = vmatprep.subr.mxu0 0.0
    %3082 = vmatpush1.msra.mxu0 0.0
    %3083 = vmatprep.subr.mxu0 0.0
    %3084 = vmatpush1.msra.mxu0 0.0
    %3085 = vmatprep.subr.mxu0 0.0
    %3086 = vmatpush1.msra.mxu0 0.0
    %3087 = vmatprep.subr.mxu0 0.0
    %3088 = vmatpush1.msra.mxu0 0.0
    %3089 = vmatprep.subr.mxu0 0.0
    %3090 = vmatpush1.msra.mxu0 0.0
    %3091 = vmatprep.subr.mxu0 0.0
    %3092 = vmatpush1.msra.mxu0 0.0
    %3093 = vmatprep.subr.mxu0 0.0
    %3094 = vmatpush1.msra.mxu0 0.0
    %3095 = vmatprep.subr.mxu0 0.0
    %3096 = vmatpush1.msra.mxu0 0.0
    %3097 = vmatprep.subr.mxu0 0.0
    %3098 = vmatpush1.msra.mxu0 0.0
    %3099 = vmatprep.subr.mxu0 0.0
    %3100 = vmatpush1.msra.mxu0 0.0
    %3101 = vmatprep.subr.mxu0 0.0
    %3102 = vmatpush1.msra.mxu0 0.0
    %3103 = vmatprep.subr.mxu0 0.0
    %3104 = vmatpush1.msra.mxu0 0.0
    %3105 = vmatprep.subr.mxu0 0.0
    %3106 = vmatpush1.msra.mxu0 0.0
    %3107 = vmatprep.subr.mxu0 0.0
    %3108 = vmatpush1.msra.mxu0 0.0
    %3109 = vmatprep.subr.mxu0 0.0
    %3110 = vmatpush1.msra.mxu0 0.0
    %3111 = vmatprep.subr.mxu0 0.0
    %3112 = vmatpush1.msra.mxu0 0.0
    %3113 = vmatprep.subr.mxu0 0.0
    %3114 = vmatpush1.msra.mxu0 0.0
    %3115 = vmatprep.mubr.f32.mxu0 0.0
    %3116 = vmatmul.mubr.f32.gmra.mrb[0].mxu0 %v3049
    %v3117 = vpop.f32.mrb[0].mxu0
    %v3118 = vadd.f32 0.0, %v3117
    %v3119 = vpop.f32.mrb[0].mxu0
    %3120 = vdwg.mxu0
    %v3123 = vunpack.c.l.s4 1966171168
    %v3124 = vunpack.c.0.s8 %v3123
    %v3125 = vlaneseq
    %v3126 = vshrl.u32 %v3125, 7
    %v3127 = vsub.s32 %v3124, %v3126
    %v3128 = vrot.slane %v3118, %v3127
    %v3129 = vcombine.high %v3128, %v3128
    %v3131 = vunpack.c.l.s4 1966171168
    %v3132 = vunpack.c.0.s8 %v3131
    %v3133 = vlaneseq
    %v3134 = vshrl.u32 %v3133, 7
    %v3135 = vsub.s32 %v3132, %v3134
    %v3136 = vrot.slane %v3128, %v3135
    %v3138 = vunpack.c.l.s4 1966171168
    %v3139 = vunpack.c.0.s8 %v3138
    %v3140 = vlaneseq
    %v3141 = vshrl.u32 %v3140, 7
    %v3142 = vsub.s32 %v3139, %v3141
    %v3143 = vrot.slane %v3129, %v3142
    %v3146 = vadd.f32 %v2901, %v3136
    %v3147 = vadd.f32 %v2894, %v3143
    %v3148 = vtanh.pop %v3146
    %v3149 = vtanh.pop %v3147
    %v3150 = vxor.u32 %v3146, 2147483648
    %v3151 = vxor.u32 %v3147, 2147483648
    %v3152 = vmul.f32 %v3150, 1.442695
    %v3153 = vpow.pop %v3152
    %v3154 = vmul.f32 %v3151, 1.442695
    %v3155 = vpow.pop %v3154
    %v3156 = vadd.f32 %v3153, 1.0
    %v3157 = vadd.f32 %v3155, 1.0
    %v3158 = vrcp.pop %v3156
    %v3159 = vmul.f32 1.0, %v3158
    %v3160 = vrcp.pop %v3157
    %v3161 = vmul.f32 1.0, %v3160
    %v3164 = vcombine.low %v3148, %v3149
    %v3166 = vunpack.c.l.s4 1966171168
    %v3167 = vunpack.c.0.s8 %v3166
    %v3168 = vlaneseq
    %v3169 = vshrl.u32 %v3168, 7
    %v3170 = vsub.s32 %v3167, %v3169
    %v3171 = vrot.slane %v3164, %v3170
    %v3173 = vunpack.c.l.s4 1966171168
    %v3174 = vunpack.c.0.s8 %v3173
    %v3175 = vlaneseq
    %v3176 = vshrl.u32 %v3175, 7
    %v3177 = vsub.s32 %v3174, %v3176
    %v3178 = vrot.slane %v3171, %v3177
    %v3182 = vcombine.low %v3159, %v3161
    %v3184 = vunpack.c.l.s4 1966171168
    %v3185 = vunpack.c.0.s8 %v3184
    %v3186 = vlaneseq
    %v3187 = vshrl.u32 %v3186, 7
    %v3188 = vsub.s32 %v3185, %v3187
    %v3189 = vrot.slane %v3182, %v3188
    %v3191 = vunpack.c.l.s4 1966171168
    %v3192 = vunpack.c.0.s8 %v3191
    %v3193 = vlaneseq
    %v3194 = vshrl.u32 %v3193, 7
    %v3195 = vsub.s32 %v3192, %v3194
    %v3196 = vrot.slane %v3189, %v3195
    %v3198 = vsel %vm137, %v3178, %v3196
    %v3199 = vmul.f32 %v3198, %v3039
    %3201 = vrot.lane.b32.xlu0 %v3198, 64
    %v3202 = vpop.permute.xlu0 %3201
    %v3204 = vmul.f32 %v3198, %v3202
    %3206 = vrot.lane.b32.xlu0 %v3204, 32
    %v3207 = vpop.permute.xlu0 %3206
    %v3209 = vadd.f32 %v3199, %v3207
    %v3210 = vtanh.pop %v3209
    %3212 = vrot.lane.b32.xlu0 %v3210, 64
    %v3213 = vpop.permute.xlu0 %3212
    %v3215 = vmul.f32 %v3198, %v3213
    %v3216 = vsel %vm134, %v2947, %v2931
    %3218 = vrot.lane.b32.xlu0 %v3215, 32
    %v3219 = vpop.permute.xlu0 %3218
    %v3220 = vsel %vm1218, %v3219, 0
    %3222 = vmatprep.subr.mxu0 0.0
    %3223 = vmatpush1.msra.mxu0 %v2913
    %3224 = vmatprep.subr.mxu0 0.0
    %3225 = vmatpush1.msra.mxu0 %v2914
    %3226 = vmatprep.subr.mxu0 0.0
    %3227 = vmatpush1.msra.mxu0 %v2915
    %3228 = vmatprep.subr.mxu0 0.0
    %3229 = vmatpush1.msra.mxu0 %v2916
    %3230 = vmatprep.subr.mxu0 0.0
    %3231 = vmatpush1.msra.mxu0 0.0
    %3232 = vmatprep.subr.mxu0 0.0
    %3233 = vmatpush1.msra.mxu0 0.0
    %3234 = vmatprep.subr.mxu0 0.0
    %3235 = vmatpush1.msra.mxu0 0.0
    %3236 = vmatprep.subr.mxu0 0.0
    %3237 = vmatpush1.msra.mxu0 0.0
    %3238 = vmatprep.subr.mxu0 0.0
    %3239 = vmatpush1.msra.mxu0 0.0
    %3240 = vmatprep.subr.mxu0 0.0
    %3241 = vmatpush1.msra.mxu0 0.0
    %3242 = vmatprep.subr.mxu0 0.0
    %3243 = vmatpush1.msra.mxu0 0.0
    %3244 = vmatprep.subr.mxu0 0.0
    %3245 = vmatpush1.msra.mxu0 0.0
    %3246 = vmatprep.subr.mxu0 0.0
    %3247 = vmatpush1.msra.mxu0 0.0
    %3248 = vmatprep.subr.mxu0 0.0
    %3249 = vmatpush1.msra.mxu0 0.0
    %3250 = vmatprep.subr.mxu0 0.0
    %3251 = vmatpush1.msra.mxu0 0.0
    %3252 = vmatprep.subr.mxu0 0.0
    %3253 = vmatpush1.msra.mxu0 0.0
    %3254 = vmatprep.subr.mxu0 0.0
    %3255 = vmatpush1.msra.mxu0 0.0
    %3256 = vmatprep.subr.mxu0 0.0
    %3257 = vmatpush1.msra.mxu0 0.0
    %3258 = vmatprep.subr.mxu0 0.0
    %3259 = vmatpush1.msra.mxu0 0.0
    %3260 = vmatprep.subr.mxu0 0.0
    %3261 = vmatpush1.msra.mxu0 0.0
    %3262 = vmatprep.subr.mxu0 0.0
    %3263 = vmatpush1.msra.mxu0 0.0
    %3264 = vmatprep.subr.mxu0 0.0
    %3265 = vmatpush1.msra.mxu0 0.0
    %3266 = vmatprep.subr.mxu0 0.0
    %3267 = vmatpush1.msra.mxu0 0.0
    %3268 = vmatprep.subr.mxu0 0.0
    %3269 = vmatpush1.msra.mxu0 0.0
    %3270 = vmatprep.subr.mxu0 0.0
    %3271 = vmatpush1.msra.mxu0 0.0
    %3272 = vmatprep.subr.mxu0 0.0
    %3273 = vmatpush1.msra.mxu0 0.0
    %3274 = vmatprep.subr.mxu0 0.0
    %3275 = vmatpush1.msra.mxu0 0.0
    %3276 = vmatprep.subr.mxu0 0.0
    %3277 = vmatpush1.msra.mxu0 0.0
    %3278 = vmatprep.subr.mxu0 0.0
    %3279 = vmatpush1.msra.mxu0 0.0
    %3280 = vmatprep.subr.mxu0 0.0
    %3281 = vmatpush1.msra.mxu0 0.0
    %3282 = vmatprep.subr.mxu0 0.0
    %3283 = vmatpush1.msra.mxu0 0.0
    %3284 = vmatprep.subr.mxu0 0.0
    %3285 = vmatpush1.msra.mxu0 0.0
    %3286 = vmatprep.mubr.f32.mxu0 0.0
    %3287 = vmatmul.mubr.f32.gmra.mrb[0].mxu0 %v3220
    %v3288 = vpop.f32.mrb[0].mxu0
    %v3289 = vadd.f32 0.0, %v3288
    %v3290 = vpop.f32.mrb[0].mxu0
    %3291 = vdwg.mxu0
    %v3292 = vadd.f32 %v3216, %v3289
    %v3293 = vtanh.pop %v3292
    %v3294 = vxor.u32 %v3292, 2147483648
    %v3295 = vmul.f32 %v3294, 1.442695
    %v3296 = vpow.pop %v3295
    %v3297 = vadd.f32 %v3296, 1.0
    %v3298 = vrcp.pop %v3297
    %v3299 = vmul.f32 1.0, %v3298
    %v3300 = vsel %vm137, %v3293, %v3299
    %v3301 = vmul.f32 %v3300, %v3209
    %3303 = vrot.lane.b32.xlu0 %v3300, 64
    %v3304 = vpop.permute.xlu0 %3303
    %v3306 = vmul.f32 %v3300, %v3304
    %3308 = vrot.lane.b32.xlu0 %v3306, 32
    %v3309 = vpop.permute.xlu0 %3308
    %v3311 = vadd.f32 %v3301, %v3309
    %v3312 = vtanh.pop %v3311
    %3314 = vrot.lane.b32.xlu0 %v3312, 64
    %v3315 = vpop.permute.xlu0 %3314
    %v3317 = vmul.f32 %v3300, %v3315
    %3319 = vrot.lane.b32.xlu0 %v3317, 32
    %v3320 = vpop.permute.xlu0 %3319
    %v3323 = vsel %vm138, %v3320, %v3048
    %vm3324 = vcmask 254976
    %3325 = vst.msk [vmem:[%s15] sm:$0x3] %vm3324, %v3323
    // Predicated region
    $region82: #{bigmhc_core.6} parent=1 // pred_check
      _
    $region83: #{bigmhc_core.6} parent=1 // pred_check_branch
      %3327 = sbr.rel (0) target = $region85
    $region84: #{bigmhc_core.6} parent=1 // pred_region
      _
    $region85: #{bigmhc_core.6} parent=1 // pred_fallthru
      _
    // Predicated region
    $region86: #{bigmhc_core.6} parent=1 // pred_check
      _
    $region87: #{bigmhc_core.6} parent=1 // pred_check_branch
      %3329 = sbr.rel (0) target = $region89
    $region88: #{bigmhc_core.6} parent=1 // pred_region
      _
    $region89: #{bigmhc_core.6} parent=1 // pred_fallthru
      _
    %3330 = vsyncpa [#allocation3], 1
    %3331 = vsyncpa [#allocation5], 1
    %3332 = vsyncpa [#allocation8], 1

// kernel: bigmhc_core.5
$region0: #{bigmhc_core.5}
  #allocation0 [shape = 'u32[]', space=smem, size = 0x4, offset = 0x4, fixed_abs, tag = 'smem constant byte address 0x4 - core index']
  #allocation1 [shape = 'u32[144,128]{1,0:T(1,128)}', space=vmem, size = 0x12000, scoped, tag = 'internal scratch']
  %s0 = inlined_call_operand.vmem [shape: f32[2,10,36], index: 0, kind: input, shape index: {}]
  %s1 = inlined_call_operand.vmem [shape: f32[36,108], index: 1, kind: input, shape index: {}]
  %s2 = inlined_call_operand.vmem [shape: f32[1,108], index: 2, kind: input, shape index: {}]
  %s3 = inlined_call_operand.vmem [shape: f32[36,36], index: 3, kind: input, shape index: {}]
  %s4 = inlined_call_operand.vmem [shape: f32[1,36], index: 4, kind: input, shape index: {}]
  %s5 = inlined_call_operand.vmem [shape: f32[36,128], index: 5, kind: input, shape index: {}]
  %s6 = inlined_call_operand.vmem [shape: f32[1,128], index: 6, kind: input, shape index: {}]
  %s7 = inlined_call_operand.vmem [shape: f32[32,128], index: 7, kind: input, shape index: {}]
  %s8 = inlined_call_operand.vmem [shape: f32[68,204], index: 8, kind: input, shape index: {}]
  %s9 = inlined_call_operand.vmem [shape: f32[1,204], index: 9, kind: input, shape index: {}]
  %s10 = inlined_call_operand.vmem [shape: f32[68,68], index: 10, kind: input, shape index: {}]
  %s11 = inlined_call_operand.vmem [shape: f32[1,68], index: 11, kind: input, shape index: {}]
  %s12 = inlined_call_operand.vmem [shape: f32[68,128], index: 12, kind: input, shape index: {}]
  %s13 = inlined_call_operand.vmem [shape: f32[1,128], index: 13, kind: input, shape index: {}]
  %s14 = inlined_call_operand.vmem [shape: f32[32,128], index: 14, kind: input, shape index: {}]
  %s15 = inlined_call_operand.vmem [shape: f32[2,32], index: 15, kind: output, shape index: {}]
  %s16 = sld [smem:[#allocation0]]
  $region70: #{bigmhc_core.5} parent=0
    _
  %s18 = ssub.s32 1, %s16
  %s19 = scalar_select 0, %s18, %s16
  // Predicated region
  $region2: #{bigmhc_core.5} parent=0 // pred_check
    _
  $region3: #{bigmhc_core.5} parent=0 // pred_check_branch
    %21 = sbr.rel (0) target = $region5
  $region4: #{bigmhc_core.5} parent=0 // pred_region
    _
  $region5: #{bigmhc_core.5} parent=0 // pred_fallthru
    _
  // Predicated region
  $region6: #{bigmhc_core.5} parent=0 // pred_check
    _
  $region7: #{bigmhc_core.5} parent=0 // pred_check_branch
    %23 = sbr.rel (0) target = $region9
  $region8: #{bigmhc_core.5} parent=0 // pred_region
    _
  $region9: #{bigmhc_core.5} parent=0 // pred_fallthru
    _
  // Predicated region
  $region10: #{bigmhc_core.5} parent=0 // pred_check
    _
  $region11: #{bigmhc_core.5} parent=0 // pred_check_branch
    %25 = sbr.rel (0) target = $region13
  $region12: #{bigmhc_core.5} parent=0 // pred_region
    _
  $region13: #{bigmhc_core.5} parent=0 // pred_fallthru
    _
  // Predicated region
  $region14: #{bigmhc_core.5} parent=0 // pred_check
    _
  $region15: #{bigmhc_core.5} parent=0 // pred_check_branch
    %27 = sbr.rel (0) target = $region17
  $region16: #{bigmhc_core.5} parent=0 // pred_region
    _
  $region17: #{bigmhc_core.5} parent=0 // pred_fallthru
    _
  // Predicated region
  $region18: #{bigmhc_core.5} parent=0 // pred_check
    _
  $region19: #{bigmhc_core.5} parent=0 // pred_check_branch
    %29 = sbr.rel (0) target = $region21
  $region20: #{bigmhc_core.5} parent=0 // pred_region
    _
  $region21: #{bigmhc_core.5} parent=0 // pred_fallthru
    _
  // Predicated region
  $region22: #{bigmhc_core.5} parent=0 // pred_check
    _
  $region23: #{bigmhc_core.5} parent=0 // pred_check_branch
    %31 = sbr.rel (0) target = $region25
  $region24: #{bigmhc_core.5} parent=0 // pred_region
    _
  $region25: #{bigmhc_core.5} parent=0 // pred_fallthru
    _
  // Predicated region
  $region26: #{bigmhc_core.5} parent=0 // pred_check
    _
  $region27: #{bigmhc_core.5} parent=0 // pred_check_branch
    %33 = sbr.rel (0) target = $region29
  $region28: #{bigmhc_core.5} parent=0 // pred_region
    _
  $region29: #{bigmhc_core.5} parent=0 // pred_fallthru
    _
  // Predicated region
  $region30: #{bigmhc_core.5} parent=0 // pred_check
    _
  $region31: #{bigmhc_core.5} parent=0 // pred_check_branch
    %35 = sbr.rel (0) target = $region33
  $region32: #{bigmhc_core.5} parent=0 // pred_region
    _
  $region33: #{bigmhc_core.5} parent=0 // pred_fallthru
    _
  // Predicated region
  $region34: #{bigmhc_core.5} parent=0 // pred_check
    _
  $region35: #{bigmhc_core.5} parent=0 // pred_check_branch
    %37 = sbr.rel (0) target = $region37
  $region36: #{bigmhc_core.5} parent=0 // pred_region
    _
  $region37: #{bigmhc_core.5} parent=0 // pred_fallthru
    _
  // Predicated region
  $region38: #{bigmhc_core.5} parent=0 // pred_check
    _
  $region39: #{bigmhc_core.5} parent=0 // pred_check_branch
    %39 = sbr.rel (0) target = $region41
  $region40: #{bigmhc_core.5} parent=0 // pred_region
    _
  $region41: #{bigmhc_core.5} parent=0 // pred_fallthru
    _
  // Predicated region
  $region42: #{bigmhc_core.5} parent=0 // pred_check
    _
  $region43: #{bigmhc_core.5} parent=0 // pred_check_branch
    %41 = sbr.rel (0) target = $region45
  $region44: #{bigmhc_core.5} parent=0 // pred_region
    _
  $region45: #{bigmhc_core.5} parent=0 // pred_fallthru
    _
  // Predicated region
  $region46: #{bigmhc_core.5} parent=0 // pred_check
    _
  $region47: #{bigmhc_core.5} parent=0 // pred_check_branch
    %43 = sbr.rel (0) target = $region49
  $region48: #{bigmhc_core.5} parent=0 // pred_region
    _
  $region49: #{bigmhc_core.5} parent=0 // pred_fallthru
    _
  // Predicated region
  $region50: #{bigmhc_core.5} parent=0 // pred_check
    _
  $region51: #{bigmhc_core.5} parent=0 // pred_check_branch
    %45 = sbr.rel (0) target = $region53
  $region52: #{bigmhc_core.5} parent=0 // pred_region
    _
  $region53: #{bigmhc_core.5} parent=0 // pred_fallthru
    _
  // Predicated region
  $region54: #{bigmhc_core.5} parent=0 // pred_check
    _
  $region55: #{bigmhc_core.5} parent=0 // pred_check_branch
    %47 = sbr.rel (0) target = $region57
  $region56: #{bigmhc_core.5} parent=0 // pred_region
    _
  $region57: #{bigmhc_core.5} parent=0 // pred_fallthru
    _
  // Predicated region
  $region58: #{bigmhc_core.5} parent=0 // pred_check
    _
  $region59: #{bigmhc_core.5} parent=0 // pred_check_branch
    %49 = sbr.rel (0) target = $region61
  $region60: #{bigmhc_core.5} parent=0 // pred_region
    _
  $region61: #{bigmhc_core.5} parent=0 // pred_fallthru
    _
  %v50 = vld [vmem:[%s0] sm:$0xff]
  %v51 = vld [vmem:[%s0 + $0x8] sm:$0x3]
  %v52 = vld [vmem:[%s0 + $0x10] sm:$0xff]
  %v53 = vld [vmem:[%s0 + $0x18] sm:$0x3]
  %v54 = vlaneseq
  %v55 = vand.u32 %v54, 127
  %vm56 = vcmp.lt.s32.totalorder %v55, 0
  %v57 = vsub.s32 0, %v55
  %v58 = vsel %vm56, %v57, %v55
  %v59 = vshrl.u32 %v58, 5
  %v60 = vand.u32 %v58, 31
  %v61 = vsub.s32 0, %v60
  %v62 = vsel %vm56, %v61, %v60
  %vm63 = vcmp.ne.s32.totalorder %v62, 0
  %vm64 = vcmp.lt.s32.totalorder %v62, 0
  %vm65 = vmand %vm64, %vm63
  %v66 = vadd.s32 %v62, 32
  %v67 = vsel %vm65, %v66, %v62
  %vm68 = vcmp.lt.s32.totalorder %v67, 16
  %vm69 = vcmp.ge.s32.totalorder %v55, 64
  %vm70 = vcmp.lt.s32.totalorder %v55, 96
  %vm71 = vmand %vm69, %vm70
  %vm72 = vcmp.lt.s32.totalorder %v55, 16
  %v77 = vcombine.high %v50, %v50
  %v79 = vunpack.c.l.s4 1983009808
  %v80 = vunpack.c.0.s8 %v79
  %v81 = vlaneseq
  %v82 = vshrl.u32 %v81, 7
  %v83 = vsub.s32 %v80, %v82
  %v84 = vrot.slane %v50, %v83
  %v86 = vunpack.c.l.s4 1983009808
  %v87 = vunpack.c.0.s8 %v86
  %v88 = vlaneseq
  %v89 = vshrl.u32 %v88, 7
  %v90 = vsub.s32 %v87, %v89
  %v91 = vrot.slane %v77, %v90
  %v92 = vcombine.high %v84, %v84
  %v93 = vcombine.high %v91, %v91
  %v95 = vunpack.c.l.s4 1983009808
  %v96 = vunpack.c.0.s8 %v95
  %v97 = vlaneseq
  %v98 = vshrl.u32 %v97, 7
  %v99 = vsub.s32 %v96, %v98
  %v100 = vrot.slane %v51, %v99
  %v101 = vcombine.high %v52, %v52
  %v103 = vunpack.c.l.s4 1983009808
  %v104 = vunpack.c.0.s8 %v103
  %v105 = vlaneseq
  %v106 = vshrl.u32 %v105, 7
  %v107 = vsub.s32 %v104, %v106
  %v108 = vrot.slane %v52, %v107
  %v110 = vunpack.c.l.s4 1983009808
  %v111 = vunpack.c.0.s8 %v110
  %v112 = vlaneseq
  %v113 = vshrl.u32 %v112, 7
  %v114 = vsub.s32 %v111, %v113
  %v115 = vrot.slane %v101, %v114
  %v116 = vcombine.high %v108, %v108
  %v117 = vcombine.high %v115, %v115
  %v119 = vunpack.c.l.s4 1983009808
  %v120 = vunpack.c.0.s8 %v119
  %v121 = vlaneseq
  %v122 = vshrl.u32 %v121, 7
  %v123 = vsub.s32 %v120, %v122
  %v124 = vrot.slane %v53, %v123
  %v125 = vld [vmem:[%s1] sm:$0xff]
  %v126 = vld [vmem:[%s1 + $0x8] sm:$0xff]
  %v127 = vld [vmem:[%s1 + $0x10] sm:$0xff]
  %v128 = vld [vmem:[%s1 + $0x18] sm:$0xff]
  %v129 = vld [vmem:[%s1 + $0x20] sm:$0xf]
  %v130 = vld [vmem:[%s2] sm:$0x1]
  %v131 = vld [vmem:[%s3] sm:$0xff]
  %v132 = vld [vmem:[%s3 + $0x8] sm:$0xff]
  %v133 = vld [vmem:[%s3 + $0x10] sm:$0xff]
  %v134 = vld [vmem:[%s3 + $0x18] sm:$0xff]
  %v135 = vld [vmem:[%s3 + $0x20] sm:$0xf]
  %v136 = vld [vmem:[%s4] sm:$0x1]
  %v138 = vlaneseq
  %v139 = vshrl.u32 %v138, 7
  %v140 = vsub.s32 0, %v139
  %v141 = vrot.slane %v130, %v140
  %v143 = vcombine.low %v84, %v92
  %v144 = vcombine.low %v91, %v93
  %v146 = vunpack.c.l.s4 1983009808
  %v147 = vunpack.c.0.s8 %v146
  %v148 = vlaneseq
  %v149 = vshrl.u32 %v148, 7
  %v150 = vsub.s32 %v147, %v149
  %v151 = vrot.slane %v143, %v150
  %v153 = vunpack.c.l.s4 1983009808
  %v154 = vunpack.c.0.s8 %v153
  %v155 = vlaneseq
  %v156 = vshrl.u32 %v155, 7
  %v157 = vsub.s32 %v154, %v156
  %v158 = vrot.slane %v144, %v157
  %v159 = vcombine.low %v151, %v158
  %v160 = vcombine.low %v100, %v108
  %v161 = vcombine.low %v116, %v115
  %v163 = vunpack.c.l.s4 1983009808
  %v164 = vunpack.c.0.s8 %v163
  %v165 = vlaneseq
  %v166 = vshrl.u32 %v165, 7
  %v167 = vsub.s32 %v164, %v166
  %v168 = vrot.slane %v160, %v167
  %v170 = vunpack.c.l.s4 1983009808
  %v171 = vunpack.c.0.s8 %v170
  %v172 = vlaneseq
  %v173 = vshrl.u32 %v172, 7
  %v174 = vsub.s32 %v171, %v173
  %v175 = vrot.slane %v161, %v174
  %v176 = vcombine.low %v168, %v175
  %v177 = vcombine.low %v117, %v124
  %v179 = vunpack.c.l.s4 1983009808
  %v180 = vunpack.c.0.s8 %v179
  %v181 = vlaneseq
  %v182 = vshrl.u32 %v181, 7
  %v183 = vsub.s32 %v180, %v182
  %v184 = vrot.slane %v177, %v183
  %vm185 = vcmask 293888
  %v186 = vsel %vm185, %v159, 0
  %v188 = vsel %vm185, %v176, 0
  %v190 = vsel %vm185, %v184, 0
  %vm192 = vcmask 1043456
  %v194 = vsel %vm192, %v129, 0
  %196 = vmatprep.subr.mxu0 0.0
  %197 = vmatpush1.msra.mxu0 %v125
  %198 = vmatprep.subr.mxu0 0.0
  %199 = vmatpush1.msra.mxu0 %v126
  %200 = vmatprep.subr.mxu0 0.0
  %201 = vmatpush1.msra.mxu0 %v127
  %202 = vmatprep.subr.mxu0 0.0
  %203 = vmatpush1.msra.mxu0 %v128
  %204 = vmatprep.subr.mxu0 0.0
  %205 = vmatpush1.msra.mxu0 %v194
  %206 = vmatprep.subr.mxu0 0.0
  %207 = vmatpush1.msra.mxu0 0.0
  %208 = vmatprep.subr.mxu0 0.0
  %209 = vmatpush1.msra.mxu0 0.0
  %210 = vmatprep.subr.mxu0 0.0
  %211 = vmatpush1.msra.mxu0 0.0
  %212 = vmatprep.subr.mxu0 0.0
  %213 = vmatpush1.msra.mxu0 0.0
  %214 = vmatprep.subr.mxu0 0.0
  %215 = vmatpush1.msra.mxu0 0.0
  %216 = vmatprep.subr.mxu0 0.0
  %217 = vmatpush1.msra.mxu0 0.0
  %218 = vmatprep.subr.mxu0 0.0
  %219 = vmatpush1.msra.mxu0 0.0
  %220 = vmatprep.subr.mxu0 0.0
  %221 = vmatpush1.msra.mxu0 0.0
  %222 = vmatprep.subr.mxu0 0.0
  %223 = vmatpush1.msra.mxu0 0.0
  %224 = vmatprep.subr.mxu0 0.0
  %225 = vmatpush1.msra.mxu0 0.0
  %226 = vmatprep.subr.mxu0 0.0
  %227 = vmatpush1.msra.mxu0 0.0
  %228 = vmatprep.subr.mxu0 0.0
  %229 = vmatpush1.msra.mxu0 0.0
  %230 = vmatprep.subr.mxu0 0.0
  %231 = vmatpush1.msra.mxu0 0.0
  %232 = vmatprep.subr.mxu0 0.0
  %233 = vmatpush1.msra.mxu0 0.0
  %234 = vmatprep.subr.mxu0 0.0
  %235 = vmatpush1.msra.mxu0 0.0
  %236 = vmatprep.subr.mxu0 0.0
  %237 = vmatpush1.msra.mxu0 0.0
  %238 = vmatprep.subr.mxu0 0.0
  %239 = vmatpush1.msra.mxu0 0.0
  %240 = vmatprep.subr.mxu0 0.0
  %241 = vmatpush1.msra.mxu0 0.0
  %242 = vmatprep.subr.mxu0 0.0
  %243 = vmatpush1.msra.mxu0 0.0
  %244 = vmatprep.subr.mxu0 0.0
  %245 = vmatpush1.msra.mxu0 0.0
  %246 = vmatprep.subr.mxu0 0.0
  %247 = vmatpush1.msra.mxu0 0.0
  %248 = vmatprep.subr.mxu0 0.0
  %249 = vmatpush1.msra.mxu0 0.0
  %250 = vmatprep.subr.mxu0 0.0
  %251 = vmatpush1.msra.mxu0 0.0
  %252 = vmatprep.subr.mxu0 0.0
  %253 = vmatpush1.msra.mxu0 0.0
  %254 = vmatprep.subr.mxu0 0.0
  %255 = vmatpush1.msra.mxu0 0.0
  %256 = vmatprep.subr.mxu0 0.0
  %257 = vmatpush1.msra.mxu0 0.0
  %258 = vmatprep.subr.mxu0 0.0
  %259 = vmatpush1.msra.mxu0 0.0
  %260 = vmatprep.mubr.f32.mxu0 0.0
  %261 = vmatmul.mubr.f32.gmra.mrb[0].mxu0 %v186
  %v262 = vpop.f32.mrb[0].mxu0
  %v263 = vadd.f32 %v141, %v262
  %v264 = vpop.f32.mrb[0].mxu0
  %265 = vmatprep.mubr.f32.mxu0 0.0
  %266 = vmatmul.mubr.f32.gmra.mrb[0].mxu0 %v188
  %v267 = vpop.f32.mrb[0].mxu0
  %v268 = vadd.f32 %v141, %v267
  %v269 = vpop.f32.mrb[0].mxu0
  %270 = vmatprep.mubr.f32.mxu0 0.0
  %271 = vmatmul.mubr.f32.gmra.mrb[0].mxu0 %v190
  %v272 = vpop.f32.mrb[0].mxu0
  %v273 = vadd.f32 %v141, %v272
  %v274 = vpop.f32.mrb[0].mxu0
  %275 = vdwg.mxu0
  %v279 = vcombine.high %v263, %v263
  %v281 = vunpack.c.l.s4 1983009808
  %v282 = vunpack.c.0.s8 %v281
  %v283 = vlaneseq
  %v284 = vshrl.u32 %v283, 7
  %v285 = vsub.s32 %v282, %v284
  %v286 = vrot.slane %v263, %v285
  %v288 = vunpack.c.l.s4 1983009808
  %v289 = vunpack.c.0.s8 %v288
  %v290 = vlaneseq
  %v291 = vshrl.u32 %v290, 7
  %v292 = vsub.s32 %v289, %v291
  %v293 = vrot.slane %v279, %v292
  %v294 = vcombine.high %v286, %v286
  %v295 = vcombine.high %v293, %v293
  %v296 = vcombine.high %v268, %v268
  %v298 = vunpack.c.l.s4 1983009808
  %v299 = vunpack.c.0.s8 %v298
  %v300 = vlaneseq
  %v301 = vshrl.u32 %v300, 7
  %v302 = vsub.s32 %v299, %v301
  %v303 = vrot.slane %v268, %v302
  %v305 = vunpack.c.l.s4 1983009808
  %v306 = vunpack.c.0.s8 %v305
  %v307 = vlaneseq
  %v308 = vshrl.u32 %v307, 7
  %v309 = vsub.s32 %v306, %v308
  %v310 = vrot.slane %v296, %v309
  %v311 = vcombine.high %v303, %v303
  %v312 = vcombine.high %v310, %v310
  %v314 = vunpack.c.l.s4 1983009808
  %v315 = vunpack.c.0.s8 %v314
  %v316 = vlaneseq
  %v317 = vshrl.u32 %v316, 7
  %v318 = vsub.s32 %v315, %v317
  %v319 = vrot.slane %v273, %v318
  %v320 = vcombine.high %v319, %v319
  %v331 = vmul.f32 %v286, 0.16666667
  %v332 = vmul.f32 %v294, 0.16666667
  %v333 = vmul.f32 %v293, 0.16666667
  %v334 = vmul.f32 %v295, 0.16666667
  %v335 = vmul.f32 %v303, 0.16666667
  %v336 = vmul.f32 %v311, 0.16666667
  %v337 = vmul.f32 %v310, 0.16666667
  %v338 = vmul.f32 %v312, 0.16666667
  %v339 = vmul.f32 %v319, 0.16666667
  %v340 = vmul.f32 %v320, 0.16666667
  %v346 = vcombine.low %v331, %v332
  %v347 = vcombine.low %v333, %v334
  %v349 = vunpack.c.l.s4 1983009808
  %v350 = vunpack.c.0.s8 %v349
  %v351 = vlaneseq
  %v352 = vshrl.u32 %v351, 7
  %v353 = vsub.s32 %v350, %v352
  %v354 = vrot.slane %v346, %v353
  %v356 = vunpack.c.l.s4 1983009808
  %v357 = vunpack.c.0.s8 %v356
  %v358 = vlaneseq
  %v359 = vshrl.u32 %v358, 7
  %v360 = vsub.s32 %v357, %v359
  %v361 = vrot.slane %v347, %v360
  %v362 = vcombine.low %v354, %v361
  %v364 = vunpack.c.l.s4 1983009808
  %v365 = vunpack.c.0.s8 %v364
  %v366 = vlaneseq
  %v367 = vshrl.u32 %v366, 7
  %v368 = vsub.s32 %v365, %v367
  %v369 = vrot.slane %v335, %v368
  %v370 = vcombine.low %v286, %v294
  %v371 = vcombine.low %v293, %v295
  %v373 = vunpack.c.l.s4 1983009808
  %v374 = vunpack.c.0.s8 %v373
  %v375 = vlaneseq
  %v376 = vshrl.u32 %v375, 7
  %v377 = vsub.s32 %v374, %v376
  %v378 = vrot.slane %v370, %v377
  %v380 = vunpack.c.l.s4 1983009808
  %v381 = vunpack.c.0.s8 %v380
  %v382 = vlaneseq
  %v383 = vshrl.u32 %v382, 7
  %v384 = vsub.s32 %v381, %v383
  %v385 = vrot.slane %v371, %v384
  %v386 = vcombine.low %v378, %v385
  %v388 = vunpack.c.l.s4 1983009808
  %v389 = vunpack.c.0.s8 %v388
  %v390 = vlaneseq
  %v391 = vshrl.u32 %v390, 7
  %v392 = vsub.s32 %v389, %v391
  %v393 = vrot.slane %v303, %v392
  %394 = vrot.lane.b32.xlu0 %v386, 92
  %v395 = vpop.permute.xlu0 %394
  %396 = vrot.lane.b32.xlu0 %v393, 92
  %v397 = vpop.permute.xlu0 %396
  %v398 = vsel %vm185, %v362, 0
  %v400 = vsel %vm185, %v369, 0
  %v402 = vsel %vm185, %v395, 0
  %v404 = vsel %vm185, %v397, 0
  %406 = vmatprep.subr.mxu0 0.0
  %407 = vmatpush1.xpose.msra.mxu0 %v402
  %408 = vmatprep.subr.mxu0 0.0
  %409 = vmatpush1.xpose.msra.mxu0 %v404
  %410 = vmatprep.subr.mxu0 0.0
  %411 = vmatpush1.xpose.msra.mxu0 0.0
  %412 = vmatprep.subr.mxu0 0.0
  %413 = vmatpush1.xpose.msra.mxu0 0.0
  %414 = vmatprep.subr.mxu0 0.0
  %415 = vmatpush1.xpose.msra.mxu0 0.0
  %416 = vmatprep.subr.mxu0 0.0
  %417 = vmatpush1.xpose.msra.mxu0 0.0
  %418 = vmatprep.subr.mxu0 0.0
  %419 = vmatpush1.xpose.msra.mxu0 0.0
  %420 = vmatprep.subr.mxu0 0.0
  %421 = vmatpush1.xpose.msra.mxu0 0.0
  %422 = vmatprep.subr.mxu0 0.0
  %423 = vmatpush1.xpose.msra.mxu0 0.0
  %424 = vmatprep.subr.mxu0 0.0
  %425 = vmatpush1.xpose.msra.mxu0 0.0
  %426 = vmatprep.subr.mxu0 0.0
  %427 = vmatpush1.xpose.msra.mxu0 0.0
  %428 = vmatprep.subr.mxu0 0.0
  %429 = vmatpush1.xpose.msra.mxu0 0.0
  %430 = vmatprep.subr.mxu0 0.0
  %431 = vmatpush1.xpose.msra.mxu0 0.0
  %432 = vmatprep.subr.mxu0 0.0
  %433 = vmatpush1.xpose.msra.mxu0 0.0
  %434 = vmatprep.subr.mxu0 0.0
  %435 = vmatpush1.xpose.msra.mxu0 0.0
  %436 = vmatprep.subr.mxu0 0.0
  %437 = vmatpush1.xpose.msra.mxu0 0.0
  %438 = vmatprep.subr.mxu0 0.0
  %439 = vmatpush1.xpose.msra.mxu0 0.0
  %440 = vmatprep.subr.mxu0 0.0
  %441 = vmatpush1.xpose.msra.mxu0 0.0
  %442 = vmatprep.subr.mxu0 0.0
  %443 = vmatpush1.xpose.msra.mxu0 0.0
  %444 = vmatprep.subr.mxu0 0.0
  %445 = vmatpush1.xpose.msra.mxu0 0.0
  %446 = vmatprep.subr.mxu0 0.0
  %447 = vmatpush1.xpose.msra.mxu0 0.0
  %448 = vmatprep.subr.mxu0 0.0
  %449 = vmatpush1.xpose.msra.mxu0 0.0
  %450 = vmatprep.subr.mxu0 0.0
  %451 = vmatpush1.xpose.msra.mxu0 0.0
  %452 = vmatprep.subr.mxu0 0.0
  %453 = vmatpush1.xpose.msra.mxu0 0.0
  %454 = vmatprep.subr.mxu0 0.0
  %455 = vmatpush1.xpose.msra.mxu0 0.0
  %456 = vmatprep.subr.mxu0 0.0
  %457 = vmatpush1.xpose.msra.mxu0 0.0
  %458 = vmatprep.subr.mxu0 0.0
  %459 = vmatpush1.xpose.msra.mxu0 0.0
  %460 = vmatprep.subr.mxu0 0.0
  %461 = vmatpush1.xpose.msra.mxu0 0.0
  %462 = vmatprep.subr.mxu0 0.0
  %463 = vmatpush1.xpose.msra.mxu0 0.0
  %464 = vmatprep.subr.mxu0 0.0
  %465 = vmatpush1.xpose.msra.mxu0 0.0
  %466 = vmatprep.subr.mxu0 0.0
  %467 = vmatpush1.xpose.msra.mxu0 0.0
  %468 = vmatprep.subr.mxu0 0.0
  %469 = vmatpush1.xpose.msra.mxu0 0.0
  %470 = vmatprep.mubr.f32.mxu0 0.0
  %471 = vmatmul.mubr.f32.gmra.mrb[0].mxu0 %v398
  %v472 = vpop.f32.mrb[0].mxu0
  %v473 = vadd.f32 0.0, %v472
  %v474 = vpop.f32.mrb[0].mxu0
  %475 = vmatprep.mubr.f32.mxu0 0.0
  %476 = vmatmul.mubr.f32.gmra.mrb[0].mxu0 %v400
  %v477 = vpop.f32.mrb[0].mxu0
  %v478 = vadd.f32 0.0, %v477
  %v479 = vpop.f32.mrb[0].mxu0
  %480 = vdwg.mxu0
  %v486 = vcombine.low %v336, %v337
  %v487 = vcombine.low %v338, %v339
  %v489 = vunpack.c.l.s4 1983009808
  %v490 = vunpack.c.0.s8 %v489
  %v491 = vlaneseq
  %v492 = vshrl.u32 %v491, 7
  %v493 = vsub.s32 %v490, %v492
  %v494 = vrot.slane %v486, %v493
  %v496 = vunpack.c.l.s4 1983009808
  %v497 = vunpack.c.0.s8 %v496
  %v498 = vlaneseq
  %v499 = vshrl.u32 %v498, 7
  %v500 = vsub.s32 %v497, %v499
  %v501 = vrot.slane %v487, %v500
  %v502 = vcombine.low %v494, %v501
  %v504 = vunpack.c.l.s4 1983009808
  %v505 = vunpack.c.0.s8 %v504
  %v506 = vlaneseq
  %v507 = vshrl.u32 %v506, 7
  %v508 = vsub.s32 %v505, %v507
  %v509 = vrot.slane %v340, %v508
  %v510 = vcombine.low %v311, %v310
  %v511 = vcombine.low %v312, %v319
  %v513 = vunpack.c.l.s4 1983009808
  %v514 = vunpack.c.0.s8 %v513
  %v515 = vlaneseq
  %v516 = vshrl.u32 %v515, 7
  %v517 = vsub.s32 %v514, %v516
  %v518 = vrot.slane %v510, %v517
  %v520 = vunpack.c.l.s4 1983009808
  %v521 = vunpack.c.0.s8 %v520
  %v522 = vlaneseq
  %v523 = vshrl.u32 %v522, 7
  %v524 = vsub.s32 %v521, %v523
  %v525 = vrot.slane %v511, %v524
  %v526 = vcombine.low %v518, %v525
  %v528 = vunpack.c.l.s4 1983009808
  %v529 = vunpack.c.0.s8 %v528
  %v530 = vlaneseq
  %v531 = vshrl.u32 %v530, 7
  %v532 = vsub.s32 %v529, %v531
  %v533 = vrot.slane %v320, %v532
  %534 = vrot.lane.b32.xlu0 %v526, 92
  %v535 = vpop.permute.xlu0 %534
  %536 = vrot.lane.b32.xlu0 %v533, 92
  %v537 = vpop.permute.xlu0 %536
  %v538 = vsel %vm185, %v502, 0
  %v540 = vsel %vm185, %v509, 0
  %v542 = vsel %vm185, %v535, 0
  %v544 = vsel %vm185, %v537, 0
  %546 = vmatprep.subr.mxu0 0.0
  %547 = vmatpush1.xpose.msra.mxu0 %v542
  %548 = vmatprep.subr.mxu0 0.0
  %549 = vmatpush1.xpose.msra.mxu0 %v544
  %550 = vmatprep.subr.mxu0 0.0
  %551 = vmatpush1.xpose.msra.mxu0 0.0
  %552 = vmatprep.subr.mxu0 0.0
  %553 = vmatpush1.xpose.msra.mxu0 0.0
  %554 = vmatprep.subr.mxu0 0.0
  %555 = vmatpush1.xpose.msra.mxu0 0.0
  %556 = vmatprep.subr.mxu0 0.0
  %557 = vmatpush1.xpose.msra.mxu0 0.0
  %558 = vmatprep.subr.mxu0 0.0
  %559 = vmatpush1.xpose.msra.mxu0 0.0
  %560 = vmatprep.subr.mxu0 0.0
  %561 = vmatpush1.xpose.msra.mxu0 0.0
  %562 = vmatprep.subr.mxu0 0.0
  %563 = vmatpush1.xpose.msra.mxu0 0.0
  %564 = vmatprep.subr.mxu0 0.0
  %565 = vmatpush1.xpose.msra.mxu0 0.0
  %566 = vmatprep.subr.mxu0 0.0
  %567 = vmatpush1.xpose.msra.mxu0 0.0
  %568 = vmatprep.subr.mxu0 0.0
  %569 = vmatpush1.xpose.msra.mxu0 0.0
  %570 = vmatprep.subr.mxu0 0.0
  %571 = vmatpush1.xpose.msra.mxu0 0.0
  %572 = vmatprep.subr.mxu0 0.0
  %573 = vmatpush1.xpose.msra.mxu0 0.0
  %574 = vmatprep.subr.mxu0 0.0
  %575 = vmatpush1.xpose.msra.mxu0 0.0
  %576 = vmatprep.subr.mxu0 0.0
  %577 = vmatpush1.xpose.msra.mxu0 0.0
  %578 = vmatprep.subr.mxu0 0.0
  %579 = vmatpush1.xpose.msra.mxu0 0.0
  %580 = vmatprep.subr.mxu0 0.0
  %581 = vmatpush1.xpose.msra.mxu0 0.0
  %582 = vmatprep.subr.mxu0 0.0
  %583 = vmatpush1.xpose.msra.mxu0 0.0
  %584 = vmatprep.subr.mxu0 0.0
  %585 = vmatpush1.xpose.msra.mxu0 0.0
  %586 = vmatprep.subr.mxu0 0.0
  %587 = vmatpush1.xpose.msra.mxu0 0.0
  %588 = vmatprep.subr.mxu0 0.0
  %589 = vmatpush1.xpose.msra.mxu0 0.0
  %590 = vmatprep.subr.mxu0 0.0
  %591 = vmatpush1.xpose.msra.mxu0 0.0
  %592 = vmatprep.subr.mxu0 0.0
  %593 = vmatpush1.xpose.msra.mxu0 0.0
  %594 = vmatprep.subr.mxu0 0.0
  %595 = vmatpush1.xpose.msra.mxu0 0.0
  %596 = vmatprep.subr.mxu0 0.0
  %597 = vmatpush1.xpose.msra.mxu0 0.0
  %598 = vmatprep.subr.mxu0 0.0
  %599 = vmatpush1.xpose.msra.mxu0 0.0
  %600 = vmatprep.subr.mxu0 0.0
  %601 = vmatpush1.xpose.msra.mxu0 0.0
  %602 = vmatprep.subr.mxu0 0.0
  %603 = vmatpush1.xpose.msra.mxu0 0.0
  %604 = vmatprep.subr.mxu0 0.0
  %605 = vmatpush1.xpose.msra.mxu0 0.0
  %606 = vmatprep.subr.mxu0 0.0
  %607 = vmatpush1.xpose.msra.mxu0 0.0
  %608 = vmatprep.subr.mxu0 0.0
  %609 = vmatpush1.xpose.msra.mxu0 0.0
  %610 = vmatprep.mubr.f32.mxu0 0.0
  %611 = vmatmul.mubr.f32.gmra.mrb[0].mxu0 %v538
  %v612 = vpop.f32.mrb[0].mxu0
  %v613 = vadd.f32 0.0, %v612
  %v614 = vpop.f32.mrb[0].mxu0
  %615 = vmatprep.mubr.f32.mxu0 0.0
  %616 = vmatmul.mubr.f32.gmra.mrb[0].mxu0 %v540
  %v617 = vpop.f32.mrb[0].mxu0
  %v618 = vadd.f32 0.0, %v617
  %v619 = vpop.f32.mrb[0].mxu0
  %620 = vdwg.mxu0
  %vm621 = vcmask 80896
  %v622 = vsel %vm621, %v473, -inf
  %623 = vmax.xlane.f32.xlu0 %v622
  %v624 = vpop.xlane.xlu0 %623
  %vm625 = vcmask 74752
  %v626 = vsel %vm625, %v478, -inf
  %627 = vmax.xlane.f32.xlu0 %v626
  %v628 = vpop.xlane.xlu0 %627
  %v629 = vsel %vm621, %v613, -inf
  %630 = vmax.xlane.f32.xlu0 %v629
  %v631 = vpop.xlane.xlu0 %630
  %v632 = vsel %vm625, %v618, -inf
  %633 = vmax.xlane.f32.xlu0 %v632
  %v634 = vpop.xlane.xlu0 %633
  %v635 = vsub.f32 %v473, %v624
  %v636 = vsub.f32 %v478, %v628
  %v637 = vsub.f32 %v613, %v631
  %v638 = vsub.f32 %v618, %v634
  %v639 = vmul.f32 %v635, 1.442695
  %v640 = vpow.pop %v639
  %v641 = vmul.f32 %v636, 1.442695
  %v642 = vpow.pop %v641
  %v643 = vmul.f32 %v637, 1.442695
  %v644 = vpow.pop %v643
  %v645 = vmul.f32 %v638, 1.442695
  %v646 = vpow.pop %v645
  %v647 = vsel %vm621, %v640, 0.0
  %648 = vadd.xlane.f32.xlu0 %v647
  %v649 = vpop.xlane.xlu0 %648
  %v650 = vsel %vm625, %v642, 0.0
  %651 = vadd.xlane.f32.xlu0 %v650
  %v652 = vpop.xlane.xlu0 %651
  %v653 = vsel %vm621, %v644, 0.0
  %654 = vadd.xlane.f32.xlu0 %v653
  %v655 = vpop.xlane.xlu0 %654
  %v656 = vsel %vm625, %v646, 0.0
  %657 = vadd.xlane.f32.xlu0 %v656
  %v658 = vpop.xlane.xlu0 %657
  %v659 = vrcp.pop %v649
  %v660 = vmul.f32 %v640, %v659
  %v661 = vrcp.pop %v652
  %v662 = vmul.f32 %v642, %v661
  %v663 = vrcp.pop %v655
  %v664 = vmul.f32 %v644, %v663
  %v665 = vrcp.pop %v658
  %v666 = vmul.f32 %v646, %v665
  %667 = vrot.lane.b32.xlu0 %v386, 56
  %v668 = vpop.permute.xlu0 %667
  %669 = vrot.lane.b32.xlu0 %v393, 56
  %v670 = vpop.permute.xlu0 %669
  %v673 = vsel %vm621, %v660, 0
  %v676 = vsel %vm621, %v662, 0
  %vm678 = vcmask 1041408
  %v679 = vsel %vm678, %v670, 0
  %681 = vmatprep.subr.mxu0 0.0
  %682 = vmatpush1.msra.mxu0 %v668
  %683 = vmatprep.subr.mxu0 0.0
  %684 = vmatpush1.msra.mxu0 %v679
  %685 = vmatprep.subr.mxu0 0.0
  %686 = vmatpush1.msra.mxu0 0.0
  %687 = vmatprep.subr.mxu0 0.0
  %688 = vmatpush1.msra.mxu0 0.0
  %689 = vmatprep.subr.mxu0 0.0
  %690 = vmatpush1.msra.mxu0 0.0
  %691 = vmatprep.subr.mxu0 0.0
  %692 = vmatpush1.msra.mxu0 0.0
  %693 = vmatprep.subr.mxu0 0.0
  %694 = vmatpush1.msra.mxu0 0.0
  %695 = vmatprep.subr.mxu0 0.0
  %696 = vmatpush1.msra.mxu0 0.0
  %697 = vmatprep.subr.mxu0 0.0
  %698 = vmatpush1.msra.mxu0 0.0
  %699 = vmatprep.subr.mxu0 0.0
  %700 = vmatpush1.msra.mxu0 0.0
  %701 = vmatprep.subr.mxu0 0.0
  %702 = vmatpush1.msra.mxu0 0.0
  %703 = vmatprep.subr.mxu0 0.0
  %704 = vmatpush1.msra.mxu0 0.0
  %705 = vmatprep.subr.mxu0 0.0
  %706 = vmatpush1.msra.mxu0 0.0
  %707 = vmatprep.subr.mxu0 0.0
  %708 = vmatpush1.msra.mxu0 0.0
  %709 = vmatprep.subr.mxu0 0.0
  %710 = vmatpush1.msra.mxu0 0.0
  %711 = vmatprep.subr.mxu0 0.0
  %712 = vmatpush1.msra.mxu0 0.0
  %713 = vmatprep.subr.mxu0 0.0
  %714 = vmatpush1.msra.mxu0 0.0
  %715 = vmatprep.subr.mxu0 0.0
  %716 = vmatpush1.msra.mxu0 0.0
  %717 = vmatprep.subr.mxu0 0.0
  %718 = vmatpush1.msra.mxu0 0.0
  %719 = vmatprep.subr.mxu0 0.0
  %720 = vmatpush1.msra.mxu0 0.0
  %721 = vmatprep.subr.mxu0 0.0
  %722 = vmatpush1.msra.mxu0 0.0
  %723 = vmatprep.subr.mxu0 0.0
  %724 = vmatpush1.msra.mxu0 0.0
  %725 = vmatprep.subr.mxu0 0.0
  %726 = vmatpush1.msra.mxu0 0.0
  %727 = vmatprep.subr.mxu0 0.0
  %728 = vmatpush1.msra.mxu0 0.0
  %729 = vmatprep.subr.mxu0 0.0
  %730 = vmatpush1.msra.mxu0 0.0
  %731 = vmatprep.subr.mxu0 0.0
  %732 = vmatpush1.msra.mxu0 0.0
  %733 = vmatprep.subr.mxu0 0.0
  %734 = vmatpush1.msra.mxu0 0.0
  %735 = vmatprep.subr.mxu0 0.0
  %736 = vmatpush1.msra.mxu0 0.0
  %737 = vmatprep.subr.mxu0 0.0
  %738 = vmatpush1.msra.mxu0 0.0
  %739 = vmatprep.subr.mxu0 0.0
  %740 = vmatpush1.msra.mxu0 0.0
  %741 = vmatprep.subr.mxu0 0.0
  %742 = vmatpush1.msra.mxu0 0.0
  %743 = vmatprep.subr.mxu0 0.0
  %744 = vmatpush1.msra.mxu0 0.0
  %745 = vmatprep.mubr.f32.mxu0 0.0
  %746 = vmatmul.mubr.f32.gmra.mrb[0].mxu0 %v673
  %v747 = vpop.f32.mrb[0].mxu0
  %v748 = vadd.f32 0.0, %v747
  %v749 = vpop.f32.mrb[0].mxu0
  %750 = vmatprep.mubr.f32.mxu0 0.0
  %751 = vmatmul.mubr.f32.gmra.mrb[0].mxu0 %v676
  %v752 = vpop.f32.mrb[0].mxu0
  %v753 = vadd.f32 0.0, %v752
  %v754 = vpop.f32.mrb[0].mxu0
  %755 = vdwg.mxu0
  %756 = vrot.lane.b32.xlu0 %v526, 56
  %v757 = vpop.permute.xlu0 %756
  %758 = vrot.lane.b32.xlu0 %v533, 56
  %v759 = vpop.permute.xlu0 %758
  %v762 = vsel %vm621, %v664, 0
  %v765 = vsel %vm621, %v666, 0
  %v767 = vsel %vm678, %v759, 0
  %769 = vmatprep.subr.mxu0 0.0
  %770 = vmatpush1.msra.mxu0 %v757
  %771 = vmatprep.subr.mxu0 0.0
  %772 = vmatpush1.msra.mxu0 %v767
  %773 = vmatprep.subr.mxu0 0.0
  %774 = vmatpush1.msra.mxu0 0.0
  %775 = vmatprep.subr.mxu0 0.0
  %776 = vmatpush1.msra.mxu0 0.0
  %777 = vmatprep.subr.mxu0 0.0
  %778 = vmatpush1.msra.mxu0 0.0
  %779 = vmatprep.subr.mxu0 0.0
  %780 = vmatpush1.msra.mxu0 0.0
  %781 = vmatprep.subr.mxu0 0.0
  %782 = vmatpush1.msra.mxu0 0.0
  %783 = vmatprep.subr.mxu0 0.0
  %784 = vmatpush1.msra.mxu0 0.0
  %785 = vmatprep.subr.mxu0 0.0
  %786 = vmatpush1.msra.mxu0 0.0
  %787 = vmatprep.subr.mxu0 0.0
  %788 = vmatpush1.msra.mxu0 0.0
  %789 = vmatprep.subr.mxu0 0.0
  %790 = vmatpush1.msra.mxu0 0.0
  %791 = vmatprep.subr.mxu0 0.0
  %792 = vmatpush1.msra.mxu0 0.0
  %793 = vmatprep.subr.mxu0 0.0
  %794 = vmatpush1.msra.mxu0 0.0
  %795 = vmatprep.subr.mxu0 0.0
  %796 = vmatpush1.msra.mxu0 0.0
  %797 = vmatprep.subr.mxu0 0.0
  %798 = vmatpush1.msra.mxu0 0.0
  %799 = vmatprep.subr.mxu0 0.0
  %800 = vmatpush1.msra.mxu0 0.0
  %801 = vmatprep.subr.mxu0 0.0
  %802 = vmatpush1.msra.mxu0 0.0
  %803 = vmatprep.subr.mxu0 0.0
  %804 = vmatpush1.msra.mxu0 0.0
  %805 = vmatprep.subr.mxu0 0.0
  %806 = vmatpush1.msra.mxu0 0.0
  %807 = vmatprep.subr.mxu0 0.0
  %808 = vmatpush1.msra.mxu0 0.0
  %809 = vmatprep.subr.mxu0 0.0
  %810 = vmatpush1.msra.mxu0 0.0
  %811 = vmatprep.subr.mxu0 0.0
  %812 = vmatpush1.msra.mxu0 0.0
  %813 = vmatprep.subr.mxu0 0.0
  %814 = vmatpush1.msra.mxu0 0.0
  %815 = vmatprep.subr.mxu0 0.0
  %816 = vmatpush1.msra.mxu0 0.0
  %817 = vmatprep.subr.mxu0 0.0
  %818 = vmatpush1.msra.mxu0 0.0
  %819 = vmatprep.subr.mxu0 0.0
  %820 = vmatpush1.msra.mxu0 0.0
  %821 = vmatprep.subr.mxu0 0.0
  %822 = vmatpush1.msra.mxu0 0.0
  %823 = vmatprep.subr.mxu0 0.0
  %824 = vmatpush1.msra.mxu0 0.0
  %825 = vmatprep.subr.mxu0 0.0
  %826 = vmatpush1.msra.mxu0 0.0
  %827 = vmatprep.subr.mxu0 0.0
  %828 = vmatpush1.msra.mxu0 0.0
  %829 = vmatprep.subr.mxu0 0.0
  %830 = vmatpush1.msra.mxu0 0.0
  %831 = vmatprep.subr.mxu0 0.0
  %832 = vmatpush1.msra.mxu0 0.0
  %833 = vmatprep.mubr.f32.mxu0 0.0
  %834 = vmatmul.mubr.f32.gmra.mrb[0].mxu0 %v762
  %v835 = vpop.f32.mrb[0].mxu0
  %v836 = vadd.f32 0.0, %v835
  %v837 = vpop.f32.mrb[0].mxu0
  %838 = vmatprep.mubr.f32.mxu0 0.0
  %839 = vmatmul.mubr.f32.gmra.mrb[0].mxu0 %v765
  %v840 = vpop.f32.mrb[0].mxu0
  %v841 = vadd.f32 0.0, %v840
  %v842 = vpop.f32.mrb[0].mxu0
  %843 = vdwg.mxu0
  %v848 = vcombine.high %v748, %v748
  %v850 = vunpack.c.l.s4 1983009808
  %v851 = vunpack.c.0.s8 %v850
  %v852 = vlaneseq
  %v853 = vshrl.u32 %v852, 7
  %v854 = vsub.s32 %v851, %v853
  %v855 = vrot.slane %v748, %v854
  %v857 = vunpack.c.l.s4 1983009808
  %v858 = vunpack.c.0.s8 %v857
  %v859 = vlaneseq
  %v860 = vshrl.u32 %v859, 7
  %v861 = vsub.s32 %v858, %v860
  %v862 = vrot.slane %v848, %v861
  %v863 = vcombine.high %v855, %v855
  %v864 = vcombine.high %v862, %v862
  %v866 = vunpack.c.l.s4 1983009808
  %v867 = vunpack.c.0.s8 %v866
  %v868 = vlaneseq
  %v869 = vshrl.u32 %v868, 7
  %v870 = vsub.s32 %v867, %v869
  %v871 = vrot.slane %v753, %v870
  %v872 = vcombine.high %v836, %v836
  %v874 = vunpack.c.l.s4 1983009808
  %v875 = vunpack.c.0.s8 %v874
  %v876 = vlaneseq
  %v877 = vshrl.u32 %v876, 7
  %v878 = vsub.s32 %v875, %v877
  %v879 = vrot.slane %v836, %v878
  %v881 = vunpack.c.l.s4 1983009808
  %v882 = vunpack.c.0.s8 %v881
  %v883 = vlaneseq
  %v884 = vshrl.u32 %v883, 7
  %v885 = vsub.s32 %v882, %v884
  %v886 = vrot.slane %v872, %v885
  %v887 = vcombine.high %v879, %v879
  %v888 = vcombine.high %v886, %v886
  %v890 = vunpack.c.l.s4 1983009808
  %v891 = vunpack.c.0.s8 %v890
  %v892 = vlaneseq
  %v893 = vshrl.u32 %v892, 7
  %v894 = vsub.s32 %v891, %v893
  %v895 = vrot.slane %v841, %v894
  %v897 = vlaneseq
  %v898 = vshrl.u32 %v897, 7
  %v899 = vsub.s32 0, %v898
  %v900 = vrot.slane %v136, %v899
  %v902 = vcombine.low %v855, %v863
  %v903 = vcombine.low %v862, %v864
  %v905 = vunpack.c.l.s4 1983009808
  %v906 = vunpack.c.0.s8 %v905
  %v907 = vlaneseq
  %v908 = vshrl.u32 %v907, 7
  %v909 = vsub.s32 %v906, %v908
  %v910 = vrot.slane %v902, %v909
  %v912 = vunpack.c.l.s4 1983009808
  %v913 = vunpack.c.0.s8 %v912
  %v914 = vlaneseq
  %v915 = vshrl.u32 %v914, 7
  %v916 = vsub.s32 %v913, %v915
  %v917 = vrot.slane %v903, %v916
  %v918 = vcombine.low %v910, %v917
  %v919 = vcombine.low %v871, %v879
  %v920 = vcombine.low %v887, %v886
  %v922 = vunpack.c.l.s4 1983009808
  %v923 = vunpack.c.0.s8 %v922
  %v924 = vlaneseq
  %v925 = vshrl.u32 %v924, 7
  %v926 = vsub.s32 %v923, %v925
  %v927 = vrot.slane %v919, %v926
  %v929 = vunpack.c.l.s4 1983009808
  %v930 = vunpack.c.0.s8 %v929
  %v931 = vlaneseq
  %v932 = vshrl.u32 %v931, 7
  %v933 = vsub.s32 %v930, %v932
  %v934 = vrot.slane %v920, %v933
  %v935 = vcombine.low %v927, %v934
  %v936 = vcombine.low %v888, %v895
  %v938 = vunpack.c.l.s4 1983009808
  %v939 = vunpack.c.0.s8 %v938
  %v940 = vlaneseq
  %v941 = vshrl.u32 %v940, 7
  %v942 = vsub.s32 %v939, %v941
  %v943 = vrot.slane %v936, %v942
  %v944 = vsel %vm185, %v918, 0
  %v946 = vsel %vm185, %v935, 0
  %v948 = vsel %vm185, %v943, 0
  %v951 = vsel %vm192, %v135, 0
  %953 = vmatprep.subr.mxu0 0.0
  %954 = vmatpush1.msra.mxu0 %v131
  %955 = vmatprep.subr.mxu0 0.0
  %956 = vmatpush1.msra.mxu0 %v132
  %957 = vmatprep.subr.mxu0 0.0
  %958 = vmatpush1.msra.mxu0 %v133
  %959 = vmatprep.subr.mxu0 0.0
  %960 = vmatpush1.msra.mxu0 %v134
  %961 = vmatprep.subr.mxu0 0.0
  %962 = vmatpush1.msra.mxu0 %v951
  %963 = vmatprep.subr.mxu0 0.0
  %964 = vmatpush1.msra.mxu0 0.0
  %965 = vmatprep.subr.mxu0 0.0
  %966 = vmatpush1.msra.mxu0 0.0
  %967 = vmatprep.subr.mxu0 0.0
  %968 = vmatpush1.msra.mxu0 0.0
  %969 = vmatprep.subr.mxu0 0.0
  %970 = vmatpush1.msra.mxu0 0.0
  %971 = vmatprep.subr.mxu0 0.0
  %972 = vmatpush1.msra.mxu0 0.0
  %973 = vmatprep.subr.mxu0 0.0
  %974 = vmatpush1.msra.mxu0 0.0
  %975 = vmatprep.subr.mxu0 0.0
  %976 = vmatpush1.msra.mxu0 0.0
  %977 = vmatprep.subr.mxu0 0.0
  %978 = vmatpush1.msra.mxu0 0.0
  %979 = vmatprep.subr.mxu0 0.0
  %980 = vmatpush1.msra.mxu0 0.0
  %981 = vmatprep.subr.mxu0 0.0
  %982 = vmatpush1.msra.mxu0 0.0
  %983 = vmatprep.subr.mxu0 0.0
  %984 = vmatpush1.msra.mxu0 0.0
  %985 = vmatprep.subr.mxu0 0.0
  %986 = vmatpush1.msra.mxu0 0.0
  %987 = vmatprep.subr.mxu0 0.0
  %988 = vmatpush1.msra.mxu0 0.0
  %989 = vmatprep.subr.mxu0 0.0
  %990 = vmatpush1.msra.mxu0 0.0
  %991 = vmatprep.subr.mxu0 0.0
  %992 = vmatpush1.msra.mxu0 0.0
  %993 = vmatprep.subr.mxu0 0.0
  %994 = vmatpush1.msra.mxu0 0.0
  %995 = vmatprep.subr.mxu0 0.0
  %996 = vmatpush1.msra.mxu0 0.0
  %997 = vmatprep.subr.mxu0 0.0
  %998 = vmatpush1.msra.mxu0 0.0
  %999 = vmatprep.subr.mxu0 0.0
  %1000 = vmatpush1.msra.mxu0 0.0
  %1001 = vmatprep.subr.mxu0 0.0
  %1002 = vmatpush1.msra.mxu0 0.0
  %1003 = vmatprep.subr.mxu0 0.0
  %1004 = vmatpush1.msra.mxu0 0.0
  %1005 = vmatprep.subr.mxu0 0.0
  %1006 = vmatpush1.msra.mxu0 0.0
  %1007 = vmatprep.subr.mxu0 0.0
  %1008 = vmatpush1.msra.mxu0 0.0
  %1009 = vmatprep.subr.mxu0 0.0
  %1010 = vmatpush1.msra.mxu0 0.0
  %1011 = vmatprep.subr.mxu0 0.0
  %1012 = vmatpush1.msra.mxu0 0.0
  %1013 = vmatprep.subr.mxu0 0.0
  %1014 = vmatpush1.msra.mxu0 0.0
  %1015 = vmatprep.subr.mxu0 0.0
  %1016 = vmatpush1.msra.mxu0 0.0
  %1017 = vmatprep.mubr.f32.mxu0 0.0
  %1018 = vmatmul.mubr.f32.gmra.mrb[0].mxu0 %v944
  %v1019 = vpop.f32.mrb[0].mxu0
  %v1020 = vadd.f32 %v900, %v1019
  %v1021 = vpop.f32.mrb[0].mxu0
  %1022 = vmatprep.mubr.f32.mxu0 0.0
  %1023 = vmatmul.mubr.f32.gmra.mrb[0].mxu0 %v946
  %v1024 = vpop.f32.mrb[0].mxu0
  %v1025 = vadd.f32 %v900, %v1024
  %v1026 = vpop.f32.mrb[0].mxu0
  %1027 = vmatprep.mubr.f32.mxu0 0.0
  %1028 = vmatmul.mubr.f32.gmra.mrb[0].mxu0 %v948
  %v1029 = vpop.f32.mrb[0].mxu0
  %v1030 = vadd.f32 %v900, %v1029
  %v1031 = vpop.f32.mrb[0].mxu0
  %1032 = vdwg.mxu0
  %v1033 = vld [vmem:[%s5] sm:$0xff]
  %v1034 = vld [vmem:[%s5 + $0x8] sm:$0xff]
  %v1035 = vld [vmem:[%s5 + $0x10] sm:$0xff]
  %v1036 = vld [vmem:[%s5 + $0x18] sm:$0xff]
  %v1037 = vld [vmem:[%s5 + $0x20] sm:$0xf]
  %v1038 = vld [vmem:[%s6] sm:$0x1]
  %v1040 = vlaneseq
  %v1041 = vshrl.u32 %v1040, 7
  %v1042 = vsub.s32 0, %v1041
  %v1043 = vrot.slane %v1038, %v1042
  %v1046 = vsel %vm185, %v1020, 0
  %v1049 = vsel %vm185, %v1025, 0
  %v1052 = vsel %vm185, %v1030, 0
  %v1055 = vsel %vm192, %v1037, 0
  %1057 = vmatprep.subr.mxu0 0.0
  %1058 = vmatpush1.msra.mxu0 %v1033
  %1059 = vmatprep.subr.mxu0 0.0
  %1060 = vmatpush1.msra.mxu0 %v1034
  %1061 = vmatprep.subr.mxu0 0.0
  %1062 = vmatpush1.msra.mxu0 %v1035
  %1063 = vmatprep.subr.mxu0 0.0
  %1064 = vmatpush1.msra.mxu0 %v1036
  %1065 = vmatprep.subr.mxu0 0.0
  %1066 = vmatpush1.msra.mxu0 %v1055
  %1067 = vmatprep.subr.mxu0 0.0
  %1068 = vmatpush1.msra.mxu0 0.0
  %1069 = vmatprep.subr.mxu0 0.0
  %1070 = vmatpush1.msra.mxu0 0.0
  %1071 = vmatprep.subr.mxu0 0.0
  %1072 = vmatpush1.msra.mxu0 0.0
  %1073 = vmatprep.subr.mxu0 0.0
  %1074 = vmatpush1.msra.mxu0 0.0
  %1075 = vmatprep.subr.mxu0 0.0
  %1076 = vmatpush1.msra.mxu0 0.0
  %1077 = vmatprep.subr.mxu0 0.0
  %1078 = vmatpush1.msra.mxu0 0.0
  %1079 = vmatprep.subr.mxu0 0.0
  %1080 = vmatpush1.msra.mxu0 0.0
  %1081 = vmatprep.subr.mxu0 0.0
  %1082 = vmatpush1.msra.mxu0 0.0
  %1083 = vmatprep.subr.mxu0 0.0
  %1084 = vmatpush1.msra.mxu0 0.0
  %1085 = vmatprep.subr.mxu0 0.0
  %1086 = vmatpush1.msra.mxu0 0.0
  %1087 = vmatprep.subr.mxu0 0.0
  %1088 = vmatpush1.msra.mxu0 0.0
  %1089 = vmatprep.subr.mxu0 0.0
  %1090 = vmatpush1.msra.mxu0 0.0
  %1091 = vmatprep.subr.mxu0 0.0
  %1092 = vmatpush1.msra.mxu0 0.0
  %1093 = vmatprep.subr.mxu0 0.0
  %1094 = vmatpush1.msra.mxu0 0.0
  %1095 = vmatprep.subr.mxu0 0.0
  %1096 = vmatpush1.msra.mxu0 0.0
  %1097 = vmatprep.subr.mxu0 0.0
  %1098 = vmatpush1.msra.mxu0 0.0
  %1099 = vmatprep.subr.mxu0 0.0
  %1100 = vmatpush1.msra.mxu0 0.0
  %1101 = vmatprep.subr.mxu0 0.0
  %1102 = vmatpush1.msra.mxu0 0.0
  %1103 = vmatprep.subr.mxu0 0.0
  %1104 = vmatpush1.msra.mxu0 0.0
  %1105 = vmatprep.subr.mxu0 0.0
  %1106 = vmatpush1.msra.mxu0 0.0
  %1107 = vmatprep.subr.mxu0 0.0
  %1108 = vmatpush1.msra.mxu0 0.0
  %1109 = vmatprep.subr.mxu0 0.0
  %1110 = vmatpush1.msra.mxu0 0.0
  %1111 = vmatprep.subr.mxu0 0.0
  %1112 = vmatpush1.msra.mxu0 0.0
  %1113 = vmatprep.subr.mxu0 0.0
  %1114 = vmatpush1.msra.mxu0 0.0
  %1115 = vmatprep.subr.mxu0 0.0
  %1116 = vmatpush1.msra.mxu0 0.0
  %1117 = vmatprep.subr.mxu0 0.0
  %1118 = vmatpush1.msra.mxu0 0.0
  %1119 = vmatprep.subr.mxu0 0.0
  %1120 = vmatpush1.msra.mxu0 0.0
  %1121 = vmatprep.mubr.f32.mxu0 0.0
  %1122 = vmatmul.mubr.f32.gmra.mrb[0].mxu0 %v1046
  %v1123 = vpop.f32.mrb[0].mxu0
  %v1124 = vadd.f32 %v1043, %v1123
  %v1125 = vpop.f32.mrb[0].mxu0
  %1126 = vmatprep.mubr.f32.mxu0 0.0
  %1127 = vmatmul.mubr.f32.gmra.mrb[0].mxu0 %v1049
  %v1128 = vpop.f32.mrb[0].mxu0
  %v1129 = vadd.f32 %v1043, %v1128
  %v1130 = vpop.f32.mrb[0].mxu0
  %1131 = vmatprep.mubr.f32.mxu0 0.0
  %1132 = vmatmul.mubr.f32.gmra.mrb[0].mxu0 %v1052
  %v1133 = vpop.f32.mrb[0].mxu0
  %v1134 = vadd.f32 %v1043, %v1133
  %v1135 = vpop.f32.mrb[0].mxu0
  %1136 = vdwg.mxu0
  %v1140 = vcombine.high %v1124, %v1124
  %v1142 = vunpack.c.l.s4 1983009808
  %v1143 = vunpack.c.0.s8 %v1142
  %v1144 = vlaneseq
  %v1145 = vshrl.u32 %v1144, 7
  %v1146 = vsub.s32 %v1143, %v1145
  %v1147 = vrot.slane %v1124, %v1146
  %v1149 = vunpack.c.l.s4 1983009808
  %v1150 = vunpack.c.0.s8 %v1149
  %v1151 = vlaneseq
  %v1152 = vshrl.u32 %v1151, 7
  %v1153 = vsub.s32 %v1150, %v1152
  %v1154 = vrot.slane %v1140, %v1153
  %v1155 = vcombine.high %v1147, %v1147
  %v1156 = vcombine.high %v1154, %v1154
  %v1157 = vcombine.high %v1129, %v1129
  %v1159 = vunpack.c.l.s4 1983009808
  %v1160 = vunpack.c.0.s8 %v1159
  %v1161 = vlaneseq
  %v1162 = vshrl.u32 %v1161, 7
  %v1163 = vsub.s32 %v1160, %v1162
  %v1164 = vrot.slane %v1129, %v1163
  %v1166 = vunpack.c.l.s4 1983009808
  %v1167 = vunpack.c.0.s8 %v1166
  %v1168 = vlaneseq
  %v1169 = vshrl.u32 %v1168, 7
  %v1170 = vsub.s32 %v1167, %v1169
  %v1171 = vrot.slane %v1157, %v1170
  %v1172 = vcombine.high %v1164, %v1164
  %v1173 = vcombine.high %v1171, %v1171
  %v1175 = vunpack.c.l.s4 1983009808
  %v1176 = vunpack.c.0.s8 %v1175
  %v1177 = vlaneseq
  %v1178 = vshrl.u32 %v1177, 7
  %v1179 = vsub.s32 %v1176, %v1178
  %v1180 = vrot.slane %v1134, %v1179
  %v1181 = vcombine.high %v1180, %v1180
  %v1182 = vld [vmem:[%s7] sm:$0xff]
  %v1183 = vld [vmem:[%s7 + $0x8] sm:$0xff]
  %v1184 = vld [vmem:[%s7 + $0x10] sm:$0xff]
  %v1185 = vld [vmem:[%s7 + $0x18] sm:$0xff]
  %v1186 = vlaneseq
  %v1187 = vshrl.u32 %v1186, 7
  %v1188 = vsub.s32 0, %v1187
  %v1189 = vrot.slane %v1147, %v1188
  %v1190 = vlaneseq
  %v1191 = vshrl.u32 %v1190, 7
  %v1192 = vsub.s32 0, %v1191
  %v1193 = vrot.slane %v1172, %v1192
  %vm1194 = vcmask 1041409
  %v1195 = vsel %vm1194, %v1193, %v1189
  %v1197 = vlaneseq
  %v1198 = vshrl.u32 %v1197, 7
  %v1199 = vsub.s32 1, %v1198
  %v1200 = vrot.slane %v1164, %v1199
  %v1201 = vlaneseq
  %v1202 = vshrl.u32 %v1201, 7
  %v1203 = vsub.s32 1, %v1202
  %v1204 = vrot.slane %v1181, %v1203
  %v1205 = vsel %vm1194, %v1204, %v1200
  %v1207 = vsel %vm68, %v1195, %v1205
  %vm1208 = vcmask 261120
  %v1210 = vsel %vm1208, 0.0, 0
  %1212 = vmatprep.subr.mxu0 0.0
  %1213 = vmatpush1.msra.mxu0 %v1182
  %1214 = vmatprep.subr.mxu0 0.0
  %1215 = vmatpush1.msra.mxu0 %v1183
  %1216 = vmatprep.subr.mxu0 0.0
  %1217 = vmatpush1.msra.mxu0 %v1184
  %1218 = vmatprep.subr.mxu0 0.0
  %1219 = vmatpush1.msra.mxu0 %v1185
  %1220 = vmatprep.subr.mxu0 0.0
  %1221 = vmatpush1.msra.mxu0 0.0
  %1222 = vmatprep.subr.mxu0 0.0
  %1223 = vmatpush1.msra.mxu0 0.0
  %1224 = vmatprep.subr.mxu0 0.0
  %1225 = vmatpush1.msra.mxu0 0.0
  %1226 = vmatprep.subr.mxu0 0.0
  %1227 = vmatpush1.msra.mxu0 0.0
  %1228 = vmatprep.subr.mxu0 0.0
  %1229 = vmatpush1.msra.mxu0 0.0
  %1230 = vmatprep.subr.mxu0 0.0
  %1231 = vmatpush1.msra.mxu0 0.0
  %1232 = vmatprep.subr.mxu0 0.0
  %1233 = vmatpush1.msra.mxu0 0.0
  %1234 = vmatprep.subr.mxu0 0.0
  %1235 = vmatpush1.msra.mxu0 0.0
  %1236 = vmatprep.subr.mxu0 0.0
  %1237 = vmatpush1.msra.mxu0 0.0
  %1238 = vmatprep.subr.mxu0 0.0
  %1239 = vmatpush1.msra.mxu0 0.0
  %1240 = vmatprep.subr.mxu0 0.0
  %1241 = vmatpush1.msra.mxu0 0.0
  %1242 = vmatprep.subr.mxu0 0.0
  %1243 = vmatpush1.msra.mxu0 0.0
  %1244 = vmatprep.subr.mxu0 0.0
  %1245 = vmatpush1.msra.mxu0 0.0
  %1246 = vmatprep.subr.mxu0 0.0
  %1247 = vmatpush1.msra.mxu0 0.0
  %1248 = vmatprep.subr.mxu0 0.0
  %1249 = vmatpush1.msra.mxu0 0.0
  %1250 = vmatprep.subr.mxu0 0.0
  %1251 = vmatpush1.msra.mxu0 0.0
  %1252 = vmatprep.subr.mxu0 0.0
  %1253 = vmatpush1.msra.mxu0 0.0
  %1254 = vmatprep.subr.mxu0 0.0
  %1255 = vmatpush1.msra.mxu0 0.0
  %1256 = vmatprep.subr.mxu0 0.0
  %1257 = vmatpush1.msra.mxu0 0.0
  %1258 = vmatprep.subr.mxu0 0.0
  %1259 = vmatpush1.msra.mxu0 0.0
  %1260 = vmatprep.subr.mxu0 0.0
  %1261 = vmatpush1.msra.mxu0 0.0
  %1262 = vmatprep.subr.mxu0 0.0
  %1263 = vmatpush1.msra.mxu0 0.0
  %1264 = vmatprep.subr.mxu0 0.0
  %1265 = vmatpush1.msra.mxu0 0.0
  %1266 = vmatprep.subr.mxu0 0.0
  %1267 = vmatpush1.msra.mxu0 0.0
  %1268 = vmatprep.subr.mxu0 0.0
  %1269 = vmatpush1.msra.mxu0 0.0
  %1270 = vmatprep.subr.mxu0 0.0
  %1271 = vmatpush1.msra.mxu0 0.0
  %1272 = vmatprep.subr.mxu0 0.0
  %1273 = vmatpush1.msra.mxu0 0.0
  %1274 = vmatprep.subr.mxu0 0.0
  %1275 = vmatpush1.msra.mxu0 0.0
  %1276 = vmatprep.mubr.f32.mxu0 0.0
  %1277 = vmatmul.mubr.f32.gmra.mrb[0].mxu0 %v1210
  %v1278 = vpop.f32.mrb[0].mxu0
  %v1279 = vadd.f32 0.0, %v1278
  %v1280 = vpop.f32.mrb[0].mxu0
  %1281 = vdwg.mxu0
  %v1282 = vadd.f32 %v1207, %v1279
  %v1283 = vtanh.pop %v1282
  %v1284 = vxor.u32 %v1282, 2147483648
  %v1285 = vmul.f32 %v1284, 1.442695
  %v1286 = vpow.pop %v1285
  %v1287 = vadd.f32 %v1286, 1.0
  %v1288 = vrcp.pop %v1287
  %v1289 = vmul.f32 1.0, %v1288
  %v1290 = vsel %vm71, %v1283, %v1289
  %v1291 = vmul.f32 %v1290, 0.0
  %1293 = vrot.lane.b32.xlu0 %v1290, 64
  %v1294 = vpop.permute.xlu0 %1293
  %v1296 = vmul.f32 %v1290, %v1294
  %1298 = vrot.lane.b32.xlu0 %v1296, 32
  %v1299 = vpop.permute.xlu0 %1298
  %v1301 = vadd.f32 %v1291, %v1299
  %v1302 = vtanh.pop %v1301
  %1304 = vrot.lane.b32.xlu0 %v1302, 64
  %v1305 = vpop.permute.xlu0 %1304
  %v1307 = vmul.f32 %v1290, %v1305
  %v1308 = vlaneseq
  %v1309 = vshrl.u32 %v1308, 7
  %v1310 = vsub.s32 1, %v1309
  %v1311 = vrot.slane %v1147, %v1310
  %v1312 = vlaneseq
  %v1313 = vshrl.u32 %v1312, 7
  %v1314 = vsub.s32 1, %v1313
  %v1315 = vrot.slane %v1172, %v1314
  %v1316 = vsel %vm1194, %v1315, %v1311
  %v1318 = vlaneseq
  %v1319 = vshrl.u32 %v1318, 7
  %v1320 = vsub.s32 0, %v1319
  %v1321 = vrot.slane %v1164, %v1320
  %v1322 = vlaneseq
  %v1323 = vshrl.u32 %v1322, 7
  %v1324 = vsub.s32 0, %v1323
  %v1325 = vrot.slane %v1181, %v1324
  %v1326 = vsel %vm1194, %v1325, %v1321
  %v1328 = vsel %vm68, %v1316, %v1326
  %1330 = vrot.lane.b32.xlu0 %v1307, 32
  %v1331 = vpop.permute.xlu0 %1330
  %v1332 = vsel %vm1208, %v1331, 0
  %1334 = vmatprep.subr.mxu0 0.0
  %1335 = vmatpush1.msra.mxu0 %v1182
  %1336 = vmatprep.subr.mxu0 0.0
  %1337 = vmatpush1.msra.mxu0 %v1183
  %1338 = vmatprep.subr.mxu0 0.0
  %1339 = vmatpush1.msra.mxu0 %v1184
  %1340 = vmatprep.subr.mxu0 0.0
  %1341 = vmatpush1.msra.mxu0 %v1185
  %1342 = vmatprep.subr.mxu0 0.0
  %1343 = vmatpush1.msra.mxu0 0.0
  %1344 = vmatprep.subr.mxu0 0.0
  %1345 = vmatpush1.msra.mxu0 0.0
  %1346 = vmatprep.subr.mxu0 0.0
  %1347 = vmatpush1.msra.mxu0 0.0
  %1348 = vmatprep.subr.mxu0 0.0
  %1349 = vmatpush1.msra.mxu0 0.0
  %1350 = vmatprep.subr.mxu0 0.0
  %1351 = vmatpush1.msra.mxu0 0.0
  %1352 = vmatprep.subr.mxu0 0.0
  %1353 = vmatpush1.msra.mxu0 0.0
  %1354 = vmatprep.subr.mxu0 0.0
  %1355 = vmatpush1.msra.mxu0 0.0
  %1356 = vmatprep.subr.mxu0 0.0
  %1357 = vmatpush1.msra.mxu0 0.0
  %1358 = vmatprep.subr.mxu0 0.0
  %1359 = vmatpush1.msra.mxu0 0.0
  %1360 = vmatprep.subr.mxu0 0.0
  %1361 = vmatpush1.msra.mxu0 0.0
  %1362 = vmatprep.subr.mxu0 0.0
  %1363 = vmatpush1.msra.mxu0 0.0
  %1364 = vmatprep.subr.mxu0 0.0
  %1365 = vmatpush1.msra.mxu0 0.0
  %1366 = vmatprep.subr.mxu0 0.0
  %1367 = vmatpush1.msra.mxu0 0.0
  %1368 = vmatprep.subr.mxu0 0.0
  %1369 = vmatpush1.msra.mxu0 0.0
  %1370 = vmatprep.subr.mxu0 0.0
  %1371 = vmatpush1.msra.mxu0 0.0
  %1372 = vmatprep.subr.mxu0 0.0
  %1373 = vmatpush1.msra.mxu0 0.0
  %1374 = vmatprep.subr.mxu0 0.0
  %1375 = vmatpush1.msra.mxu0 0.0
  %1376 = vmatprep.subr.mxu0 0.0
  %1377 = vmatpush1.msra.mxu0 0.0
  %1378 = vmatprep.subr.mxu0 0.0
  %1379 = vmatpush1.msra.mxu0 0.0
  %1380 = vmatprep.subr.mxu0 0.0
  %1381 = vmatpush1.msra.mxu0 0.0
  %1382 = vmatprep.subr.mxu0 0.0
  %1383 = vmatpush1.msra.mxu0 0.0
  %1384 = vmatprep.subr.mxu0 0.0
  %1385 = vmatpush1.msra.mxu0 0.0
  %1386 = vmatprep.subr.mxu0 0.0
  %1387 = vmatpush1.msra.mxu0 0.0
  %1388 = vmatprep.subr.mxu0 0.0
  %1389 = vmatpush1.msra.mxu0 0.0
  %1390 = vmatprep.subr.mxu0 0.0
  %1391 = vmatpush1.msra.mxu0 0.0
  %1392 = vmatprep.subr.mxu0 0.0
  %1393 = vmatpush1.msra.mxu0 0.0
  %1394 = vmatprep.subr.mxu0 0.0
  %1395 = vmatpush1.msra.mxu0 0.0
  %1396 = vmatprep.subr.mxu0 0.0
  %1397 = vmatpush1.msra.mxu0 0.0
  %1398 = vmatprep.mubr.f32.mxu0 0.0
  %1399 = vmatmul.mubr.f32.gmra.mrb[0].mxu0 %v1332
  %v1400 = vpop.f32.mrb[0].mxu0
  %v1401 = vadd.f32 0.0, %v1400
  %v1402 = vpop.f32.mrb[0].mxu0
  %1403 = vdwg.mxu0
  %v1404 = vadd.f32 %v1328, %v1401
  %v1405 = vtanh.pop %v1404
  %v1406 = vxor.u32 %v1404, 2147483648
  %v1407 = vmul.f32 %v1406, 1.442695
  %v1408 = vpow.pop %v1407
  %v1409 = vadd.f32 %v1408, 1.0
  %v1410 = vrcp.pop %v1409
  %v1411 = vmul.f32 1.0, %v1410
  %v1412 = vsel %vm71, %v1405, %v1411
  %v1413 = vmul.f32 %v1412, %v1301
  %1415 = vrot.lane.b32.xlu0 %v1412, 64
  %v1416 = vpop.permute.xlu0 %1415
  %v1418 = vmul.f32 %v1412, %v1416
  %1420 = vrot.lane.b32.xlu0 %v1418, 32
  %v1421 = vpop.permute.xlu0 %1420
  %v1423 = vadd.f32 %v1413, %v1421
  %v1424 = vtanh.pop %v1423
  %1426 = vrot.lane.b32.xlu0 %v1424, 64
  %v1427 = vpop.permute.xlu0 %1426
  %v1429 = vmul.f32 %v1412, %v1427
  %v1430 = vlaneseq
  %v1431 = vshrl.u32 %v1430, 7
  %v1432 = vsub.s32 0, %v1431
  %v1433 = vrot.slane %v1155, %v1432
  %v1434 = vlaneseq
  %v1435 = vshrl.u32 %v1434, 7
  %v1436 = vsub.s32 0, %v1435
  %v1437 = vrot.slane %v1171, %v1436
  %v1438 = vsel %vm1194, %v1437, %v1433
  %v1440 = vlaneseq
  %v1441 = vshrl.u32 %v1440, 7
  %v1442 = vsub.s32 1, %v1441
  %v1443 = vrot.slane %v1156, %v1442
  %v1444 = vlaneseq
  %v1445 = vshrl.u32 %v1444, 7
  %v1446 = vsub.s32 1, %v1445
  %v1447 = vrot.slane %v1180, %v1446
  %v1448 = vsel %vm1194, %v1447, %v1443
  %v1450 = vsel %vm68, %v1438, %v1448
  %1452 = vrot.lane.b32.xlu0 %v1429, 32
  %v1453 = vpop.permute.xlu0 %1452
  %v1454 = vsel %vm1208, %v1453, 0
  %1456 = vmatprep.subr.mxu0 0.0
  %1457 = vmatpush1.msra.mxu0 %v1182
  %1458 = vmatprep.subr.mxu0 0.0
  %1459 = vmatpush1.msra.mxu0 %v1183
  %1460 = vmatprep.subr.mxu0 0.0
  %1461 = vmatpush1.msra.mxu0 %v1184
  %1462 = vmatprep.subr.mxu0 0.0
  %1463 = vmatpush1.msra.mxu0 %v1185
  %1464 = vmatprep.subr.mxu0 0.0
  %1465 = vmatpush1.msra.mxu0 0.0
  %1466 = vmatprep.subr.mxu0 0.0
  %1467 = vmatpush1.msra.mxu0 0.0
  %1468 = vmatprep.subr.mxu0 0.0
  %1469 = vmatpush1.msra.mxu0 0.0
  %1470 = vmatprep.subr.mxu0 0.0
  %1471 = vmatpush1.msra.mxu0 0.0
  %1472 = vmatprep.subr.mxu0 0.0
  %1473 = vmatpush1.msra.mxu0 0.0
  %1474 = vmatprep.subr.mxu0 0.0
  %1475 = vmatpush1.msra.mxu0 0.0
  %1476 = vmatprep.subr.mxu0 0.0
  %1477 = vmatpush1.msra.mxu0 0.0
  %1478 = vmatprep.subr.mxu0 0.0
  %1479 = vmatpush1.msra.mxu0 0.0
  %1480 = vmatprep.subr.mxu0 0.0
  %1481 = vmatpush1.msra.mxu0 0.0
  %1482 = vmatprep.subr.mxu0 0.0
  %1483 = vmatpush1.msra.mxu0 0.0
  %1484 = vmatprep.subr.mxu0 0.0
  %1485 = vmatpush1.msra.mxu0 0.0
  %1486 = vmatprep.subr.mxu0 0.0
  %1487 = vmatpush1.msra.mxu0 0.0
  %1488 = vmatprep.subr.mxu0 0.0
  %1489 = vmatpush1.msra.mxu0 0.0
  %1490 = vmatprep.subr.mxu0 0.0
  %1491 = vmatpush1.msra.mxu0 0.0
  %1492 = vmatprep.subr.mxu0 0.0
  %1493 = vmatpush1.msra.mxu0 0.0
  %1494 = vmatprep.subr.mxu0 0.0
  %1495 = vmatpush1.msra.mxu0 0.0
  %1496 = vmatprep.subr.mxu0 0.0
  %1497 = vmatpush1.msra.mxu0 0.0
  %1498 = vmatprep.subr.mxu0 0.0
  %1499 = vmatpush1.msra.mxu0 0.0
  %1500 = vmatprep.subr.mxu0 0.0
  %1501 = vmatpush1.msra.mxu0 0.0
  %1502 = vmatprep.subr.mxu0 0.0
  %1503 = vmatpush1.msra.mxu0 0.0
  %1504 = vmatprep.subr.mxu0 0.0
  %1505 = vmatpush1.msra.mxu0 0.0
  %1506 = vmatprep.subr.mxu0 0.0
  %1507 = vmatpush1.msra.mxu0 0.0
  %1508 = vmatprep.subr.mxu0 0.0
  %1509 = vmatpush1.msra.mxu0 0.0
  %1510 = vmatprep.subr.mxu0 0.0
  %1511 = vmatpush1.msra.mxu0 0.0
  %1512 = vmatprep.subr.mxu0 0.0
  %1513 = vmatpush1.msra.mxu0 0.0
  %1514 = vmatprep.subr.mxu0 0.0
  %1515 = vmatpush1.msra.mxu0 0.0
  %1516 = vmatprep.subr.mxu0 0.0
  %1517 = vmatpush1.msra.mxu0 0.0
  %1518 = vmatprep.subr.mxu0 0.0
  %1519 = vmatpush1.msra.mxu0 0.0
  %1520 = vmatprep.mubr.f32.mxu0 0.0
  %1521 = vmatmul.mubr.f32.gmra.mrb[0].mxu0 %v1454
  %v1522 = vpop.f32.mrb[0].mxu0
  %v1523 = vadd.f32 0.0, %v1522
  %v1524 = vpop.f32.mrb[0].mxu0
  %1525 = vdwg.mxu0
  %v1526 = vadd.f32 %v1450, %v1523
  %v1527 = vtanh.pop %v1526
  %v1528 = vxor.u32 %v1526, 2147483648
  %v1529 = vmul.f32 %v1528, 1.442695
  %v1530 = vpow.pop %v1529
  %v1531 = vadd.f32 %v1530, 1.0
  %v1532 = vrcp.pop %v1531
  %v1533 = vmul.f32 1.0, %v1532
  %v1534 = vsel %vm71, %v1527, %v1533
  %v1535 = vmul.f32 %v1534, %v1423
  %1537 = vrot.lane.b32.xlu0 %v1534, 64
  %v1538 = vpop.permute.xlu0 %1537
  %v1540 = vmul.f32 %v1534, %v1538
  %1542 = vrot.lane.b32.xlu0 %v1540, 32
  %v1543 = vpop.permute.xlu0 %1542
  %v1545 = vadd.f32 %v1535, %v1543
  %v1546 = vtanh.pop %v1545
  %1548 = vrot.lane.b32.xlu0 %v1546, 64
  %v1549 = vpop.permute.xlu0 %1548
  %v1551 = vmul.f32 %v1534, %v1549
  %v1552 = vlaneseq
  %v1553 = vshrl.u32 %v1552, 7
  %v1554 = vsub.s32 1, %v1553
  %v1555 = vrot.slane %v1155, %v1554
  %v1556 = vlaneseq
  %v1557 = vshrl.u32 %v1556, 7
  %v1558 = vsub.s32 1, %v1557
  %v1559 = vrot.slane %v1171, %v1558
  %v1560 = vsel %vm1194, %v1559, %v1555
  %v1562 = vlaneseq
  %v1563 = vshrl.u32 %v1562, 7
  %v1564 = vsub.s32 0, %v1563
  %v1565 = vrot.slane %v1156, %v1564
  %v1566 = vlaneseq
  %v1567 = vshrl.u32 %v1566, 7
  %v1568 = vsub.s32 0, %v1567
  %v1569 = vrot.slane %v1180, %v1568
  %v1570 = vsel %vm1194, %v1569, %v1565
  %v1572 = vsel %vm68, %v1560, %v1570
  %1574 = vrot.lane.b32.xlu0 %v1551, 32
  %v1575 = vpop.permute.xlu0 %1574
  %v1576 = vsel %vm1208, %v1575, 0
  %1578 = vmatprep.subr.mxu0 0.0
  %1579 = vmatpush1.msra.mxu0 %v1182
  %1580 = vmatprep.subr.mxu0 0.0
  %1581 = vmatpush1.msra.mxu0 %v1183
  %1582 = vmatprep.subr.mxu0 0.0
  %1583 = vmatpush1.msra.mxu0 %v1184
  %1584 = vmatprep.subr.mxu0 0.0
  %1585 = vmatpush1.msra.mxu0 %v1185
  %1586 = vmatprep.subr.mxu0 0.0
  %1587 = vmatpush1.msra.mxu0 0.0
  %1588 = vmatprep.subr.mxu0 0.0
  %1589 = vmatpush1.msra.mxu0 0.0
  %1590 = vmatprep.subr.mxu0 0.0
  %1591 = vmatpush1.msra.mxu0 0.0
  %1592 = vmatprep.subr.mxu0 0.0
  %1593 = vmatpush1.msra.mxu0 0.0
  %1594 = vmatprep.subr.mxu0 0.0
  %1595 = vmatpush1.msra.mxu0 0.0
  %1596 = vmatprep.subr.mxu0 0.0
  %1597 = vmatpush1.msra.mxu0 0.0
  %1598 = vmatprep.subr.mxu0 0.0
  %1599 = vmatpush1.msra.mxu0 0.0
  %1600 = vmatprep.subr.mxu0 0.0
  %1601 = vmatpush1.msra.mxu0 0.0
  %1602 = vmatprep.subr.mxu0 0.0
  %1603 = vmatpush1.msra.mxu0 0.0
  %1604 = vmatprep.subr.mxu0 0.0
  %1605 = vmatpush1.msra.mxu0 0.0
  %1606 = vmatprep.subr.mxu0 0.0
  %1607 = vmatpush1.msra.mxu0 0.0
  %1608 = vmatprep.subr.mxu0 0.0
  %1609 = vmatpush1.msra.mxu0 0.0
  %1610 = vmatprep.subr.mxu0 0.0
  %1611 = vmatpush1.msra.mxu0 0.0
  %1612 = vmatprep.subr.mxu0 0.0
  %1613 = vmatpush1.msra.mxu0 0.0
  %1614 = vmatprep.subr.mxu0 0.0
  %1615 = vmatpush1.msra.mxu0 0.0
  %1616 = vmatprep.subr.mxu0 0.0
  %1617 = vmatpush1.msra.mxu0 0.0
  %1618 = vmatprep.subr.mxu0 0.0
  %1619 = vmatpush1.msra.mxu0 0.0
  %1620 = vmatprep.subr.mxu0 0.0
  %1621 = vmatpush1.msra.mxu0 0.0
  %1622 = vmatprep.subr.mxu0 0.0
  %1623 = vmatpush1.msra.mxu0 0.0
  %1624 = vmatprep.subr.mxu0 0.0
  %1625 = vmatpush1.msra.mxu0 0.0
  %1626 = vmatprep.subr.mxu0 0.0
  %1627 = vmatpush1.msra.mxu0 0.0
  %1628 = vmatprep.subr.mxu0 0.0
  %1629 = vmatpush1.msra.mxu0 0.0
  %1630 = vmatprep.subr.mxu0 0.0
  %1631 = vmatpush1.msra.mxu0 0.0
  %1632 = vmatprep.subr.mxu0 0.0
  %1633 = vmatpush1.msra.mxu0 0.0
  %1634 = vmatprep.subr.mxu0 0.0
  %1635 = vmatpush1.msra.mxu0 0.0
  %1636 = vmatprep.subr.mxu0 0.0
  %1637 = vmatpush1.msra.mxu0 0.0
  %1638 = vmatprep.subr.mxu0 0.0
  %1639 = vmatpush1.msra.mxu0 0.0
  %1640 = vmatprep.subr.mxu0 0.0
  %1641 = vmatpush1.msra.mxu0 0.0
  %1642 = vmatprep.mubr.f32.mxu0 0.0
  %1643 = vmatmul.mubr.f32.gmra.mrb[0].mxu0 %v1576
  %v1644 = vpop.f32.mrb[0].mxu0
  %v1645 = vadd.f32 0.0, %v1644
  %v1646 = vpop.f32.mrb[0].mxu0
  %1647 = vdwg.mxu0
  %v1648 = vadd.f32 %v1572, %v1645
  %v1649 = vtanh.pop %v1648
  %v1650 = vxor.u32 %v1648, 2147483648
  %v1651 = vmul.f32 %v1650, 1.442695
  %v1652 = vpow.pop %v1651
  %v1653 = vadd.f32 %v1652, 1.0
  %v1654 = vrcp.pop %v1653
  %v1655 = vmul.f32 1.0, %v1654
  %v1656 = vsel %vm71, %v1649, %v1655
  %v1657 = vmul.f32 %v1656, %v1545
  %1659 = vrot.lane.b32.xlu0 %v1656, 64
  %v1660 = vpop.permute.xlu0 %1659
  %v1662 = vmul.f32 %v1656, %v1660
  %1664 = vrot.lane.b32.xlu0 %v1662, 32
  %v1665 = vpop.permute.xlu0 %1664
  %v1667 = vadd.f32 %v1657, %v1665
  %v1668 = vtanh.pop %v1667
  %1670 = vrot.lane.b32.xlu0 %v1668, 64
  %v1671 = vpop.permute.xlu0 %1670
  %v1673 = vmul.f32 %v1656, %v1671
  %v1674 = vlaneseq
  %v1675 = vshrl.u32 %v1674, 7
  %v1676 = vsub.s32 0, %v1675
  %v1677 = vrot.slane %v1154, %v1676
  %v1678 = vlaneseq
  %v1679 = vshrl.u32 %v1678, 7
  %v1680 = vsub.s32 0, %v1679
  %v1681 = vrot.slane %v1173, %v1680
  %v1682 = vsel %vm1194, %v1681, %v1677
  %v1684 = vlaneseq
  %v1685 = vshrl.u32 %v1684, 7
  %v1686 = vsub.s32 1, %v1685
  %v1687 = vrot.slane %v1154, %v1686
  %v1688 = vlaneseq
  %v1689 = vshrl.u32 %v1688, 7
  %v1690 = vsub.s32 1, %v1689
  %v1691 = vrot.slane %v1173, %v1690
  %v1692 = vsel %vm1194, %v1691, %v1687
  %v1694 = vsel %vm68, %v1682, %v1692
  %1696 = vrot.lane.b32.xlu0 %v1673, 32
  %v1697 = vpop.permute.xlu0 %1696
  %v1698 = vsel %vm1208, %v1697, 0
  %1700 = vmatprep.subr.mxu0 0.0
  %1701 = vmatpush1.msra.mxu0 %v1182
  %1702 = vmatprep.subr.mxu0 0.0
  %1703 = vmatpush1.msra.mxu0 %v1183
  %1704 = vmatprep.subr.mxu0 0.0
  %1705 = vmatpush1.msra.mxu0 %v1184
  %1706 = vmatprep.subr.mxu0 0.0
  %1707 = vmatpush1.msra.mxu0 %v1185
  %1708 = vmatprep.subr.mxu0 0.0
  %1709 = vmatpush1.msra.mxu0 0.0
  %1710 = vmatprep.subr.mxu0 0.0
  %1711 = vmatpush1.msra.mxu0 0.0
  %1712 = vmatprep.subr.mxu0 0.0
  %1713 = vmatpush1.msra.mxu0 0.0
  %1714 = vmatprep.subr.mxu0 0.0
  %1715 = vmatpush1.msra.mxu0 0.0
  %1716 = vmatprep.subr.mxu0 0.0
  %1717 = vmatpush1.msra.mxu0 0.0
  %1718 = vmatprep.subr.mxu0 0.0
  %1719 = vmatpush1.msra.mxu0 0.0
  %1720 = vmatprep.subr.mxu0 0.0
  %1721 = vmatpush1.msra.mxu0 0.0
  %1722 = vmatprep.subr.mxu0 0.0
  %1723 = vmatpush1.msra.mxu0 0.0
  %1724 = vmatprep.subr.mxu0 0.0
  %1725 = vmatpush1.msra.mxu0 0.0
  %1726 = vmatprep.subr.mxu0 0.0
  %1727 = vmatpush1.msra.mxu0 0.0
  %1728 = vmatprep.subr.mxu0 0.0
  %1729 = vmatpush1.msra.mxu0 0.0
  %1730 = vmatprep.subr.mxu0 0.0
  %1731 = vmatpush1.msra.mxu0 0.0
  %1732 = vmatprep.subr.mxu0 0.0
  %1733 = vmatpush1.msra.mxu0 0.0
  %1734 = vmatprep.subr.mxu0 0.0
  %1735 = vmatpush1.msra.mxu0 0.0
  %1736 = vmatprep.subr.mxu0 0.0
  %1737 = vmatpush1.msra.mxu0 0.0
  %1738 = vmatprep.subr.mxu0 0.0
  %1739 = vmatpush1.msra.mxu0 0.0
  %1740 = vmatprep.subr.mxu0 0.0
  %1741 = vmatpush1.msra.mxu0 0.0
  %1742 = vmatprep.subr.mxu0 0.0
  %1743 = vmatpush1.msra.mxu0 0.0
  %1744 = vmatprep.subr.mxu0 0.0
  %1745 = vmatpush1.msra.mxu0 0.0
  %1746 = vmatprep.subr.mxu0 0.0
  %1747 = vmatpush1.msra.mxu0 0.0
  %1748 = vmatprep.subr.mxu0 0.0
  %1749 = vmatpush1.msra.mxu0 0.0
  %1750 = vmatprep.subr.mxu0 0.0
  %1751 = vmatpush1.msra.mxu0 0.0
  %1752 = vmatprep.subr.mxu0 0.0
  %1753 = vmatpush1.msra.mxu0 0.0
  %1754 = vmatprep.subr.mxu0 0.0
  %1755 = vmatpush1.msra.mxu0 0.0
  %1756 = vmatprep.subr.mxu0 0.0
  %1757 = vmatpush1.msra.mxu0 0.0
  %1758 = vmatprep.subr.mxu0 0.0
  %1759 = vmatpush1.msra.mxu0 0.0
  %1760 = vmatprep.subr.mxu0 0.0
  %1761 = vmatpush1.msra.mxu0 0.0
  %1762 = vmatprep.subr.mxu0 0.0
  %1763 = vmatpush1.msra.mxu0 0.0
  %1764 = vmatprep.mubr.f32.mxu0 0.0
  %1765 = vmatmul.mubr.f32.gmra.mrb[0].mxu0 %v1698
  %v1766 = vpop.f32.mrb[0].mxu0
  %v1767 = vadd.f32 0.0, %v1766
  %v1768 = vpop.f32.mrb[0].mxu0
  %1769 = vdwg.mxu0
  %v1770 = vadd.f32 %v1694, %v1767
  %v1771 = vtanh.pop %v1770
  %v1772 = vxor.u32 %v1770, 2147483648
  %v1773 = vmul.f32 %v1772, 1.442695
  %v1774 = vpow.pop %v1773
  %v1775 = vadd.f32 %v1774, 1.0
  %v1776 = vrcp.pop %v1775
  %v1777 = vmul.f32 1.0, %v1776
  %v1778 = vsel %vm71, %v1771, %v1777
  %v1779 = vmul.f32 %v1778, %v1667
  %1781 = vrot.lane.b32.xlu0 %v1778, 64
  %v1782 = vpop.permute.xlu0 %1781
  %v1784 = vmul.f32 %v1778, %v1782
  %1786 = vrot.lane.b32.xlu0 %v1784, 32
  %v1787 = vpop.permute.xlu0 %1786
  %v1789 = vadd.f32 %v1779, %v1787
  %v1790 = vtanh.pop %v1789
  %1792 = vrot.lane.b32.xlu0 %v1790, 64
  %v1793 = vpop.permute.xlu0 %1792
  %v1795 = vmul.f32 %v1778, %v1793
  %v1796 = vsel %vm68, %v1692, %v1682
  %1798 = vrot.lane.b32.xlu0 %v1795, 32
  %v1799 = vpop.permute.xlu0 %1798
  %v1800 = vsel %vm1208, %v1799, 0
  %1802 = vmatprep.subr.mxu0 0.0
  %1803 = vmatpush1.msra.mxu0 %v1182
  %1804 = vmatprep.subr.mxu0 0.0
  %1805 = vmatpush1.msra.mxu0 %v1183
  %1806 = vmatprep.subr.mxu0 0.0
  %1807 = vmatpush1.msra.mxu0 %v1184
  %1808 = vmatprep.subr.mxu0 0.0
  %1809 = vmatpush1.msra.mxu0 %v1185
  %1810 = vmatprep.subr.mxu0 0.0
  %1811 = vmatpush1.msra.mxu0 0.0
  %1812 = vmatprep.subr.mxu0 0.0
  %1813 = vmatpush1.msra.mxu0 0.0
  %1814 = vmatprep.subr.mxu0 0.0
  %1815 = vmatpush1.msra.mxu0 0.0
  %1816 = vmatprep.subr.mxu0 0.0
  %1817 = vmatpush1.msra.mxu0 0.0
  %1818 = vmatprep.subr.mxu0 0.0
  %1819 = vmatpush1.msra.mxu0 0.0
  %1820 = vmatprep.subr.mxu0 0.0
  %1821 = vmatpush1.msra.mxu0 0.0
  %1822 = vmatprep.subr.mxu0 0.0
  %1823 = vmatpush1.msra.mxu0 0.0
  %1824 = vmatprep.subr.mxu0 0.0
  %1825 = vmatpush1.msra.mxu0 0.0
  %1826 = vmatprep.subr.mxu0 0.0
  %1827 = vmatpush1.msra.mxu0 0.0
  %1828 = vmatprep.subr.mxu0 0.0
  %1829 = vmatpush1.msra.mxu0 0.0
  %1830 = vmatprep.subr.mxu0 0.0
  %1831 = vmatpush1.msra.mxu0 0.0
  %1832 = vmatprep.subr.mxu0 0.0
  %1833 = vmatpush1.msra.mxu0 0.0
  %1834 = vmatprep.subr.mxu0 0.0
  %1835 = vmatpush1.msra.mxu0 0.0
  %1836 = vmatprep.subr.mxu0 0.0
  %1837 = vmatpush1.msra.mxu0 0.0
  %1838 = vmatprep.subr.mxu0 0.0
  %1839 = vmatpush1.msra.mxu0 0.0
  %1840 = vmatprep.subr.mxu0 0.0
  %1841 = vmatpush1.msra.mxu0 0.0
  %1842 = vmatprep.subr.mxu0 0.0
  %1843 = vmatpush1.msra.mxu0 0.0
  %1844 = vmatprep.subr.mxu0 0.0
  %1845 = vmatpush1.msra.mxu0 0.0
  %1846 = vmatprep.subr.mxu0 0.0
  %1847 = vmatpush1.msra.mxu0 0.0
  %1848 = vmatprep.subr.mxu0 0.0
  %1849 = vmatpush1.msra.mxu0 0.0
  %1850 = vmatprep.subr.mxu0 0.0
  %1851 = vmatpush1.msra.mxu0 0.0
  %1852 = vmatprep.subr.mxu0 0.0
  %1853 = vmatpush1.msra.mxu0 0.0
  %1854 = vmatprep.subr.mxu0 0.0
  %1855 = vmatpush1.msra.mxu0 0.0
  %1856 = vmatprep.subr.mxu0 0.0
  %1857 = vmatpush1.msra.mxu0 0.0
  %1858 = vmatprep.subr.mxu0 0.0
  %1859 = vmatpush1.msra.mxu0 0.0
  %1860 = vmatprep.subr.mxu0 0.0
  %1861 = vmatpush1.msra.mxu0 0.0
  %1862 = vmatprep.subr.mxu0 0.0
  %1863 = vmatpush1.msra.mxu0 0.0
  %1864 = vmatprep.subr.mxu0 0.0
  %1865 = vmatpush1.msra.mxu0 0.0
  %1866 = vmatprep.mubr.f32.mxu0 0.0
  %1867 = vmatmul.mubr.f32.gmra.mrb[0].mxu0 %v1800
  %v1868 = vpop.f32.mrb[0].mxu0
  %v1869 = vadd.f32 0.0, %v1868
  %v1870 = vpop.f32.mrb[0].mxu0
  %1871 = vdwg.mxu0
  %v1872 = vadd.f32 %v1796, %v1869
  %v1873 = vtanh.pop %v1872
  %v1874 = vxor.u32 %v1872, 2147483648
  %v1875 = vmul.f32 %v1874, 1.442695
  %v1876 = vpow.pop %v1875
  %v1877 = vadd.f32 %v1876, 1.0
  %v1878 = vrcp.pop %v1877
  %v1879 = vmul.f32 1.0, %v1878
  %v1880 = vsel %vm71, %v1873, %v1879
  %v1881 = vmul.f32 %v1880, %v1789
  %1883 = vrot.lane.b32.xlu0 %v1880, 64
  %v1884 = vpop.permute.xlu0 %1883
  %v1886 = vmul.f32 %v1880, %v1884
  %1888 = vrot.lane.b32.xlu0 %v1886, 32
  %v1889 = vpop.permute.xlu0 %1888
  %v1891 = vadd.f32 %v1881, %v1889
  %v1892 = vtanh.pop %v1891
  %1894 = vrot.lane.b32.xlu0 %v1892, 64
  %v1895 = vpop.permute.xlu0 %1894
  %v1897 = vmul.f32 %v1880, %v1895
  %v1898 = vsel %vm68, %v1570, %v1560
  %1900 = vrot.lane.b32.xlu0 %v1897, 32
  %v1901 = vpop.permute.xlu0 %1900
  %v1902 = vsel %vm1208, %v1901, 0
  %1904 = vmatprep.subr.mxu0 0.0
  %1905 = vmatpush1.msra.mxu0 %v1182
  %1906 = vmatprep.subr.mxu0 0.0
  %1907 = vmatpush1.msra.mxu0 %v1183
  %1908 = vmatprep.subr.mxu0 0.0
  %1909 = vmatpush1.msra.mxu0 %v1184
  %1910 = vmatprep.subr.mxu0 0.0
  %1911 = vmatpush1.msra.mxu0 %v1185
  %1912 = vmatprep.subr.mxu0 0.0
  %1913 = vmatpush1.msra.mxu0 0.0
  %1914 = vmatprep.subr.mxu0 0.0
  %1915 = vmatpush1.msra.mxu0 0.0
  %1916 = vmatprep.subr.mxu0 0.0
  %1917 = vmatpush1.msra.mxu0 0.0
  %1918 = vmatprep.subr.mxu0 0.0
  %1919 = vmatpush1.msra.mxu0 0.0
  %1920 = vmatprep.subr.mxu0 0.0
  %1921 = vmatpush1.msra.mxu0 0.0
  %1922 = vmatprep.subr.mxu0 0.0
  %1923 = vmatpush1.msra.mxu0 0.0
  %1924 = vmatprep.subr.mxu0 0.0
  %1925 = vmatpush1.msra.mxu0 0.0
  %1926 = vmatprep.subr.mxu0 0.0
  %1927 = vmatpush1.msra.mxu0 0.0
  %1928 = vmatprep.subr.mxu0 0.0
  %1929 = vmatpush1.msra.mxu0 0.0
  %1930 = vmatprep.subr.mxu0 0.0
  %1931 = vmatpush1.msra.mxu0 0.0
  %1932 = vmatprep.subr.mxu0 0.0
  %1933 = vmatpush1.msra.mxu0 0.0
  %1934 = vmatprep.subr.mxu0 0.0
  %1935 = vmatpush1.msra.mxu0 0.0
  %1936 = vmatprep.subr.mxu0 0.0
  %1937 = vmatpush1.msra.mxu0 0.0
  %1938 = vmatprep.subr.mxu0 0.0
  %1939 = vmatpush1.msra.mxu0 0.0
  %1940 = vmatprep.subr.mxu0 0.0
  %1941 = vmatpush1.msra.mxu0 0.0
  %1942 = vmatprep.subr.mxu0 0.0
  %1943 = vmatpush1.msra.mxu0 0.0
  %1944 = vmatprep.subr.mxu0 0.0
  %1945 = vmatpush1.msra.mxu0 0.0
  %1946 = vmatprep.subr.mxu0 0.0
  %1947 = vmatpush1.msra.mxu0 0.0
  %1948 = vmatprep.subr.mxu0 0.0
  %1949 = vmatpush1.msra.mxu0 0.0
  %1950 = vmatprep.subr.mxu0 0.0
  %1951 = vmatpush1.msra.mxu0 0.0
  %1952 = vmatprep.subr.mxu0 0.0
  %1953 = vmatpush1.msra.mxu0 0.0
  %1954 = vmatprep.subr.mxu0 0.0
  %1955 = vmatpush1.msra.mxu0 0.0
  %1956 = vmatprep.subr.mxu0 0.0
  %1957 = vmatpush1.msra.mxu0 0.0
  %1958 = vmatprep.subr.mxu0 0.0
  %1959 = vmatpush1.msra.mxu0 0.0
  %1960 = vmatprep.subr.mxu0 0.0
  %1961 = vmatpush1.msra.mxu0 0.0
  %1962 = vmatprep.subr.mxu0 0.0
  %1963 = vmatpush1.msra.mxu0 0.0
  %1964 = vmatprep.subr.mxu0 0.0
  %1965 = vmatpush1.msra.mxu0 0.0
  %1966 = vmatprep.subr.mxu0 0.0
  %1967 = vmatpush1.msra.mxu0 0.0
  %1968 = vmatprep.mubr.f32.mxu0 0.0
  %1969 = vmatmul.mubr.f32.gmra.mrb[0].mxu0 %v1902
  %v1970 = vpop.f32.mrb[0].mxu0
  %v1971 = vadd.f32 0.0, %v1970
  %v1972 = vpop.f32.mrb[0].mxu0
  %1973 = vdwg.mxu0
  %v1974 = vadd.f32 %v1898, %v1971
  %v1975 = vtanh.pop %v1974
  %v1976 = vxor.u32 %v1974, 2147483648
  %v1977 = vmul.f32 %v1976, 1.442695
  %v1978 = vpow.pop %v1977
  %v1979 = vadd.f32 %v1978, 1.0
  %v1980 = vrcp.pop %v1979
  %v1981 = vmul.f32 1.0, %v1980
  %v1982 = vsel %vm71, %v1975, %v1981
  %v1983 = vmul.f32 %v1982, %v1891
  %1985 = vrot.lane.b32.xlu0 %v1982, 64
  %v1986 = vpop.permute.xlu0 %1985
  %v1988 = vmul.f32 %v1982, %v1986
  %1990 = vrot.lane.b32.xlu0 %v1988, 32
  %v1991 = vpop.permute.xlu0 %1990
  %v1993 = vadd.f32 %v1983, %v1991
  %v1994 = vtanh.pop %v1993
  %1996 = vrot.lane.b32.xlu0 %v1994, 64
  %v1997 = vpop.permute.xlu0 %1996
  %v1999 = vmul.f32 %v1982, %v1997
  %v2000 = vsel %vm68, %v1448, %v1438
  %2002 = vrot.lane.b32.xlu0 %v1999, 32
  %v2003 = vpop.permute.xlu0 %2002
  %v2004 = vsel %vm1208, %v2003, 0
  %2006 = vmatprep.subr.mxu0 0.0
  %2007 = vmatpush1.msra.mxu0 %v1182
  %2008 = vmatprep.subr.mxu0 0.0
  %2009 = vmatpush1.msra.mxu0 %v1183
  %2010 = vmatprep.subr.mxu0 0.0
  %2011 = vmatpush1.msra.mxu0 %v1184
  %2012 = vmatprep.subr.mxu0 0.0
  %2013 = vmatpush1.msra.mxu0 %v1185
  %2014 = vmatprep.subr.mxu0 0.0
  %2015 = vmatpush1.msra.mxu0 0.0
  %2016 = vmatprep.subr.mxu0 0.0
  %2017 = vmatpush1.msra.mxu0 0.0
  %2018 = vmatprep.subr.mxu0 0.0
  %2019 = vmatpush1.msra.mxu0 0.0
  %2020 = vmatprep.subr.mxu0 0.0
  %2021 = vmatpush1.msra.mxu0 0.0
  %2022 = vmatprep.subr.mxu0 0.0
  %2023 = vmatpush1.msra.mxu0 0.0
  %2024 = vmatprep.subr.mxu0 0.0
  %2025 = vmatpush1.msra.mxu0 0.0
  %2026 = vmatprep.subr.mxu0 0.0
  %2027 = vmatpush1.msra.mxu0 0.0
  %2028 = vmatprep.subr.mxu0 0.0
  %2029 = vmatpush1.msra.mxu0 0.0
  %2030 = vmatprep.subr.mxu0 0.0
  %2031 = vmatpush1.msra.mxu0 0.0
  %2032 = vmatprep.subr.mxu0 0.0
  %2033 = vmatpush1.msra.mxu0 0.0
  %2034 = vmatprep.subr.mxu0 0.0
  %2035 = vmatpush1.msra.mxu0 0.0
  %2036 = vmatprep.subr.mxu0 0.0
  %2037 = vmatpush1.msra.mxu0 0.0
  %2038 = vmatprep.subr.mxu0 0.0
  %2039 = vmatpush1.msra.mxu0 0.0
  %2040 = vmatprep.subr.mxu0 0.0
  %2041 = vmatpush1.msra.mxu0 0.0
  %2042 = vmatprep.subr.mxu0 0.0
  %2043 = vmatpush1.msra.mxu0 0.0
  %2044 = vmatprep.subr.mxu0 0.0
  %2045 = vmatpush1.msra.mxu0 0.0
  %2046 = vmatprep.subr.mxu0 0.0
  %2047 = vmatpush1.msra.mxu0 0.0
  %2048 = vmatprep.subr.mxu0 0.0
  %2049 = vmatpush1.msra.mxu0 0.0
  %2050 = vmatprep.subr.mxu0 0.0
  %2051 = vmatpush1.msra.mxu0 0.0
  %2052 = vmatprep.subr.mxu0 0.0
  %2053 = vmatpush1.msra.mxu0 0.0
  %2054 = vmatprep.subr.mxu0 0.0
  %2055 = vmatpush1.msra.mxu0 0.0
  %2056 = vmatprep.subr.mxu0 0.0
  %2057 = vmatpush1.msra.mxu0 0.0
  %2058 = vmatprep.subr.mxu0 0.0
  %2059 = vmatpush1.msra.mxu0 0.0
  %2060 = vmatprep.subr.mxu0 0.0
  %2061 = vmatpush1.msra.mxu0 0.0
  %2062 = vmatprep.subr.mxu0 0.0
  %2063 = vmatpush1.msra.mxu0 0.0
  %2064 = vmatprep.subr.mxu0 0.0
  %2065 = vmatpush1.msra.mxu0 0.0
  %2066 = vmatprep.subr.mxu0 0.0
  %2067 = vmatpush1.msra.mxu0 0.0
  %2068 = vmatprep.subr.mxu0 0.0
  %2069 = vmatpush1.msra.mxu0 0.0
  %2070 = vmatprep.mubr.f32.mxu0 0.0
  %2071 = vmatmul.mubr.f32.gmra.mrb[0].mxu0 %v2004
  %v2072 = vpop.f32.mrb[0].mxu0
  %v2073 = vadd.f32 0.0, %v2072
  %v2074 = vpop.f32.mrb[0].mxu0
  %2075 = vdwg.mxu0
  %v2076 = vadd.f32 %v2000, %v2073
  %v2077 = vtanh.pop %v2076
  %v2078 = vxor.u32 %v2076, 2147483648
  %v2079 = vmul.f32 %v2078, 1.442695
  %v2080 = vpow.pop %v2079
  %v2081 = vadd.f32 %v2080, 1.0
  %v2082 = vrcp.pop %v2081
  %v2083 = vmul.f32 1.0, %v2082
  %v2084 = vsel %vm71, %v2077, %v2083
  %v2085 = vmul.f32 %v2084, %v1993
  %2087 = vrot.lane.b32.xlu0 %v2084, 64
  %v2088 = vpop.permute.xlu0 %2087
  %v2090 = vmul.f32 %v2084, %v2088
  %2092 = vrot.lane.b32.xlu0 %v2090, 32
  %v2093 = vpop.permute.xlu0 %2092
  %v2095 = vadd.f32 %v2085, %v2093
  %v2096 = vtanh.pop %v2095
  %2098 = vrot.lane.b32.xlu0 %v2096, 64
  %v2099 = vpop.permute.xlu0 %2098
  %v2101 = vmul.f32 %v2084, %v2099
  %v2102 = vsel %vm68, %v1326, %v1316
  %2104 = vrot.lane.b32.xlu0 %v2101, 32
  %v2105 = vpop.permute.xlu0 %2104
  %v2106 = vsel %vm1208, %v2105, 0
  %2108 = vmatprep.subr.mxu0 0.0
  %2109 = vmatpush1.msra.mxu0 %v1182
  %2110 = vmatprep.subr.mxu0 0.0
  %2111 = vmatpush1.msra.mxu0 %v1183
  %2112 = vmatprep.subr.mxu0 0.0
  %2113 = vmatpush1.msra.mxu0 %v1184
  %2114 = vmatprep.subr.mxu0 0.0
  %2115 = vmatpush1.msra.mxu0 %v1185
  %2116 = vmatprep.subr.mxu0 0.0
  %2117 = vmatpush1.msra.mxu0 0.0
  %2118 = vmatprep.subr.mxu0 0.0
  %2119 = vmatpush1.msra.mxu0 0.0
  %2120 = vmatprep.subr.mxu0 0.0
  %2121 = vmatpush1.msra.mxu0 0.0
  %2122 = vmatprep.subr.mxu0 0.0
  %2123 = vmatpush1.msra.mxu0 0.0
  %2124 = vmatprep.subr.mxu0 0.0
  %2125 = vmatpush1.msra.mxu0 0.0
  %2126 = vmatprep.subr.mxu0 0.0
  %2127 = vmatpush1.msra.mxu0 0.0
  %2128 = vmatprep.subr.mxu0 0.0
  %2129 = vmatpush1.msra.mxu0 0.0
  %2130 = vmatprep.subr.mxu0 0.0
  %2131 = vmatpush1.msra.mxu0 0.0
  %2132 = vmatprep.subr.mxu0 0.0
  %2133 = vmatpush1.msra.mxu0 0.0
  %2134 = vmatprep.subr.mxu0 0.0
  %2135 = vmatpush1.msra.mxu0 0.0
  %2136 = vmatprep.subr.mxu0 0.0
  %2137 = vmatpush1.msra.mxu0 0.0
  %2138 = vmatprep.subr.mxu0 0.0
  %2139 = vmatpush1.msra.mxu0 0.0
  %2140 = vmatprep.subr.mxu0 0.0
  %2141 = vmatpush1.msra.mxu0 0.0
  %2142 = vmatprep.subr.mxu0 0.0
  %2143 = vmatpush1.msra.mxu0 0.0
  %2144 = vmatprep.subr.mxu0 0.0
  %2145 = vmatpush1.msra.mxu0 0.0
  %2146 = vmatprep.subr.mxu0 0.0
  %2147 = vmatpush1.msra.mxu0 0.0
  %2148 = vmatprep.subr.mxu0 0.0
  %2149 = vmatpush1.msra.mxu0 0.0
  %2150 = vmatprep.subr.mxu0 0.0
  %2151 = vmatpush1.msra.mxu0 0.0
  %2152 = vmatprep.subr.mxu0 0.0
  %2153 = vmatpush1.msra.mxu0 0.0
  %2154 = vmatprep.subr.mxu0 0.0
  %2155 = vmatpush1.msra.mxu0 0.0
  %2156 = vmatprep.subr.mxu0 0.0
  %2157 = vmatpush1.msra.mxu0 0.0
  %2158 = vmatprep.subr.mxu0 0.0
  %2159 = vmatpush1.msra.mxu0 0.0
  %2160 = vmatprep.subr.mxu0 0.0
  %2161 = vmatpush1.msra.mxu0 0.0
  %2162 = vmatprep.subr.mxu0 0.0
  %2163 = vmatpush1.msra.mxu0 0.0
  %2164 = vmatprep.subr.mxu0 0.0
  %2165 = vmatpush1.msra.mxu0 0.0
  %2166 = vmatprep.subr.mxu0 0.0
  %2167 = vmatpush1.msra.mxu0 0.0
  %2168 = vmatprep.subr.mxu0 0.0
  %2169 = vmatpush1.msra.mxu0 0.0
  %2170 = vmatprep.subr.mxu0 0.0
  %2171 = vmatpush1.msra.mxu0 0.0
  %2172 = vmatprep.mubr.f32.mxu0 0.0
  %2173 = vmatmul.mubr.f32.gmra.mrb[0].mxu0 %v2106
  %v2174 = vpop.f32.mrb[0].mxu0
  %v2175 = vadd.f32 0.0, %v2174
  %v2176 = vpop.f32.mrb[0].mxu0
  %2177 = vdwg.mxu0
  %v2178 = vadd.f32 %v2102, %v2175
  %v2179 = vtanh.pop %v2178
  %v2180 = vxor.u32 %v2178, 2147483648
  %v2181 = vmul.f32 %v2180, 1.442695
  %v2182 = vpow.pop %v2181
  %v2183 = vadd.f32 %v2182, 1.0
  %v2184 = vrcp.pop %v2183
  %v2185 = vmul.f32 1.0, %v2184
  %v2186 = vsel %vm71, %v2179, %v2185
  %v2187 = vmul.f32 %v2186, %v2095
  %2189 = vrot.lane.b32.xlu0 %v2186, 64
  %v2190 = vpop.permute.xlu0 %2189
  %v2192 = vmul.f32 %v2186, %v2190
  %2194 = vrot.lane.b32.xlu0 %v2192, 32
  %v2195 = vpop.permute.xlu0 %2194
  %v2197 = vadd.f32 %v2187, %v2195
  %v2198 = vtanh.pop %v2197
  %2200 = vrot.lane.b32.xlu0 %v2198, 64
  %v2201 = vpop.permute.xlu0 %2200
  %v2203 = vmul.f32 %v2186, %v2201
  %v2204 = vsel %vm68, %v1205, %v1195
  %2206 = vrot.lane.b32.xlu0 %v2203, 32
  %v2207 = vpop.permute.xlu0 %2206
  %v2208 = vsel %vm1208, %v2207, 0
  %2210 = vmatprep.subr.mxu0 0.0
  %2211 = vmatpush1.msra.mxu0 %v1182
  %2212 = vmatprep.subr.mxu0 0.0
  %2213 = vmatpush1.msra.mxu0 %v1183
  %2214 = vmatprep.subr.mxu0 0.0
  %2215 = vmatpush1.msra.mxu0 %v1184
  %2216 = vmatprep.subr.mxu0 0.0
  %2217 = vmatpush1.msra.mxu0 %v1185
  %2218 = vmatprep.subr.mxu0 0.0
  %2219 = vmatpush1.msra.mxu0 0.0
  %2220 = vmatprep.subr.mxu0 0.0
  %2221 = vmatpush1.msra.mxu0 0.0
  %2222 = vmatprep.subr.mxu0 0.0
  %2223 = vmatpush1.msra.mxu0 0.0
  %2224 = vmatprep.subr.mxu0 0.0
  %2225 = vmatpush1.msra.mxu0 0.0
  %2226 = vmatprep.subr.mxu0 0.0
  %2227 = vmatpush1.msra.mxu0 0.0
  %2228 = vmatprep.subr.mxu0 0.0
  %2229 = vmatpush1.msra.mxu0 0.0
  %2230 = vmatprep.subr.mxu0 0.0
  %2231 = vmatpush1.msra.mxu0 0.0
  %2232 = vmatprep.subr.mxu0 0.0
  %2233 = vmatpush1.msra.mxu0 0.0
  %2234 = vmatprep.subr.mxu0 0.0
  %2235 = vmatpush1.msra.mxu0 0.0
  %2236 = vmatprep.subr.mxu0 0.0
  %2237 = vmatpush1.msra.mxu0 0.0
  %2238 = vmatprep.subr.mxu0 0.0
  %2239 = vmatpush1.msra.mxu0 0.0
  %2240 = vmatprep.subr.mxu0 0.0
  %2241 = vmatpush1.msra.mxu0 0.0
  %2242 = vmatprep.subr.mxu0 0.0
  %2243 = vmatpush1.msra.mxu0 0.0
  %2244 = vmatprep.subr.mxu0 0.0
  %2245 = vmatpush1.msra.mxu0 0.0
  %2246 = vmatprep.subr.mxu0 0.0
  %2247 = vmatpush1.msra.mxu0 0.0
  %2248 = vmatprep.subr.mxu0 0.0
  %2249 = vmatpush1.msra.mxu0 0.0
  %2250 = vmatprep.subr.mxu0 0.0
  %2251 = vmatpush1.msra.mxu0 0.0
  %2252 = vmatprep.subr.mxu0 0.0
  %2253 = vmatpush1.msra.mxu0 0.0
  %2254 = vmatprep.subr.mxu0 0.0
  %2255 = vmatpush1.msra.mxu0 0.0
  %2256 = vmatprep.subr.mxu0 0.0
  %2257 = vmatpush1.msra.mxu0 0.0
  %2258 = vmatprep.subr.mxu0 0.0
  %2259 = vmatpush1.msra.mxu0 0.0
  %2260 = vmatprep.subr.mxu0 0.0
  %2261 = vmatpush1.msra.mxu0 0.0
  %2262 = vmatprep.subr.mxu0 0.0
  %2263 = vmatpush1.msra.mxu0 0.0
  %2264 = vmatprep.subr.mxu0 0.0
  %2265 = vmatpush1.msra.mxu0 0.0
  %2266 = vmatprep.subr.mxu0 0.0
  %2267 = vmatpush1.msra.mxu0 0.0
  %2268 = vmatprep.subr.mxu0 0.0
  %2269 = vmatpush1.msra.mxu0 0.0
  %2270 = vmatprep.subr.mxu0 0.0
  %2271 = vmatpush1.msra.mxu0 0.0
  %2272 = vmatprep.subr.mxu0 0.0
  %2273 = vmatpush1.msra.mxu0 0.0
  %2274 = vmatprep.mubr.f32.mxu0 0.0
  %2275 = vmatmul.mubr.f32.gmra.mrb[0].mxu0 %v2208
  %v2276 = vpop.f32.mrb[0].mxu0
  %v2277 = vadd.f32 0.0, %v2276
  %v2278 = vpop.f32.mrb[0].mxu0
  %2279 = vdwg.mxu0
  %v2280 = vadd.f32 %v2204, %v2277
  %v2281 = vtanh.pop %v2280
  %v2282 = vxor.u32 %v2280, 2147483648
  %v2283 = vmul.f32 %v2282, 1.442695
  %v2284 = vpow.pop %v2283
  %v2285 = vadd.f32 %v2284, 1.0
  %v2286 = vrcp.pop %v2285
  %v2287 = vmul.f32 1.0, %v2286
  %v2288 = vsel %vm71, %v2281, %v2287
  %v2289 = vmul.f32 %v2288, %v2197
  %2291 = vrot.lane.b32.xlu0 %v2288, 64
  %v2292 = vpop.permute.xlu0 %2291
  %v2294 = vmul.f32 %v2288, %v2292
  %2296 = vrot.lane.b32.xlu0 %v2294, 32
  %v2297 = vpop.permute.xlu0 %2296
  %v2299 = vadd.f32 %v2289, %v2297
  %v2300 = vtanh.pop %v2299
  %2302 = vrot.lane.b32.xlu0 %v2300, 64
  %v2303 = vpop.permute.xlu0 %2302
  %v2305 = vmul.f32 %v2288, %v2303
  %2308 = vrot.lane.b32.xlu0 %v2305, 32
  %v2309 = vpop.permute.xlu0 %2308
  %v2311 = vsel %vm72, %v1331, %v2309
  %v2314 = vsel %vm72, %v1453, %v2207
  %v2317 = vsel %vm72, %v1575, %v2105
  %v2320 = vsel %vm72, %v1697, %v2003
  %v2323 = vsel %vm72, %v1799, %v1901
  %v2324 = vsel %vm72, %v1901, %v1799
  %v2325 = vsel %vm72, %v2003, %v1697
  %v2326 = vsel %vm72, %v2105, %v1575
  %v2327 = vsel %vm72, %v2207, %v1453
  %v2328 = vsel %vm72, %v2309, %v1331
  %v2331 = vunpack.c.l.s4 1966171168
  %v2332 = vunpack.c.0.s8 %v2331
  %v2333 = vlaneseq
  %v2334 = vshrl.u32 %v2333, 7
  %v2335 = vsub.s32 %v2332, %v2334
  %v2336 = vrot.slane %v2311, %v2335
  %v2337 = vcombine.high %v2336, %v2336
  %v2339 = vunpack.c.l.s4 1966171168
  %v2340 = vunpack.c.0.s8 %v2339
  %v2341 = vlaneseq
  %v2342 = vshrl.u32 %v2341, 7
  %v2343 = vsub.s32 %v2340, %v2342
  %v2344 = vrot.slane %v2336, %v2343
  %v2346 = vunpack.c.l.s4 1966171168
  %v2347 = vunpack.c.0.s8 %v2346
  %v2348 = vlaneseq
  %v2349 = vshrl.u32 %v2348, 7
  %v2350 = vsub.s32 %v2347, %v2349
  %v2351 = vrot.slane %v2337, %v2350
  %v2356 = vunpack.c.l.s4 1966171168
  %v2357 = vunpack.c.0.s8 %v2356
  %v2358 = vlaneseq
  %v2359 = vshrl.u32 %v2358, 7
  %v2360 = vsub.s32 %v2357, %v2359
  %v2361 = vrot.slane %v2314, %v2360
  %v2362 = vcombine.high %v2361, %v2361
  %v2364 = vunpack.c.l.s4 1966171168
  %v2365 = vunpack.c.0.s8 %v2364
  %v2366 = vlaneseq
  %v2367 = vshrl.u32 %v2366, 7
  %v2368 = vsub.s32 %v2365, %v2367
  %v2369 = vrot.slane %v2361, %v2368
  %v2371 = vunpack.c.l.s4 1966171168
  %v2372 = vunpack.c.0.s8 %v2371
  %v2373 = vlaneseq
  %v2374 = vshrl.u32 %v2373, 7
  %v2375 = vsub.s32 %v2372, %v2374
  %v2376 = vrot.slane %v2362, %v2375
  %v2379 = vunpack.c.l.s4 1966171168
  %v2380 = vunpack.c.0.s8 %v2379
  %v2381 = vlaneseq
  %v2382 = vshrl.u32 %v2381, 7
  %v2383 = vsub.s32 %v2380, %v2382
  %v2384 = vrot.slane %v2317, %v2383
  %v2385 = vcombine.high %v2384, %v2384
  %v2387 = vunpack.c.l.s4 1966171168
  %v2388 = vunpack.c.0.s8 %v2387
  %v2389 = vlaneseq
  %v2390 = vshrl.u32 %v2389, 7
  %v2391 = vsub.s32 %v2388, %v2390
  %v2392 = vrot.slane %v2384, %v2391
  %v2394 = vunpack.c.l.s4 1966171168
  %v2395 = vunpack.c.0.s8 %v2394
  %v2396 = vlaneseq
  %v2397 = vshrl.u32 %v2396, 7
  %v2398 = vsub.s32 %v2395, %v2397
  %v2399 = vrot.slane %v2385, %v2398
  %v2402 = vunpack.c.l.s4 1966171168
  %v2403 = vunpack.c.0.s8 %v2402
  %v2404 = vlaneseq
  %v2405 = vshrl.u32 %v2404, 7
  %v2406 = vsub.s32 %v2403, %v2405
  %v2407 = vrot.slane %v2320, %v2406
  %v2408 = vcombine.high %v2407, %v2407
  %v2410 = vunpack.c.l.s4 1966171168
  %v2411 = vunpack.c.0.s8 %v2410
  %v2412 = vlaneseq
  %v2413 = vshrl.u32 %v2412, 7
  %v2414 = vsub.s32 %v2411, %v2413
  %v2415 = vrot.slane %v2407, %v2414
  %v2417 = vunpack.c.l.s4 1966171168
  %v2418 = vunpack.c.0.s8 %v2417
  %v2419 = vlaneseq
  %v2420 = vshrl.u32 %v2419, 7
  %v2421 = vsub.s32 %v2418, %v2420
  %v2422 = vrot.slane %v2408, %v2421
  %v2425 = vunpack.c.l.s4 1966171168
  %v2426 = vunpack.c.0.s8 %v2425
  %v2427 = vlaneseq
  %v2428 = vshrl.u32 %v2427, 7
  %v2429 = vsub.s32 %v2426, %v2428
  %v2430 = vrot.slane %v2323, %v2429
  %v2431 = vcombine.high %v2430, %v2430
  %v2433 = vunpack.c.l.s4 1966171168
  %v2434 = vunpack.c.0.s8 %v2433
  %v2435 = vlaneseq
  %v2436 = vshrl.u32 %v2435, 7
  %v2437 = vsub.s32 %v2434, %v2436
  %v2438 = vrot.slane %v2430, %v2437
  %v2440 = vunpack.c.l.s4 1966171168
  %v2441 = vunpack.c.0.s8 %v2440
  %v2442 = vlaneseq
  %v2443 = vshrl.u32 %v2442, 7
  %v2444 = vsub.s32 %v2441, %v2443
  %v2445 = vrot.slane %v2431, %v2444
  %v2448 = vunpack.c.l.s4 1966171168
  %v2449 = vunpack.c.0.s8 %v2448
  %v2450 = vlaneseq
  %v2451 = vshrl.u32 %v2450, 7
  %v2452 = vsub.s32 %v2449, %v2451
  %v2453 = vrot.slane %v2324, %v2452
  %v2454 = vcombine.high %v2453, %v2453
  %v2456 = vunpack.c.l.s4 1966171168
  %v2457 = vunpack.c.0.s8 %v2456
  %v2458 = vlaneseq
  %v2459 = vshrl.u32 %v2458, 7
  %v2460 = vsub.s32 %v2457, %v2459
  %v2461 = vrot.slane %v2453, %v2460
  %v2463 = vunpack.c.l.s4 1966171168
  %v2464 = vunpack.c.0.s8 %v2463
  %v2465 = vlaneseq
  %v2466 = vshrl.u32 %v2465, 7
  %v2467 = vsub.s32 %v2464, %v2466
  %v2468 = vrot.slane %v2454, %v2467
  %v2471 = vunpack.c.l.s4 1966171168
  %v2472 = vunpack.c.0.s8 %v2471
  %v2473 = vlaneseq
  %v2474 = vshrl.u32 %v2473, 7
  %v2475 = vsub.s32 %v2472, %v2474
  %v2476 = vrot.slane %v2325, %v2475
  %v2477 = vcombine.high %v2476, %v2476
  %v2479 = vunpack.c.l.s4 1966171168
  %v2480 = vunpack.c.0.s8 %v2479
  %v2481 = vlaneseq
  %v2482 = vshrl.u32 %v2481, 7
  %v2483 = vsub.s32 %v2480, %v2482
  %v2484 = vrot.slane %v2476, %v2483
  %v2486 = vunpack.c.l.s4 1966171168
  %v2487 = vunpack.c.0.s8 %v2486
  %v2488 = vlaneseq
  %v2489 = vshrl.u32 %v2488, 7
  %v2490 = vsub.s32 %v2487, %v2489
  %v2491 = vrot.slane %v2477, %v2490
  %v2494 = vunpack.c.l.s4 1966171168
  %v2495 = vunpack.c.0.s8 %v2494
  %v2496 = vlaneseq
  %v2497 = vshrl.u32 %v2496, 7
  %v2498 = vsub.s32 %v2495, %v2497
  %v2499 = vrot.slane %v2326, %v2498
  %v2500 = vcombine.high %v2499, %v2499
  %v2502 = vunpack.c.l.s4 1966171168
  %v2503 = vunpack.c.0.s8 %v2502
  %v2504 = vlaneseq
  %v2505 = vshrl.u32 %v2504, 7
  %v2506 = vsub.s32 %v2503, %v2505
  %v2507 = vrot.slane %v2499, %v2506
  %v2509 = vunpack.c.l.s4 1966171168
  %v2510 = vunpack.c.0.s8 %v2509
  %v2511 = vlaneseq
  %v2512 = vshrl.u32 %v2511, 7
  %v2513 = vsub.s32 %v2510, %v2512
  %v2514 = vrot.slane %v2500, %v2513
  %v2517 = vunpack.c.l.s4 1966171168
  %v2518 = vunpack.c.0.s8 %v2517
  %v2519 = vlaneseq
  %v2520 = vshrl.u32 %v2519, 7
  %v2521 = vsub.s32 %v2518, %v2520
  %v2522 = vrot.slane %v2327, %v2521
  %v2523 = vcombine.high %v2522, %v2522
  %v2525 = vunpack.c.l.s4 1966171168
  %v2526 = vunpack.c.0.s8 %v2525
  %v2527 = vlaneseq
  %v2528 = vshrl.u32 %v2527, 7
  %v2529 = vsub.s32 %v2526, %v2528
  %v2530 = vrot.slane %v2522, %v2529
  %v2532 = vunpack.c.l.s4 1966171168
  %v2533 = vunpack.c.0.s8 %v2532
  %v2534 = vlaneseq
  %v2535 = vshrl.u32 %v2534, 7
  %v2536 = vsub.s32 %v2533, %v2535
  %v2537 = vrot.slane %v2523, %v2536
  %v2542 = vunpack.c.l.s4 1966171168
  %v2543 = vunpack.c.0.s8 %v2542
  %v2544 = vlaneseq
  %v2545 = vshrl.u32 %v2544, 7
  %v2546 = vsub.s32 %v2543, %v2545
  %v2547 = vrot.slane %v2328, %v2546
  %v2548 = vcombine.high %v2547, %v2547
  %v2550 = vunpack.c.l.s4 1966171168
  %v2551 = vunpack.c.0.s8 %v2550
  %v2552 = vlaneseq
  %v2553 = vshrl.u32 %v2552, 7
  %v2554 = vsub.s32 %v2551, %v2553
  %v2555 = vrot.slane %v2547, %v2554
  %v2557 = vunpack.c.l.s4 1966171168
  %v2558 = vunpack.c.0.s8 %v2557
  %v2559 = vlaneseq
  %v2560 = vshrl.u32 %v2559, 7
  %v2561 = vsub.s32 %v2558, %v2560
  %v2562 = vrot.slane %v2548, %v2561
  %v2563 = vlaneseq
  %v2564 = vshrl.u32 %v2563, 7
  %v2565 = vsub.s32 0, %v2564
  %v2566 = vrot.slane %v2369, %v2565
  %v2567 = vlaneseq
  %v2568 = vshrl.u32 %v2567, 7
  %v2569 = vsub.s32 0, %v2568
  %v2570 = vrot.slane %v2376, %v2569
  %v2573 = vlaneseq
  %v2574 = vshrl.u32 %v2573, 7
  %v2575 = vsub.s32 0, %v2574
  %v2576 = vrot.slane %v2392, %v2575
  %v2577 = vlaneseq
  %v2578 = vshrl.u32 %v2577, 7
  %v2579 = vsub.s32 0, %v2578
  %v2580 = vrot.slane %v2399, %v2579
  %v2583 = vlaneseq
  %v2584 = vshrl.u32 %v2583, 7
  %v2585 = vsub.s32 0, %v2584
  %v2586 = vrot.slane %v2415, %v2585
  %v2587 = vlaneseq
  %v2588 = vshrl.u32 %v2587, 7
  %v2589 = vsub.s32 0, %v2588
  %v2590 = vrot.slane %v2422, %v2589
  %v2593 = vlaneseq
  %v2594 = vshrl.u32 %v2593, 7
  %v2595 = vsub.s32 0, %v2594
  %v2596 = vrot.slane %v2438, %v2595
  %v2597 = vlaneseq
  %v2598 = vshrl.u32 %v2597, 7
  %v2599 = vsub.s32 0, %v2598
  %v2600 = vrot.slane %v2445, %v2599
  %v2603 = vlaneseq
  %v2604 = vshrl.u32 %v2603, 7
  %v2605 = vsub.s32 0, %v2604
  %v2606 = vrot.slane %v2461, %v2605
  %v2607 = vlaneseq
  %v2608 = vshrl.u32 %v2607, 7
  %v2609 = vsub.s32 0, %v2608
  %v2610 = vrot.slane %v2468, %v2609
  %v2613 = vlaneseq
  %v2614 = vshrl.u32 %v2613, 7
  %v2615 = vsub.s32 0, %v2614
  %v2616 = vrot.slane %v2484, %v2615
  %v2617 = vlaneseq
  %v2618 = vshrl.u32 %v2617, 7
  %v2619 = vsub.s32 0, %v2618
  %v2620 = vrot.slane %v2491, %v2619
  %v2623 = vlaneseq
  %v2624 = vshrl.u32 %v2623, 7
  %v2625 = vsub.s32 0, %v2624
  %v2626 = vrot.slane %v2507, %v2625
  %v2627 = vlaneseq
  %v2628 = vshrl.u32 %v2627, 7
  %v2629 = vsub.s32 0, %v2628
  %v2630 = vrot.slane %v2514, %v2629
  %v2633 = vlaneseq
  %v2634 = vshrl.u32 %v2633, 7
  %v2635 = vsub.s32 0, %v2634
  %v2636 = vrot.slane %v2555, %v2635
  %v2637 = vlaneseq
  %v2638 = vshrl.u32 %v2637, 7
  %v2639 = vsub.s32 0, %v2638
  %v2640 = vrot.slane %v2562, %v2639
  %vm2643 = vcmask 1040384
  %v2644 = vsel %vm2643, %v2344, %v2566
  %v2645 = vsel %vm2643, %v2351, %v2570
  %v2646 = vsel %vm678, %v2644, %v2576
  %v2647 = vsel %vm678, %v2645, %v2580
  %vm2648 = vcmask 1042432
  %v2649 = vsel %vm2648, %v2646, %v2586
  %v2650 = vsel %vm2648, %v2647, %v2590
  %v2651 = vsel %vm192, %v2649, %v2596
  %v2652 = vsel %vm192, %v2650, %v2600
  %vm2653 = vcmask 1044480
  %v2654 = vsel %vm2653, %v2651, %v2606
  %v2655 = vsel %vm2653, %v2652, %v2610
  %vm2656 = vcmask 1045504
  %v2657 = vsel %vm2656, %v2654, %v2616
  %v2658 = vsel %vm2656, %v2655, %v2620
  %vm2659 = vcmask 1046528
  %v2660 = vsel %vm2659, %v2657, %v2626
  %v2661 = vsel %vm2659, %v2658, %v2630
  %v2662 = vsel %vm2643, %v2530, %v2636
  %v2663 = vsel %vm2643, %v2537, %v2640
  %2668 = vrot.lane.b32.xlu0 %v2660, 36
  %v2669 = vpop.permute.xlu0 %2668
  %2670 = vrot.lane.b32.xlu0 %v2662, 36
  %v2671 = vpop.permute.xlu0 %2670
  %2672 = vrot.lane.b32.xlu0 %v2661, 36
  %v2673 = vpop.permute.xlu0 %2672
  %2674 = vrot.lane.b32.xlu0 %v2663, 36
  %v2675 = vpop.permute.xlu0 %2674
  %v2680 = vsel %vm185, %v50, %v2669
  %v2681 = vsel %vm185, %v51, %v2671
  %v2682 = vsel %vm185, %v52, %v2673
  %v2683 = vsel %vm185, %v53, %v2675
  %v2688 = vcombine.high %v2680, %v2680
  %v2690 = vunpack.c.l.s4 1983009808
  %v2691 = vunpack.c.0.s8 %v2690
  %v2692 = vlaneseq
  %v2693 = vshrl.u32 %v2692, 7
  %v2694 = vsub.s32 %v2691, %v2693
  %v2695 = vrot.slane %v2680, %v2694
  %v2697 = vunpack.c.l.s4 1983009808
  %v2698 = vunpack.c.0.s8 %v2697
  %v2699 = vlaneseq
  %v2700 = vshrl.u32 %v2699, 7
  %v2701 = vsub.s32 %v2698, %v2700
  %v2702 = vrot.slane %v2688, %v2701
  %v2703 = vcombine.high %v2695, %v2695
  %v2704 = vcombine.high %v2702, %v2702
  %v2706 = vunpack.c.l.s4 1983009808
  %v2707 = vunpack.c.0.s8 %v2706
  %v2708 = vlaneseq
  %v2709 = vshrl.u32 %v2708, 7
  %v2710 = vsub.s32 %v2707, %v2709
  %v2711 = vrot.slane %v2681, %v2710
  %v2712 = vcombine.high %v2682, %v2682
  %v2714 = vunpack.c.l.s4 1983009808
  %v2715 = vunpack.c.0.s8 %v2714
  %v2716 = vlaneseq
  %v2717 = vshrl.u32 %v2716, 7
  %v2718 = vsub.s32 %v2715, %v2717
  %v2719 = vrot.slane %v2682, %v2718
  %v2721 = vunpack.c.l.s4 1983009808
  %v2722 = vunpack.c.0.s8 %v2721
  %v2723 = vlaneseq
  %v2724 = vshrl.u32 %v2723, 7
  %v2725 = vsub.s32 %v2722, %v2724
  %v2726 = vrot.slane %v2712, %v2725
  %v2727 = vcombine.high %v2719, %v2719
  %v2728 = vcombine.high %v2726, %v2726
  %v2730 = vunpack.c.l.s4 1983009808
  %v2731 = vunpack.c.0.s8 %v2730
  %v2732 = vlaneseq
  %v2733 = vshrl.u32 %v2732, 7
  %v2734 = vsub.s32 %v2731, %v2733
  %v2735 = vrot.slane %v2683, %v2734
  %v2736 = vld [vmem:[%s8] sm:$0xff]
  %v2737 = vld [vmem:[%s8 + $0x8] sm:$0xff]
  %v2738 = vld [vmem:[%s8 + $0x10] sm:$0xff]
  %v2739 = vld [vmem:[%s8 + $0x18] sm:$0xff]
  %v2740 = vld [vmem:[%s8 + $0x20] sm:$0xff]
  %v2741 = vld [vmem:[%s8 + $0x28] sm:$0xff]
  %v2742 = vld [vmem:[%s8 + $0x30] sm:$0xff]
  %v2743 = vld [vmem:[%s8 + $0x38] sm:$0xff]
  %v2744 = vld [vmem:[%s8 + $0x40] sm:$0xff]
  %v2745 = vld [vmem:[%s8 + $0x48] sm:$0xff]
  %v2746 = vld [vmem:[%s8 + $0x50] sm:$0xff]
  %v2747 = vld [vmem:[%s8 + $0x58] sm:$0xff]
  %v2748 = vld [vmem:[%s8 + $0x60] sm:$0xff]
  %v2749 = vld [vmem:[%s8 + $0x68] sm:$0xff]
  %v2750 = vld [vmem:[%s8 + $0x70] sm:$0xff]
  %v2751 = vld [vmem:[%s8 + $0x78] sm:$0xff]
  %v2752 = vld [vmem:[%s8 + $0x80] sm:$0xf]
  %v2753 = vld [vmem:[%s8 + $0x88] sm:$0xf]
  %v2754 = vld [vmem:[%s9] sm:$0x3]
  %v2755 = vld [vmem:[%s10] sm:$0xff]
  %v2756 = vld [vmem:[%s10 + $0x8] sm:$0xff]
  %v2757 = vld [vmem:[%s10 + $0x10] sm:$0xff]
  %v2758 = vld [vmem:[%s10 + $0x18] sm:$0xff]
  %v2759 = vld [vmem:[%s10 + $0x20] sm:$0xff]
  %v2760 = vld [vmem:[%s10 + $0x28] sm:$0xff]
  %v2761 = vld [vmem:[%s10 + $0x30] sm:$0xff]
  %v2762 = vld [vmem:[%s10 + $0x38] sm:$0xff]
  %v2763 = vld [vmem:[%s10 + $0x40] sm:$0xf]
  %v2764 = vld [vmem:[%s11] sm:$0x1]
  %v2766 = vlaneseq
  %v2767 = vshrl.u32 %v2766, 7
  %v2768 = vsub.s32 0, %v2767
  %v2769 = vrot.slane %v2754, %v2768
  %v2770 = vlaneseq
  %v2771 = vshrl.u32 %v2770, 7
  %v2772 = vsub.s32 1, %v2771
  %v2773 = vrot.slane %v2754, %v2772
  %v2776 = vcombine.low %v2695, %v2703
  %v2777 = vcombine.low %v2702, %v2704
  %v2779 = vunpack.c.l.s4 1983009808
  %v2780 = vunpack.c.0.s8 %v2779
  %v2781 = vlaneseq
  %v2782 = vshrl.u32 %v2781, 7
  %v2783 = vsub.s32 %v2780, %v2782
  %v2784 = vrot.slane %v2776, %v2783
  %v2786 = vunpack.c.l.s4 1983009808
  %v2787 = vunpack.c.0.s8 %v2786
  %v2788 = vlaneseq
  %v2789 = vshrl.u32 %v2788, 7
  %v2790 = vsub.s32 %v2787, %v2789
  %v2791 = vrot.slane %v2777, %v2790
  %v2792 = vcombine.low %v2784, %v2791
  %v2793 = vcombine.low %v2711, %v2719
  %v2794 = vcombine.low %v2727, %v2726
  %v2796 = vunpack.c.l.s4 1983009808
  %v2797 = vunpack.c.0.s8 %v2796
  %v2798 = vlaneseq
  %v2799 = vshrl.u32 %v2798, 7
  %v2800 = vsub.s32 %v2797, %v2799
  %v2801 = vrot.slane %v2793, %v2800
  %v2803 = vunpack.c.l.s4 1983009808
  %v2804 = vunpack.c.0.s8 %v2803
  %v2805 = vlaneseq
  %v2806 = vshrl.u32 %v2805, 7
  %v2807 = vsub.s32 %v2804, %v2806
  %v2808 = vrot.slane %v2794, %v2807
  %v2809 = vcombine.low %v2801, %v2808
  %v2810 = vcombine.low %v2728, %v2735
  %v2812 = vunpack.c.l.s4 1983009808
  %v2813 = vunpack.c.0.s8 %v2812
  %v2814 = vlaneseq
  %v2815 = vshrl.u32 %v2814, 7
  %v2816 = vsub.s32 %v2813, %v2815
  %v2817 = vrot.slane %v2810, %v2816
  %vm2818 = vcmask 556032
  %v2819 = vsel %vm2818, %v2792, 0
  %v2821 = vsel %vm2818, %v2809, 0
  %v2823 = vsel %vm2818, %v2817, 0
  %v2826 = vsel %vm192, %v2752, 0
  %v2829 = vsel %vm192, %v2753, 0
  %2831 = vmatprep.subr.mxu0 %v2737
  %2832 = vmatpush1.msra.mxu0 %v2736
  %2833 = vmatprep.subr.mxu0 %v2739
  %2834 = vmatpush1.msra.mxu0 %v2738
  %2835 = vmatprep.subr.mxu0 %v2741
  %2836 = vmatpush1.msra.mxu0 %v2740
  %2837 = vmatprep.subr.mxu0 %v2743
  %2838 = vmatpush1.msra.mxu0 %v2742
  %2839 = vmatprep.subr.mxu0 %v2745
  %2840 = vmatpush1.msra.mxu0 %v2744
  %2841 = vmatprep.subr.mxu0 %v2747
  %2842 = vmatpush1.msra.mxu0 %v2746
  %2843 = vmatprep.subr.mxu0 %v2749
  %2844 = vmatpush1.msra.mxu0 %v2748
  %2845 = vmatprep.subr.mxu0 %v2751
  %2846 = vmatpush1.msra.mxu0 %v2750
  %2847 = vmatprep.subr.mxu0 %v2829
  %2848 = vmatpush1.msra.mxu0 %v2826
  %2849 = vmatprep.subr.mxu0 0.0
  %2850 = vmatpush1.msra.mxu0 0.0
  %2851 = vmatprep.subr.mxu0 0.0
  %2852 = vmatpush1.msra.mxu0 0.0
  %2853 = vmatprep.subr.mxu0 0.0
  %2854 = vmatpush1.msra.mxu0 0.0
  %2855 = vmatprep.subr.mxu0 0.0
  %2856 = vmatpush1.msra.mxu0 0.0
  %2857 = vmatprep.subr.mxu0 0.0
  %2858 = vmatpush1.msra.mxu0 0.0
  %2859 = vmatprep.subr.mxu0 0.0
  %2860 = vmatpush1.msra.mxu0 0.0
  %2861 = vmatprep.subr.mxu0 0.0
  %2862 = vmatpush1.msra.mxu0 0.0
  %2863 = vmatprep.subr.mxu0 0.0
  %2864 = vmatpush1.msra.mxu0 0.0
  %2865 = vmatprep.subr.mxu0 0.0
  %2866 = vmatpush1.msra.mxu0 0.0
  %2867 = vmatprep.subr.mxu0 0.0
  %2868 = vmatpush1.msra.mxu0 0.0
  %2869 = vmatprep.subr.mxu0 0.0
  %2870 = vmatpush1.msra.mxu0 0.0
  %2871 = vmatprep.subr.mxu0 0.0
  %2872 = vmatpush1.msra.mxu0 0.0
  %2873 = vmatprep.subr.mxu0 0.0
  %2874 = vmatpush1.msra.mxu0 0.0
  %2875 = vmatprep.subr.mxu0 0.0
  %2876 = vmatpush1.msra.mxu0 0.0
  %2877 = vmatprep.subr.mxu0 0.0
  %2878 = vmatpush1.msra.mxu0 0.0
  %2879 = vmatprep.subr.mxu0 0.0
  %2880 = vmatpush1.msra.mxu0 0.0
  %2881 = vmatprep.subr.mxu0 0.0
  %2882 = vmatpush1.msra.mxu0 0.0
  %2883 = vmatprep.subr.mxu0 0.0
  %2884 = vmatpush1.msra.mxu0 0.0
  %2885 = vmatprep.subr.mxu0 0.0
  %2886 = vmatpush1.msra.mxu0 0.0
  %2887 = vmatprep.subr.mxu0 0.0
  %2888 = vmatpush1.msra.mxu0 0.0
  %2889 = vmatprep.subr.mxu0 0.0
  %2890 = vmatpush1.msra.mxu0 0.0
  %2891 = vmatprep.subr.mxu0 0.0
  %2892 = vmatpush1.msra.mxu0 0.0
  %2893 = vmatprep.subr.mxu0 0.0
  %2894 = vmatpush1.msra.mxu0 0.0
  %2895 = vmatprep.mubr.f32.mxu0 0.0
  %2896 = vmatmul.mubr.f32.gmra.mrb[0].mxu0 %v2819
  %v2897 = vpop.f32.mrb[0].mxu0
  %v2898 = vadd.f32 %v2769, %v2897
  %v2899 = vpop.f32.mrb[0].mxu0
  %v2900 = vadd.f32 %v2773, %v2899
  %2901 = vmatprep.mubr.f32.mxu0 0.0
  %2902 = vmatmul.mubr.f32.gmra.mrb[0].mxu0 %v2821
  %v2903 = vpop.f32.mrb[0].mxu0
  %v2904 = vadd.f32 %v2769, %v2903
  %v2905 = vpop.f32.mrb[0].mxu0
  %v2906 = vadd.f32 %v2773, %v2905
  %2907 = vmatprep.mubr.f32.mxu0 0.0
  %2908 = vmatmul.mubr.f32.gmra.mrb[0].mxu0 %v2823
  %v2909 = vpop.f32.mrb[0].mxu0
  %v2910 = vadd.f32 %v2769, %v2909
  %v2911 = vpop.f32.mrb[0].mxu0
  %v2912 = vadd.f32 %v2773, %v2911
  %2913 = vdwg.mxu0
  %v2920 = vcombine.low %v2898, %v2900
  %v2921 = vcombine.high %v2898, %v2900
  %v2923 = vunpack.c.l.s4 1983009808
  %v2924 = vunpack.c.0.s8 %v2923
  %v2925 = vlaneseq
  %v2926 = vshrl.u32 %v2925, 7
  %v2927 = vsub.s32 %v2924, %v2926
  %v2928 = vrot.slane %v2920, %v2927
  %v2930 = vunpack.c.l.s4 1983009808
  %v2931 = vunpack.c.0.s8 %v2930
  %v2932 = vlaneseq
  %v2933 = vshrl.u32 %v2932, 7
  %v2934 = vsub.s32 %v2931, %v2933
  %v2935 = vrot.slane %v2921, %v2934
  %v2936 = vcombine.high %v2928, %v2928
  %v2937 = vcombine.high %v2935, %v2935
  %v2938 = vcombine.low %v2904, %v2906
  %v2939 = vcombine.high %v2904, %v2906
  %v2941 = vunpack.c.l.s4 1983009808
  %v2942 = vunpack.c.0.s8 %v2941
  %v2943 = vlaneseq
  %v2944 = vshrl.u32 %v2943, 7
  %v2945 = vsub.s32 %v2942, %v2944
  %v2946 = vrot.slane %v2938, %v2945
  %v2948 = vunpack.c.l.s4 1983009808
  %v2949 = vunpack.c.0.s8 %v2948
  %v2950 = vlaneseq
  %v2951 = vshrl.u32 %v2950, 7
  %v2952 = vsub.s32 %v2949, %v2951
  %v2953 = vrot.slane %v2939, %v2952
  %v2954 = vcombine.high %v2946, %v2946
  %v2955 = vcombine.high %v2953, %v2953
  %v2956 = vcombine.low %v2910, %v2912
  %v2958 = vunpack.c.l.s4 1983009808
  %v2959 = vunpack.c.0.s8 %v2958
  %v2960 = vlaneseq
  %v2961 = vshrl.u32 %v2960, 7
  %v2962 = vsub.s32 %v2959, %v2961
  %v2963 = vrot.slane %v2956, %v2962
  %v2964 = vcombine.high %v2963, %v2963
  %v2975 = vmul.f32 %v2928, 0.12126781
  %v2976 = vmul.f32 %v2936, 0.12126781
  %v2977 = vmul.f32 %v2935, 0.12126781
  %v2978 = vmul.f32 %v2937, 0.12126781
  %v2979 = vmul.f32 %v2946, 0.12126781
  %v2980 = vmul.f32 %v2954, 0.12126781
  %v2981 = vmul.f32 %v2953, 0.12126781
  %v2982 = vmul.f32 %v2955, 0.12126781
  %v2983 = vmul.f32 %v2963, 0.12126781
  %v2984 = vmul.f32 %v2964, 0.12126781
  %v2990 = vcombine.low %v2975, %v2976
  %v2991 = vcombine.low %v2977, %v2978
  %v2993 = vunpack.c.l.s4 1983009808
  %v2994 = vunpack.c.0.s8 %v2993
  %v2995 = vlaneseq
  %v2996 = vshrl.u32 %v2995, 7
  %v2997 = vsub.s32 %v2994, %v2996
  %v2998 = vrot.slane %v2990, %v2997
  %v3000 = vunpack.c.l.s4 1983009808
  %v3001 = vunpack.c.0.s8 %v3000
  %v3002 = vlaneseq
  %v3003 = vshrl.u32 %v3002, 7
  %v3004 = vsub.s32 %v3001, %v3003
  %v3005 = vrot.slane %v2991, %v3004
  %v3006 = vcombine.low %v2998, %v3005
  %v3008 = vunpack.c.l.s4 1983009808
  %v3009 = vunpack.c.0.s8 %v3008
  %v3010 = vlaneseq
  %v3011 = vshrl.u32 %v3010, 7
  %v3012 = vsub.s32 %v3009, %v3011
  %v3013 = vrot.slane %v2979, %v3012
  %v3014 = vcombine.low %v2928, %v2936
  %v3015 = vcombine.low %v2935, %v2937
  %v3017 = vunpack.c.l.s4 1983009808
  %v3018 = vunpack.c.0.s8 %v3017
  %v3019 = vlaneseq
  %v3020 = vshrl.u32 %v3019, 7
  %v3021 = vsub.s32 %v3018, %v3020
  %v3022 = vrot.slane %v3014, %v3021
  %v3024 = vunpack.c.l.s4 1983009808
  %v3025 = vunpack.c.0.s8 %v3024
  %v3026 = vlaneseq
  %v3027 = vshrl.u32 %v3026, 7
  %v3028 = vsub.s32 %v3025, %v3027
  %v3029 = vrot.slane %v3015, %v3028
  %v3030 = vcombine.low %v3022, %v3029
  %v3031 = vcombine.high %v3022, %v3029
  %v3033 = vunpack.c.l.s4 1983009808
  %v3034 = vunpack.c.0.s8 %v3033
  %v3035 = vlaneseq
  %v3036 = vshrl.u32 %v3035, 7
  %v3037 = vsub.s32 %v3034, %v3036
  %v3038 = vrot.slane %v2946, %v3037
  %v3039 = vcombine.high %v3038, %v3038
  %3040 = vrot.lane.b32.xlu0 %v3030, 60
  %v3041 = vpop.permute.xlu0 %3040
  %3042 = vrot.lane.b32.xlu0 %v3031, 60
  %v3043 = vpop.permute.xlu0 %3042
  %3044 = vrot.lane.b32.xlu0 %v3038, 60
  %v3045 = vpop.permute.xlu0 %3044
  %3046 = vrot.lane.b32.xlu0 %v3039, 60
  %v3047 = vpop.permute.xlu0 %3046
  %vm3048 = vcmask 490496
  %v3049 = vsel %vm3048, %v3041, %v3043
  %v3050 = vsel %vm3048, %v3045, %v3047
  %v3051 = vsel %vm2818, %v3006, 0
  %v3053 = vsel %vm2818, %v3013, 0
  %v3055 = vsel %vm2818, %v3049, 0
  %v3057 = vsel %vm2818, %v3050, 0
  %3059 = vmatprep.subr.mxu0 0.0
  %3060 = vmatpush1.xpose.msra.mxu0 %v3055
  %3061 = vmatprep.subr.mxu0 0.0
  %3062 = vmatpush1.xpose.msra.mxu0 %v3057
  %3063 = vmatprep.subr.mxu0 0.0
  %3064 = vmatpush1.xpose.msra.mxu0 0.0
  %3065 = vmatprep.subr.mxu0 0.0
  %3066 = vmatpush1.xpose.msra.mxu0 0.0
  %3067 = vmatprep.subr.mxu0 0.0
  %3068 = vmatpush1.xpose.msra.mxu0 0.0
  %3069 = vmatprep.subr.mxu0 0.0
  %3070 = vmatpush1.xpose.msra.mxu0 0.0
  %3071 = vmatprep.subr.mxu0 0.0
  %3072 = vmatpush1.xpose.msra.mxu0 0.0
  %3073 = vmatprep.subr.mxu0 0.0
  %3074 = vmatpush1.xpose.msra.mxu0 0.0
  %3075 = vmatprep.subr.mxu0 0.0
  %3076 = vmatpush1.xpose.msra.mxu0 0.0
  %3077 = vmatprep.subr.mxu0 0.0
  %3078 = vmatpush1.xpose.msra.mxu0 0.0
  %3079 = vmatprep.subr.mxu0 0.0
  %3080 = vmatpush1.xpose.msra.mxu0 0.0
  %3081 = vmatprep.subr.mxu0 0.0
  %3082 = vmatpush1.xpose.msra.mxu0 0.0
  %3083 = vmatprep.subr.mxu0 0.0
  %3084 = vmatpush1.xpose.msra.mxu0 0.0
  %3085 = vmatprep.subr.mxu0 0.0
  %3086 = vmatpush1.xpose.msra.mxu0 0.0
  %3087 = vmatprep.subr.mxu0 0.0
  %3088 = vmatpush1.xpose.msra.mxu0 0.0
  %3089 = vmatprep.subr.mxu0 0.0
  %3090 = vmatpush1.xpose.msra.mxu0 0.0
  %3091 = vmatprep.subr.mxu0 0.0
  %3092 = vmatpush1.xpose.msra.mxu0 0.0
  %3093 = vmatprep.subr.mxu0 0.0
  %3094 = vmatpush1.xpose.msra.mxu0 0.0
  %3095 = vmatprep.subr.mxu0 0.0
  %3096 = vmatpush1.xpose.msra.mxu0 0.0
  %3097 = vmatprep.subr.mxu0 0.0
  %3098 = vmatpush1.xpose.msra.mxu0 0.0
  %3099 = vmatprep.subr.mxu0 0.0
  %3100 = vmatpush1.xpose.msra.mxu0 0.0
  %3101 = vmatprep.subr.mxu0 0.0
  %3102 = vmatpush1.xpose.msra.mxu0 0.0
  %3103 = vmatprep.subr.mxu0 0.0
  %3104 = vmatpush1.xpose.msra.mxu0 0.0
  %3105 = vmatprep.subr.mxu0 0.0
  %3106 = vmatpush1.xpose.msra.mxu0 0.0
  %3107 = vmatprep.subr.mxu0 0.0
  %3108 = vmatpush1.xpose.msra.mxu0 0.0
  %3109 = vmatprep.subr.mxu0 0.0
  %3110 = vmatpush1.xpose.msra.mxu0 0.0
  %3111 = vmatprep.subr.mxu0 0.0
  %3112 = vmatpush1.xpose.msra.mxu0 0.0
  %3113 = vmatprep.subr.mxu0 0.0
  %3114 = vmatpush1.xpose.msra.mxu0 0.0
  %3115 = vmatprep.subr.mxu0 0.0
  %3116 = vmatpush1.xpose.msra.mxu0 0.0
  %3117 = vmatprep.subr.mxu0 0.0
  %3118 = vmatpush1.xpose.msra.mxu0 0.0
  %3119 = vmatprep.subr.mxu0 0.0
  %3120 = vmatpush1.xpose.msra.mxu0 0.0
  %3121 = vmatprep.subr.mxu0 0.0
  %3122 = vmatpush1.xpose.msra.mxu0 0.0
  %3123 = vmatprep.mubr.f32.mxu0 0.0
  %3124 = vmatmul.mubr.f32.gmra.mrb[0].mxu0 %v3051
  %v3125 = vpop.f32.mrb[0].mxu0
  %v3126 = vadd.f32 0.0, %v3125
  %v3127 = vpop.f32.mrb[0].mxu0
  %3128 = vmatprep.mubr.f32.mxu0 0.0
  %3129 = vmatmul.mubr.f32.gmra.mrb[0].mxu0 %v3053
  %v3130 = vpop.f32.mrb[0].mxu0
  %v3131 = vadd.f32 0.0, %v3130
  %v3132 = vpop.f32.mrb[0].mxu0
  %3133 = vdwg.mxu0
  %v3139 = vcombine.low %v2980, %v2981
  %v3140 = vcombine.low %v2982, %v2983
  %v3142 = vunpack.c.l.s4 1983009808
  %v3143 = vunpack.c.0.s8 %v3142
  %v3144 = vlaneseq
  %v3145 = vshrl.u32 %v3144, 7
  %v3146 = vsub.s32 %v3143, %v3145
  %v3147 = vrot.slane %v3139, %v3146
  %v3149 = vunpack.c.l.s4 1983009808
  %v3150 = vunpack.c.0.s8 %v3149
  %v3151 = vlaneseq
  %v3152 = vshrl.u32 %v3151, 7
  %v3153 = vsub.s32 %v3150, %v3152
  %v3154 = vrot.slane %v3140, %v3153
  %v3155 = vcombine.low %v3147, %v3154
  %v3157 = vunpack.c.l.s4 1983009808
  %v3158 = vunpack.c.0.s8 %v3157
  %v3159 = vlaneseq
  %v3160 = vshrl.u32 %v3159, 7
  %v3161 = vsub.s32 %v3158, %v3160
  %v3162 = vrot.slane %v2984, %v3161
  %v3163 = vcombine.low %v2954, %v2953
  %v3164 = vcombine.low %v2955, %v2963
  %v3166 = vunpack.c.l.s4 1983009808
  %v3167 = vunpack.c.0.s8 %v3166
  %v3168 = vlaneseq
  %v3169 = vshrl.u32 %v3168, 7
  %v3170 = vsub.s32 %v3167, %v3169
  %v3171 = vrot.slane %v3163, %v3170
  %v3173 = vunpack.c.l.s4 1983009808
  %v3174 = vunpack.c.0.s8 %v3173
  %v3175 = vlaneseq
  %v3176 = vshrl.u32 %v3175, 7
  %v3177 = vsub.s32 %v3174, %v3176
  %v3178 = vrot.slane %v3164, %v3177
  %v3179 = vcombine.low %v3171, %v3178
  %v3180 = vcombine.high %v3171, %v3178
  %v3182 = vunpack.c.l.s4 1983009808
  %v3183 = vunpack.c.0.s8 %v3182
  %v3184 = vlaneseq
  %v3185 = vshrl.u32 %v3184, 7
  %v3186 = vsub.s32 %v3183, %v3185
  %v3187 = vrot.slane %v2964, %v3186
  %v3188 = vcombine.high %v3187, %v3187
  %3189 = vrot.lane.b32.xlu0 %v3179, 60
  %v3190 = vpop.permute.xlu0 %3189
  %3191 = vrot.lane.b32.xlu0 %v3180, 60
  %v3192 = vpop.permute.xlu0 %3191
  %3193 = vrot.lane.b32.xlu0 %v3187, 60
  %v3194 = vpop.permute.xlu0 %3193
  %3195 = vrot.lane.b32.xlu0 %v3188, 60
  %v3196 = vpop.permute.xlu0 %3195
  %v3197 = vsel %vm3048, %v3190, %v3192
  %v3198 = vsel %vm3048, %v3194, %v3196
  %v3199 = vsel %vm2818, %v3155, 0
  %v3201 = vsel %vm2818, %v3162, 0
  %v3203 = vsel %vm2818, %v3197, 0
  %v3205 = vsel %vm2818, %v3198, 0
  %3207 = vmatprep.subr.mxu0 0.0
  %3208 = vmatpush1.xpose.msra.mxu0 %v3203
  %3209 = vmatprep.subr.mxu0 0.0
  %3210 = vmatpush1.xpose.msra.mxu0 %v3205
  %3211 = vmatprep.subr.mxu0 0.0
  %3212 = vmatpush1.xpose.msra.mxu0 0.0
  %3213 = vmatprep.subr.mxu0 0.0
  %3214 = vmatpush1.xpose.msra.mxu0 0.0
  %3215 = vmatprep.subr.mxu0 0.0
  %3216 = vmatpush1.xpose.msra.mxu0 0.0
  %3217 = vmatprep.subr.mxu0 0.0
  %3218 = vmatpush1.xpose.msra.mxu0 0.0
  %3219 = vmatprep.subr.mxu0 0.0
  %3220 = vmatpush1.xpose.msra.mxu0 0.0
  %3221 = vmatprep.subr.mxu0 0.0
  %3222 = vmatpush1.xpose.msra.mxu0 0.0
  %3223 = vmatprep.subr.mxu0 0.0
  %3224 = vmatpush1.xpose.msra.mxu0 0.0
  %3225 = vmatprep.subr.mxu0 0.0
  %3226 = vmatpush1.xpose.msra.mxu0 0.0
  %3227 = vmatprep.subr.mxu0 0.0
  %3228 = vmatpush1.xpose.msra.mxu0 0.0
  %3229 = vmatprep.subr.mxu0 0.0
  %3230 = vmatpush1.xpose.msra.mxu0 0.0
  %3231 = vmatprep.subr.mxu0 0.0
  %3232 = vmatpush1.xpose.msra.mxu0 0.0
  %3233 = vmatprep.subr.mxu0 0.0
  %3234 = vmatpush1.xpose.msra.mxu0 0.0
  %3235 = vmatprep.subr.mxu0 0.0
  %3236 = vmatpush1.xpose.msra.mxu0 0.0
  %3237 = vmatprep.subr.mxu0 0.0
  %3238 = vmatpush1.xpose.msra.mxu0 0.0
  %3239 = vmatprep.subr.mxu0 0.0
  %3240 = vmatpush1.xpose.msra.mxu0 0.0
  %3241 = vmatprep.subr.mxu0 0.0
  %3242 = vmatpush1.xpose.msra.mxu0 0.0
  %3243 = vmatprep.subr.mxu0 0.0
  %3244 = vmatpush1.xpose.msra.mxu0 0.0
  %3245 = vmatprep.subr.mxu0 0.0
  %3246 = vmatpush1.xpose.msra.mxu0 0.0
  %3247 = vmatprep.subr.mxu0 0.0
  %3248 = vmatpush1.xpose.msra.mxu0 0.0
  %3249 = vmatprep.subr.mxu0 0.0
  %3250 = vmatpush1.xpose.msra.mxu0 0.0
  %3251 = vmatprep.subr.mxu0 0.0
  %3252 = vmatpush1.xpose.msra.mxu0 0.0
  %3253 = vmatprep.subr.mxu0 0.0
  %3254 = vmatpush1.xpose.msra.mxu0 0.0
  %3255 = vmatprep.subr.mxu0 0.0
  %3256 = vmatpush1.xpose.msra.mxu0 0.0
  %3257 = vmatprep.subr.mxu0 0.0
  %3258 = vmatpush1.xpose.msra.mxu0 0.0
  %3259 = vmatprep.subr.mxu0 0.0
  %3260 = vmatpush1.xpose.msra.mxu0 0.0
  %3261 = vmatprep.subr.mxu0 0.0
  %3262 = vmatpush1.xpose.msra.mxu0 0.0
  %3263 = vmatprep.subr.mxu0 0.0
  %3264 = vmatpush1.xpose.msra.mxu0 0.0
  %3265 = vmatprep.subr.mxu0 0.0
  %3266 = vmatpush1.xpose.msra.mxu0 0.0
  %3267 = vmatprep.subr.mxu0 0.0
  %3268 = vmatpush1.xpose.msra.mxu0 0.0
  %3269 = vmatprep.subr.mxu0 0.0
  %3270 = vmatpush1.xpose.msra.mxu0 0.0
  %3271 = vmatprep.mubr.f32.mxu0 0.0
  %3272 = vmatmul.mubr.f32.gmra.mrb[0].mxu0 %v3199
  %v3273 = vpop.f32.mrb[0].mxu0
  %v3274 = vadd.f32 0.0, %v3273
  %v3275 = vpop.f32.mrb[0].mxu0
  %3276 = vmatprep.mubr.f32.mxu0 0.0
  %3277 = vmatmul.mubr.f32.gmra.mrb[0].mxu0 %v3201
  %v3278 = vpop.f32.mrb[0].mxu0
  %v3279 = vadd.f32 0.0, %v3278
  %v3280 = vpop.f32.mrb[0].mxu0
  %3281 = vdwg.mxu0
  %v3282 = vsel %vm621, %v3126, -inf
  %3283 = vmax.xlane.f32.xlu0 %v3282
  %v3284 = vpop.xlane.xlu0 %3283
  %v3285 = vsel %vm625, %v3131, -inf
  %3286 = vmax.xlane.f32.xlu0 %v3285
  %v3287 = vpop.xlane.xlu0 %3286
  %v3288 = vsel %vm621, %v3274, -inf
  %3289 = vmax.xlane.f32.xlu0 %v3288
  %v3290 = vpop.xlane.xlu0 %3289
  %v3291 = vsel %vm625, %v3279, -inf
  %3292 = vmax.xlane.f32.xlu0 %v3291
  %v3293 = vpop.xlane.xlu0 %3292
  %v3294 = vsub.f32 %v3126, %v3284
  %v3295 = vsub.f32 %v3131, %v3287
  %v3296 = vsub.f32 %v3274, %v3290
  %v3297 = vsub.f32 %v3279, %v3293
  %v3298 = vmul.f32 %v3294, 1.442695
  %v3299 = vpow.pop %v3298
  %v3300 = vmul.f32 %v3295, 1.442695
  %v3301 = vpow.pop %v3300
  %v3302 = vmul.f32 %v3296, 1.442695
  %v3303 = vpow.pop %v3302
  %v3304 = vmul.f32 %v3297, 1.442695
  %v3305 = vpow.pop %v3304
  %v3306 = vsel %vm621, %v3299, 0.0
  %3307 = vadd.xlane.f32.xlu0 %v3306
  %v3308 = vpop.xlane.xlu0 %3307
  %v3309 = vsel %vm625, %v3301, 0.0
  %3310 = vadd.xlane.f32.xlu0 %v3309
  %v3311 = vpop.xlane.xlu0 %3310
  %v3312 = vsel %vm621, %v3303, 0.0
  %3313 = vadd.xlane.f32.xlu0 %v3312
  %v3314 = vpop.xlane.xlu0 %3313
  %v3315 = vsel %vm625, %v3305, 0.0
  %3316 = vadd.xlane.f32.xlu0 %v3315
  %v3317 = vpop.xlane.xlu0 %3316
  %v3318 = vrcp.pop %v3308
  %v3319 = vmul.f32 %v3299, %v3318
  %v3320 = vrcp.pop %v3311
  %v3321 = vmul.f32 %v3301, %v3320
  %v3322 = vrcp.pop %v3314
  %v3323 = vmul.f32 %v3303, %v3322
  %v3324 = vrcp.pop %v3317
  %v3325 = vmul.f32 %v3305, %v3324
  %3326 = vrot.lane.b32.xlu0 %v2928, 120
  %v3327 = vpop.permute.xlu0 %3326
  %3328 = vrot.lane.b32.xlu0 %v2936, 120
  %v3329 = vpop.permute.xlu0 %3328
  %3330 = vrot.lane.b32.xlu0 %v2935, 120
  %v3331 = vpop.permute.xlu0 %3330
  %3332 = vrot.lane.b32.xlu0 %v2937, 120
  %v3333 = vpop.permute.xlu0 %3332
  %3334 = vrot.lane.b32.xlu0 %v2946, 120
  %v3335 = vpop.permute.xlu0 %3334
  %v3336 = vrot.slane %v3327, 2
  %v3337 = vrot.slane %v3329, 2
  %v3338 = vrot.slane %v3331, 2
  %v3339 = vrot.slane %v3333, 2
  %v3340 = vrot.slane %v3335, 2
  %v3341 = vcombine.low %v3336, %v3337
  %v3342 = vcombine.low %v3338, %v3339
  %v3344 = vunpack.c.l.s4 1983009808
  %v3345 = vunpack.c.0.s8 %v3344
  %v3346 = vlaneseq
  %v3347 = vshrl.u32 %v3346, 7
  %v3348 = vsub.s32 %v3345, %v3347
  %v3349 = vrot.slane %v3341, %v3348
  %v3351 = vunpack.c.l.s4 1983009808
  %v3352 = vunpack.c.0.s8 %v3351
  %v3353 = vlaneseq
  %v3354 = vshrl.u32 %v3353, 7
  %v3355 = vsub.s32 %v3352, %v3354
  %v3356 = vrot.slane %v3342, %v3355
  %v3357 = vcombine.low %v3349, %v3356
  %v3359 = vunpack.c.l.s4 1983009808
  %v3360 = vunpack.c.0.s8 %v3359
  %v3361 = vlaneseq
  %v3362 = vshrl.u32 %v3361, 7
  %v3363 = vsub.s32 %v3360, %v3362
  %v3364 = vrot.slane %v3340, %v3363
  %v3367 = vsel %vm621, %v3319, 0
  %v3370 = vsel %vm621, %v3321, 0
  %v3372 = vsel %vm678, %v3364, 0
  %3374 = vmatprep.subr.mxu0 0.0
  %3375 = vmatpush1.msra.mxu0 %v3357
  %3376 = vmatprep.subr.mxu0 0.0
  %3377 = vmatpush1.msra.mxu0 %v3372
  %3378 = vmatprep.subr.mxu0 0.0
  %3379 = vmatpush1.msra.mxu0 0.0
  %3380 = vmatprep.subr.mxu0 0.0
  %3381 = vmatpush1.msra.mxu0 0.0
  %3382 = vmatprep.subr.mxu0 0.0
  %3383 = vmatpush1.msra.mxu0 0.0
  %3384 = vmatprep.subr.mxu0 0.0
  %3385 = vmatpush1.msra.mxu0 0.0
  %3386 = vmatprep.subr.mxu0 0.0
  %3387 = vmatpush1.msra.mxu0 0.0
  %3388 = vmatprep.subr.mxu0 0.0
  %3389 = vmatpush1.msra.mxu0 0.0
  %3390 = vmatprep.subr.mxu0 0.0
  %3391 = vmatpush1.msra.mxu0 0.0
  %3392 = vmatprep.subr.mxu0 0.0
  %3393 = vmatpush1.msra.mxu0 0.0
  %3394 = vmatprep.subr.mxu0 0.0
  %3395 = vmatpush1.msra.mxu0 0.0
  %3396 = vmatprep.subr.mxu0 0.0
  %3397 = vmatpush1.msra.mxu0 0.0
  %3398 = vmatprep.subr.mxu0 0.0
  %3399 = vmatpush1.msra.mxu0 0.0
  %3400 = vmatprep.subr.mxu0 0.0
  %3401 = vmatpush1.msra.mxu0 0.0
  %3402 = vmatprep.subr.mxu0 0.0
  %3403 = vmatpush1.msra.mxu0 0.0
  %3404 = vmatprep.subr.mxu0 0.0
  %3405 = vmatpush1.msra.mxu0 0.0
  %3406 = vmatprep.subr.mxu0 0.0
  %3407 = vmatpush1.msra.mxu0 0.0
  %3408 = vmatprep.subr.mxu0 0.0
  %3409 = vmatpush1.msra.mxu0 0.0
  %3410 = vmatprep.subr.mxu0 0.0
  %3411 = vmatpush1.msra.mxu0 0.0
  %3412 = vmatprep.subr.mxu0 0.0
  %3413 = vmatpush1.msra.mxu0 0.0
  %3414 = vmatprep.subr.mxu0 0.0
  %3415 = vmatpush1.msra.mxu0 0.0
  %3416 = vmatprep.subr.mxu0 0.0
  %3417 = vmatpush1.msra.mxu0 0.0
  %3418 = vmatprep.subr.mxu0 0.0
  %3419 = vmatpush1.msra.mxu0 0.0
  %3420 = vmatprep.subr.mxu0 0.0
  %3421 = vmatpush1.msra.mxu0 0.0
  %3422 = vmatprep.subr.mxu0 0.0
  %3423 = vmatpush1.msra.mxu0 0.0
  %3424 = vmatprep.subr.mxu0 0.0
  %3425 = vmatpush1.msra.mxu0 0.0
  %3426 = vmatprep.subr.mxu0 0.0
  %3427 = vmatpush1.msra.mxu0 0.0
  %3428 = vmatprep.subr.mxu0 0.0
  %3429 = vmatpush1.msra.mxu0 0.0
  %3430 = vmatprep.subr.mxu0 0.0
  %3431 = vmatpush1.msra.mxu0 0.0
  %3432 = vmatprep.subr.mxu0 0.0
  %3433 = vmatpush1.msra.mxu0 0.0
  %3434 = vmatprep.subr.mxu0 0.0
  %3435 = vmatpush1.msra.mxu0 0.0
  %3436 = vmatprep.subr.mxu0 0.0
  %3437 = vmatpush1.msra.mxu0 0.0
  %3438 = vmatprep.mubr.f32.mxu0 0.0
  %3439 = vmatmul.mubr.f32.gmra.mrb[0].mxu0 %v3367
  %v3440 = vpop.f32.mrb[0].mxu0
  %v3441 = vadd.f32 0.0, %v3440
  %v3442 = vpop.f32.mrb[0].mxu0
  %3443 = vmatprep.mubr.f32.mxu0 0.0
  %3444 = vmatmul.mubr.f32.gmra.mrb[0].mxu0 %v3370
  %v3445 = vpop.f32.mrb[0].mxu0
  %v3446 = vadd.f32 0.0, %v3445
  %v3447 = vpop.f32.mrb[0].mxu0
  %3448 = vdwg.mxu0
  %3449 = vrot.lane.b32.xlu0 %v2954, 120
  %v3450 = vpop.permute.xlu0 %3449
  %3451 = vrot.lane.b32.xlu0 %v2953, 120
  %v3452 = vpop.permute.xlu0 %3451
  %3453 = vrot.lane.b32.xlu0 %v2955, 120
  %v3454 = vpop.permute.xlu0 %3453
  %3455 = vrot.lane.b32.xlu0 %v2963, 120
  %v3456 = vpop.permute.xlu0 %3455
  %3457 = vrot.lane.b32.xlu0 %v2964, 120
  %v3458 = vpop.permute.xlu0 %3457
  %v3459 = vrot.slane %v3450, 2
  %v3460 = vrot.slane %v3452, 2
  %v3461 = vrot.slane %v3454, 2
  %v3462 = vrot.slane %v3456, 2
  %v3463 = vrot.slane %v3458, 2
  %v3464 = vcombine.low %v3459, %v3460
  %v3465 = vcombine.low %v3461, %v3462
  %v3467 = vunpack.c.l.s4 1983009808
  %v3468 = vunpack.c.0.s8 %v3467
  %v3469 = vlaneseq
  %v3470 = vshrl.u32 %v3469, 7
  %v3471 = vsub.s32 %v3468, %v3470
  %v3472 = vrot.slane %v3464, %v3471
  %v3474 = vunpack.c.l.s4 1983009808
  %v3475 = vunpack.c.0.s8 %v3474
  %v3476 = vlaneseq
  %v3477 = vshrl.u32 %v3476, 7
  %v3478 = vsub.s32 %v3475, %v3477
  %v3479 = vrot.slane %v3465, %v3478
  %v3480 = vcombine.low %v3472, %v3479
  %v3482 = vunpack.c.l.s4 1983009808
  %v3483 = vunpack.c.0.s8 %v3482
  %v3484 = vlaneseq
  %v3485 = vshrl.u32 %v3484, 7
  %v3486 = vsub.s32 %v3483, %v3485
  %v3487 = vrot.slane %v3463, %v3486
  %v3490 = vsel %vm621, %v3323, 0
  %v3493 = vsel %vm621, %v3325, 0
  %v3495 = vsel %vm678, %v3487, 0
  %3497 = vmatprep.subr.mxu0 0.0
  %3498 = vmatpush1.msra.mxu0 %v3480
  %3499 = vmatprep.subr.mxu0 0.0
  %3500 = vmatpush1.msra.mxu0 %v3495
  %3501 = vmatprep.subr.mxu0 0.0
  %3502 = vmatpush1.msra.mxu0 0.0
  %3503 = vmatprep.subr.mxu0 0.0
  %3504 = vmatpush1.msra.mxu0 0.0
  %3505 = vmatprep.subr.mxu0 0.0
  %3506 = vmatpush1.msra.mxu0 0.0
  %3507 = vmatprep.subr.mxu0 0.0
  %3508 = vmatpush1.msra.mxu0 0.0
  %3509 = vmatprep.subr.mxu0 0.0
  %3510 = vmatpush1.msra.mxu0 0.0
  %3511 = vmatprep.subr.mxu0 0.0
  %3512 = vmatpush1.msra.mxu0 0.0
  %3513 = vmatprep.subr.mxu0 0.0
  %3514 = vmatpush1.msra.mxu0 0.0
  %3515 = vmatprep.subr.mxu0 0.0
  %3516 = vmatpush1.msra.mxu0 0.0
  %3517 = vmatprep.subr.mxu0 0.0
  %3518 = vmatpush1.msra.mxu0 0.0
  %3519 = vmatprep.subr.mxu0 0.0
  %3520 = vmatpush1.msra.mxu0 0.0
  %3521 = vmatprep.subr.mxu0 0.0
  %3522 = vmatpush1.msra.mxu0 0.0
  %3523 = vmatprep.subr.mxu0 0.0
  %3524 = vmatpush1.msra.mxu0 0.0
  %3525 = vmatprep.subr.mxu0 0.0
  %3526 = vmatpush1.msra.mxu0 0.0
  %3527 = vmatprep.subr.mxu0 0.0
  %3528 = vmatpush1.msra.mxu0 0.0
  %3529 = vmatprep.subr.mxu0 0.0
  %3530 = vmatpush1.msra.mxu0 0.0
  %3531 = vmatprep.subr.mxu0 0.0
  %3532 = vmatpush1.msra.mxu0 0.0
  %3533 = vmatprep.subr.mxu0 0.0
  %3534 = vmatpush1.msra.mxu0 0.0
  %3535 = vmatprep.subr.mxu0 0.0
  %3536 = vmatpush1.msra.mxu0 0.0
  %3537 = vmatprep.subr.mxu0 0.0
  %3538 = vmatpush1.msra.mxu0 0.0
  %3539 = vmatprep.subr.mxu0 0.0
  %3540 = vmatpush1.msra.mxu0 0.0
  %3541 = vmatprep.subr.mxu0 0.0
  %3542 = vmatpush1.msra.mxu0 0.0
  %3543 = vmatprep.subr.mxu0 0.0
  %3544 = vmatpush1.msra.mxu0 0.0
  %3545 = vmatprep.subr.mxu0 0.0
  %3546 = vmatpush1.msra.mxu0 0.0
  %3547 = vmatprep.subr.mxu0 0.0
  %3548 = vmatpush1.msra.mxu0 0.0
  %3549 = vmatprep.subr.mxu0 0.0
  %3550 = vmatpush1.msra.mxu0 0.0
  %3551 = vmatprep.subr.mxu0 0.0
  %3552 = vmatpush1.msra.mxu0 0.0
  %3553 = vmatprep.subr.mxu0 0.0
  %3554 = vmatpush1.msra.mxu0 0.0
  %3555 = vmatprep.subr.mxu0 0.0
  %3556 = vmatpush1.msra.mxu0 0.0
  %3557 = vmatprep.subr.mxu0 0.0
  %3558 = vmatpush1.msra.mxu0 0.0
  %3559 = vmatprep.subr.mxu0 0.0
  %3560 = vmatpush1.msra.mxu0 0.0
  %3561 = vmatprep.mubr.f32.mxu0 0.0
  %3562 = vmatmul.mubr.f32.gmra.mrb[0].mxu0 %v3490
  %v3563 = vpop.f32.mrb[0].mxu0
  %v3564 = vadd.f32 0.0, %v3563
  %v3565 = vpop.f32.mrb[0].mxu0
  %3566 = vmatprep.mubr.f32.mxu0 0.0
  %3567 = vmatmul.mubr.f32.gmra.mrb[0].mxu0 %v3493
  %v3568 = vpop.f32.mrb[0].mxu0
  %v3569 = vadd.f32 0.0, %v3568
  %v3570 = vpop.f32.mrb[0].mxu0
  %3571 = vdwg.mxu0
  %v3576 = vcombine.high %v3441, %v3441
  %v3578 = vunpack.c.l.s4 1983009808
  %v3579 = vunpack.c.0.s8 %v3578
  %v3580 = vlaneseq
  %v3581 = vshrl.u32 %v3580, 7
  %v3582 = vsub.s32 %v3579, %v3581
  %v3583 = vrot.slane %v3441, %v3582
  %v3585 = vunpack.c.l.s4 1983009808
  %v3586 = vunpack.c.0.s8 %v3585
  %v3587 = vlaneseq
  %v3588 = vshrl.u32 %v3587, 7
  %v3589 = vsub.s32 %v3586, %v3588
  %v3590 = vrot.slane %v3576, %v3589
  %v3591 = vcombine.high %v3583, %v3583
  %v3592 = vcombine.high %v3590, %v3590
  %v3594 = vunpack.c.l.s4 1983009808
  %v3595 = vunpack.c.0.s8 %v3594
  %v3596 = vlaneseq
  %v3597 = vshrl.u32 %v3596, 7
  %v3598 = vsub.s32 %v3595, %v3597
  %v3599 = vrot.slane %v3446, %v3598
  %v3600 = vcombine.high %v3564, %v3564
  %v3602 = vunpack.c.l.s4 1983009808
  %v3603 = vunpack.c.0.s8 %v3602
  %v3604 = vlaneseq
  %v3605 = vshrl.u32 %v3604, 7
  %v3606 = vsub.s32 %v3603, %v3605
  %v3607 = vrot.slane %v3564, %v3606
  %v3609 = vunpack.c.l.s4 1983009808
  %v3610 = vunpack.c.0.s8 %v3609
  %v3611 = vlaneseq
  %v3612 = vshrl.u32 %v3611, 7
  %v3613 = vsub.s32 %v3610, %v3612
  %v3614 = vrot.slane %v3600, %v3613
  %v3615 = vcombine.high %v3607, %v3607
  %v3616 = vcombine.high %v3614, %v3614
  %v3618 = vunpack.c.l.s4 1983009808
  %v3619 = vunpack.c.0.s8 %v3618
  %v3620 = vlaneseq
  %v3621 = vshrl.u32 %v3620, 7
  %v3622 = vsub.s32 %v3619, %v3621
  %v3623 = vrot.slane %v3569, %v3622
  %v3625 = vlaneseq
  %v3626 = vshrl.u32 %v3625, 7
  %v3627 = vsub.s32 0, %v3626
  %v3628 = vrot.slane %v2764, %v3627
  %v3630 = vcombine.low %v3583, %v3591
  %v3631 = vcombine.low %v3590, %v3592
  %v3633 = vunpack.c.l.s4 1983009808
  %v3634 = vunpack.c.0.s8 %v3633
  %v3635 = vlaneseq
  %v3636 = vshrl.u32 %v3635, 7
  %v3637 = vsub.s32 %v3634, %v3636
  %v3638 = vrot.slane %v3630, %v3637
  %v3640 = vunpack.c.l.s4 1983009808
  %v3641 = vunpack.c.0.s8 %v3640
  %v3642 = vlaneseq
  %v3643 = vshrl.u32 %v3642, 7
  %v3644 = vsub.s32 %v3641, %v3643
  %v3645 = vrot.slane %v3631, %v3644
  %v3646 = vcombine.low %v3638, %v3645
  %v3647 = vcombine.low %v3599, %v3607
  %v3648 = vcombine.low %v3615, %v3614
  %v3650 = vunpack.c.l.s4 1983009808
  %v3651 = vunpack.c.0.s8 %v3650
  %v3652 = vlaneseq
  %v3653 = vshrl.u32 %v3652, 7
  %v3654 = vsub.s32 %v3651, %v3653
  %v3655 = vrot.slane %v3647, %v3654
  %v3657 = vunpack.c.l.s4 1983009808
  %v3658 = vunpack.c.0.s8 %v3657
  %v3659 = vlaneseq
  %v3660 = vshrl.u32 %v3659, 7
  %v3661 = vsub.s32 %v3658, %v3660
  %v3662 = vrot.slane %v3648, %v3661
  %v3663 = vcombine.low %v3655, %v3662
  %v3664 = vcombine.low %v3616, %v3623
  %v3666 = vunpack.c.l.s4 1983009808
  %v3667 = vunpack.c.0.s8 %v3666
  %v3668 = vlaneseq
  %v3669 = vshrl.u32 %v3668, 7
  %v3670 = vsub.s32 %v3667, %v3669
  %v3671 = vrot.slane %v3664, %v3670
  %v3672 = vsel %vm2818, %v3646, 0
  %v3674 = vsel %vm2818, %v3663, 0
  %v3676 = vsel %vm2818, %v3671, 0
  %v3679 = vsel %vm192, %v2763, 0
  %3681 = vmatprep.subr.mxu0 0.0
  %3682 = vmatpush1.msra.mxu0 %v2755
  %3683 = vmatprep.subr.mxu0 0.0
  %3684 = vmatpush1.msra.mxu0 %v2756
  %3685 = vmatprep.subr.mxu0 0.0
  %3686 = vmatpush1.msra.mxu0 %v2757
  %3687 = vmatprep.subr.mxu0 0.0
  %3688 = vmatpush1.msra.mxu0 %v2758
  %3689 = vmatprep.subr.mxu0 0.0
  %3690 = vmatpush1.msra.mxu0 %v2759
  %3691 = vmatprep.subr.mxu0 0.0
  %3692 = vmatpush1.msra.mxu0 %v2760
  %3693 = vmatprep.subr.mxu0 0.0
  %3694 = vmatpush1.msra.mxu0 %v2761
  %3695 = vmatprep.subr.mxu0 0.0
  %3696 = vmatpush1.msra.mxu0 %v2762
  %3697 = vmatprep.subr.mxu0 0.0
  %3698 = vmatpush1.msra.mxu0 %v3679
  %3699 = vmatprep.subr.mxu0 0.0
  %3700 = vmatpush1.msra.mxu0 0.0
  %3701 = vmatprep.subr.mxu0 0.0
  %3702 = vmatpush1.msra.mxu0 0.0
  %3703 = vmatprep.subr.mxu0 0.0
  %3704 = vmatpush1.msra.mxu0 0.0
  %3705 = vmatprep.subr.mxu0 0.0
  %3706 = vmatpush1.msra.mxu0 0.0
  %3707 = vmatprep.subr.mxu0 0.0
  %3708 = vmatpush1.msra.mxu0 0.0
  %3709 = vmatprep.subr.mxu0 0.0
  %3710 = vmatpush1.msra.mxu0 0.0
  %3711 = vmatprep.subr.mxu0 0.0
  %3712 = vmatpush1.msra.mxu0 0.0
  %3713 = vmatprep.subr.mxu0 0.0
  %3714 = vmatpush1.msra.mxu0 0.0
  %3715 = vmatprep.subr.mxu0 0.0
  %3716 = vmatpush1.msra.mxu0 0.0
  %3717 = vmatprep.subr.mxu0 0.0
  %3718 = vmatpush1.msra.mxu0 0.0
  %3719 = vmatprep.subr.mxu0 0.0
  %3720 = vmatpush1.msra.mxu0 0.0
  %3721 = vmatprep.subr.mxu0 0.0
  %3722 = vmatpush1.msra.mxu0 0.0
  %3723 = vmatprep.subr.mxu0 0.0
  %3724 = vmatpush1.msra.mxu0 0.0
  %3725 = vmatprep.subr.mxu0 0.0
  %3726 = vmatpush1.msra.mxu0 0.0
  %3727 = vmatprep.subr.mxu0 0.0
  %3728 = vmatpush1.msra.mxu0 0.0
  %3729 = vmatprep.subr.mxu0 0.0
  %3730 = vmatpush1.msra.mxu0 0.0
  %3731 = vmatprep.subr.mxu0 0.0
  %3732 = vmatpush1.msra.mxu0 0.0
  %3733 = vmatprep.subr.mxu0 0.0
  %3734 = vmatpush1.msra.mxu0 0.0
  %3735 = vmatprep.subr.mxu0 0.0
  %3736 = vmatpush1.msra.mxu0 0.0
  %3737 = vmatprep.subr.mxu0 0.0
  %3738 = vmatpush1.msra.mxu0 0.0
  %3739 = vmatprep.subr.mxu0 0.0
  %3740 = vmatpush1.msra.mxu0 0.0
  %3741 = vmatprep.subr.mxu0 0.0
  %3742 = vmatpush1.msra.mxu0 0.0
  %3743 = vmatprep.subr.mxu0 0.0
  %3744 = vmatpush1.msra.mxu0 0.0
  %3745 = vmatprep.mubr.f32.mxu0 0.0
  %3746 = vmatmul.mubr.f32.gmra.mrb[0].mxu0 %v3672
  %v3747 = vpop.f32.mrb[0].mxu0
  %v3748 = vadd.f32 %v3628, %v3747
  %v3749 = vpop.f32.mrb[0].mxu0
  %3750 = vmatprep.mubr.f32.mxu0 0.0
  %3751 = vmatmul.mubr.f32.gmra.mrb[0].mxu0 %v3674
  %v3752 = vpop.f32.mrb[0].mxu0
  %v3753 = vadd.f32 %v3628, %v3752
  %v3754 = vpop.f32.mrb[0].mxu0
  %3755 = vmatprep.mubr.f32.mxu0 0.0
  %3756 = vmatmul.mubr.f32.gmra.mrb[0].mxu0 %v3676
  %v3757 = vpop.f32.mrb[0].mxu0
  %v3758 = vadd.f32 %v3628, %v3757
  %v3759 = vpop.f32.mrb[0].mxu0
  %3760 = vdwg.mxu0
  %v3761 = vld [vmem:[%s12] sm:$0xff]
  %v3762 = vld [vmem:[%s12 + $0x8] sm:$0xff]
  %v3763 = vld [vmem:[%s12 + $0x10] sm:$0xff]
  %v3764 = vld [vmem:[%s12 + $0x18] sm:$0xff]
  %v3765 = vld [vmem:[%s12 + $0x20] sm:$0xff]
  %v3766 = vld [vmem:[%s12 + $0x28] sm:$0xff]
  %v3767 = vld [vmem:[%s12 + $0x30] sm:$0xff]
  %v3768 = vld [vmem:[%s12 + $0x38] sm:$0xff]
  %v3769 = vld [vmem:[%s12 + $0x40] sm:$0xf]
  %v3770 = vld [vmem:[%s13] sm:$0x1]
  %v3772 = vlaneseq
  %v3773 = vshrl.u32 %v3772, 7
  %v3774 = vsub.s32 0, %v3773
  %v3775 = vrot.slane %v3770, %v3774
  %v3778 = vsel %vm2818, %v3748, 0
  %v3781 = vsel %vm2818, %v3753, 0
  %v3784 = vsel %vm2818, %v3758, 0
  %v3787 = vsel %vm192, %v3769, 0
  %3789 = vmatprep.subr.mxu0 0.0
  %3790 = vmatpush1.msra.mxu0 %v3761
  %3791 = vmatprep.subr.mxu0 0.0
  %3792 = vmatpush1.msra.mxu0 %v3762
  %3793 = vmatprep.subr.mxu0 0.0
  %3794 = vmatpush1.msra.mxu0 %v3763
  %3795 = vmatprep.subr.mxu0 0.0
  %3796 = vmatpush1.msra.mxu0 %v3764
  %3797 = vmatprep.subr.mxu0 0.0
  %3798 = vmatpush1.msra.mxu0 %v3765
  %3799 = vmatprep.subr.mxu0 0.0
  %3800 = vmatpush1.msra.mxu0 %v3766
  %3801 = vmatprep.subr.mxu0 0.0
  %3802 = vmatpush1.msra.mxu0 %v3767
  %3803 = vmatprep.subr.mxu0 0.0
  %3804 = vmatpush1.msra.mxu0 %v3768
  %3805 = vmatprep.subr.mxu0 0.0
  %3806 = vmatpush1.msra.mxu0 %v3787
  %3807 = vmatprep.subr.mxu0 0.0
  %3808 = vmatpush1.msra.mxu0 0.0
  %3809 = vmatprep.subr.mxu0 0.0
  %3810 = vmatpush1.msra.mxu0 0.0
  %3811 = vmatprep.subr.mxu0 0.0
  %3812 = vmatpush1.msra.mxu0 0.0
  %3813 = vmatprep.subr.mxu0 0.0
  %3814 = vmatpush1.msra.mxu0 0.0
  %3815 = vmatprep.subr.mxu0 0.0
  %3816 = vmatpush1.msra.mxu0 0.0
  %3817 = vmatprep.subr.mxu0 0.0
  %3818 = vmatpush1.msra.mxu0 0.0
  %3819 = vmatprep.subr.mxu0 0.0
  %3820 = vmatpush1.msra.mxu0 0.0
  %3821 = vmatprep.subr.mxu0 0.0
  %3822 = vmatpush1.msra.mxu0 0.0
  %3823 = vmatprep.subr.mxu0 0.0
  %3824 = vmatpush1.msra.mxu0 0.0
  %3825 = vmatprep.subr.mxu0 0.0
  %3826 = vmatpush1.msra.mxu0 0.0
  %3827 = vmatprep.subr.mxu0 0.0
  %3828 = vmatpush1.msra.mxu0 0.0
  %3829 = vmatprep.subr.mxu0 0.0
  %3830 = vmatpush1.msra.mxu0 0.0
  %3831 = vmatprep.subr.mxu0 0.0
  %3832 = vmatpush1.msra.mxu0 0.0
  %3833 = vmatprep.subr.mxu0 0.0
  %3834 = vmatpush1.msra.mxu0 0.0
  %3835 = vmatprep.subr.mxu0 0.0
  %3836 = vmatpush1.msra.mxu0 0.0
  %3837 = vmatprep.subr.mxu0 0.0
  %3838 = vmatpush1.msra.mxu0 0.0
  %3839 = vmatprep.subr.mxu0 0.0
  %3840 = vmatpush1.msra.mxu0 0.0
  %3841 = vmatprep.subr.mxu0 0.0
  %3842 = vmatpush1.msra.mxu0 0.0
  %3843 = vmatprep.subr.mxu0 0.0
  %3844 = vmatpush1.msra.mxu0 0.0
  %3845 = vmatprep.subr.mxu0 0.0
  %3846 = vmatpush1.msra.mxu0 0.0
  %3847 = vmatprep.subr.mxu0 0.0
  %3848 = vmatpush1.msra.mxu0 0.0
  %3849 = vmatprep.subr.mxu0 0.0
  %3850 = vmatpush1.msra.mxu0 0.0
  %3851 = vmatprep.subr.mxu0 0.0
  %3852 = vmatpush1.msra.mxu0 0.0
  %3853 = vmatprep.mubr.f32.mxu0 0.0
  %3854 = vmatmul.mubr.f32.gmra.mrb[0].mxu0 %v3778
  %v3855 = vpop.f32.mrb[0].mxu0
  %v3856 = vadd.f32 %v3775, %v3855
  %v3857 = vpop.f32.mrb[0].mxu0
  %3858 = vmatprep.mubr.f32.mxu0 0.0
  %3859 = vmatmul.mubr.f32.gmra.mrb[0].mxu0 %v3781
  %v3860 = vpop.f32.mrb[0].mxu0
  %v3861 = vadd.f32 %v3775, %v3860
  %v3862 = vpop.f32.mrb[0].mxu0
  %3863 = vmatprep.mubr.f32.mxu0 0.0
  %3864 = vmatmul.mubr.f32.gmra.mrb[0].mxu0 %v3784
  %v3865 = vpop.f32.mrb[0].mxu0
  %v3866 = vadd.f32 %v3775, %v3865
  %v3867 = vpop.f32.mrb[0].mxu0
  %3868 = vdwg.mxu0
  %v3872 = vcombine.high %v3856, %v3856
  %v3874 = vunpack.c.l.s4 1983009808
  %v3875 = vunpack.c.0.s8 %v3874
  %v3876 = vlaneseq
  %v3877 = vshrl.u32 %v3876, 7
  %v3878 = vsub.s32 %v3875, %v3877
  %v3879 = vrot.slane %v3856, %v3878
  %v3881 = vunpack.c.l.s4 1983009808
  %v3882 = vunpack.c.0.s8 %v3881
  %v3883 = vlaneseq
  %v3884 = vshrl.u32 %v3883, 7
  %v3885 = vsub.s32 %v3882, %v3884
  %v3886 = vrot.slane %v3872, %v3885
  %v3887 = vcombine.high %v3879, %v3879
  %v3888 = vcombine.high %v3886, %v3886
  %v3889 = vcombine.high %v3861, %v3861
  %v3891 = vunpack.c.l.s4 1983009808
  %v3892 = vunpack.c.0.s8 %v3891
  %v3893 = vlaneseq
  %v3894 = vshrl.u32 %v3893, 7
  %v3895 = vsub.s32 %v3892, %v3894
  %v3896 = vrot.slane %v3861, %v3895
  %v3898 = vunpack.c.l.s4 1983009808
  %v3899 = vunpack.c.0.s8 %v3898
  %v3900 = vlaneseq
  %v3901 = vshrl.u32 %v3900, 7
  %v3902 = vsub.s32 %v3899, %v3901
  %v3903 = vrot.slane %v3889, %v3902
  %v3904 = vcombine.high %v3896, %v3896
  %v3905 = vcombine.high %v3903, %v3903
  %v3907 = vunpack.c.l.s4 1983009808
  %v3908 = vunpack.c.0.s8 %v3907
  %v3909 = vlaneseq
  %v3910 = vshrl.u32 %v3909, 7
  %v3911 = vsub.s32 %v3908, %v3910
  %v3912 = vrot.slane %v3866, %v3911
  %v3913 = vcombine.high %v3912, %v3912
  %v3914 = vld [vmem:[%s14] sm:$0xff]
  %v3915 = vld [vmem:[%s14 + $0x8] sm:$0xff]
  %v3916 = vld [vmem:[%s14 + $0x10] sm:$0xff]
  %v3917 = vld [vmem:[%s14 + $0x18] sm:$0xff]
  %v3918 = vlaneseq
  %v3919 = vshrl.u32 %v3918, 7
  %v3920 = vsub.s32 0, %v3919
  %v3921 = vrot.slane %v3879, %v3920
  %v3922 = vlaneseq
  %v3923 = vshrl.u32 %v3922, 7
  %v3924 = vsub.s32 0, %v3923
  %v3925 = vrot.slane %v3904, %v3924
  %v3926 = vsel %vm1194, %v3925, %v3921
  %v3928 = vlaneseq
  %v3929 = vshrl.u32 %v3928, 7
  %v3930 = vsub.s32 1, %v3929
  %v3931 = vrot.slane %v3896, %v3930
  %v3932 = vlaneseq
  %v3933 = vshrl.u32 %v3932, 7
  %v3934 = vsub.s32 1, %v3933
  %v3935 = vrot.slane %v3913, %v3934
  %v3936 = vsel %vm1194, %v3935, %v3931
  %v3938 = vsel %vm68, %v3926, %v3936
  %3939 = vmatprep.subr.mxu0 0.0
  %3940 = vmatpush1.msra.mxu0 %v3914
  %3941 = vmatprep.subr.mxu0 0.0
  %3942 = vmatpush1.msra.mxu0 %v3915
  %3943 = vmatprep.subr.mxu0 0.0
  %3944 = vmatpush1.msra.mxu0 %v3916
  %3945 = vmatprep.subr.mxu0 0.0
  %3946 = vmatpush1.msra.mxu0 %v3917
  %3947 = vmatprep.subr.mxu0 0.0
  %3948 = vmatpush1.msra.mxu0 0.0
  %3949 = vmatprep.subr.mxu0 0.0
  %3950 = vmatpush1.msra.mxu0 0.0
  %3951 = vmatprep.subr.mxu0 0.0
  %3952 = vmatpush1.msra.mxu0 0.0
  %3953 = vmatprep.subr.mxu0 0.0
  %3954 = vmatpush1.msra.mxu0 0.0
  %3955 = vmatprep.subr.mxu0 0.0
  %3956 = vmatpush1.msra.mxu0 0.0
  %3957 = vmatprep.subr.mxu0 0.0
  %3958 = vmatpush1.msra.mxu0 0.0
  %3959 = vmatprep.subr.mxu0 0.0
  %3960 = vmatpush1.msra.mxu0 0.0
  %3961 = vmatprep.subr.mxu0 0.0
  %3962 = vmatpush1.msra.mxu0 0.0
  %3963 = vmatprep.subr.mxu0 0.0
  %3964 = vmatpush1.msra.mxu0 0.0
  %3965 = vmatprep.subr.mxu0 0.0
  %3966 = vmatpush1.msra.mxu0 0.0
  %3967 = vmatprep.subr.mxu0 0.0
  %3968 = vmatpush1.msra.mxu0 0.0
  %3969 = vmatprep.subr.mxu0 0.0
  %3970 = vmatpush1.msra.mxu0 0.0
  %3971 = vmatprep.subr.mxu0 0.0
  %3972 = vmatpush1.msra.mxu0 0.0
  %3973 = vmatprep.subr.mxu0 0.0
  %3974 = vmatpush1.msra.mxu0 0.0
  %3975 = vmatprep.subr.mxu0 0.0
  %3976 = vmatpush1.msra.mxu0 0.0
  %3977 = vmatprep.subr.mxu0 0.0
  %3978 = vmatpush1.msra.mxu0 0.0
  %3979 = vmatprep.subr.mxu0 0.0
  %3980 = vmatpush1.msra.mxu0 0.0
  %3981 = vmatprep.subr.mxu0 0.0
  %3982 = vmatpush1.msra.mxu0 0.0
  %3983 = vmatprep.subr.mxu0 0.0
  %3984 = vmatpush1.msra.mxu0 0.0
  %3985 = vmatprep.subr.mxu0 0.0
  %3986 = vmatpush1.msra.mxu0 0.0
  %3987 = vmatprep.subr.mxu0 0.0
  %3988 = vmatpush1.msra.mxu0 0.0
  %3989 = vmatprep.subr.mxu0 0.0
  %3990 = vmatpush1.msra.mxu0 0.0
  %3991 = vmatprep.subr.mxu0 0.0
  %3992 = vmatpush1.msra.mxu0 0.0
  %3993 = vmatprep.subr.mxu0 0.0
  %3994 = vmatpush1.msra.mxu0 0.0
  %3995 = vmatprep.subr.mxu0 0.0
  %3996 = vmatpush1.msra.mxu0 0.0
  %3997 = vmatprep.subr.mxu0 0.0
  %3998 = vmatpush1.msra.mxu0 0.0
  %3999 = vmatprep.subr.mxu0 0.0
  %4000 = vmatpush1.msra.mxu0 0.0
  %4001 = vmatprep.subr.mxu0 0.0
  %4002 = vmatpush1.msra.mxu0 0.0
  %4003 = vmatprep.mubr.f32.mxu0 0.0
  %4004 = vmatmul.mubr.f32.gmra.mrb[0].mxu0 %v1210
  %v4005 = vpop.f32.mrb[0].mxu0
  %v4006 = vadd.f32 0.0, %v4005
  %v4007 = vpop.f32.mrb[0].mxu0
  %4008 = vdwg.mxu0
  %v4009 = vadd.f32 %v3938, %v4006
  %v4010 = vtanh.pop %v4009
  %v4011 = vxor.u32 %v4009, 2147483648
  %v4012 = vmul.f32 %v4011, 1.442695
  %v4013 = vpow.pop %v4012
  %v4014 = vadd.f32 %v4013, 1.0
  %v4015 = vrcp.pop %v4014
  %v4016 = vmul.f32 1.0, %v4015
  %v4017 = vsel %vm71, %v4010, %v4016
  %v4018 = vmul.f32 %v4017, 0.0
  %4020 = vrot.lane.b32.xlu0 %v4017, 64
  %v4021 = vpop.permute.xlu0 %4020
  %v4023 = vmul.f32 %v4017, %v4021
  %4025 = vrot.lane.b32.xlu0 %v4023, 32
  %v4026 = vpop.permute.xlu0 %4025
  %v4028 = vadd.f32 %v4018, %v4026
  %v4029 = vtanh.pop %v4028
  %4031 = vrot.lane.b32.xlu0 %v4029, 64
  %v4032 = vpop.permute.xlu0 %4031
  %v4034 = vmul.f32 %v4017, %v4032
  %v4035 = vlaneseq
  %v4036 = vshrl.u32 %v4035, 7
  %v4037 = vsub.s32 1, %v4036
  %v4038 = vrot.slane %v3879, %v4037
  %v4039 = vlaneseq
  %v4040 = vshrl.u32 %v4039, 7
  %v4041 = vsub.s32 1, %v4040
  %v4042 = vrot.slane %v3904, %v4041
  %v4043 = vsel %vm1194, %v4042, %v4038
  %v4045 = vlaneseq
  %v4046 = vshrl.u32 %v4045, 7
  %v4047 = vsub.s32 0, %v4046
  %v4048 = vrot.slane %v3896, %v4047
  %v4049 = vlaneseq
  %v4050 = vshrl.u32 %v4049, 7
  %v4051 = vsub.s32 0, %v4050
  %v4052 = vrot.slane %v3913, %v4051
  %v4053 = vsel %vm1194, %v4052, %v4048
  %v4055 = vsel %vm68, %v4043, %v4053
  %4057 = vrot.lane.b32.xlu0 %v4034, 32
  %v4058 = vpop.permute.xlu0 %4057
  %v4059 = vsel %vm1208, %v4058, 0
  %4061 = vmatprep.subr.mxu0 0.0
  %4062 = vmatpush1.msra.mxu0 %v3914
  %4063 = vmatprep.subr.mxu0 0.0
  %4064 = vmatpush1.msra.mxu0 %v3915
  %4065 = vmatprep.subr.mxu0 0.0
  %4066 = vmatpush1.msra.mxu0 %v3916
  %4067 = vmatprep.subr.mxu0 0.0
  %4068 = vmatpush1.msra.mxu0 %v3917
  %4069 = vmatprep.subr.mxu0 0.0
  %4070 = vmatpush1.msra.mxu0 0.0
  %4071 = vmatprep.subr.mxu0 0.0
  %4072 = vmatpush1.msra.mxu0 0.0
  %4073 = vmatprep.subr.mxu0 0.0
  %4074 = vmatpush1.msra.mxu0 0.0
  %4075 = vmatprep.subr.mxu0 0.0
  %4076 = vmatpush1.msra.mxu0 0.0
  %4077 = vmatprep.subr.mxu0 0.0
  %4078 = vmatpush1.msra.mxu0 0.0
  %4079 = vmatprep.subr.mxu0 0.0
  %4080 = vmatpush1.msra.mxu0 0.0
  %4081 = vmatprep.subr.mxu0 0.0
  %4082 = vmatpush1.msra.mxu0 0.0
  %4083 = vmatprep.subr.mxu0 0.0
  %4084 = vmatpush1.msra.mxu0 0.0
  %4085 = vmatprep.subr.mxu0 0.0
  %4086 = vmatpush1.msra.mxu0 0.0
  %4087 = vmatprep.subr.mxu0 0.0
  %4088 = vmatpush1.msra.mxu0 0.0
  %4089 = vmatprep.subr.mxu0 0.0
  %4090 = vmatpush1.msra.mxu0 0.0
  %4091 = vmatprep.subr.mxu0 0.0
  %4092 = vmatpush1.msra.mxu0 0.0
  %4093 = vmatprep.subr.mxu0 0.0
  %4094 = vmatpush1.msra.mxu0 0.0
  %4095 = vmatprep.subr.mxu0 0.0
  %4096 = vmatpush1.msra.mxu0 0.0
  %4097 = vmatprep.subr.mxu0 0.0
  %4098 = vmatpush1.msra.mxu0 0.0
  %4099 = vmatprep.subr.mxu0 0.0
  %4100 = vmatpush1.msra.mxu0 0.0
  %4101 = vmatprep.subr.mxu0 0.0
  %4102 = vmatpush1.msra.mxu0 0.0
  %4103 = vmatprep.subr.mxu0 0.0
  %4104 = vmatpush1.msra.mxu0 0.0
  %4105 = vmatprep.subr.mxu0 0.0
  %4106 = vmatpush1.msra.mxu0 0.0
  %4107 = vmatprep.subr.mxu0 0.0
  %4108 = vmatpush1.msra.mxu0 0.0
  %4109 = vmatprep.subr.mxu0 0.0
  %4110 = vmatpush1.msra.mxu0 0.0
  %4111 = vmatprep.subr.mxu0 0.0
  %4112 = vmatpush1.msra.mxu0 0.0
  %4113 = vmatprep.subr.mxu0 0.0
  %4114 = vmatpush1.msra.mxu0 0.0
  %4115 = vmatprep.subr.mxu0 0.0
  %4116 = vmatpush1.msra.mxu0 0.0
  %4117 = vmatprep.subr.mxu0 0.0
  %4118 = vmatpush1.msra.mxu0 0.0
  %4119 = vmatprep.subr.mxu0 0.0
  %4120 = vmatpush1.msra.mxu0 0.0
  %4121 = vmatprep.subr.mxu0 0.0
  %4122 = vmatpush1.msra.mxu0 0.0
  %4123 = vmatprep.subr.mxu0 0.0
  %4124 = vmatpush1.msra.mxu0 0.0
  %4125 = vmatprep.mubr.f32.mxu0 0.0
  %4126 = vmatmul.mubr.f32.gmra.mrb[0].mxu0 %v4059
  %v4127 = vpop.f32.mrb[0].mxu0
  %v4128 = vadd.f32 0.0, %v4127
  %v4129 = vpop.f32.mrb[0].mxu0
  %4130 = vdwg.mxu0
  %v4131 = vadd.f32 %v4055, %v4128
  %v4132 = vtanh.pop %v4131
  %v4133 = vxor.u32 %v4131, 2147483648
  %v4134 = vmul.f32 %v4133, 1.442695
  %v4135 = vpow.pop %v4134
  %v4136 = vadd.f32 %v4135, 1.0
  %v4137 = vrcp.pop %v4136
  %v4138 = vmul.f32 1.0, %v4137
  %v4139 = vsel %vm71, %v4132, %v4138
  %v4140 = vmul.f32 %v4139, %v4028
  %4142 = vrot.lane.b32.xlu0 %v4139, 64
  %v4143 = vpop.permute.xlu0 %4142
  %v4145 = vmul.f32 %v4139, %v4143
  %4147 = vrot.lane.b32.xlu0 %v4145, 32
  %v4148 = vpop.permute.xlu0 %4147
  %v4150 = vadd.f32 %v4140, %v4148
  %v4151 = vtanh.pop %v4150
  %4153 = vrot.lane.b32.xlu0 %v4151, 64
  %v4154 = vpop.permute.xlu0 %4153
  %v4156 = vmul.f32 %v4139, %v4154
  %v4157 = vlaneseq
  %v4158 = vshrl.u32 %v4157, 7
  %v4159 = vsub.s32 0, %v4158
  %v4160 = vrot.slane %v3887, %v4159
  %v4161 = vlaneseq
  %v4162 = vshrl.u32 %v4161, 7
  %v4163 = vsub.s32 0, %v4162
  %v4164 = vrot.slane %v3903, %v4163
  %v4165 = vsel %vm1194, %v4164, %v4160
  %v4167 = vlaneseq
  %v4168 = vshrl.u32 %v4167, 7
  %v4169 = vsub.s32 1, %v4168
  %v4170 = vrot.slane %v3888, %v4169
  %v4171 = vlaneseq
  %v4172 = vshrl.u32 %v4171, 7
  %v4173 = vsub.s32 1, %v4172
  %v4174 = vrot.slane %v3912, %v4173
  %v4175 = vsel %vm1194, %v4174, %v4170
  %v4177 = vsel %vm68, %v4165, %v4175
  %4179 = vrot.lane.b32.xlu0 %v4156, 32
  %v4180 = vpop.permute.xlu0 %4179
  %v4181 = vsel %vm1208, %v4180, 0
  %4183 = vmatprep.subr.mxu0 0.0
  %4184 = vmatpush1.msra.mxu0 %v3914
  %4185 = vmatprep.subr.mxu0 0.0
  %4186 = vmatpush1.msra.mxu0 %v3915
  %4187 = vmatprep.subr.mxu0 0.0
  %4188 = vmatpush1.msra.mxu0 %v3916
  %4189 = vmatprep.subr.mxu0 0.0
  %4190 = vmatpush1.msra.mxu0 %v3917
  %4191 = vmatprep.subr.mxu0 0.0
  %4192 = vmatpush1.msra.mxu0 0.0
  %4193 = vmatprep.subr.mxu0 0.0
  %4194 = vmatpush1.msra.mxu0 0.0
  %4195 = vmatprep.subr.mxu0 0.0
  %4196 = vmatpush1.msra.mxu0 0.0
  %4197 = vmatprep.subr.mxu0 0.0
  %4198 = vmatpush1.msra.mxu0 0.0
  %4199 = vmatprep.subr.mxu0 0.0
  %4200 = vmatpush1.msra.mxu0 0.0
  %4201 = vmatprep.subr.mxu0 0.0
  %4202 = vmatpush1.msra.mxu0 0.0
  %4203 = vmatprep.subr.mxu0 0.0
  %4204 = vmatpush1.msra.mxu0 0.0
  %4205 = vmatprep.subr.mxu0 0.0
  %4206 = vmatpush1.msra.mxu0 0.0
  %4207 = vmatprep.subr.mxu0 0.0
  %4208 = vmatpush1.msra.mxu0 0.0
  %4209 = vmatprep.subr.mxu0 0.0
  %4210 = vmatpush1.msra.mxu0 0.0
  %4211 = vmatprep.subr.mxu0 0.0
  %4212 = vmatpush1.msra.mxu0 0.0
  %4213 = vmatprep.subr.mxu0 0.0
  %4214 = vmatpush1.msra.mxu0 0.0
  %4215 = vmatprep.subr.mxu0 0.0
  %4216 = vmatpush1.msra.mxu0 0.0
  %4217 = vmatprep.subr.mxu0 0.0
  %4218 = vmatpush1.msra.mxu0 0.0
  %4219 = vmatprep.subr.mxu0 0.0
  %4220 = vmatpush1.msra.mxu0 0.0
  %4221 = vmatprep.subr.mxu0 0.0
  %4222 = vmatpush1.msra.mxu0 0.0
  %4223 = vmatprep.subr.mxu0 0.0
  %4224 = vmatpush1.msra.mxu0 0.0
  %4225 = vmatprep.subr.mxu0 0.0
  %4226 = vmatpush1.msra.mxu0 0.0
  %4227 = vmatprep.subr.mxu0 0.0
  %4228 = vmatpush1.msra.mxu0 0.0
  %4229 = vmatprep.subr.mxu0 0.0
  %4230 = vmatpush1.msra.mxu0 0.0
  %4231 = vmatprep.subr.mxu0 0.0
  %4232 = vmatpush1.msra.mxu0 0.0
  %4233 = vmatprep.subr.mxu0 0.0
  %4234 = vmatpush1.msra.mxu0 0.0
  %4235 = vmatprep.subr.mxu0 0.0
  %4236 = vmatpush1.msra.mxu0 0.0
  %4237 = vmatprep.subr.mxu0 0.0
  %4238 = vmatpush1.msra.mxu0 0.0
  %4239 = vmatprep.subr.mxu0 0.0
  %4240 = vmatpush1.msra.mxu0 0.0
  %4241 = vmatprep.subr.mxu0 0.0
  %4242 = vmatpush1.msra.mxu0 0.0
  %4243 = vmatprep.subr.mxu0 0.0
  %4244 = vmatpush1.msra.mxu0 0.0
  %4245 = vmatprep.subr.mxu0 0.0
  %4246 = vmatpush1.msra.mxu0 0.0
  %4247 = vmatprep.mubr.f32.mxu0 0.0
  %4248 = vmatmul.mubr.f32.gmra.mrb[0].mxu0 %v4181
  %v4249 = vpop.f32.mrb[0].mxu0
  %v4250 = vadd.f32 0.0, %v4249
  %v4251 = vpop.f32.mrb[0].mxu0
  %4252 = vdwg.mxu0
  %v4253 = vadd.f32 %v4177, %v4250
  %v4254 = vtanh.pop %v4253
  %v4255 = vxor.u32 %v4253, 2147483648
  %v4256 = vmul.f32 %v4255, 1.442695
  %v4257 = vpow.pop %v4256
  %v4258 = vadd.f32 %v4257, 1.0
  %v4259 = vrcp.pop %v4258
  %v4260 = vmul.f32 1.0, %v4259
  %v4261 = vsel %vm71, %v4254, %v4260
  %v4262 = vmul.f32 %v4261, %v4150
  %4264 = vrot.lane.b32.xlu0 %v4261, 64
  %v4265 = vpop.permute.xlu0 %4264
  %v4267 = vmul.f32 %v4261, %v4265
  %4269 = vrot.lane.b32.xlu0 %v4267, 32
  %v4270 = vpop.permute.xlu0 %4269
  %v4272 = vadd.f32 %v4262, %v4270
  %v4273 = vtanh.pop %v4272
  %4275 = vrot.lane.b32.xlu0 %v4273, 64
  %v4276 = vpop.permute.xlu0 %4275
  %v4278 = vmul.f32 %v4261, %v4276
  %v4279 = vlaneseq
  %v4280 = vshrl.u32 %v4279, 7
  %v4281 = vsub.s32 1, %v4280
  %v4282 = vrot.slane %v3887, %v4281
  %v4283 = vlaneseq
  %v4284 = vshrl.u32 %v4283, 7
  %v4285 = vsub.s32 1, %v4284
  %v4286 = vrot.slane %v3903, %v4285
  %v4287 = vsel %vm1194, %v4286, %v4282
  %v4289 = vlaneseq
  %v4290 = vshrl.u32 %v4289, 7
  %v4291 = vsub.s32 0, %v4290
  %v4292 = vrot.slane %v3888, %v4291
  %v4293 = vlaneseq
  %v4294 = vshrl.u32 %v4293, 7
  %v4295 = vsub.s32 0, %v4294
  %v4296 = vrot.slane %v3912, %v4295
  %v4297 = vsel %vm1194, %v4296, %v4292
  %v4299 = vsel %vm68, %v4287, %v4297
  %4301 = vrot.lane.b32.xlu0 %v4278, 32
  %v4302 = vpop.permute.xlu0 %4301
  %v4303 = vsel %vm1208, %v4302, 0
  %4305 = vmatprep.subr.mxu0 0.0
  %4306 = vmatpush1.msra.mxu0 %v3914
  %4307 = vmatprep.subr.mxu0 0.0
  %4308 = vmatpush1.msra.mxu0 %v3915
  %4309 = vmatprep.subr.mxu0 0.0
  %4310 = vmatpush1.msra.mxu0 %v3916
  %4311 = vmatprep.subr.mxu0 0.0
  %4312 = vmatpush1.msra.mxu0 %v3917
  %4313 = vmatprep.subr.mxu0 0.0
  %4314 = vmatpush1.msra.mxu0 0.0
  %4315 = vmatprep.subr.mxu0 0.0
  %4316 = vmatpush1.msra.mxu0 0.0
  %4317 = vmatprep.subr.mxu0 0.0
  %4318 = vmatpush1.msra.mxu0 0.0
  %4319 = vmatprep.subr.mxu0 0.0
  %4320 = vmatpush1.msra.mxu0 0.0
  %4321 = vmatprep.subr.mxu0 0.0
  %4322 = vmatpush1.msra.mxu0 0.0
  %4323 = vmatprep.subr.mxu0 0.0
  %4324 = vmatpush1.msra.mxu0 0.0
  %4325 = vmatprep.subr.mxu0 0.0
  %4326 = vmatpush1.msra.mxu0 0.0
  %4327 = vmatprep.subr.mxu0 0.0
  %4328 = vmatpush1.msra.mxu0 0.0
  %4329 = vmatprep.subr.mxu0 0.0
  %4330 = vmatpush1.msra.mxu0 0.0
  %4331 = vmatprep.subr.mxu0 0.0
  %4332 = vmatpush1.msra.mxu0 0.0
  %4333 = vmatprep.subr.mxu0 0.0
  %4334 = vmatpush1.msra.mxu0 0.0
  %4335 = vmatprep.subr.mxu0 0.0
  %4336 = vmatpush1.msra.mxu0 0.0
  %4337 = vmatprep.subr.mxu0 0.0
  %4338 = vmatpush1.msra.mxu0 0.0
  %4339 = vmatprep.subr.mxu0 0.0
  %4340 = vmatpush1.msra.mxu0 0.0
  %4341 = vmatprep.subr.mxu0 0.0
  %4342 = vmatpush1.msra.mxu0 0.0
  %4343 = vmatprep.subr.mxu0 0.0
  %4344 = vmatpush1.msra.mxu0 0.0
  %4345 = vmatprep.subr.mxu0 0.0
  %4346 = vmatpush1.msra.mxu0 0.0
  %4347 = vmatprep.subr.mxu0 0.0
  %4348 = vmatpush1.msra.mxu0 0.0
  %4349 = vmatprep.subr.mxu0 0.0
  %4350 = vmatpush1.msra.mxu0 0.0
  %4351 = vmatprep.subr.mxu0 0.0
  %4352 = vmatpush1.msra.mxu0 0.0
  %4353 = vmatprep.subr.mxu0 0.0
  %4354 = vmatpush1.msra.mxu0 0.0
  %4355 = vmatprep.subr.mxu0 0.0
  %4356 = vmatpush1.msra.mxu0 0.0
  %4357 = vmatprep.subr.mxu0 0.0
  %4358 = vmatpush1.msra.mxu0 0.0
  %4359 = vmatprep.subr.mxu0 0.0
  %4360 = vmatpush1.msra.mxu0 0.0
  %4361 = vmatprep.subr.mxu0 0.0
  %4362 = vmatpush1.msra.mxu0 0.0
  %4363 = vmatprep.subr.mxu0 0.0
  %4364 = vmatpush1.msra.mxu0 0.0
  %4365 = vmatprep.subr.mxu0 0.0
  %4366 = vmatpush1.msra.mxu0 0.0
  %4367 = vmatprep.subr.mxu0 0.0
  %4368 = vmatpush1.msra.mxu0 0.0
  %4369 = vmatprep.mubr.f32.mxu0 0.0
  %4370 = vmatmul.mubr.f32.gmra.mrb[0].mxu0 %v4303
  %v4371 = vpop.f32.mrb[0].mxu0
  %v4372 = vadd.f32 0.0, %v4371
  %v4373 = vpop.f32.mrb[0].mxu0
  %4374 = vdwg.mxu0
  %v4375 = vadd.f32 %v4299, %v4372
  %v4376 = vtanh.pop %v4375
  %v4377 = vxor.u32 %v4375, 2147483648
  %v4378 = vmul.f32 %v4377, 1.442695
  %v4379 = vpow.pop %v4378
  %v4380 = vadd.f32 %v4379, 1.0
  %v4381 = vrcp.pop %v4380
  %v4382 = vmul.f32 1.0, %v4381
  %v4383 = vsel %vm71, %v4376, %v4382
  %v4384 = vmul.f32 %v4383, %v4272
  %4386 = vrot.lane.b32.xlu0 %v4383, 64
  %v4387 = vpop.permute.xlu0 %4386
  %v4389 = vmul.f32 %v4383, %v4387
  %4391 = vrot.lane.b32.xlu0 %v4389, 32
  %v4392 = vpop.permute.xlu0 %4391
  %v4394 = vadd.f32 %v4384, %v4392
  %v4395 = vtanh.pop %v4394
  %4397 = vrot.lane.b32.xlu0 %v4395, 64
  %v4398 = vpop.permute.xlu0 %4397
  %v4400 = vmul.f32 %v4383, %v4398
  %v4401 = vlaneseq
  %v4402 = vshrl.u32 %v4401, 7
  %v4403 = vsub.s32 0, %v4402
  %v4404 = vrot.slane %v3886, %v4403
  %v4405 = vlaneseq
  %v4406 = vshrl.u32 %v4405, 7
  %v4407 = vsub.s32 0, %v4406
  %v4408 = vrot.slane %v3905, %v4407
  %v4409 = vsel %vm1194, %v4408, %v4404
  %v4411 = vlaneseq
  %v4412 = vshrl.u32 %v4411, 7
  %v4413 = vsub.s32 1, %v4412
  %v4414 = vrot.slane %v3886, %v4413
  %v4415 = vlaneseq
  %v4416 = vshrl.u32 %v4415, 7
  %v4417 = vsub.s32 1, %v4416
  %v4418 = vrot.slane %v3905, %v4417
  %v4419 = vsel %vm1194, %v4418, %v4414
  %v4421 = vsel %vm68, %v4409, %v4419
  %4423 = vrot.lane.b32.xlu0 %v4400, 32
  %v4424 = vpop.permute.xlu0 %4423
  %v4425 = vsel %vm1208, %v4424, 0
  %4427 = vmatprep.subr.mxu0 0.0
  %4428 = vmatpush1.msra.mxu0 %v3914
  %4429 = vmatprep.subr.mxu0 0.0
  %4430 = vmatpush1.msra.mxu0 %v3915
  %4431 = vmatprep.subr.mxu0 0.0
  %4432 = vmatpush1.msra.mxu0 %v3916
  %4433 = vmatprep.subr.mxu0 0.0
  %4434 = vmatpush1.msra.mxu0 %v3917
  %4435 = vmatprep.subr.mxu0 0.0
  %4436 = vmatpush1.msra.mxu0 0.0
  %4437 = vmatprep.subr.mxu0 0.0
  %4438 = vmatpush1.msra.mxu0 0.0
  %4439 = vmatprep.subr.mxu0 0.0
  %4440 = vmatpush1.msra.mxu0 0.0
  %4441 = vmatprep.subr.mxu0 0.0
  %4442 = vmatpush1.msra.mxu0 0.0
  %4443 = vmatprep.subr.mxu0 0.0
  %4444 = vmatpush1.msra.mxu0 0.0
  %4445 = vmatprep.subr.mxu0 0.0
  %4446 = vmatpush1.msra.mxu0 0.0
  %4447 = vmatprep.subr.mxu0 0.0
  %4448 = vmatpush1.msra.mxu0 0.0
  %4449 = vmatprep.subr.mxu0 0.0
  %4450 = vmatpush1.msra.mxu0 0.0
  %4451 = vmatprep.subr.mxu0 0.0
  %4452 = vmatpush1.msra.mxu0 0.0
  %4453 = vmatprep.subr.mxu0 0.0
  %4454 = vmatpush1.msra.mxu0 0.0
  %4455 = vmatprep.subr.mxu0 0.0
  %4456 = vmatpush1.msra.mxu0 0.0
  %4457 = vmatprep.subr.mxu0 0.0
  %4458 = vmatpush1.msra.mxu0 0.0
  %4459 = vmatprep.subr.mxu0 0.0
  %4460 = vmatpush1.msra.mxu0 0.0
  %4461 = vmatprep.subr.mxu0 0.0
  %4462 = vmatpush1.msra.mxu0 0.0
  %4463 = vmatprep.subr.mxu0 0.0
  %4464 = vmatpush1.msra.mxu0 0.0
  %4465 = vmatprep.subr.mxu0 0.0
  %4466 = vmatpush1.msra.mxu0 0.0
  %4467 = vmatprep.subr.mxu0 0.0
  %4468 = vmatpush1.msra.mxu0 0.0
  %4469 = vmatprep.subr.mxu0 0.0
  %4470 = vmatpush1.msra.mxu0 0.0
  %4471 = vmatprep.subr.mxu0 0.0
  %4472 = vmatpush1.msra.mxu0 0.0
  %4473 = vmatprep.subr.mxu0 0.0
  %4474 = vmatpush1.msra.mxu0 0.0
  %4475 = vmatprep.subr.mxu0 0.0
  %4476 = vmatpush1.msra.mxu0 0.0
  %4477 = vmatprep.subr.mxu0 0.0
  %4478 = vmatpush1.msra.mxu0 0.0
  %4479 = vmatprep.subr.mxu0 0.0
  %4480 = vmatpush1.msra.mxu0 0.0
  %4481 = vmatprep.subr.mxu0 0.0
  %4482 = vmatpush1.msra.mxu0 0.0
  %4483 = vmatprep.subr.mxu0 0.0
  %4484 = vmatpush1.msra.mxu0 0.0
  %4485 = vmatprep.subr.mxu0 0.0
  %4486 = vmatpush1.msra.mxu0 0.0
  %4487 = vmatprep.subr.mxu0 0.0
  %4488 = vmatpush1.msra.mxu0 0.0
  %4489 = vmatprep.subr.mxu0 0.0
  %4490 = vmatpush1.msra.mxu0 0.0
  %4491 = vmatprep.mubr.f32.mxu0 0.0
  %4492 = vmatmul.mubr.f32.gmra.mrb[0].mxu0 %v4425
  %v4493 = vpop.f32.mrb[0].mxu0
  %v4494 = vadd.f32 0.0, %v4493
  %v4495 = vpop.f32.mrb[0].mxu0
  %4496 = vdwg.mxu0
  %v4497 = vadd.f32 %v4421, %v4494
  %v4498 = vtanh.pop %v4497
  %v4499 = vxor.u32 %v4497, 2147483648
  %v4500 = vmul.f32 %v4499, 1.442695
  %v4501 = vpow.pop %v4500
  %v4502 = vadd.f32 %v4501, 1.0
  %v4503 = vrcp.pop %v4502
  %v4504 = vmul.f32 1.0, %v4503
  %v4505 = vsel %vm71, %v4498, %v4504
  %v4506 = vmul.f32 %v4505, %v4394
  %4508 = vrot.lane.b32.xlu0 %v4505, 64
  %v4509 = vpop.permute.xlu0 %4508
  %v4511 = vmul.f32 %v4505, %v4509
  %4513 = vrot.lane.b32.xlu0 %v4511, 32
  %v4514 = vpop.permute.xlu0 %4513
  %v4516 = vadd.f32 %v4506, %v4514
  %v4517 = vtanh.pop %v4516
  %4519 = vrot.lane.b32.xlu0 %v4517, 64
  %v4520 = vpop.permute.xlu0 %4519
  %v4522 = vmul.f32 %v4505, %v4520
  %v4523 = vsel %vm68, %v4419, %v4409
  %4525 = vrot.lane.b32.xlu0 %v4522, 32
  %v4526 = vpop.permute.xlu0 %4525
  %v4527 = vsel %vm1208, %v4526, 0
  %4529 = vmatprep.subr.mxu0 0.0
  %4530 = vmatpush1.msra.mxu0 %v3914
  %4531 = vmatprep.subr.mxu0 0.0
  %4532 = vmatpush1.msra.mxu0 %v3915
  %4533 = vmatprep.subr.mxu0 0.0
  %4534 = vmatpush1.msra.mxu0 %v3916
  %4535 = vmatprep.subr.mxu0 0.0
  %4536 = vmatpush1.msra.mxu0 %v3917
  %4537 = vmatprep.subr.mxu0 0.0
  %4538 = vmatpush1.msra.mxu0 0.0
  %4539 = vmatprep.subr.mxu0 0.0
  %4540 = vmatpush1.msra.mxu0 0.0
  %4541 = vmatprep.subr.mxu0 0.0
  %4542 = vmatpush1.msra.mxu0 0.0
  %4543 = vmatprep.subr.mxu0 0.0
  %4544 = vmatpush1.msra.mxu0 0.0
  %4545 = vmatprep.subr.mxu0 0.0
  %4546 = vmatpush1.msra.mxu0 0.0
  %4547 = vmatprep.subr.mxu0 0.0
  %4548 = vmatpush1.msra.mxu0 0.0
  %4549 = vmatprep.subr.mxu0 0.0
  %4550 = vmatpush1.msra.mxu0 0.0
  %4551 = vmatprep.subr.mxu0 0.0
  %4552 = vmatpush1.msra.mxu0 0.0
  %4553 = vmatprep.subr.mxu0 0.0
  %4554 = vmatpush1.msra.mxu0 0.0
  %4555 = vmatprep.subr.mxu0 0.0
  %4556 = vmatpush1.msra.mxu0 0.0
  %4557 = vmatprep.subr.mxu0 0.0
  %4558 = vmatpush1.msra.mxu0 0.0
  %4559 = vmatprep.subr.mxu0 0.0
  %4560 = vmatpush1.msra.mxu0 0.0
  %4561 = vmatprep.subr.mxu0 0.0
  %4562 = vmatpush1.msra.mxu0 0.0
  %4563 = vmatprep.subr.mxu0 0.0
  %4564 = vmatpush1.msra.mxu0 0.0
  %4565 = vmatprep.subr.mxu0 0.0
  %4566 = vmatpush1.msra.mxu0 0.0
  %4567 = vmatprep.subr.mxu0 0.0
  %4568 = vmatpush1.msra.mxu0 0.0
  %4569 = vmatprep.subr.mxu0 0.0
  %4570 = vmatpush1.msra.mxu0 0.0
  %4571 = vmatprep.subr.mxu0 0.0
  %4572 = vmatpush1.msra.mxu0 0.0
  %4573 = vmatprep.subr.mxu0 0.0
  %4574 = vmatpush1.msra.mxu0 0.0
  %4575 = vmatprep.subr.mxu0 0.0
  %4576 = vmatpush1.msra.mxu0 0.0
  %4577 = vmatprep.subr.mxu0 0.0
  %4578 = vmatpush1.msra.mxu0 0.0
  %4579 = vmatprep.subr.mxu0 0.0
  %4580 = vmatpush1.msra.mxu0 0.0
  %4581 = vmatprep.subr.mxu0 0.0
  %4582 = vmatpush1.msra.mxu0 0.0
  %4583 = vmatprep.subr.mxu0 0.0
  %4584 = vmatpush1.msra.mxu0 0.0
  %4585 = vmatprep.subr.mxu0 0.0
  %4586 = vmatpush1.msra.mxu0 0.0
  %4587 = vmatprep.subr.mxu0 0.0
  %4588 = vmatpush1.msra.mxu0 0.0
  %4589 = vmatprep.subr.mxu0 0.0
  %4590 = vmatpush1.msra.mxu0 0.0
  %4591 = vmatprep.subr.mxu0 0.0
  %4592 = vmatpush1.msra.mxu0 0.0
  %4593 = vmatprep.mubr.f32.mxu0 0.0
  %4594 = vmatmul.mubr.f32.gmra.mrb[0].mxu0 %v4527
  %v4595 = vpop.f32.mrb[0].mxu0
  %v4596 = vadd.f32 0.0, %v4595
  %v4597 = vpop.f32.mrb[0].mxu0
  %4598 = vdwg.mxu0
  %v4599 = vadd.f32 %v4523, %v4596
  %v4600 = vtanh.pop %v4599
  %v4601 = vxor.u32 %v4599, 2147483648
  %v4602 = vmul.f32 %v4601, 1.442695
  %v4603 = vpow.pop %v4602
  %v4604 = vadd.f32 %v4603, 1.0
  %v4605 = vrcp.pop %v4604
  %v4606 = vmul.f32 1.0, %v4605
  %v4607 = vsel %vm71, %v4600, %v4606
  %v4608 = vmul.f32 %v4607, %v4516
  %4610 = vrot.lane.b32.xlu0 %v4607, 64
  %v4611 = vpop.permute.xlu0 %4610
  %v4613 = vmul.f32 %v4607, %v4611
  %4615 = vrot.lane.b32.xlu0 %v4613, 32
  %v4616 = vpop.permute.xlu0 %4615
  %v4618 = vadd.f32 %v4608, %v4616
  %v4619 = vtanh.pop %v4618
  %4621 = vrot.lane.b32.xlu0 %v4619, 64
  %v4622 = vpop.permute.xlu0 %4621
  %v4624 = vmul.f32 %v4607, %v4622
  %v4625 = vsel %vm68, %v4297, %v4287
  %4627 = vrot.lane.b32.xlu0 %v4624, 32
  %v4628 = vpop.permute.xlu0 %4627
  %v4629 = vsel %vm1208, %v4628, 0
  %4631 = vmatprep.subr.mxu0 0.0
  %4632 = vmatpush1.msra.mxu0 %v3914
  %4633 = vmatprep.subr.mxu0 0.0
  %4634 = vmatpush1.msra.mxu0 %v3915
  %4635 = vmatprep.subr.mxu0 0.0
  %4636 = vmatpush1.msra.mxu0 %v3916
  %4637 = vmatprep.subr.mxu0 0.0
  %4638 = vmatpush1.msra.mxu0 %v3917
  %4639 = vmatprep.subr.mxu0 0.0
  %4640 = vmatpush1.msra.mxu0 0.0
  %4641 = vmatprep.subr.mxu0 0.0
  %4642 = vmatpush1.msra.mxu0 0.0
  %4643 = vmatprep.subr.mxu0 0.0
  %4644 = vmatpush1.msra.mxu0 0.0
  %4645 = vmatprep.subr.mxu0 0.0
  %4646 = vmatpush1.msra.mxu0 0.0
  %4647 = vmatprep.subr.mxu0 0.0
  %4648 = vmatpush1.msra.mxu0 0.0
  %4649 = vmatprep.subr.mxu0 0.0
  %4650 = vmatpush1.msra.mxu0 0.0
  %4651 = vmatprep.subr.mxu0 0.0
  %4652 = vmatpush1.msra.mxu0 0.0
  %4653 = vmatprep.subr.mxu0 0.0
  %4654 = vmatpush1.msra.mxu0 0.0
  %4655 = vmatprep.subr.mxu0 0.0
  %4656 = vmatpush1.msra.mxu0 0.0
  %4657 = vmatprep.subr.mxu0 0.0
  %4658 = vmatpush1.msra.mxu0 0.0
  %4659 = vmatprep.subr.mxu0 0.0
  %4660 = vmatpush1.msra.mxu0 0.0
  %4661 = vmatprep.subr.mxu0 0.0
  %4662 = vmatpush1.msra.mxu0 0.0
  %4663 = vmatprep.subr.mxu0 0.0
  %4664 = vmatpush1.msra.mxu0 0.0
  %4665 = vmatprep.subr.mxu0 0.0
  %4666 = vmatpush1.msra.mxu0 0.0
  %4667 = vmatprep.subr.mxu0 0.0
  %4668 = vmatpush1.msra.mxu0 0.0
  %4669 = vmatprep.subr.mxu0 0.0
  %4670 = vmatpush1.msra.mxu0 0.0
  %4671 = vmatprep.subr.mxu0 0.0
  %4672 = vmatpush1.msra.mxu0 0.0
  %4673 = vmatprep.subr.mxu0 0.0
  %4674 = vmatpush1.msra.mxu0 0.0
  %4675 = vmatprep.subr.mxu0 0.0
  %4676 = vmatpush1.msra.mxu0 0.0
  %4677 = vmatprep.subr.mxu0 0.0
  %4678 = vmatpush1.msra.mxu0 0.0
  %4679 = vmatprep.subr.mxu0 0.0
  %4680 = vmatpush1.msra.mxu0 0.0
  %4681 = vmatprep.subr.mxu0 0.0
  %4682 = vmatpush1.msra.mxu0 0.0
  %4683 = vmatprep.subr.mxu0 0.0
  %4684 = vmatpush1.msra.mxu0 0.0
  %4685 = vmatprep.subr.mxu0 0.0
  %4686 = vmatpush1.msra.mxu0 0.0
  %4687 = vmatprep.subr.mxu0 0.0
  %4688 = vmatpush1.msra.mxu0 0.0
  %4689 = vmatprep.subr.mxu0 0.0
  %4690 = vmatpush1.msra.mxu0 0.0
  %4691 = vmatprep.subr.mxu0 0.0
  %4692 = vmatpush1.msra.mxu0 0.0
  %4693 = vmatprep.subr.mxu0 0.0
  %4694 = vmatpush1.msra.mxu0 0.0
  %4695 = vmatprep.mubr.f32.mxu0 0.0
  %4696 = vmatmul.mubr.f32.gmra.mrb[0].mxu0 %v4629
  %v4697 = vpop.f32.mrb[0].mxu0
  %v4698 = vadd.f32 0.0, %v4697
  %v4699 = vpop.f32.mrb[0].mxu0
  %4700 = vdwg.mxu0
  %v4701 = vadd.f32 %v4625, %v4698
  %v4702 = vtanh.pop %v4701
  %v4703 = vxor.u32 %v4701, 2147483648
  %v4704 = vmul.f32 %v4703, 1.442695
  %v4705 = vpow.pop %v4704
  %v4706 = vadd.f32 %v4705, 1.0
  %v4707 = vrcp.pop %v4706
  %v4708 = vmul.f32 1.0, %v4707
  %v4709 = vsel %vm71, %v4702, %v4708
  %v4710 = vmul.f32 %v4709, %v4618
  %4712 = vrot.lane.b32.xlu0 %v4709, 64
  %v4713 = vpop.permute.xlu0 %4712
  %v4715 = vmul.f32 %v4709, %v4713
  %4717 = vrot.lane.b32.xlu0 %v4715, 32
  %v4718 = vpop.permute.xlu0 %4717
  %v4720 = vadd.f32 %v4710, %v4718
  %v4721 = vtanh.pop %v4720
  %4723 = vrot.lane.b32.xlu0 %v4721, 64
  %v4724 = vpop.permute.xlu0 %4723
  %v4726 = vmul.f32 %v4709, %v4724
  %v4727 = vsel %vm68, %v4175, %v4165
  %4729 = vrot.lane.b32.xlu0 %v4726, 32
  %v4730 = vpop.permute.xlu0 %4729
  %v4731 = vsel %vm1208, %v4730, 0
  %4733 = vmatprep.subr.mxu0 0.0
  %4734 = vmatpush1.msra.mxu0 %v3914
  %4735 = vmatprep.subr.mxu0 0.0
  %4736 = vmatpush1.msra.mxu0 %v3915
  %4737 = vmatprep.subr.mxu0 0.0
  %4738 = vmatpush1.msra.mxu0 %v3916
  %4739 = vmatprep.subr.mxu0 0.0
  %4740 = vmatpush1.msra.mxu0 %v3917
  %4741 = vmatprep.subr.mxu0 0.0
  %4742 = vmatpush1.msra.mxu0 0.0
  %4743 = vmatprep.subr.mxu0 0.0
  %4744 = vmatpush1.msra.mxu0 0.0
  %4745 = vmatprep.subr.mxu0 0.0
  %4746 = vmatpush1.msra.mxu0 0.0
  %4747 = vmatprep.subr.mxu0 0.0
  %4748 = vmatpush1.msra.mxu0 0.0
  %4749 = vmatprep.subr.mxu0 0.0
  %4750 = vmatpush1.msra.mxu0 0.0
  %4751 = vmatprep.subr.mxu0 0.0
  %4752 = vmatpush1.msra.mxu0 0.0
  %4753 = vmatprep.subr.mxu0 0.0
  %4754 = vmatpush1.msra.mxu0 0.0
  %4755 = vmatprep.subr.mxu0 0.0
  %4756 = vmatpush1.msra.mxu0 0.0
  %4757 = vmatprep.subr.mxu0 0.0
  %4758 = vmatpush1.msra.mxu0 0.0
  %4759 = vmatprep.subr.mxu0 0.0
  %4760 = vmatpush1.msra.mxu0 0.0
  %4761 = vmatprep.subr.mxu0 0.0
  %4762 = vmatpush1.msra.mxu0 0.0
  %4763 = vmatprep.subr.mxu0 0.0
  %4764 = vmatpush1.msra.mxu0 0.0
  %4765 = vmatprep.subr.mxu0 0.0
  %4766 = vmatpush1.msra.mxu0 0.0
  %4767 = vmatprep.subr.mxu0 0.0
  %4768 = vmatpush1.msra.mxu0 0.0
  %4769 = vmatprep.subr.mxu0 0.0
  %4770 = vmatpush1.msra.mxu0 0.0
  %4771 = vmatprep.subr.mxu0 0.0
  %4772 = vmatpush1.msra.mxu0 0.0
  %4773 = vmatprep.subr.mxu0 0.0
  %4774 = vmatpush1.msra.mxu0 0.0
  %4775 = vmatprep.subr.mxu0 0.0
  %4776 = vmatpush1.msra.mxu0 0.0
  %4777 = vmatprep.subr.mxu0 0.0
  %4778 = vmatpush1.msra.mxu0 0.0
  %4779 = vmatprep.subr.mxu0 0.0
  %4780 = vmatpush1.msra.mxu0 0.0
  %4781 = vmatprep.subr.mxu0 0.0
  %4782 = vmatpush1.msra.mxu0 0.0
  %4783 = vmatprep.subr.mxu0 0.0
  %4784 = vmatpush1.msra.mxu0 0.0
  %4785 = vmatprep.subr.mxu0 0.0
  %4786 = vmatpush1.msra.mxu0 0.0
  %4787 = vmatprep.subr.mxu0 0.0
  %4788 = vmatpush1.msra.mxu0 0.0
  %4789 = vmatprep.subr.mxu0 0.0
  %4790 = vmatpush1.msra.mxu0 0.0
  %4791 = vmatprep.subr.mxu0 0.0
  %4792 = vmatpush1.msra.mxu0 0.0
  %4793 = vmatprep.subr.mxu0 0.0
  %4794 = vmatpush1.msra.mxu0 0.0
  %4795 = vmatprep.subr.mxu0 0.0
  %4796 = vmatpush1.msra.mxu0 0.0
  %4797 = vmatprep.mubr.f32.mxu0 0.0
  %4798 = vmatmul.mubr.f32.gmra.mrb[0].mxu0 %v4731
  %v4799 = vpop.f32.mrb[0].mxu0
  %v4800 = vadd.f32 0.0, %v4799
  %v4801 = vpop.f32.mrb[0].mxu0
  %4802 = vdwg.mxu0
  %v4803 = vadd.f32 %v4727, %v4800
  %v4804 = vtanh.pop %v4803
  %v4805 = vxor.u32 %v4803, 2147483648
  %v4806 = vmul.f32 %v4805, 1.442695
  %v4807 = vpow.pop %v4806
  %v4808 = vadd.f32 %v4807, 1.0
  %v4809 = vrcp.pop %v4808
  %v4810 = vmul.f32 1.0, %v4809
  %v4811 = vsel %vm71, %v4804, %v4810
  %v4812 = vmul.f32 %v4811, %v4720
  %4814 = vrot.lane.b32.xlu0 %v4811, 64
  %v4815 = vpop.permute.xlu0 %4814
  %v4817 = vmul.f32 %v4811, %v4815
  %4819 = vrot.lane.b32.xlu0 %v4817, 32
  %v4820 = vpop.permute.xlu0 %4819
  %v4822 = vadd.f32 %v4812, %v4820
  %v4823 = vtanh.pop %v4822
  %4825 = vrot.lane.b32.xlu0 %v4823, 64
  %v4826 = vpop.permute.xlu0 %4825
  %v4828 = vmul.f32 %v4811, %v4826
  %v4829 = vsel %vm68, %v4053, %v4043
  %4831 = vrot.lane.b32.xlu0 %v4828, 32
  %v4832 = vpop.permute.xlu0 %4831
  %v4833 = vsel %vm1208, %v4832, 0
  %4835 = vmatprep.subr.mxu0 0.0
  %4836 = vmatpush1.msra.mxu0 %v3914
  %4837 = vmatprep.subr.mxu0 0.0
  %4838 = vmatpush1.msra.mxu0 %v3915
  %4839 = vmatprep.subr.mxu0 0.0
  %4840 = vmatpush1.msra.mxu0 %v3916
  %4841 = vmatprep.subr.mxu0 0.0
  %4842 = vmatpush1.msra.mxu0 %v3917
  %4843 = vmatprep.subr.mxu0 0.0
  %4844 = vmatpush1.msra.mxu0 0.0
  %4845 = vmatprep.subr.mxu0 0.0
  %4846 = vmatpush1.msra.mxu0 0.0
  %4847 = vmatprep.subr.mxu0 0.0
  %4848 = vmatpush1.msra.mxu0 0.0
  %4849 = vmatprep.subr.mxu0 0.0
  %4850 = vmatpush1.msra.mxu0 0.0
  %4851 = vmatprep.subr.mxu0 0.0
  %4852 = vmatpush1.msra.mxu0 0.0
  %4853 = vmatprep.subr.mxu0 0.0
  %4854 = vmatpush1.msra.mxu0 0.0
  %4855 = vmatprep.subr.mxu0 0.0
  %4856 = vmatpush1.msra.mxu0 0.0
  %4857 = vmatprep.subr.mxu0 0.0
  %4858 = vmatpush1.msra.mxu0 0.0
  %4859 = vmatprep.subr.mxu0 0.0
  %4860 = vmatpush1.msra.mxu0 0.0
  %4861 = vmatprep.subr.mxu0 0.0
  %4862 = vmatpush1.msra.mxu0 0.0
  %4863 = vmatprep.subr.mxu0 0.0
  %4864 = vmatpush1.msra.mxu0 0.0
  %4865 = vmatprep.subr.mxu0 0.0
  %4866 = vmatpush1.msra.mxu0 0.0
  %4867 = vmatprep.subr.mxu0 0.0
  %4868 = vmatpush1.msra.mxu0 0.0
  %4869 = vmatprep.subr.mxu0 0.0
  %4870 = vmatpush1.msra.mxu0 0.0
  %4871 = vmatprep.subr.mxu0 0.0
  %4872 = vmatpush1.msra.mxu0 0.0
  %4873 = vmatprep.subr.mxu0 0.0
  %4874 = vmatpush1.msra.mxu0 0.0
  %4875 = vmatprep.subr.mxu0 0.0
  %4876 = vmatpush1.msra.mxu0 0.0
  %4877 = vmatprep.subr.mxu0 0.0
  %4878 = vmatpush1.msra.mxu0 0.0
  %4879 = vmatprep.subr.mxu0 0.0
  %4880 = vmatpush1.msra.mxu0 0.0
  %4881 = vmatprep.subr.mxu0 0.0
  %4882 = vmatpush1.msra.mxu0 0.0
  %4883 = vmatprep.subr.mxu0 0.0
  %4884 = vmatpush1.msra.mxu0 0.0
  %4885 = vmatprep.subr.mxu0 0.0
  %4886 = vmatpush1.msra.mxu0 0.0
  %4887 = vmatprep.subr.mxu0 0.0
  %4888 = vmatpush1.msra.mxu0 0.0
  %4889 = vmatprep.subr.mxu0 0.0
  %4890 = vmatpush1.msra.mxu0 0.0
  %4891 = vmatprep.subr.mxu0 0.0
  %4892 = vmatpush1.msra.mxu0 0.0
  %4893 = vmatprep.subr.mxu0 0.0
  %4894 = vmatpush1.msra.mxu0 0.0
  %4895 = vmatprep.subr.mxu0 0.0
  %4896 = vmatpush1.msra.mxu0 0.0
  %4897 = vmatprep.subr.mxu0 0.0
  %4898 = vmatpush1.msra.mxu0 0.0
  %4899 = vmatprep.mubr.f32.mxu0 0.0
  %4900 = vmatmul.mubr.f32.gmra.mrb[0].mxu0 %v4833
  %v4901 = vpop.f32.mrb[0].mxu0
  %v4902 = vadd.f32 0.0, %v4901
  %v4903 = vpop.f32.mrb[0].mxu0
  %4904 = vdwg.mxu0
  %v4905 = vadd.f32 %v4829, %v4902
  %v4906 = vtanh.pop %v4905
  %v4907 = vxor.u32 %v4905, 2147483648
  %v4908 = vmul.f32 %v4907, 1.442695
  %v4909 = vpow.pop %v4908
  %v4910 = vadd.f32 %v4909, 1.0
  %v4911 = vrcp.pop %v4910
  %v4912 = vmul.f32 1.0, %v4911
  %v4913 = vsel %vm71, %v4906, %v4912
  %v4914 = vmul.f32 %v4913, %v4822
  %4916 = vrot.lane.b32.xlu0 %v4913, 64
  %v4917 = vpop.permute.xlu0 %4916
  %v4919 = vmul.f32 %v4913, %v4917
  %4921 = vrot.lane.b32.xlu0 %v4919, 32
  %v4922 = vpop.permute.xlu0 %4921
  %v4924 = vadd.f32 %v4914, %v4922
  %v4925 = vtanh.pop %v4924
  %4927 = vrot.lane.b32.xlu0 %v4925, 64
  %v4928 = vpop.permute.xlu0 %4927
  %v4930 = vmul.f32 %v4913, %v4928
  %v4931 = vsel %vm68, %v3936, %v3926
  %4933 = vrot.lane.b32.xlu0 %v4930, 32
  %v4934 = vpop.permute.xlu0 %4933
  %v4935 = vsel %vm1208, %v4934, 0
  %4937 = vmatprep.subr.mxu0 0.0
  %4938 = vmatpush1.msra.mxu0 %v3914
  %4939 = vmatprep.subr.mxu0 0.0
  %4940 = vmatpush1.msra.mxu0 %v3915
  %4941 = vmatprep.subr.mxu0 0.0
  %4942 = vmatpush1.msra.mxu0 %v3916
  %4943 = vmatprep.subr.mxu0 0.0
  %4944 = vmatpush1.msra.mxu0 %v3917
  %4945 = vmatprep.subr.mxu0 0.0
  %4946 = vmatpush1.msra.mxu0 0.0
  %4947 = vmatprep.subr.mxu0 0.0
  %4948 = vmatpush1.msra.mxu0 0.0
  %4949 = vmatprep.subr.mxu0 0.0
  %4950 = vmatpush1.msra.mxu0 0.0
  %4951 = vmatprep.subr.mxu0 0.0
  %4952 = vmatpush1.msra.mxu0 0.0
  %4953 = vmatprep.subr.mxu0 0.0
  %4954 = vmatpush1.msra.mxu0 0.0
  %4955 = vmatprep.subr.mxu0 0.0
  %4956 = vmatpush1.msra.mxu0 0.0
  %4957 = vmatprep.subr.mxu0 0.0
  %4958 = vmatpush1.msra.mxu0 0.0
  %4959 = vmatprep.subr.mxu0 0.0
  %4960 = vmatpush1.msra.mxu0 0.0
  %4961 = vmatprep.subr.mxu0 0.0
  %4962 = vmatpush1.msra.mxu0 0.0
  %4963 = vmatprep.subr.mxu0 0.0
  %4964 = vmatpush1.msra.mxu0 0.0
  %4965 = vmatprep.subr.mxu0 0.0
  %4966 = vmatpush1.msra.mxu0 0.0
  %4967 = vmatprep.subr.mxu0 0.0
  %4968 = vmatpush1.msra.mxu0 0.0
  %4969 = vmatprep.subr.mxu0 0.0
  %4970 = vmatpush1.msra.mxu0 0.0
  %4971 = vmatprep.subr.mxu0 0.0
  %4972 = vmatpush1.msra.mxu0 0.0
  %4973 = vmatprep.subr.mxu0 0.0
  %4974 = vmatpush1.msra.mxu0 0.0
  %4975 = vmatprep.subr.mxu0 0.0
  %4976 = vmatpush1.msra.mxu0 0.0
  %4977 = vmatprep.subr.mxu0 0.0
  %4978 = vmatpush1.msra.mxu0 0.0
  %4979 = vmatprep.subr.mxu0 0.0
  %4980 = vmatpush1.msra.mxu0 0.0
  %4981 = vmatprep.subr.mxu0 0.0
  %4982 = vmatpush1.msra.mxu0 0.0
  %4983 = vmatprep.subr.mxu0 0.0
  %4984 = vmatpush1.msra.mxu0 0.0
  %4985 = vmatprep.subr.mxu0 0.0
  %4986 = vmatpush1.msra.mxu0 0.0
  %4987 = vmatprep.subr.mxu0 0.0
  %4988 = vmatpush1.msra.mxu0 0.0
  %4989 = vmatprep.subr.mxu0 0.0
  %4990 = vmatpush1.msra.mxu0 0.0
  %4991 = vmatprep.subr.mxu0 0.0
  %4992 = vmatpush1.msra.mxu0 0.0
  %4993 = vmatprep.subr.mxu0 0.0
  %4994 = vmatpush1.msra.mxu0 0.0
  %4995 = vmatprep.subr.mxu0 0.0
  %4996 = vmatpush1.msra.mxu0 0.0
  %4997 = vmatprep.subr.mxu0 0.0
  %4998 = vmatpush1.msra.mxu0 0.0
  %4999 = vmatprep.subr.mxu0 0.0
  %5000 = vmatpush1.msra.mxu0 0.0
  %5001 = vmatprep.mubr.f32.mxu0 0.0
  %5002 = vmatmul.mubr.f32.gmra.mrb[0].mxu0 %v4935
  %v5003 = vpop.f32.mrb[0].mxu0
  %v5004 = vadd.f32 0.0, %v5003
  %v5005 = vpop.f32.mrb[0].mxu0
  %5006 = vdwg.mxu0
  %v5007 = vadd.f32 %v4931, %v5004
  %v5008 = vtanh.pop %v5007
  %v5009 = vxor.u32 %v5007, 2147483648
  %v5010 = vmul.f32 %v5009, 1.442695
  %v5011 = vpow.pop %v5010
  %v5012 = vadd.f32 %v5011, 1.0
  %v5013 = vrcp.pop %v5012
  %v5014 = vmul.f32 1.0, %v5013
  %v5015 = vsel %vm71, %v5008, %v5014
  %v5016 = vmul.f32 %v5015, %v4924
  %5018 = vrot.lane.b32.xlu0 %v5015, 64
  %v5019 = vpop.permute.xlu0 %5018
  %v5021 = vmul.f32 %v5015, %v5019
  %5023 = vrot.lane.b32.xlu0 %v5021, 32
  %v5024 = vpop.permute.xlu0 %5023
  %v5026 = vadd.f32 %v5016, %v5024
  %v5027 = vtanh.pop %v5026
  %5029 = vrot.lane.b32.xlu0 %v5027, 64
  %v5030 = vpop.permute.xlu0 %5029
  %v5032 = vmul.f32 %v5015, %v5030
  %5034 = vrot.lane.b32.xlu0 %v5032, 32
  %v5035 = vpop.permute.xlu0 %5034
  %v5038 = vsel %vm72, %v5035, %v4058
  %vm5039 = vcmask 254976
  %5040 = vst.msk [vmem:[%s15] sm:$0x3] %vm5039, %v5038
  // Predicated region
  $region62: #{bigmhc_core.5} parent=0 // pred_check
    _
  $region63: #{bigmhc_core.5} parent=0 // pred_check_branch
    %5042 = sbr.rel (0) target = $region65
  $region64: #{bigmhc_core.5} parent=0 // pred_region
    _
  $region65: #{bigmhc_core.5} parent=0 // pred_fallthru
    _
  // Predicated region
  $region66: #{bigmhc_core.5} parent=0 // pred_check
    _
  $region67: #{bigmhc_core.5} parent=0 // pred_check_branch
    %5044 = sbr.rel (0) target = $region69
  $region68: #{bigmhc_core.5} parent=0 // pred_region
    _
  $region69: #{bigmhc_core.5} parent=0 // pred_fallthru
    _

</llo_original>
